<compile_context>
chip_gen: v7x
topology: tpu7x:2x2x1
jax: 0.10.0
libtpu: 0.0.40
codegen_flags: <defaults>
</compile_context>

<pallas_src>
import math
import numpy as np

import jax
import jax.numpy as jnp
from jax import lax
from jax.experimental import pallas as pl
from jax.experimental.pallas import tpu as pltpu

# ----------------------------- configuration -----------------------------
B = 2                         # batch (num crops = 1, so x_g_norm batch == B)
IN_CHANS = 3
IMG = 32
PATCH = 16
NUM_PATCHES = (IMG // PATCH) ** 2           # 4
N_TOK = NUM_PATCHES + 1                     # 5 (cls + patches)
CPP = IN_CHANS * PATCH * PATCH              # 768
EMBED_DIM = 192                             # forced by SAT d_model=192
DEPTH = 2                                   # small depth for the example
NUM_HEADS = 12
HEAD_DIM = EMBED_DIM // NUM_HEADS           # 16
MLP_HIDDEN = EMBED_DIM * 4                  # 768
# ScaledDotProductAttention(d_model=192, d_k=32, d_v=32, h=8)
SAT_H = 8
SAT_DK = 32
SAT_HK = SAT_H * SAT_DK                     # 256
NUM_ELE_SLICE = 8
PER_LI = [(i + 1) / NUM_ELE_SLICE for i in range(NUM_ELE_SLICE)]
PER_LI_VAR = [(i + 1) * 0.25 / NUM_ELE_SLICE for i in range(NUM_ELE_SLICE)]
LN_EPS = 1e-5


# ------------------------------ kernel helpers ----------------------------
def _layernorm(x, w, b):
    mu = jnp.mean(x, axis=-1, keepdims=True)
    var = jnp.mean((x - mu) ** 2, axis=-1, keepdims=True)
    return (x - mu) * lax.rsqrt(var + LN_EPS) * w + b


def _head_masks(total, nheads):
    """h_sum (total, nheads): 1 where lane belongs to head; h_exp = transpose."""
    dk = total // nheads
    hs = np.zeros((total, nheads), np.float32)
    for h in range(nheads):
        hs[h * dk:(h + 1) * dk, h] = 1.0
    return jnp.asarray(hs), jnp.asarray(hs.T.copy())


# ------------------------------ fused kernel ------------------------------
def _fused_forward_kernel(
    patches_ref, ele_ref,
    pe_w_ref, base_ref,
    sat_wq_ref, sat_bq_ref, sat_wk_ref, sat_bk_ref, sat_wv_ref, sat_bv_ref,
    sat_wo_ref, sat_bo_ref, sat_hsum_ref, sat_hexp_ref,
    vit_hsum_ref, vit_hexp_ref,
    b_ln1w_ref, b_ln1b_ref, b_wq_ref, b_wk_ref, b_wv_ref, b_wproj_ref,
    b_bproj_ref, b_ln2w_ref, b_ln2b_ref, b_wfc1_ref, b_bfc1_ref,
    b_wfc2_ref, b_bfc2_ref,
    norm_w_ref, norm_b_ref,
    out_ref,
):
    f32 = jnp.float32
    bf16 = jnp.bfloat16

    # ---- patch embed + cls + pos (row 0 of patches is zero; base_ref already
    #      contains cls+pos for row 0 and pos+conv_bias for rows 1..) ----
    x = (jnp.dot(patches_ref[...].astype(bf16), pe_w_ref[...],
                 preferred_element_type=f32) + base_ref[...])          # (N_TOK, D)

    # ---- SAT elevation attention (each token vs [token, eleEm, elevarEm]) ----
    x16 = x.astype(bf16)
    ev16 = ele_ref[...].astype(bf16)                                   # (2, D)

    Qt = jnp.dot(x16, sat_wq_ref[...], preferred_element_type=f32) + sat_bq_ref[...]
    Kt = jnp.dot(x16, sat_wk_ref[...], preferred_element_type=f32) + sat_bk_ref[...]
    Vt = jnp.dot(x16, sat_wv_ref[...], preferred_element_type=f32) + sat_bv_ref[...]
    Qev = jnp.dot(ev16, sat_wq_ref[...], preferred_element_type=f32) + sat_bq_ref[...]
    Kev = jnp.dot(ev16, sat_wk_ref[...], preferred_element_type=f32) + sat_bk_ref[...]
    Vev = jnp.dot(ev16, sat_wv_ref[...], preferred_element_type=f32) + sat_bv_ref[...]
    Qe, Qv = Qev[0:1, :], Qev[1:2, :]
    Ke, Kv = Kev[0:1, :], Kev[1:2, :]
    Ve, Vv = Vev[0:1, :], Vev[1:2, :]

    hsum = sat_hsum_ref[...]                                           # (HK, H)
    hexp = sat_hexp_ref[...]                                           # (H, HK)
    inv_sqrt_dk = 1.0 / math.sqrt(SAT_DK)

    def hscore(q, k):   # per-head dot products (diag over rows via broadcasting)
        return jnp.dot(q * k, hsum, preferred_element_type=f32) * inv_sqrt_dk

    s_tt = hscore(Qt, Kt); s_te = hscore(Qt, Ke); s_tv = hscore(Qt, Kv)
    s_et = hscore(Qe, Kt); s_ee = hscore(Qe, Ke); s_ev = hscore(Qe, Kv)
    s_vt = hscore(Qv, Kt); s_ve = hscore(Qv, Ke); s_vv = hscore(Qv, Kv)

    def row_softmax3(a, b, c):
        m = jnp.maximum(a, jnp.maximum(b, c))
        pa, pb, pc = jnp.exp(a - m), jnp.exp(b - m), jnp.exp(c - m)
        inv = pl.reciprocal(pa + pb + pc, approx=True)
        return pa * inv, pb * inv, pc * inv

    a_tt, a_te, a_tv = row_softmax3(s_tt, s_te, s_tv)                  # (N_TOK, H)
    a_et, a_ee, a_ev = row_softmax3(s_et, s_ee, s_ev)
    a_vt, a_ve, a_vv = row_softmax3(s_vt, s_ve, s_vv)

    # sum over the 3 query positions -> per-key coefficients
    c_t = a_tt + a_et + a_vt
    c_e = a_te + a_ee + a_ve
    c_v = a_tv + a_ev + a_vv

    o = (jnp.dot(c_t, hexp, preferred_element_type=f32) * Vt
         + jnp.dot(c_e, hexp, preferred_element_type=f32) * Ve
         + jnp.dot(c_v, hexp, preferred_element_type=f32) * Vv)        # (N_TOK, HK)

    # fc_o applied to all 3 positions then summed == (sum o) @ Wo + 3*bo
    x = (jnp.dot(o.astype(bf16), sat_wo_ref[...], preferred_element_type=f32)
         + 3.0 * sat_bo_ref[...])                                      # replaces tokens

    # ---- ViT blocks ----
    vh_sum = vit_hsum_ref[...]                                         # (D, NH)
    vh_exp = vit_hexp_ref[...]                                         # (NH, D)
    attn_scale = HEAD_DIM ** -0.5

    for d in range(DEPTH):                                             # static loop
        xn = _layernorm(x, b_ln1w_ref[d], b_ln1b_ref[d])
        xn16 = xn.astype(bf16)
        q = jnp.dot(xn16, b_wq_ref[d], preferred_element_type=f32)     # (N_TOK, D)
        k = jnp.dot(xn16, b_wk_ref[d], preferred_element_type=f32)
        v = jnp.dot(xn16, b_wv_ref[d], preferred_element_type=f32)

        # scores of every query vs key m, per head, via the head-sum mask
        s = [jnp.dot(q * k[m:m + 1, :], vh_sum, preferred_element_type=f32)
             * attn_scale for m in range(N_TOK)]                       # N_TOK x (N_TOK, NH)
        mmax = s[0]
        for sm in s[1:]:
            mmax = jnp.maximum(mmax, sm)
        p = [jnp.exp(sm - mmax) for sm in s]
        den = p[0]
        for pm in p[1:]:
            den = den + pm
        inv = pl.reciprocal(den, approx=True)

        attn_out = jnp.zeros((N_TOK, EMBED_DIM), f32)
        for m in range(N_TOK):
            coef = jnp.dot(p[m] * inv, vh_exp, preferred_element_type=f32)  # (N_TOK, D)
            attn_out = attn_out + coef * v[m:m + 1, :]

        x = x + (jnp.dot(attn_out.astype(bf16), b_wproj_ref[d],
                         preferred_element_type=f32) + b_bproj_ref[d])

        xn2 = _layernorm(x, b_ln2w_ref[d], b_ln2b_ref[d])
        h1 = (jnp.dot(xn2.astype(bf16), b_wfc1_ref[d], preferred_element_type=f32)
              + b_bfc1_ref[d])
        h1 = 0.5 * h1 * (1.0 + lax.erf(h1 * (1.0 / math.sqrt(2.0))))   # exact GELU
        x = x + (jnp.dot(h1.astype(bf16), b_wfc2_ref[d], preferred_element_type=f32)
                 + b_bfc2_ref[d])

    # ---- final LayerNorm + cls token ----
    xn = _layernorm(x, norm_w_ref[...], norm_b_ref[...])
    out_ref[...] = xn[0:1, :]


# ------------------------------- wrapper ----------------------------------
def _const_spec(arr):
    nd = arr.ndim
    return pl.BlockSpec(arr.shape, lambda i, _nd=nd: (0,) * _nd)


def fused_forward_pallas(patches, ele_rows, params):
    bn = patches.shape[0]
    # combined additive term: row 0 = cls + pos[0]; rows 1.. = pos + conv bias
    base = params["pos_embed"][0] + jnp.concatenate(
        [params["cls_token"][0],
         jnp.broadcast_to(params["conv_b"], (NUM_PATCHES, EMBED_DIM))], axis=0)

    blk = params["blk"]
    weight_args = (
        params["pe_w"], base,
        params["sat_wq"], params["sat_bq"], params["sat_wk"], params["sat_bk"],
        params["sat_wv"], params["sat_bv"], params["sat_wo"], params["sat_bo"],
        params["sat_hsum"], params["sat_hexp"],
        params["vit_hsum"], params["vit_hexp"],
        blk["ln1_w"], blk["ln1_b"], blk["wq"], blk["wk"], blk["wv"],
        blk["wproj"], blk["bproj"], blk["ln2_w"], blk["ln2_b"],
        blk["wfc1"], blk["bfc1"], blk["wfc2"], blk["bfc2"],
        params["norm_w"], params["norm_b"],
    )
    out = pl.pallas_call(
        _fused_forward_kernel,
        grid=(bn,),
        in_specs=[
            pl.BlockSpec((None, N_TOK, CPP), lambda i: (i, 0, 0)),
            pl.BlockSpec((None, 2, EMBED_DIM), lambda i: (i, 0, 0)),
        ] + [_const_spec(a) for a in weight_args],
        out_specs=pl.BlockSpec((None, 1, EMBED_DIM), lambda i: (i, 0, 0)),
        out_shape=jax.ShapeDtypeStruct((bn, 1, EMBED_DIM), jnp.float32),
        compiler_params=pltpu.CompilerParams(
            dimension_semantics=("parallel",)),     # shards batch over 2 TCs on v7x
    )(patches, ele_rows, *weight_args)
    return out[:, 0, :]


# ------------------------------- glue -------------------------------------
def extract_patches(x, patch):
    # NCHW -> (B, num_patches, C*patch*patch); patch vector order = (C, ph, pw)
    b, c, h, w = x.shape
    hp, wp = h // patch, w // patch
    x = x.reshape(b, c, hp, patch, wp, patch)
    x = x.transpose(0, 2, 4, 1, 3, 5)
    return x.reshape(b, hp * wp, c * patch * patch)


def elevation_rows(params, x_g_norm, bn):
    # get_map_idx / get_map_var_idx (bisect_left on mean / unbiased variance),
    # then gather the selected embedding rows.  Scalar host-side glue.
    per = jnp.asarray(PER_LI, jnp.float32)
    per_var = jnp.asarray(PER_LI_VAR, jnp.float32)
    means = jnp.mean(x_g_norm, axis=(1, 2, 3))
    variances = jnp.var(x_g_norm, axis=(1, 2, 3), ddof=1)   # torch.var unbiased
    idx = jnp.clip(jnp.searchsorted(per, means, side="left"),
                   0, NUM_ELE_SLICE - 1)
    vidx = jnp.clip(jnp.searchsorted(per_var, variances, side="left"),
                    0, NUM_ELE_SLICE - 1)
    rows = jnp.stack([params["eleva_embed"][idx],
                      params["eleva_var_embed"][vidx]], axis=1)        # (Bt, 2, D)
    crops = bn // x_g_norm.shape[0]
    return jnp.tile(rows, (crops, 1, 1)).astype(jnp.float32)           # (B, 2, D)


def init_params(key):
    ks = jax.random.split(key, 16)

    def nrm(k, shape, dtype=jnp.float32):
        return (jax.random.normal(k, shape, jnp.float32) * 0.02).astype(dtype)

    p = {
        # == conv.weight.reshape(D, -1).T  (lane-dense, bf16 for the MXU)
        "pe_w": nrm(ks[0], (CPP, EMBED_DIM), jnp.bfloat16),
        "conv_b": jnp.zeros((1, EMBED_DIM), jnp.float32),
        "cls_token": nrm(ks[1], (1, 1, EMBED_DIM)),
        "pos_embed": nrm(ks[2], (1, N_TOK, EMBED_DIM)),
        "eleva_embed": nrm(ks[3], (NUM_ELE_SLICE, EMBED_DIM)),
        "eleva_var_embed": nrm(ks[4], (NUM_ELE_SLICE, EMBED_DIM)),
        "sat_wq": nrm(ks[5], (EMBED_DIM, SAT_HK), jnp.bfloat16),
        "sat_bq": jnp.zeros((1, SAT_HK), jnp.float32),
        "sat_wk": nrm(ks[6], (EMBED_DIM, SAT_HK), jnp.bfloat16),
        "sat_bk": jnp.zeros((1, SAT_HK), jnp.float32),
        "sat_wv": nrm(ks[7], (EMBED_DIM, SAT_HK), jnp.bfloat16),
        "sat_bv": jnp.zeros((1, SAT_HK), jnp.float32),
        "sat_wo": nrm(ks[8], (SAT_HK, EMBED_DIM), jnp.bfloat16),
        "sat_bo": jnp.zeros((1, EMBED_DIM), jnp.float32),
        "norm_w": jnp.ones((1, EMBED_DIM), jnp.float32),
        "norm_b": jnp.zeros((1, EMBED_DIM), jnp.float32),
    }
    p["sat_hsum"], p["sat_hexp"] = _head_masks(SAT_HK, SAT_H)
    p["vit_hsum"], p["vit_hexp"] = _head_masks(EMBED_DIM, NUM_HEADS)

    bkeys = jax.random.split(ks[9], DEPTH * 6)

    def bk(d, j):
        return bkeys[d * 6 + j]

    p["blk"] = {
        "ln1_w": jnp.ones((DEPTH, 1, EMBED_DIM), jnp.float32),
        "ln1_b": jnp.zeros((DEPTH, 1, EMBED_DIM), jnp.float32),
        # stored pre-transposed (x @ W); qkv_bias=False in the module
        "wq": jnp.stack([nrm(bk(d, 0), (EMBED_DIM, EMBED_DIM), jnp.bfloat16)
                         for d in range(DEPTH)]),
        "wk": jnp.stack([nrm(bk(d, 1), (EMBED_DIM, EMBED_DIM), jnp.bfloat16)
                         for d in range(DEPTH)]),
        "wv": jnp.stack([nrm(bk(d, 2), (EMBED_DIM, EMBED_DIM), jnp.bfloat16)
                         for d in range(DEPTH)]),
        "wproj": jnp.stack([nrm(bk(d, 3), (EMBED_DIM, EMBED_DIM), jnp.bfloat16)
                            for d in range(DEPTH)]),
        "bproj": jnp.zeros((DEPTH, 1, EMBED_DIM), jnp.float32),
        "ln2_w": jnp.ones((DEPTH, 1, EMBED_DIM), jnp.float32),
        "ln2_b": jnp.zeros((DEPTH, 1, EMBED_DIM), jnp.float32),
        "wfc1": jnp.stack([nrm(bk(d, 4), (EMBED_DIM, MLP_HIDDEN), jnp.bfloat16)
                           for d in range(DEPTH)]),
        "bfc1": jnp.zeros((DEPTH, 1, MLP_HIDDEN), jnp.float32),
        "wfc2": jnp.stack([nrm(bk(d, 5), (MLP_HIDDEN, EMBED_DIM), jnp.bfloat16)
                           for d in range(DEPTH)]),
        "bfc2": jnp.zeros((DEPTH, 1, EMBED_DIM), jnp.float32),
    }
    return p


def forward(params, x, x_g_norm):
    bn = x.shape[0]
    patches = extract_patches(x, PATCH)                                 # (B, P, CPP)
    # prepend a zero row so one matmul yields all N_TOK rows (row 0 handled by base)
    patches = jnp.concatenate(
        [jnp.zeros((bn, 1, CPP), jnp.float32), patches], axis=1)        # (B, N, CPP)
    ele_rows = elevation_rows(params, x_g_norm, bn)                     # (B, 2, D)
    return fused_forward_pallas(patches, ele_rows, params)              # (B, D)


if __name__ == "__main__":
    key = jax.random.PRNGKey(0)
    kp, kx, kg = jax.random.split(key, 3)
    params = init_params(kp)
    x = jax.random.normal(kx, (B, IN_CHANS, IMG, IMG), jnp.float32)
    x_g_norm = jax.random.uniform(kg, (B, 1, 16, 16), dtype=jnp.float32)

    fwd = jax.jit(forward)
    out = jax.block_until_ready(fwd(params, x, x_g_norm))
    assert out.shape == (B, EMBED_DIM) and out.dtype == jnp.float32
    assert bool(jnp.all(jnp.isfinite(out)))
    print("KERNEL_OK")
</pallas_src>

<mosaic_0001>
module attributes {stable_mosaic.version = 11 : i64} {
  func.func @_fused_forward_kernel(%arg0: i32, %arg1: memref<1x5x768xf32, #tpu.memory_space<vmem>>, %arg2: memref<1x2x192xf32, #tpu.memory_space<vmem>>, %arg3: memref<768x192xbf16, #tpu.memory_space<vmem>>, %arg4: memref<5x192xf32, #tpu.memory_space<vmem>>, %arg5: memref<192x256xbf16, #tpu.memory_space<vmem>>, %arg6: memref<1x256xf32, #tpu.memory_space<vmem>>, %arg7: memref<192x256xbf16, #tpu.memory_space<vmem>>, %arg8: memref<1x256xf32, #tpu.memory_space<vmem>>, %arg9: memref<192x256xbf16, #tpu.memory_space<vmem>>, %arg10: memref<1x256xf32, #tpu.memory_space<vmem>>, %arg11: memref<256x192xbf16, #tpu.memory_space<vmem>>, %arg12: memref<1x192xf32, #tpu.memory_space<vmem>>, %arg13: memref<256x8xf32, #tpu.memory_space<vmem>>, %arg14: memref<8x256xf32, #tpu.memory_space<vmem>>, %arg15: memref<192x12xf32, #tpu.memory_space<vmem>>, %arg16: memref<12x192xf32, #tpu.memory_space<vmem>>, %arg17: memref<2x1x192xf32, #tpu.memory_space<vmem>>, %arg18: memref<2x1x192xf32, #tpu.memory_space<vmem>>, %arg19: memref<2x192x192xbf16, #tpu.memory_space<vmem>>, %arg20: memref<2x192x192xbf16, #tpu.memory_space<vmem>>, %arg21: memref<2x192x192xbf16, #tpu.memory_space<vmem>>, %arg22: memref<2x192x192xbf16, #tpu.memory_space<vmem>>, %arg23: memref<2x1x192xf32, #tpu.memory_space<vmem>>, %arg24: memref<2x1x192xf32, #tpu.memory_space<vmem>>, %arg25: memref<2x1x192xf32, #tpu.memory_space<vmem>>, %arg26: memref<2x192x768xbf16, #tpu.memory_space<vmem>>, %arg27: memref<2x1x768xf32, #tpu.memory_space<vmem>>, %arg28: memref<2x768x192xbf16, #tpu.memory_space<vmem>>, %arg29: memref<2x1x192xf32, #tpu.memory_space<vmem>>, %arg30: memref<1x192xf32, #tpu.memory_space<vmem>>, %arg31: memref<1x192xf32, #tpu.memory_space<vmem>>, %arg32: memref<1x1x192xf32, #tpu.memory_space<vmem>>) attributes {dimension_semantics = [#tpu.dimension_semantics<parallel>], iteration_bounds = array<i64: 2>, scalar_prefetch = 0 : i64, scratch_operands = 0 : i64, tpu.core_type = #tpu.core_type<tc>, window_params = [{transform_indices = @transform_0, window_bounds = array<i64: 1, 5, 768>}, {transform_indices = @transform_1, window_bounds = array<i64: 1, 2, 192>}, {pipeline_mode = #tpu.pipeline_mode<synchronous>, transform_indices = @transform_2, window_bounds = array<i64: 768, 192>}, {pipeline_mode = #tpu.pipeline_mode<synchronous>, transform_indices = @transform_3, window_bounds = array<i64: 5, 192>}, {pipeline_mode = #tpu.pipeline_mode<synchronous>, transform_indices = @transform_4, window_bounds = array<i64: 192, 256>}, {pipeline_mode = #tpu.pipeline_mode<synchronous>, transform_indices = @transform_5, window_bounds = array<i64: 1, 256>}, {pipeline_mode = #tpu.pipeline_mode<synchronous>, transform_indices = @transform_6, window_bounds = array<i64: 192, 256>}, {pipeline_mode = #tpu.pipeline_mode<synchronous>, transform_indices = @transform_7, window_bounds = array<i64: 1, 256>}, {pipeline_mode = #tpu.pipeline_mode<synchronous>, transform_indices = @transform_8, window_bounds = array<i64: 192, 256>}, {pipeline_mode = #tpu.pipeline_mode<synchronous>, transform_indices = @transform_9, window_bounds = array<i64: 1, 256>}, {pipeline_mode = #tpu.pipeline_mode<synchronous>, transform_indices = @transform_10, window_bounds = array<i64: 256, 192>}, {pipeline_mode = #tpu.pipeline_mode<synchronous>, transform_indices = @transform_11, window_bounds = array<i64: 1, 192>}, {pipeline_mode = #tpu.pipeline_mode<synchronous>, transform_indices = @transform_12, window_bounds = array<i64: 256, 8>}, {pipeline_mode = #tpu.pipeline_mode<synchronous>, transform_indices = @transform_13, window_bounds = array<i64: 8, 256>}, {pipeline_mode = #tpu.pipeline_mode<synchronous>, transform_indices = @transform_14, window_bounds = array<i64: 192, 12>}, {pipeline_mode = #tpu.pipeline_mode<synchronous>, transform_indices = @transform_15, window_bounds = array<i64: 12, 192>}, {pipeline_mode = #tpu.pipeline_mode<synchronous>, transform_indices = @transform_16, window_bounds = array<i64: 2, 1, 192>}, {pipeline_mode = #tpu.pipeline_mode<synchronous>, transform_indices = @transform_17, window_bounds = array<i64: 2, 1, 192>}, {pipeline_mode = #tpu.pipeline_mode<synchronous>, transform_indices = @transform_18, window_bounds = array<i64: 2, 192, 192>}, {pipeline_mode = #tpu.pipeline_mode<synchronous>, transform_indices = @transform_19, window_bounds = array<i64: 2, 192, 192>}, {pipeline_mode = #tpu.pipeline_mode<synchronous>, transform_indices = @transform_20, window_bounds = array<i64: 2, 192, 192>}, {pipeline_mode = #tpu.pipeline_mode<synchronous>, transform_indices = @transform_21, window_bounds = array<i64: 2, 192, 192>}, {pipeline_mode = #tpu.pipeline_mode<synchronous>, transform_indices = @transform_22, window_bounds = array<i64: 2, 1, 192>}, {pipeline_mode = #tpu.pipeline_mode<synchronous>, transform_indices = @transform_23, window_bounds = array<i64: 2, 1, 192>}, {pipeline_mode = #tpu.pipeline_mode<synchronous>, transform_indices = @transform_24, window_bounds = array<i64: 2, 1, 192>}, {pipeline_mode = #tpu.pipeline_mode<synchronous>, transform_indices = @transform_25, window_bounds = array<i64: 2, 192, 768>}, {pipeline_mode = #tpu.pipeline_mode<synchronous>, transform_indices = @transform_26, window_bounds = array<i64: 2, 1, 768>}, {pipeline_mode = #tpu.pipeline_mode<synchronous>, transform_indices = @transform_27, window_bounds = array<i64: 2, 768, 192>}, {pipeline_mode = #tpu.pipeline_mode<synchronous>, transform_indices = @transform_28, window_bounds = array<i64: 2, 1, 192>}, {pipeline_mode = #tpu.pipeline_mode<synchronous>, transform_indices = @transform_29, window_bounds = array<i64: 1, 192>}, {pipeline_mode = #tpu.pipeline_mode<synchronous>, transform_indices = @transform_30, window_bounds = array<i64: 1, 192>}, {transform_indices = @transform_31, window_bounds = array<i64: 1, 1, 192>}]} {
    %c0 = arith.constant 0 : index
    %c0_0 = arith.constant 0 : index
    %c0_1 = arith.constant 0 : index
    %0 = vector.load %arg1[%c0, %c0_0, %c0_1] : memref<1x5x768xf32, #tpu.memory_space<vmem>>, vector<1x5x768xf32>
    %1 = vector.shape_cast %0 : vector<1x5x768xf32> to vector<5x768xf32>
    %2 = arith.truncf %1 : vector<5x768xf32> to vector<5x768xbf16>
    %c0_2 = arith.constant 0 : index
    %c0_3 = arith.constant 0 : index
    %3 = vector.load %arg3[%c0_2, %c0_3] : memref<768x192xbf16, #tpu.memory_space<vmem>>, vector<768x192xbf16>
    %cst = arith.constant dense<0.000000e+00> : vector<5x192xf32>
    %4 = tpu.matmul %2, %3, %cst {dimension_numbers = #tpu.dot_dimension_numbers<[1], [0], [0], [1], [0, 0, 1, 1], [], []>} : vector<5x768xbf16>, vector<768x192xbf16>, vector<5x192xf32> -> vector<5x192xf32>
    %c0_4 = arith.constant 0 : index
    %c0_5 = arith.constant 0 : index
    %5 = vector.load %arg4[%c0_4, %c0_5] : memref<5x192xf32, #tpu.memory_space<vmem>>, vector<5x192xf32>
    %6 = arith.addf %4, %5 : vector<5x192xf32>
    %7 = arith.truncf %6 : vector<5x192xf32> to vector<5x192xbf16>
    %c0_6 = arith.constant 0 : index
    %c0_7 = arith.constant 0 : index
    %c0_8 = arith.constant 0 : index
    %8 = vector.load %arg2[%c0_6, %c0_7, %c0_8] : memref<1x2x192xf32, #tpu.memory_space<vmem>>, vector<1x2x192xf32>
    %9 = vector.shape_cast %8 : vector<1x2x192xf32> to vector<2x192xf32>
    %10 = arith.truncf %9 : vector<2x192xf32> to vector<2x192xbf16>
    %c0_9 = arith.constant 0 : index
    %c0_10 = arith.constant 0 : index
    %11 = vector.load %arg5[%c0_9, %c0_10] : memref<192x256xbf16, #tpu.memory_space<vmem>>, vector<192x256xbf16>
    %cst_11 = arith.constant dense<0.000000e+00> : vector<5x256xf32>
    %12 = tpu.matmul %7, %11, %cst_11 {dimension_numbers = #tpu.dot_dimension_numbers<[1], [0], [0], [1], [0, 0, 1, 1], [], []>} : vector<5x192xbf16>, vector<192x256xbf16>, vector<5x256xf32> -> vector<5x256xf32>
    %c0_12 = arith.constant 0 : index
    %c0_13 = arith.constant 0 : index
    %13 = vector.load %arg6[%c0_12, %c0_13] : memref<1x256xf32, #tpu.memory_space<vmem>>, vector<1x256xf32>
    %14 = vector.broadcast %13 : vector<1x256xf32> to vector<5x256xf32>
    %15 = arith.addf %12, %14 : vector<5x256xf32>
    %c0_14 = arith.constant 0 : index
    %c0_15 = arith.constant 0 : index
    %16 = vector.load %arg7[%c0_14, %c0_15] : memref<192x256xbf16, #tpu.memory_space<vmem>>, vector<192x256xbf16>
    %cst_16 = arith.constant dense<0.000000e+00> : vector<5x256xf32>
    %17 = tpu.matmul %7, %16, %cst_16 {dimension_numbers = #tpu.dot_dimension_numbers<[1], [0], [0], [1], [0, 0, 1, 1], [], []>} : vector<5x192xbf16>, vector<192x256xbf16>, vector<5x256xf32> -> vector<5x256xf32>
    %c0_17 = arith.constant 0 : index
    %c0_18 = arith.constant 0 : index
    %18 = vector.load %arg8[%c0_17, %c0_18] : memref<1x256xf32, #tpu.memory_space<vmem>>, vector<1x256xf32>
    %19 = vector.broadcast %18 : vector<1x256xf32> to vector<5x256xf32>
    %20 = arith.addf %17, %19 : vector<5x256xf32>
    %c0_19 = arith.constant 0 : index
    %c0_20 = arith.constant 0 : index
    %21 = vector.load %arg9[%c0_19, %c0_20] : memref<192x256xbf16, #tpu.memory_space<vmem>>, vector<192x256xbf16>
    %cst_21 = arith.constant dense<0.000000e+00> : vector<5x256xf32>
    %22 = tpu.matmul %7, %21, %cst_21 {dimension_numbers = #tpu.dot_dimension_numbers<[1], [0], [0], [1], [0, 0, 1, 1], [], []>} : vector<5x192xbf16>, vector<192x256xbf16>, vector<5x256xf32> -> vector<5x256xf32>
    %c0_22 = arith.constant 0 : index
    %c0_23 = arith.constant 0 : index
    %23 = vector.load %arg10[%c0_22, %c0_23] : memref<1x256xf32, #tpu.memory_space<vmem>>, vector<1x256xf32>
    %24 = vector.broadcast %23 : vector<1x256xf32> to vector<5x256xf32>
    %25 = arith.addf %22, %24 : vector<5x256xf32>
    %c0_24 = arith.constant 0 : index
    %c0_25 = arith.constant 0 : index
    %26 = vector.load %arg5[%c0_24, %c0_25] : memref<192x256xbf16, #tpu.memory_space<vmem>>, vector<192x256xbf16>
    %cst_26 = arith.constant dense<0.000000e+00> : vector<2x256xf32>
    %27 = tpu.matmul %10, %26, %cst_26 {dimension_numbers = #tpu.dot_dimension_numbers<[1], [0], [0], [1], [0, 0, 1, 1], [], []>} : vector<2x192xbf16>, vector<192x256xbf16>, vector<2x256xf32> -> vector<2x256xf32>
    %c0_27 = arith.constant 0 : index
    %c0_28 = arith.constant 0 : index
    %28 = vector.load %arg6[%c0_27, %c0_28] : memref<1x256xf32, #tpu.memory_space<vmem>>, vector<1x256xf32>
    %29 = vector.broadcast %28 : vector<1x256xf32> to vector<2x256xf32>
    %30 = arith.addf %27, %29 : vector<2x256xf32>
    %c0_29 = arith.constant 0 : index
    %c0_30 = arith.constant 0 : index
    %31 = vector.load %arg7[%c0_29, %c0_30] : memref<192x256xbf16, #tpu.memory_space<vmem>>, vector<192x256xbf16>
    %cst_31 = arith.constant dense<0.000000e+00> : vector<2x256xf32>
    %32 = tpu.matmul %10, %31, %cst_31 {dimension_numbers = #tpu.dot_dimension_numbers<[1], [0], [0], [1], [0, 0, 1, 1], [], []>} : vector<2x192xbf16>, vector<192x256xbf16>, vector<2x256xf32> -> vector<2x256xf32>
    %c0_32 = arith.constant 0 : index
    %c0_33 = arith.constant 0 : index
    %33 = vector.load %arg8[%c0_32, %c0_33] : memref<1x256xf32, #tpu.memory_space<vmem>>, vector<1x256xf32>
    %34 = vector.broadcast %33 : vector<1x256xf32> to vector<2x256xf32>
    %35 = arith.addf %32, %34 : vector<2x256xf32>
    %c0_34 = arith.constant 0 : index
    %c0_35 = arith.constant 0 : index
    %36 = vector.load %arg9[%c0_34, %c0_35] : memref<192x256xbf16, #tpu.memory_space<vmem>>, vector<192x256xbf16>
    %cst_36 = arith.constant dense<0.000000e+00> : vector<2x256xf32>
    %37 = tpu.matmul %10, %36, %cst_36 {dimension_numbers = #tpu.dot_dimension_numbers<[1], [0], [0], [1], [0, 0, 1, 1], [], []>} : vector<2x192xbf16>, vector<192x256xbf16>, vector<2x256xf32> -> vector<2x256xf32>
    %c0_37 = arith.constant 0 : index
    %c0_38 = arith.constant 0 : index
    %38 = vector.load %arg10[%c0_37, %c0_38] : memref<1x256xf32, #tpu.memory_space<vmem>>, vector<1x256xf32>
    %39 = vector.broadcast %38 : vector<1x256xf32> to vector<2x256xf32>
    %40 = arith.addf %37, %39 : vector<2x256xf32>
    %41 = vector.extract_strided_slice %30 {offsets = [0, 0], sizes = [1, 256], strides = [1, 1]} : vector<2x256xf32> to vector<1x256xf32>
    %42 = vector.extract_strided_slice %30 {offsets = [1, 0], sizes = [1, 256], strides = [1, 1]} : vector<2x256xf32> to vector<1x256xf32>
    %43 = vector.extract_strided_slice %35 {offsets = [0, 0], sizes = [1, 256], strides = [1, 1]} : vector<2x256xf32> to vector<1x256xf32>
    %44 = vector.extract_strided_slice %35 {offsets = [1, 0], sizes = [1, 256], strides = [1, 1]} : vector<2x256xf32> to vector<1x256xf32>
    %45 = vector.extract_strided_slice %40 {offsets = [0, 0], sizes = [1, 256], strides = [1, 1]} : vector<2x256xf32> to vector<1x256xf32>
    %46 = vector.extract_strided_slice %40 {offsets = [1, 0], sizes = [1, 256], strides = [1, 1]} : vector<2x256xf32> to vector<1x256xf32>
    %c0_39 = arith.constant 0 : index
    %c0_40 = arith.constant 0 : index
    %47 = vector.load %arg13[%c0_39, %c0_40] : memref<256x8xf32, #tpu.memory_space<vmem>>, vector<256x8xf32>
    %c0_41 = arith.constant 0 : index
    %c0_42 = arith.constant 0 : index
    %48 = vector.load %arg14[%c0_41, %c0_42] : memref<8x256xf32, #tpu.memory_space<vmem>>, vector<8x256xf32>
    %49 = arith.mulf %15, %20 : vector<5x256xf32>
    %cst_43 = arith.constant dense<0.000000e+00> : vector<5x8xf32>
    %50 = tpu.matmul %49, %47, %cst_43 {dimension_numbers = #tpu.dot_dimension_numbers<[1], [0], [0], [1], [0, 0, 1, 1], [], []>} : vector<5x256xf32>, vector<256x8xf32>, vector<5x8xf32> -> vector<5x8xf32>
    %cst_44 = arith.constant 0.176776692 : f32
    %51 = vector.broadcast %cst_44 : f32 to vector<5x8xf32>
    %52 = arith.mulf %50, %51 : vector<5x8xf32>
    %53 = vector.broadcast %43 : vector<1x256xf32> to vector<5x256xf32>
    %54 = arith.mulf %15, %53 : vector<5x256xf32>
    %cst_45 = arith.constant dense<0.000000e+00> : vector<5x8xf32>
    %55 = tpu.matmul %54, %47, %cst_45 {dimension_numbers = #tpu.dot_dimension_numbers<[1], [0], [0], [1], [0, 0, 1, 1], [], []>} : vector<5x256xf32>, vector<256x8xf32>, vector<5x8xf32> -> vector<5x8xf32>
    %cst_46 = arith.constant 0.176776692 : f32
    %56 = vector.broadcast %cst_46 : f32 to vector<5x8xf32>
    %57 = arith.mulf %55, %56 : vector<5x8xf32>
    %58 = vector.broadcast %44 : vector<1x256xf32> to vector<5x256xf32>
    %59 = arith.mulf %15, %58 : vector<5x256xf32>
    %cst_47 = arith.constant dense<0.000000e+00> : vector<5x8xf32>
    %60 = tpu.matmul %59, %47, %cst_47 {dimension_numbers = #tpu.dot_dimension_numbers<[1], [0], [0], [1], [0, 0, 1, 1], [], []>} : vector<5x256xf32>, vector<256x8xf32>, vector<5x8xf32> -> vector<5x8xf32>
    %cst_48 = arith.constant 0.176776692 : f32
    %61 = vector.broadcast %cst_48 : f32 to vector<5x8xf32>
    %62 = arith.mulf %60, %61 : vector<5x8xf32>
    %63 = vector.broadcast %41 : vector<1x256xf32> to vector<5x256xf32>
    %64 = arith.mulf %63, %20 : vector<5x256xf32>
    %cst_49 = arith.constant dense<0.000000e+00> : vector<5x8xf32>
    %65 = tpu.matmul %64, %47, %cst_49 {dimension_numbers = #tpu.dot_dimension_numbers<[1], [0], [0], [1], [0, 0, 1, 1], [], []>} : vector<5x256xf32>, vector<256x8xf32>, vector<5x8xf32> -> vector<5x8xf32>
    %cst_50 = arith.constant 0.176776692 : f32
    %66 = vector.broadcast %cst_50 : f32 to vector<5x8xf32>
    %67 = arith.mulf %65, %66 : vector<5x8xf32>
    %68 = arith.mulf %41, %43 : vector<1x256xf32>
    %cst_51 = arith.constant dense<0.000000e+00> : vector<1x8xf32>
    %69 = tpu.matmul %68, %47, %cst_51 {dimension_numbers = #tpu.dot_dimension_numbers<[1], [0], [0], [1], [0, 0, 1, 1], [], []>} : vector<1x256xf32>, vector<256x8xf32>, vector<1x8xf32> -> vector<1x8xf32>
    %cst_52 = arith.constant 0.176776692 : f32
    %70 = vector.broadcast %cst_52 : f32 to vector<1x8xf32>
    %71 = arith.mulf %69, %70 : vector<1x8xf32>
    %72 = arith.mulf %41, %44 : vector<1x256xf32>
    %cst_53 = arith.constant dense<0.000000e+00> : vector<1x8xf32>
    %73 = tpu.matmul %72, %47, %cst_53 {dimension_numbers = #tpu.dot_dimension_numbers<[1], [0], [0], [1], [0, 0, 1, 1], [], []>} : vector<1x256xf32>, vector<256x8xf32>, vector<1x8xf32> -> vector<1x8xf32>
    %cst_54 = arith.constant 0.176776692 : f32
    %74 = vector.broadcast %cst_54 : f32 to vector<1x8xf32>
    %75 = arith.mulf %73, %74 : vector<1x8xf32>
    %76 = vector.broadcast %42 : vector<1x256xf32> to vector<5x256xf32>
    %77 = arith.mulf %76, %20 : vector<5x256xf32>
    %cst_55 = arith.constant dense<0.000000e+00> : vector<5x8xf32>
    %78 = tpu.matmul %77, %47, %cst_55 {dimension_numbers = #tpu.dot_dimension_numbers<[1], [0], [0], [1], [0, 0, 1, 1], [], []>} : vector<5x256xf32>, vector<256x8xf32>, vector<5x8xf32> -> vector<5x8xf32>
    %cst_56 = arith.constant 0.176776692 : f32
    %79 = vector.broadcast %cst_56 : f32 to vector<5x8xf32>
    %80 = arith.mulf %78, %79 : vector<5x8xf32>
    %81 = arith.mulf %42, %43 : vector<1x256xf32>
    %cst_57 = arith.constant dense<0.000000e+00> : vector<1x8xf32>
    %82 = tpu.matmul %81, %47, %cst_57 {dimension_numbers = #tpu.dot_dimension_numbers<[1], [0], [0], [1], [0, 0, 1, 1], [], []>} : vector<1x256xf32>, vector<256x8xf32>, vector<1x8xf32> -> vector<1x8xf32>
    %cst_58 = arith.constant 0.176776692 : f32
    %83 = vector.broadcast %cst_58 : f32 to vector<1x8xf32>
    %84 = arith.mulf %82, %83 : vector<1x8xf32>
    %85 = arith.mulf %42, %44 : vector<1x256xf32>
    %cst_59 = arith.constant dense<0.000000e+00> : vector<1x8xf32>
    %86 = tpu.matmul %85, %47, %cst_59 {dimension_numbers = #tpu.dot_dimension_numbers<[1], [0], [0], [1], [0, 0, 1, 1], [], []>} : vector<1x256xf32>, vector<256x8xf32>, vector<1x8xf32> -> vector<1x8xf32>
    %cst_60 = arith.constant 0.176776692 : f32
    %87 = vector.broadcast %cst_60 : f32 to vector<1x8xf32>
    %88 = arith.mulf %86, %87 : vector<1x8xf32>
    %89 = arith.maximumf %57, %62 : vector<5x8xf32>
    %90 = arith.maximumf %52, %89 : vector<5x8xf32>
    %91 = arith.subf %52, %90 : vector<5x8xf32>
    %92 = math.exp %91 : vector<5x8xf32>
    %93 = arith.subf %57, %90 : vector<5x8xf32>
    %94 = math.exp %93 : vector<5x8xf32>
    %95 = arith.subf %62, %90 : vector<5x8xf32>
    %96 = math.exp %95 : vector<5x8xf32>
    %97 = arith.addf %92, %94 : vector<5x8xf32>
    %98 = arith.addf %97, %96 : vector<5x8xf32>
    %99 = tpu.reciprocal %98 {approx = true} : vector<5x8xf32> -> vector<5x8xf32>
    %100 = arith.mulf %92, %99 : vector<5x8xf32>
    %101 = arith.mulf %94, %99 : vector<5x8xf32>
    %102 = arith.mulf %96, %99 : vector<5x8xf32>
    %103 = arith.maximumf %71, %75 : vector<1x8xf32>
    %104 = vector.broadcast %103 : vector<1x8xf32> to vector<5x8xf32>
    %105 = arith.maximumf %67, %104 : vector<5x8xf32>
    %106 = arith.subf %67, %105 : vector<5x8xf32>
    %107 = math.exp %106 : vector<5x8xf32>
    %108 = vector.broadcast %71 : vector<1x8xf32> to vector<5x8xf32>
    %109 = arith.subf %108, %105 : vector<5x8xf32>
    %110 = math.exp %109 : vector<5x8xf32>
    %111 = vector.broadcast %75 : vector<1x8xf32> to vector<5x8xf32>
    %112 = arith.subf %111, %105 : vector<5x8xf32>
    %113 = math.exp %112 : vector<5x8xf32>
    %114 = arith.addf %107, %110 : vector<5x8xf32>
    %115 = arith.addf %114, %113 : vector<5x8xf32>
    %116 = tpu.reciprocal %115 {approx = true} : vector<5x8xf32> -> vector<5x8xf32>
    %117 = arith.mulf %107, %116 : vector<5x8xf32>
    %118 = arith.mulf %110, %116 : vector<5x8xf32>
    %119 = arith.mulf %113, %116 : vector<5x8xf32>
    %120 = arith.maximumf %84, %88 : vector<1x8xf32>
    %121 = vector.broadcast %120 : vector<1x8xf32> to vector<5x8xf32>
    %122 = arith.maximumf %80, %121 : vector<5x8xf32>
    %123 = arith.subf %80, %122 : vector<5x8xf32>
    %124 = math.exp %123 : vector<5x8xf32>
    %125 = vector.broadcast %84 : vector<1x8xf32> to vector<5x8xf32>
    %126 = arith.subf %125, %122 : vector<5x8xf32>
    %127 = math.exp %126 : vector<5x8xf32>
    %128 = vector.broadcast %88 : vector<1x8xf32> to vector<5x8xf32>
    %129 = arith.subf %128, %122 : vector<5x8xf32>
    %130 = math.exp %129 : vector<5x8xf32>
    %131 = arith.addf %124, %127 : vector<5x8xf32>
    %132 = arith.addf %131, %130 : vector<5x8xf32>
    %133 = tpu.reciprocal %132 {approx = true} : vector<5x8xf32> -> vector<5x8xf32>
    %134 = arith.mulf %124, %133 : vector<5x8xf32>
    %135 = arith.mulf %127, %133 : vector<5x8xf32>
    %136 = arith.mulf %130, %133 : vector<5x8xf32>
    %137 = arith.addf %100, %117 : vector<5x8xf32>
    %138 = arith.addf %137, %134 : vector<5x8xf32>
    %139 = arith.addf %101, %118 : vector<5x8xf32>
    %140 = arith.addf %139, %135 : vector<5x8xf32>
    %141 = arith.addf %102, %119 : vector<5x8xf32>
    %142 = arith.addf %141, %136 : vector<5x8xf32>
    %cst_61 = arith.constant dense<0.000000e+00> : vector<5x256xf32>
    %143 = tpu.matmul %138, %48, %cst_61 {dimension_numbers = #tpu.dot_dimension_numbers<[1], [0], [0], [1], [0, 0, 1, 1], [], []>} : vector<5x8xf32>, vector<8x256xf32>, vector<5x256xf32> -> vector<5x256xf32>
    %144 = arith.mulf %143, %25 : vector<5x256xf32>
    %cst_62 = arith.constant dense<0.000000e+00> : vector<5x256xf32>
    %145 = tpu.matmul %140, %48, %cst_62 {dimension_numbers = #tpu.dot_dimension_numbers<[1], [0], [0], [1], [0, 0, 1, 1], [], []>} : vector<5x8xf32>, vector<8x256xf32>, vector<5x256xf32> -> vector<5x256xf32>
    %146 = vector.broadcast %45 : vector<1x256xf32> to vector<5x256xf32>
    %147 = arith.mulf %145, %146 : vector<5x256xf32>
    %148 = arith.addf %144, %147 : vector<5x256xf32>
    %cst_63 = arith.constant dense<0.000000e+00> : vector<5x256xf32>
    %149 = tpu.matmul %142, %48, %cst_63 {dimension_numbers = #tpu.dot_dimension_numbers<[1], [0], [0], [1], [0, 0, 1, 1], [], []>} : vector<5x8xf32>, vector<8x256xf32>, vector<5x256xf32> -> vector<5x256xf32>
    %150 = vector.broadcast %46 : vector<1x256xf32> to vector<5x256xf32>
    %151 = arith.mulf %149, %150 : vector<5x256xf32>
    %152 = arith.addf %148, %151 : vector<5x256xf32>
    %153 = arith.truncf %152 : vector<5x256xf32> to vector<5x256xbf16>
    %c0_64 = arith.constant 0 : index
    %c0_65 = arith.constant 0 : index
    %154 = vector.load %arg11[%c0_64, %c0_65] : memref<256x192xbf16, #tpu.memory_space<vmem>>, vector<256x192xbf16>
    %cst_66 = arith.constant dense<0.000000e+00> : vector<5x192xf32>
    %155 = tpu.matmul %153, %154, %cst_66 {dimension_numbers = #tpu.dot_dimension_numbers<[1], [0], [0], [1], [0, 0, 1, 1], [], []>} : vector<5x256xbf16>, vector<256x192xbf16>, vector<5x192xf32> -> vector<5x192xf32>
    %c0_67 = arith.constant 0 : index
    %c0_68 = arith.constant 0 : index
    %156 = vector.load %arg12[%c0_67, %c0_68] : memref<1x192xf32, #tpu.memory_space<vmem>>, vector<1x192xf32>
    %cst_69 = arith.constant 3.000000e+00 : f32
    %157 = vector.broadcast %cst_69 : f32 to vector<1x192xf32>
    %158 = arith.mulf %157, %156 : vector<1x192xf32>
    %159 = vector.broadcast %158 : vector<1x192xf32> to vector<5x192xf32>
    %160 = arith.addf %155, %159 : vector<5x192xf32>
    %c0_70 = arith.constant 0 : index
    %c0_71 = arith.constant 0 : index
    %161 = vector.load %arg15[%c0_70, %c0_71] : memref<192x12xf32, #tpu.memory_space<vmem>>, vector<192x12xf32>
    %c0_72 = arith.constant 0 : index
    %c0_73 = arith.constant 0 : index
    %162 = vector.load %arg16[%c0_72, %c0_73] : memref<12x192xf32, #tpu.memory_space<vmem>>, vector<12x192xf32>
    %c0_74 = arith.constant 0 : index
    %c0_75 = arith.constant 0 : index
    %c0_76 = arith.constant 0 : index
    %163 = vector.load %arg17[%c0_74, %c0_75, %c0_76] : memref<2x1x192xf32, #tpu.memory_space<vmem>>, vector<1x1x192xf32>
    %164 = vector.shape_cast %163 : vector<1x1x192xf32> to vector<1x192xf32>
    %c0_77 = arith.constant 0 : index
    %c0_78 = arith.constant 0 : index
    %c0_79 = arith.constant 0 : index
    %165 = vector.load %arg18[%c0_77, %c0_78, %c0_79] : memref<2x1x192xf32, #tpu.memory_space<vmem>>, vector<1x1x192xf32>
    %166 = vector.shape_cast %165 : vector<1x1x192xf32> to vector<1x192xf32>
    %cst_80 = arith.constant dense<0.000000e+00> : vector<5xf32>
    %167 = vector.multi_reduction <add>, %160, %cst_80 [1] : vector<5x192xf32> to vector<5xf32>
    %168 = vector.shape_cast %167 : vector<5xf32> to vector<5x1xf32>
    %cst_81 = arith.constant 1.920000e+02 : f32
    %169 = vector.broadcast %cst_81 : f32 to vector<5x1xf32>
    %170 = arith.divf %168, %169 : vector<5x1xf32>
    %171 = vector.broadcast %170 : vector<5x1xf32> to vector<5x192xf32>
    %172 = arith.subf %160, %171 : vector<5x192xf32>
    %173 = arith.mulf %172, %172 : vector<5x192xf32>
    %cst_82 = arith.constant dense<0.000000e+00> : vector<5xf32>
    %174 = vector.multi_reduction <add>, %173, %cst_82 [1] : vector<5x192xf32> to vector<5xf32>
    %175 = vector.shape_cast %174 : vector<5xf32> to vector<5x1xf32>
    %cst_83 = arith.constant 1.920000e+02 : f32
    %176 = vector.broadcast %cst_83 : f32 to vector<5x1xf32>
    %177 = arith.divf %175, %176 : vector<5x1xf32>
    %178 = vector.broadcast %170 : vector<5x1xf32> to vector<5x192xf32>
    %179 = arith.subf %160, %178 : vector<5x192xf32>
    %cst_84 = arith.constant 9.99999974E-6 : f32
    %180 = vector.broadcast %cst_84 : f32 to vector<5x1xf32>
    %181 = arith.addf %177, %180 : vector<5x1xf32>
    %182 = math.rsqrt %181 : vector<5x1xf32>
    %183 = vector.broadcast %182 : vector<5x1xf32> to vector<5x192xf32>
    %184 = arith.mulf %179, %183 : vector<5x192xf32>
    %185 = vector.broadcast %164 : vector<1x192xf32> to vector<5x192xf32>
    %186 = arith.mulf %184, %185 : vector<5x192xf32>
    %187 = vector.broadcast %166 : vector<1x192xf32> to vector<5x192xf32>
    %188 = arith.addf %186, %187 : vector<5x192xf32>
    %189 = arith.truncf %188 : vector<5x192xf32> to vector<5x192xbf16>
    %c0_85 = arith.constant 0 : index
    %c0_86 = arith.constant 0 : index
    %c0_87 = arith.constant 0 : index
    %190 = vector.load %arg19[%c0_85, %c0_86, %c0_87] : memref<2x192x192xbf16, #tpu.memory_space<vmem>>, vector<1x192x192xbf16>
    %191 = vector.shape_cast %190 : vector<1x192x192xbf16> to vector<192x192xbf16>
    %cst_88 = arith.constant dense<0.000000e+00> : vector<5x192xf32>
    %192 = tpu.matmul %189, %191, %cst_88 {dimension_numbers = #tpu.dot_dimension_numbers<[1], [0], [0], [1], [0, 0, 1, 1], [], []>} : vector<5x192xbf16>, vector<192x192xbf16>, vector<5x192xf32> -> vector<5x192xf32>
    %c0_89 = arith.constant 0 : index
    %c0_90 = arith.constant 0 : index
    %c0_91 = arith.constant 0 : index
    %193 = vector.load %arg20[%c0_89, %c0_90, %c0_91] : memref<2x192x192xbf16, #tpu.memory_space<vmem>>, vector<1x192x192xbf16>
    %194 = vector.shape_cast %193 : vector<1x192x192xbf16> to vector<192x192xbf16>
    %cst_92 = arith.constant dense<0.000000e+00> : vector<5x192xf32>
    %195 = tpu.matmul %189, %194, %cst_92 {dimension_numbers = #tpu.dot_dimension_numbers<[1], [0], [0], [1], [0, 0, 1, 1], [], []>} : vector<5x192xbf16>, vector<192x192xbf16>, vector<5x192xf32> -> vector<5x192xf32>
    %c0_93 = arith.constant 0 : index
    %c0_94 = arith.constant 0 : index
    %c0_95 = arith.constant 0 : index
    %196 = vector.load %arg21[%c0_93, %c0_94, %c0_95] : memref<2x192x192xbf16, #tpu.memory_space<vmem>>, vector<1x192x192xbf16>
    %197 = vector.shape_cast %196 : vector<1x192x192xbf16> to vector<192x192xbf16>
    %cst_96 = arith.constant dense<0.000000e+00> : vector<5x192xf32>
    %198 = tpu.matmul %189, %197, %cst_96 {dimension_numbers = #tpu.dot_dimension_numbers<[1], [0], [0], [1], [0, 0, 1, 1], [], []>} : vector<5x192xbf16>, vector<192x192xbf16>, vector<5x192xf32> -> vector<5x192xf32>
    %199 = vector.extract_strided_slice %195 {offsets = [0, 0], sizes = [1, 192], strides = [1, 1]} : vector<5x192xf32> to vector<1x192xf32>
    %200 = vector.broadcast %199 : vector<1x192xf32> to vector<5x192xf32>
    %201 = arith.mulf %192, %200 : vector<5x192xf32>
    %cst_97 = arith.constant dense<0.000000e+00> : vector<5x12xf32>
    %202 = tpu.matmul %201, %161, %cst_97 {dimension_numbers = #tpu.dot_dimension_numbers<[1], [0], [0], [1], [0, 0, 1, 1], [], []>} : vector<5x192xf32>, vector<192x12xf32>, vector<5x12xf32> -> vector<5x12xf32>
    %cst_98 = arith.constant 2.500000e-01 : f32
    %203 = vector.broadcast %cst_98 : f32 to vector<5x12xf32>
    %204 = arith.mulf %202, %203 : vector<5x12xf32>
    %205 = vector.extract_strided_slice %195 {offsets = [1, 0], sizes = [1, 192], strides = [1, 1]} : vector<5x192xf32> to vector<1x192xf32>
    %206 = vector.broadcast %205 : vector<1x192xf32> to vector<5x192xf32>
    %207 = arith.mulf %192, %206 : vector<5x192xf32>
    %cst_99 = arith.constant dense<0.000000e+00> : vector<5x12xf32>
    %208 = tpu.matmul %207, %161, %cst_99 {dimension_numbers = #tpu.dot_dimension_numbers<[1], [0], [0], [1], [0, 0, 1, 1], [], []>} : vector<5x192xf32>, vector<192x12xf32>, vector<5x12xf32> -> vector<5x12xf32>
    %cst_100 = arith.constant 2.500000e-01 : f32
    %209 = vector.broadcast %cst_100 : f32 to vector<5x12xf32>
    %210 = arith.mulf %208, %209 : vector<5x12xf32>
    %211 = vector.extract_strided_slice %195 {offsets = [2, 0], sizes = [1, 192], strides = [1, 1]} : vector<5x192xf32> to vector<1x192xf32>
    %212 = vector.broadcast %211 : vector<1x192xf32> to vector<5x192xf32>
    %213 = arith.mulf %192, %212 : vector<5x192xf32>
    %cst_101 = arith.constant dense<0.000000e+00> : vector<5x12xf32>
    %214 = tpu.matmul %213, %161, %cst_101 {dimension_numbers = #tpu.dot_dimension_numbers<[1], [0], [0], [1], [0, 0, 1, 1], [], []>} : vector<5x192xf32>, vector<192x12xf32>, vector<5x12xf32> -> vector<5x12xf32>
    %cst_102 = arith.constant 2.500000e-01 : f32
    %215 = vector.broadcast %cst_102 : f32 to vector<5x12xf32>
    %216 = arith.mulf %214, %215 : vector<5x12xf32>
    %217 = vector.extract_strided_slice %195 {offsets = [3, 0], sizes = [1, 192], strides = [1, 1]} : vector<5x192xf32> to vector<1x192xf32>
    %218 = vector.broadcast %217 : vector<1x192xf32> to vector<5x192xf32>
    %219 = arith.mulf %192, %218 : vector<5x192xf32>
    %cst_103 = arith.constant dense<0.000000e+00> : vector<5x12xf32>
    %220 = tpu.matmul %219, %161, %cst_103 {dimension_numbers = #tpu.dot_dimension_numbers<[1], [0], [0], [1], [0, 0, 1, 1], [], []>} : vector<5x192xf32>, vector<192x12xf32>, vector<5x12xf32> -> vector<5x12xf32>
    %cst_104 = arith.constant 2.500000e-01 : f32
    %221 = vector.broadcast %cst_104 : f32 to vector<5x12xf32>
    %222 = arith.mulf %220, %221 : vector<5x12xf32>
    %223 = vector.extract_strided_slice %195 {offsets = [4, 0], sizes = [1, 192], strides = [1, 1]} : vector<5x192xf32> to vector<1x192xf32>
    %224 = vector.broadcast %223 : vector<1x192xf32> to vector<5x192xf32>
    %225 = arith.mulf %192, %224 : vector<5x192xf32>
    %cst_105 = arith.constant dense<0.000000e+00> : vector<5x12xf32>
    %226 = tpu.matmul %225, %161, %cst_105 {dimension_numbers = #tpu.dot_dimension_numbers<[1], [0], [0], [1], [0, 0, 1, 1], [], []>} : vector<5x192xf32>, vector<192x12xf32>, vector<5x12xf32> -> vector<5x12xf32>
    %cst_106 = arith.constant 2.500000e-01 : f32
    %227 = vector.broadcast %cst_106 : f32 to vector<5x12xf32>
    %228 = arith.mulf %226, %227 : vector<5x12xf32>
    %229 = arith.maximumf %204, %210 : vector<5x12xf32>
    %230 = arith.maximumf %229, %216 : vector<5x12xf32>
    %231 = arith.maximumf %230, %222 : vector<5x12xf32>
    %232 = arith.maximumf %231, %228 : vector<5x12xf32>
    %233 = arith.subf %204, %232 : vector<5x12xf32>
    %234 = math.exp %233 : vector<5x12xf32>
    %235 = arith.subf %210, %232 : vector<5x12xf32>
    %236 = math.exp %235 : vector<5x12xf32>
    %237 = arith.subf %216, %232 : vector<5x12xf32>
    %238 = math.exp %237 : vector<5x12xf32>
    %239 = arith.subf %222, %232 : vector<5x12xf32>
    %240 = math.exp %239 : vector<5x12xf32>
    %241 = arith.subf %228, %232 : vector<5x12xf32>
    %242 = math.exp %241 : vector<5x12xf32>
    %243 = arith.addf %234, %236 : vector<5x12xf32>
    %244 = arith.addf %243, %238 : vector<5x12xf32>
    %245 = arith.addf %244, %240 : vector<5x12xf32>
    %246 = arith.addf %245, %242 : vector<5x12xf32>
    %247 = tpu.reciprocal %246 {approx = true} : vector<5x12xf32> -> vector<5x12xf32>
    %cst_107 = arith.constant 0.000000e+00 : f32
    %248 = vector.broadcast %cst_107 : f32 to vector<5x192xf32>
    %249 = arith.mulf %234, %247 : vector<5x12xf32>
    %cst_108 = arith.constant dense<0.000000e+00> : vector<5x192xf32>
    %250 = tpu.matmul %249, %162, %cst_108 {dimension_numbers = #tpu.dot_dimension_numbers<[1], [0], [0], [1], [0, 0, 1, 1], [], []>} : vector<5x12xf32>, vector<12x192xf32>, vector<5x192xf32> -> vector<5x192xf32>
    %251 = vector.extract_strided_slice %198 {offsets = [0, 0], sizes = [1, 192], strides = [1, 1]} : vector<5x192xf32> to vector<1x192xf32>
    %252 = vector.broadcast %251 : vector<1x192xf32> to vector<5x192xf32>
    %253 = arith.mulf %250, %252 : vector<5x192xf32>
    %254 = arith.addf %248, %253 : vector<5x192xf32>
    %255 = arith.mulf %236, %247 : vector<5x12xf32>
    %cst_109 = arith.constant dense<0.000000e+00> : vector<5x192xf32>
    %256 = tpu.matmul %255, %162, %cst_109 {dimension_numbers = #tpu.dot_dimension_numbers<[1], [0], [0], [1], [0, 0, 1, 1], [], []>} : vector<5x12xf32>, vector<12x192xf32>, vector<5x192xf32> -> vector<5x192xf32>
    %257 = vector.extract_strided_slice %198 {offsets = [1, 0], sizes = [1, 192], strides = [1, 1]} : vector<5x192xf32> to vector<1x192xf32>
    %258 = vector.broadcast %257 : vector<1x192xf32> to vector<5x192xf32>
    %259 = arith.mulf %256, %258 : vector<5x192xf32>
    %260 = arith.addf %254, %259 : vector<5x192xf32>
    %261 = arith.mulf %238, %247 : vector<5x12xf32>
    %cst_110 = arith.constant dense<0.000000e+00> : vector<5x192xf32>
    %262 = tpu.matmul %261, %162, %cst_110 {dimension_numbers = #tpu.dot_dimension_numbers<[1], [0], [0], [1], [0, 0, 1, 1], [], []>} : vector<5x12xf32>, vector<12x192xf32>, vector<5x192xf32> -> vector<5x192xf32>
    %263 = vector.extract_strided_slice %198 {offsets = [2, 0], sizes = [1, 192], strides = [1, 1]} : vector<5x192xf32> to vector<1x192xf32>
    %264 = vector.broadcast %263 : vector<1x192xf32> to vector<5x192xf32>
    %265 = arith.mulf %262, %264 : vector<5x192xf32>
    %266 = arith.addf %260, %265 : vector<5x192xf32>
    %267 = arith.mulf %240, %247 : vector<5x12xf32>
    %cst_111 = arith.constant dense<0.000000e+00> : vector<5x192xf32>
    %268 = tpu.matmul %267, %162, %cst_111 {dimension_numbers = #tpu.dot_dimension_numbers<[1], [0], [0], [1], [0, 0, 1, 1], [], []>} : vector<5x12xf32>, vector<12x192xf32>, vector<5x192xf32> -> vector<5x192xf32>
    %269 = vector.extract_strided_slice %198 {offsets = [3, 0], sizes = [1, 192], strides = [1, 1]} : vector<5x192xf32> to vector<1x192xf32>
    %270 = vector.broadcast %269 : vector<1x192xf32> to vector<5x192xf32>
    %271 = arith.mulf %268, %270 : vector<5x192xf32>
    %272 = arith.addf %266, %271 : vector<5x192xf32>
    %273 = arith.mulf %242, %247 : vector<5x12xf32>
    %cst_112 = arith.constant dense<0.000000e+00> : vector<5x192xf32>
    %274 = tpu.matmul %273, %162, %cst_112 {dimension_numbers = #tpu.dot_dimension_numbers<[1], [0], [0], [1], [0, 0, 1, 1], [], []>} : vector<5x12xf32>, vector<12x192xf32>, vector<5x192xf32> -> vector<5x192xf32>
    %275 = vector.extract_strided_slice %198 {offsets = [4, 0], sizes = [1, 192], strides = [1, 1]} : vector<5x192xf32> to vector<1x192xf32>
    %276 = vector.broadcast %275 : vector<1x192xf32> to vector<5x192xf32>
    %277 = arith.mulf %274, %276 : vector<5x192xf32>
    %278 = arith.addf %272, %277 : vector<5x192xf32>
    %279 = arith.truncf %278 : vector<5x192xf32> to vector<5x192xbf16>
    %c0_113 = arith.constant 0 : index
    %c0_114 = arith.constant 0 : index
    %c0_115 = arith.constant 0 : index
    %280 = vector.load %arg22[%c0_113, %c0_114, %c0_115] : memref<2x192x192xbf16, #tpu.memory_space<vmem>>, vector<1x192x192xbf16>
    %281 = vector.shape_cast %280 : vector<1x192x192xbf16> to vector<192x192xbf16>
    %cst_116 = arith.constant dense<0.000000e+00> : vector<5x192xf32>
    %282 = tpu.matmul %279, %281, %cst_116 {dimension_numbers = #tpu.dot_dimension_numbers<[1], [0], [0], [1], [0, 0, 1, 1], [], []>} : vector<5x192xbf16>, vector<192x192xbf16>, vector<5x192xf32> -> vector<5x192xf32>
    %c0_117 = arith.constant 0 : index
    %c0_118 = arith.constant 0 : index
    %c0_119 = arith.constant 0 : index
    %283 = vector.load %arg23[%c0_117, %c0_118, %c0_119] : memref<2x1x192xf32, #tpu.memory_space<vmem>>, vector<1x1x192xf32>
    %284 = vector.shape_cast %283 : vector<1x1x192xf32> to vector<1x192xf32>
    %285 = vector.broadcast %284 : vector<1x192xf32> to vector<5x192xf32>
    %286 = arith.addf %282, %285 : vector<5x192xf32>
    %287 = arith.addf %160, %286 : vector<5x192xf32>
    %c0_120 = arith.constant 0 : index
    %c0_121 = arith.constant 0 : index
    %c0_122 = arith.constant 0 : index
    %288 = vector.load %arg24[%c0_120, %c0_121, %c0_122] : memref<2x1x192xf32, #tpu.memory_space<vmem>>, vector<1x1x192xf32>
    %289 = vector.shape_cast %288 : vector<1x1x192xf32> to vector<1x192xf32>
    %c0_123 = arith.constant 0 : index
    %c0_124 = arith.constant 0 : index
    %c0_125 = arith.constant 0 : index
    %290 = vector.load %arg25[%c0_123, %c0_124, %c0_125] : memref<2x1x192xf32, #tpu.memory_space<vmem>>, vector<1x1x192xf32>
    %291 = vector.shape_cast %290 : vector<1x1x192xf32> to vector<1x192xf32>
    %cst_126 = arith.constant dense<0.000000e+00> : vector<5xf32>
    %292 = vector.multi_reduction <add>, %287, %cst_126 [1] : vector<5x192xf32> to vector<5xf32>
    %293 = vector.shape_cast %292 : vector<5xf32> to vector<5x1xf32>
    %cst_127 = arith.constant 1.920000e+02 : f32
    %294 = vector.broadcast %cst_127 : f32 to vector<5x1xf32>
    %295 = arith.divf %293, %294 : vector<5x1xf32>
    %296 = vector.broadcast %295 : vector<5x1xf32> to vector<5x192xf32>
    %297 = arith.subf %287, %296 : vector<5x192xf32>
    %298 = arith.mulf %297, %297 : vector<5x192xf32>
    %cst_128 = arith.constant dense<0.000000e+00> : vector<5xf32>
    %299 = vector.multi_reduction <add>, %298, %cst_128 [1] : vector<5x192xf32> to vector<5xf32>
    %300 = vector.shape_cast %299 : vector<5xf32> to vector<5x1xf32>
    %cst_129 = arith.constant 1.920000e+02 : f32
    %301 = vector.broadcast %cst_129 : f32 to vector<5x1xf32>
    %302 = arith.divf %300, %301 : vector<5x1xf32>
    %303 = vector.broadcast %295 : vector<5x1xf32> to vector<5x192xf32>
    %304 = arith.subf %287, %303 : vector<5x192xf32>
    %cst_130 = arith.constant 9.99999974E-6 : f32
    %305 = vector.broadcast %cst_130 : f32 to vector<5x1xf32>
    %306 = arith.addf %302, %305 : vector<5x1xf32>
    %307 = math.rsqrt %306 : vector<5x1xf32>
    %308 = vector.broadcast %307 : vector<5x1xf32> to vector<5x192xf32>
    %309 = arith.mulf %304, %308 : vector<5x192xf32>
    %310 = vector.broadcast %289 : vector<1x192xf32> to vector<5x192xf32>
    %311 = arith.mulf %309, %310 : vector<5x192xf32>
    %312 = vector.broadcast %291 : vector<1x192xf32> to vector<5x192xf32>
    %313 = arith.addf %311, %312 : vector<5x192xf32>
    %314 = arith.truncf %313 : vector<5x192xf32> to vector<5x192xbf16>
    %c0_131 = arith.constant 0 : index
    %c0_132 = arith.constant 0 : index
    %c0_133 = arith.constant 0 : index
    %315 = vector.load %arg26[%c0_131, %c0_132, %c0_133] : memref<2x192x768xbf16, #tpu.memory_space<vmem>>, vector<1x192x768xbf16>
    %316 = vector.shape_cast %315 : vector<1x192x768xbf16> to vector<192x768xbf16>
    %cst_134 = arith.constant dense<0.000000e+00> : vector<5x768xf32>
    %317 = tpu.matmul %314, %316, %cst_134 {dimension_numbers = #tpu.dot_dimension_numbers<[1], [0], [0], [1], [0, 0, 1, 1], [], []>} : vector<5x192xbf16>, vector<192x768xbf16>, vector<5x768xf32> -> vector<5x768xf32>
    %c0_135 = arith.constant 0 : index
    %c0_136 = arith.constant 0 : index
    %c0_137 = arith.constant 0 : index
    %318 = vector.load %arg27[%c0_135, %c0_136, %c0_137] : memref<2x1x768xf32, #tpu.memory_space<vmem>>, vector<1x1x768xf32>
    %319 = vector.shape_cast %318 : vector<1x1x768xf32> to vector<1x768xf32>
    %320 = vector.broadcast %319 : vector<1x768xf32> to vector<5x768xf32>
    %321 = arith.addf %317, %320 : vector<5x768xf32>
    %cst_138 = arith.constant 5.000000e-01 : f32
    %322 = vector.broadcast %cst_138 : f32 to vector<5x768xf32>
    %323 = arith.mulf %322, %321 : vector<5x768xf32>
    %cst_139 = arith.constant 0.707106769 : f32
    %324 = vector.broadcast %cst_139 : f32 to vector<5x768xf32>
    %325 = arith.mulf %321, %324 : vector<5x768xf32>
    %326 = math.erf %325 : vector<5x768xf32>
    %cst_140 = arith.constant 1.000000e+00 : f32
    %327 = vector.broadcast %cst_140 : f32 to vector<5x768xf32>
    %328 = arith.addf %327, %326 : vector<5x768xf32>
    %329 = arith.mulf %323, %328 : vector<5x768xf32>
    %330 = arith.truncf %329 : vector<5x768xf32> to vector<5x768xbf16>
    %c0_141 = arith.constant 0 : index
    %c0_142 = arith.constant 0 : index
    %c0_143 = arith.constant 0 : index
    %331 = vector.load %arg28[%c0_141, %c0_142, %c0_143] : memref<2x768x192xbf16, #tpu.memory_space<vmem>>, vector<1x768x192xbf16>
    %332 = vector.shape_cast %331 : vector<1x768x192xbf16> to vector<768x192xbf16>
    %cst_144 = arith.constant dense<0.000000e+00> : vector<5x192xf32>
    %333 = tpu.matmul %330, %332, %cst_144 {dimension_numbers = #tpu.dot_dimension_numbers<[1], [0], [0], [1], [0, 0, 1, 1], [], []>} : vector<5x768xbf16>, vector<768x192xbf16>, vector<5x192xf32> -> vector<5x192xf32>
    %c0_145 = arith.constant 0 : index
    %c0_146 = arith.constant 0 : index
    %c0_147 = arith.constant 0 : index
    %334 = vector.load %arg29[%c0_145, %c0_146, %c0_147] : memref<2x1x192xf32, #tpu.memory_space<vmem>>, vector<1x1x192xf32>
    %335 = vector.shape_cast %334 : vector<1x1x192xf32> to vector<1x192xf32>
    %336 = vector.broadcast %335 : vector<1x192xf32> to vector<5x192xf32>
    %337 = arith.addf %333, %336 : vector<5x192xf32>
    %338 = arith.addf %287, %337 : vector<5x192xf32>
    %c1 = arith.constant 1 : index
    %c0_148 = arith.constant 0 : index
    %c0_149 = arith.constant 0 : index
    %339 = vector.load %arg17[%c1, %c0_148, %c0_149] : memref<2x1x192xf32, #tpu.memory_space<vmem>>, vector<1x1x192xf32>
    %340 = vector.shape_cast %339 : vector<1x1x192xf32> to vector<1x192xf32>
    %c1_150 = arith.constant 1 : index
    %c0_151 = arith.constant 0 : index
    %c0_152 = arith.constant 0 : index
    %341 = vector.load %arg18[%c1_150, %c0_151, %c0_152] : memref<2x1x192xf32, #tpu.memory_space<vmem>>, vector<1x1x192xf32>
    %342 = vector.shape_cast %341 : vector<1x1x192xf32> to vector<1x192xf32>
    %cst_153 = arith.constant dense<0.000000e+00> : vector<5xf32>
    %343 = vector.multi_reduction <add>, %338, %cst_153 [1] : vector<5x192xf32> to vector<5xf32>
    %344 = vector.shape_cast %343 : vector<5xf32> to vector<5x1xf32>
    %cst_154 = arith.constant 1.920000e+02 : f32
    %345 = vector.broadcast %cst_154 : f32 to vector<5x1xf32>
    %346 = arith.divf %344, %345 : vector<5x1xf32>
    %347 = vector.broadcast %346 : vector<5x1xf32> to vector<5x192xf32>
    %348 = arith.subf %338, %347 : vector<5x192xf32>
    %349 = arith.mulf %348, %348 : vector<5x192xf32>
    %cst_155 = arith.constant dense<0.000000e+00> : vector<5xf32>
    %350 = vector.multi_reduction <add>, %349, %cst_155 [1] : vector<5x192xf32> to vector<5xf32>
    %351 = vector.shape_cast %350 : vector<5xf32> to vector<5x1xf32>
    %cst_156 = arith.constant 1.920000e+02 : f32
    %352 = vector.broadcast %cst_156 : f32 to vector<5x1xf32>
    %353 = arith.divf %351, %352 : vector<5x1xf32>
    %354 = vector.broadcast %346 : vector<5x1xf32> to vector<5x192xf32>
    %355 = arith.subf %338, %354 : vector<5x192xf32>
    %cst_157 = arith.constant 9.99999974E-6 : f32
    %356 = vector.broadcast %cst_157 : f32 to vector<5x1xf32>
    %357 = arith.addf %353, %356 : vector<5x1xf32>
    %358 = math.rsqrt %357 : vector<5x1xf32>
    %359 = vector.broadcast %358 : vector<5x1xf32> to vector<5x192xf32>
    %360 = arith.mulf %355, %359 : vector<5x192xf32>
    %361 = vector.broadcast %340 : vector<1x192xf32> to vector<5x192xf32>
    %362 = arith.mulf %360, %361 : vector<5x192xf32>
    %363 = vector.broadcast %342 : vector<1x192xf32> to vector<5x192xf32>
    %364 = arith.addf %362, %363 : vector<5x192xf32>
    %365 = arith.truncf %364 : vector<5x192xf32> to vector<5x192xbf16>
    %c1_158 = arith.constant 1 : index
    %c0_159 = arith.constant 0 : index
    %c0_160 = arith.constant 0 : index
    %366 = vector.load %arg19[%c1_158, %c0_159, %c0_160] : memref<2x192x192xbf16, #tpu.memory_space<vmem>>, vector<1x192x192xbf16>
    %367 = vector.shape_cast %366 : vector<1x192x192xbf16> to vector<192x192xbf16>
    %cst_161 = arith.constant dense<0.000000e+00> : vector<5x192xf32>
    %368 = tpu.matmul %365, %367, %cst_161 {dimension_numbers = #tpu.dot_dimension_numbers<[1], [0], [0], [1], [0, 0, 1, 1], [], []>} : vector<5x192xbf16>, vector<192x192xbf16>, vector<5x192xf32> -> vector<5x192xf32>
    %c1_162 = arith.constant 1 : index
    %c0_163 = arith.constant 0 : index
    %c0_164 = arith.constant 0 : index
    %369 = vector.load %arg20[%c1_162, %c0_163, %c0_164] : memref<2x192x192xbf16, #tpu.memory_space<vmem>>, vector<1x192x192xbf16>
    %370 = vector.shape_cast %369 : vector<1x192x192xbf16> to vector<192x192xbf16>
    %cst_165 = arith.constant dense<0.000000e+00> : vector<5x192xf32>
    %371 = tpu.matmul %365, %370, %cst_165 {dimension_numbers = #tpu.dot_dimension_numbers<[1], [0], [0], [1], [0, 0, 1, 1], [], []>} : vector<5x192xbf16>, vector<192x192xbf16>, vector<5x192xf32> -> vector<5x192xf32>
    %c1_166 = arith.constant 1 : index
    %c0_167 = arith.constant 0 : index
    %c0_168 = arith.constant 0 : index
    %372 = vector.load %arg21[%c1_166, %c0_167, %c0_168] : memref<2x192x192xbf16, #tpu.memory_space<vmem>>, vector<1x192x192xbf16>
    %373 = vector.shape_cast %372 : vector<1x192x192xbf16> to vector<192x192xbf16>
    %cst_169 = arith.constant dense<0.000000e+00> : vector<5x192xf32>
    %374 = tpu.matmul %365, %373, %cst_169 {dimension_numbers = #tpu.dot_dimension_numbers<[1], [0], [0], [1], [0, 0, 1, 1], [], []>} : vector<5x192xbf16>, vector<192x192xbf16>, vector<5x192xf32> -> vector<5x192xf32>
    %375 = vector.extract_strided_slice %371 {offsets = [0, 0], sizes = [1, 192], strides = [1, 1]} : vector<5x192xf32> to vector<1x192xf32>
    %376 = vector.broadcast %375 : vector<1x192xf32> to vector<5x192xf32>
    %377 = arith.mulf %368, %376 : vector<5x192xf32>
    %cst_170 = arith.constant dense<0.000000e+00> : vector<5x12xf32>
    %378 = tpu.matmul %377, %161, %cst_170 {dimension_numbers = #tpu.dot_dimension_numbers<[1], [0], [0], [1], [0, 0, 1, 1], [], []>} : vector<5x192xf32>, vector<192x12xf32>, vector<5x12xf32> -> vector<5x12xf32>
    %cst_171 = arith.constant 2.500000e-01 : f32
    %379 = vector.broadcast %cst_171 : f32 to vector<5x12xf32>
    %380 = arith.mulf %378, %379 : vector<5x12xf32>
    %381 = vector.extract_strided_slice %371 {offsets = [1, 0], sizes = [1, 192], strides = [1, 1]} : vector<5x192xf32> to vector<1x192xf32>
    %382 = vector.broadcast %381 : vector<1x192xf32> to vector<5x192xf32>
    %383 = arith.mulf %368, %382 : vector<5x192xf32>
    %cst_172 = arith.constant dense<0.000000e+00> : vector<5x12xf32>
    %384 = tpu.matmul %383, %161, %cst_172 {dimension_numbers = #tpu.dot_dimension_numbers<[1], [0], [0], [1], [0, 0, 1, 1], [], []>} : vector<5x192xf32>, vector<192x12xf32>, vector<5x12xf32> -> vector<5x12xf32>
    %cst_173 = arith.constant 2.500000e-01 : f32
    %385 = vector.broadcast %cst_173 : f32 to vector<5x12xf32>
    %386 = arith.mulf %384, %385 : vector<5x12xf32>
    %387 = vector.extract_strided_slice %371 {offsets = [2, 0], sizes = [1, 192], strides = [1, 1]} : vector<5x192xf32> to vector<1x192xf32>
    %388 = vector.broadcast %387 : vector<1x192xf32> to vector<5x192xf32>
    %389 = arith.mulf %368, %388 : vector<5x192xf32>
    %cst_174 = arith.constant dense<0.000000e+00> : vector<5x12xf32>
    %390 = tpu.matmul %389, %161, %cst_174 {dimension_numbers = #tpu.dot_dimension_numbers<[1], [0], [0], [1], [0, 0, 1, 1], [], []>} : vector<5x192xf32>, vector<192x12xf32>, vector<5x12xf32> -> vector<5x12xf32>
    %cst_175 = arith.constant 2.500000e-01 : f32
    %391 = vector.broadcast %cst_175 : f32 to vector<5x12xf32>
    %392 = arith.mulf %390, %391 : vector<5x12xf32>
    %393 = vector.extract_strided_slice %371 {offsets = [3, 0], sizes = [1, 192], strides = [1, 1]} : vector<5x192xf32> to vector<1x192xf32>
    %394 = vector.broadcast %393 : vector<1x192xf32> to vector<5x192xf32>
    %395 = arith.mulf %368, %394 : vector<5x192xf32>
    %cst_176 = arith.constant dense<0.000000e+00> : vector<5x12xf32>
    %396 = tpu.matmul %395, %161, %cst_176 {dimension_numbers = #tpu.dot_dimension_numbers<[1], [0], [0], [1], [0, 0, 1, 1], [], []>} : vector<5x192xf32>, vector<192x12xf32>, vector<5x12xf32> -> vector<5x12xf32>
    %cst_177 = arith.constant 2.500000e-01 : f32
    %397 = vector.broadcast %cst_177 : f32 to vector<5x12xf32>
    %398 = arith.mulf %396, %397 : vector<5x12xf32>
    %399 = vector.extract_strided_slice %371 {offsets = [4, 0], sizes = [1, 192], strides = [1, 1]} : vector<5x192xf32> to vector<1x192xf32>
    %400 = vector.broadcast %399 : vector<1x192xf32> to vector<5x192xf32>
    %401 = arith.mulf %368, %400 : vector<5x192xf32>
    %cst_178 = arith.constant dense<0.000000e+00> : vector<5x12xf32>
    %402 = tpu.matmul %401, %161, %cst_178 {dimension_numbers = #tpu.dot_dimension_numbers<[1], [0], [0], [1], [0, 0, 1, 1], [], []>} : vector<5x192xf32>, vector<192x12xf32>, vector<5x12xf32> -> vector<5x12xf32>
    %cst_179 = arith.constant 2.500000e-01 : f32
    %403 = vector.broadcast %cst_179 : f32 to vector<5x12xf32>
    %404 = arith.mulf %402, %403 : vector<5x12xf32>
    %405 = arith.maximumf %380, %386 : vector<5x12xf32>
    %406 = arith.maximumf %405, %392 : vector<5x12xf32>
    %407 = arith.maximumf %406, %398 : vector<5x12xf32>
    %408 = arith.maximumf %407, %404 : vector<5x12xf32>
    %409 = arith.subf %380, %408 : vector<5x12xf32>
    %410 = math.exp %409 : vector<5x12xf32>
    %411 = arith.subf %386, %408 : vector<5x12xf32>
    %412 = math.exp %411 : vector<5x12xf32>
    %413 = arith.subf %392, %408 : vector<5x12xf32>
    %414 = math.exp %413 : vector<5x12xf32>
    %415 = arith.subf %398, %408 : vector<5x12xf32>
    %416 = math.exp %415 : vector<5x12xf32>
    %417 = arith.subf %404, %408 : vector<5x12xf32>
    %418 = math.exp %417 : vector<5x12xf32>
    %419 = arith.addf %410, %412 : vector<5x12xf32>
    %420 = arith.addf %419, %414 : vector<5x12xf32>
    %421 = arith.addf %420, %416 : vector<5x12xf32>
    %422 = arith.addf %421, %418 : vector<5x12xf32>
    %423 = tpu.reciprocal %422 {approx = true} : vector<5x12xf32> -> vector<5x12xf32>
    %cst_180 = arith.constant 0.000000e+00 : f32
    %424 = vector.broadcast %cst_180 : f32 to vector<5x192xf32>
    %425 = arith.mulf %410, %423 : vector<5x12xf32>
    %cst_181 = arith.constant dense<0.000000e+00> : vector<5x192xf32>
    %426 = tpu.matmul %425, %162, %cst_181 {dimension_numbers = #tpu.dot_dimension_numbers<[1], [0], [0], [1], [0, 0, 1, 1], [], []>} : vector<5x12xf32>, vector<12x192xf32>, vector<5x192xf32> -> vector<5x192xf32>
    %427 = vector.extract_strided_slice %374 {offsets = [0, 0], sizes = [1, 192], strides = [1, 1]} : vector<5x192xf32> to vector<1x192xf32>
    %428 = vector.broadcast %427 : vector<1x192xf32> to vector<5x192xf32>
    %429 = arith.mulf %426, %428 : vector<5x192xf32>
    %430 = arith.addf %424, %429 : vector<5x192xf32>
    %431 = arith.mulf %412, %423 : vector<5x12xf32>
    %cst_182 = arith.constant dense<0.000000e+00> : vector<5x192xf32>
    %432 = tpu.matmul %431, %162, %cst_182 {dimension_numbers = #tpu.dot_dimension_numbers<[1], [0], [0], [1], [0, 0, 1, 1], [], []>} : vector<5x12xf32>, vector<12x192xf32>, vector<5x192xf32> -> vector<5x192xf32>
    %433 = vector.extract_strided_slice %374 {offsets = [1, 0], sizes = [1, 192], strides = [1, 1]} : vector<5x192xf32> to vector<1x192xf32>
    %434 = vector.broadcast %433 : vector<1x192xf32> to vector<5x192xf32>
    %435 = arith.mulf %432, %434 : vector<5x192xf32>
    %436 = arith.addf %430, %435 : vector<5x192xf32>
    %437 = arith.mulf %414, %423 : vector<5x12xf32>
    %cst_183 = arith.constant dense<0.000000e+00> : vector<5x192xf32>
    %438 = tpu.matmul %437, %162, %cst_183 {dimension_numbers = #tpu.dot_dimension_numbers<[1], [0], [0], [1], [0, 0, 1, 1], [], []>} : vector<5x12xf32>, vector<12x192xf32>, vector<5x192xf32> -> vector<5x192xf32>
    %439 = vector.extract_strided_slice %374 {offsets = [2, 0], sizes = [1, 192], strides = [1, 1]} : vector<5x192xf32> to vector<1x192xf32>
    %440 = vector.broadcast %439 : vector<1x192xf32> to vector<5x192xf32>
    %441 = arith.mulf %438, %440 : vector<5x192xf32>
    %442 = arith.addf %436, %441 : vector<5x192xf32>
    %443 = arith.mulf %416, %423 : vector<5x12xf32>
    %cst_184 = arith.constant dense<0.000000e+00> : vector<5x192xf32>
    %444 = tpu.matmul %443, %162, %cst_184 {dimension_numbers = #tpu.dot_dimension_numbers<[1], [0], [0], [1], [0, 0, 1, 1], [], []>} : vector<5x12xf32>, vector<12x192xf32>, vector<5x192xf32> -> vector<5x192xf32>
    %445 = vector.extract_strided_slice %374 {offsets = [3, 0], sizes = [1, 192], strides = [1, 1]} : vector<5x192xf32> to vector<1x192xf32>
    %446 = vector.broadcast %445 : vector<1x192xf32> to vector<5x192xf32>
    %447 = arith.mulf %444, %446 : vector<5x192xf32>
    %448 = arith.addf %442, %447 : vector<5x192xf32>
    %449 = arith.mulf %418, %423 : vector<5x12xf32>
    %cst_185 = arith.constant dense<0.000000e+00> : vector<5x192xf32>
    %450 = tpu.matmul %449, %162, %cst_185 {dimension_numbers = #tpu.dot_dimension_numbers<[1], [0], [0], [1], [0, 0, 1, 1], [], []>} : vector<5x12xf32>, vector<12x192xf32>, vector<5x192xf32> -> vector<5x192xf32>
    %451 = vector.extract_strided_slice %374 {offsets = [4, 0], sizes = [1, 192], strides = [1, 1]} : vector<5x192xf32> to vector<1x192xf32>
    %452 = vector.broadcast %451 : vector<1x192xf32> to vector<5x192xf32>
    %453 = arith.mulf %450, %452 : vector<5x192xf32>
    %454 = arith.addf %448, %453 : vector<5x192xf32>
    %455 = arith.truncf %454 : vector<5x192xf32> to vector<5x192xbf16>
    %c1_186 = arith.constant 1 : index
    %c0_187 = arith.constant 0 : index
    %c0_188 = arith.constant 0 : index
    %456 = vector.load %arg22[%c1_186, %c0_187, %c0_188] : memref<2x192x192xbf16, #tpu.memory_space<vmem>>, vector<1x192x192xbf16>
    %457 = vector.shape_cast %456 : vector<1x192x192xbf16> to vector<192x192xbf16>
    %cst_189 = arith.constant dense<0.000000e+00> : vector<5x192xf32>
    %458 = tpu.matmul %455, %457, %cst_189 {dimension_numbers = #tpu.dot_dimension_numbers<[1], [0], [0], [1], [0, 0, 1, 1], [], []>} : vector<5x192xbf16>, vector<192x192xbf16>, vector<5x192xf32> -> vector<5x192xf32>
    %c1_190 = arith.constant 1 : index
    %c0_191 = arith.constant 0 : index
    %c0_192 = arith.constant 0 : index
    %459 = vector.load %arg23[%c1_190, %c0_191, %c0_192] : memref<2x1x192xf32, #tpu.memory_space<vmem>>, vector<1x1x192xf32>
    %460 = vector.shape_cast %459 : vector<1x1x192xf32> to vector<1x192xf32>
    %461 = vector.broadcast %460 : vector<1x192xf32> to vector<5x192xf32>
    %462 = arith.addf %458, %461 : vector<5x192xf32>
    %463 = arith.addf %338, %462 : vector<5x192xf32>
    %c1_193 = arith.constant 1 : index
    %c0_194 = arith.constant 0 : index
    %c0_195 = arith.constant 0 : index
    %464 = vector.load %arg24[%c1_193, %c0_194, %c0_195] : memref<2x1x192xf32, #tpu.memory_space<vmem>>, vector<1x1x192xf32>
    %465 = vector.shape_cast %464 : vector<1x1x192xf32> to vector<1x192xf32>
    %c1_196 = arith.constant 1 : index
    %c0_197 = arith.constant 0 : index
    %c0_198 = arith.constant 0 : index
    %466 = vector.load %arg25[%c1_196, %c0_197, %c0_198] : memref<2x1x192xf32, #tpu.memory_space<vmem>>, vector<1x1x192xf32>
    %467 = vector.shape_cast %466 : vector<1x1x192xf32> to vector<1x192xf32>
    %cst_199 = arith.constant dense<0.000000e+00> : vector<5xf32>
    %468 = vector.multi_reduction <add>, %463, %cst_199 [1] : vector<5x192xf32> to vector<5xf32>
    %469 = vector.shape_cast %468 : vector<5xf32> to vector<5x1xf32>
    %cst_200 = arith.constant 1.920000e+02 : f32
    %470 = vector.broadcast %cst_200 : f32 to vector<5x1xf32>
    %471 = arith.divf %469, %470 : vector<5x1xf32>
    %472 = vector.broadcast %471 : vector<5x1xf32> to vector<5x192xf32>
    %473 = arith.subf %463, %472 : vector<5x192xf32>
    %474 = arith.mulf %473, %473 : vector<5x192xf32>
    %cst_201 = arith.constant dense<0.000000e+00> : vector<5xf32>
    %475 = vector.multi_reduction <add>, %474, %cst_201 [1] : vector<5x192xf32> to vector<5xf32>
    %476 = vector.shape_cast %475 : vector<5xf32> to vector<5x1xf32>
    %cst_202 = arith.constant 1.920000e+02 : f32
    %477 = vector.broadcast %cst_202 : f32 to vector<5x1xf32>
    %478 = arith.divf %476, %477 : vector<5x1xf32>
    %479 = vector.broadcast %471 : vector<5x1xf32> to vector<5x192xf32>
    %480 = arith.subf %463, %479 : vector<5x192xf32>
    %cst_203 = arith.constant 9.99999974E-6 : f32
    %481 = vector.broadcast %cst_203 : f32 to vector<5x1xf32>
    %482 = arith.addf %478, %481 : vector<5x1xf32>
    %483 = math.rsqrt %482 : vector<5x1xf32>
    %484 = vector.broadcast %483 : vector<5x1xf32> to vector<5x192xf32>
    %485 = arith.mulf %480, %484 : vector<5x192xf32>
    %486 = vector.broadcast %465 : vector<1x192xf32> to vector<5x192xf32>
    %487 = arith.mulf %485, %486 : vector<5x192xf32>
    %488 = vector.broadcast %467 : vector<1x192xf32> to vector<5x192xf32>
    %489 = arith.addf %487, %488 : vector<5x192xf32>
    %490 = arith.truncf %489 : vector<5x192xf32> to vector<5x192xbf16>
    %c1_204 = arith.constant 1 : index
    %c0_205 = arith.constant 0 : index
    %c0_206 = arith.constant 0 : index
    %491 = vector.load %arg26[%c1_204, %c0_205, %c0_206] : memref<2x192x768xbf16, #tpu.memory_space<vmem>>, vector<1x192x768xbf16>
    %492 = vector.shape_cast %491 : vector<1x192x768xbf16> to vector<192x768xbf16>
    %cst_207 = arith.constant dense<0.000000e+00> : vector<5x768xf32>
    %493 = tpu.matmul %490, %492, %cst_207 {dimension_numbers = #tpu.dot_dimension_numbers<[1], [0], [0], [1], [0, 0, 1, 1], [], []>} : vector<5x192xbf16>, vector<192x768xbf16>, vector<5x768xf32> -> vector<5x768xf32>
    %c1_208 = arith.constant 1 : index
    %c0_209 = arith.constant 0 : index
    %c0_210 = arith.constant 0 : index
    %494 = vector.load %arg27[%c1_208, %c0_209, %c0_210] : memref<2x1x768xf32, #tpu.memory_space<vmem>>, vector<1x1x768xf32>
    %495 = vector.shape_cast %494 : vector<1x1x768xf32> to vector<1x768xf32>
    %496 = vector.broadcast %495 : vector<1x768xf32> to vector<5x768xf32>
    %497 = arith.addf %493, %496 : vector<5x768xf32>
    %cst_211 = arith.constant 5.000000e-01 : f32
    %498 = vector.broadcast %cst_211 : f32 to vector<5x768xf32>
    %499 = arith.mulf %498, %497 : vector<5x768xf32>
    %cst_212 = arith.constant 0.707106769 : f32
    %500 = vector.broadcast %cst_212 : f32 to vector<5x768xf32>
    %501 = arith.mulf %497, %500 : vector<5x768xf32>
    %502 = math.erf %501 : vector<5x768xf32>
    %cst_213 = arith.constant 1.000000e+00 : f32
    %503 = vector.broadcast %cst_213 : f32 to vector<5x768xf32>
    %504 = arith.addf %503, %502 : vector<5x768xf32>
    %505 = arith.mulf %499, %504 : vector<5x768xf32>
    %506 = arith.truncf %505 : vector<5x768xf32> to vector<5x768xbf16>
    %c1_214 = arith.constant 1 : index
    %c0_215 = arith.constant 0 : index
    %c0_216 = arith.constant 0 : index
    %507 = vector.load %arg28[%c1_214, %c0_215, %c0_216] : memref<2x768x192xbf16, #tpu.memory_space<vmem>>, vector<1x768x192xbf16>
    %508 = vector.shape_cast %507 : vector<1x768x192xbf16> to vector<768x192xbf16>
    %cst_217 = arith.constant dense<0.000000e+00> : vector<5x192xf32>
    %509 = tpu.matmul %506, %508, %cst_217 {dimension_numbers = #tpu.dot_dimension_numbers<[1], [0], [0], [1], [0, 0, 1, 1], [], []>} : vector<5x768xbf16>, vector<768x192xbf16>, vector<5x192xf32> -> vector<5x192xf32>
    %c1_218 = arith.constant 1 : index
    %c0_219 = arith.constant 0 : index
    %c0_220 = arith.constant 0 : index
    %510 = vector.load %arg29[%c1_218, %c0_219, %c0_220] : memref<2x1x192xf32, #tpu.memory_space<vmem>>, vector<1x1x192xf32>
    %511 = vector.shape_cast %510 : vector<1x1x192xf32> to vector<1x192xf32>
    %512 = vector.broadcast %511 : vector<1x192xf32> to vector<5x192xf32>
    %513 = arith.addf %509, %512 : vector<5x192xf32>
    %514 = arith.addf %463, %513 : vector<5x192xf32>
    %c0_221 = arith.constant 0 : index
    %c0_222 = arith.constant 0 : index
    %515 = vector.load %arg30[%c0_221, %c0_222] : memref<1x192xf32, #tpu.memory_space<vmem>>, vector<1x192xf32>
    %c0_223 = arith.constant 0 : index
    %c0_224 = arith.constant 0 : index
    %516 = vector.load %arg31[%c0_223, %c0_224] : memref<1x192xf32, #tpu.memory_space<vmem>>, vector<1x192xf32>
    %cst_225 = arith.constant dense<0.000000e+00> : vector<5xf32>
    %517 = vector.multi_reduction <add>, %514, %cst_225 [1] : vector<5x192xf32> to vector<5xf32>
    %518 = vector.shape_cast %517 : vector<5xf32> to vector<5x1xf32>
    %cst_226 = arith.constant 1.920000e+02 : f32
    %519 = vector.broadcast %cst_226 : f32 to vector<5x1xf32>
    %520 = arith.divf %518, %519 : vector<5x1xf32>
    %521 = vector.broadcast %520 : vector<5x1xf32> to vector<5x192xf32>
    %522 = arith.subf %514, %521 : vector<5x192xf32>
    %523 = arith.mulf %522, %522 : vector<5x192xf32>
    %cst_227 = arith.constant dense<0.000000e+00> : vector<5xf32>
    %524 = vector.multi_reduction <add>, %523, %cst_227 [1] : vector<5x192xf32> to vector<5xf32>
    %525 = vector.shape_cast %524 : vector<5xf32> to vector<5x1xf32>
    %cst_228 = arith.constant 1.920000e+02 : f32
    %526 = vector.broadcast %cst_228 : f32 to vector<5x1xf32>
    %527 = arith.divf %525, %526 : vector<5x1xf32>
    %528 = vector.broadcast %520 : vector<5x1xf32> to vector<5x192xf32>
    %529 = arith.subf %514, %528 : vector<5x192xf32>
    %cst_229 = arith.constant 9.99999974E-6 : f32
    %530 = vector.broadcast %cst_229 : f32 to vector<5x1xf32>
    %531 = arith.addf %527, %530 : vector<5x1xf32>
    %532 = math.rsqrt %531 : vector<5x1xf32>
    %533 = vector.broadcast %532 : vector<5x1xf32> to vector<5x192xf32>
    %534 = arith.mulf %529, %533 : vector<5x192xf32>
    %535 = vector.broadcast %515 : vector<1x192xf32> to vector<5x192xf32>
    %536 = arith.mulf %534, %535 : vector<5x192xf32>
    %537 = vector.broadcast %516 : vector<1x192xf32> to vector<5x192xf32>
    %538 = arith.addf %536, %537 : vector<5x192xf32>
    %539 = vector.extract_strided_slice %538 {offsets = [0, 0], sizes = [1, 192], strides = [1, 1]} : vector<5x192xf32> to vector<1x192xf32>
    %c0_230 = arith.constant 0 : index
    %c0_231 = arith.constant 0 : index
    %c0_232 = arith.constant 0 : index
    %540 = vector.load %arg32[%c0_230, %c0_231, %c0_232] : memref<1x1x192xf32, #tpu.memory_space<vmem>>, vector<1x1x192xf32>
    %541 = vector.shape_cast %540 : vector<1x1x192xf32> to vector<1x192xf32>
    %542 = vector.shape_cast %539 : vector<1x192xf32> to vector<1x1x192xf32>
    tpu.vector_store %arg32[%c0_230, %c0_231, %c0_232], %542 {strides = array<i32>} : memref<1x1x192xf32, #tpu.memory_space<vmem>>, vector<1x1x192xf32>,
    return
  }
  func.func @transform_0(%arg0: i32) -> (i32, i32, i32) {
    %c0_i32 = arith.constant 0 : i32
    %c0_i32_0 = arith.constant 0 : i32
    %c0_i32_1 = arith.constant 0 : i32
    return %arg0, %c0_i32, %c0_i32_0 : i32, i32, i32
  }
  func.func @transform_1(%arg0: i32) -> (i32, i32, i32) {
    %c0_i32 = arith.constant 0 : i32
    %c0_i32_0 = arith.constant 0 : i32
    %c0_i32_1 = arith.constant 0 : i32
    return %arg0, %c0_i32, %c0_i32_0 : i32, i32, i32
  }
  func.func @transform_2(%arg0: i32) -> (i32, i32) {
    %c0_i32 = arith.constant 0 : i32
    %c0_i32_0 = arith.constant 0 : i32
    %c0_i32_1 = arith.constant 0 : i32
    return %c0_i32, %c0_i32_0 : i32, i32
  }
  func.func @transform_3(%arg0: i32) -> (i32, i32) {
    %c0_i32 = arith.constant 0 : i32
    %c0_i32_0 = arith.constant 0 : i32
    %c0_i32_1 = arith.constant 0 : i32
    return %c0_i32, %c0_i32_0 : i32, i32
  }
  func.func @transform_4(%arg0: i32) -> (i32, i32) {
    %c0_i32 = arith.constant 0 : i32
    %c0_i32_0 = arith.constant 0 : i32
    %c0_i32_1 = arith.constant 0 : i32
    return %c0_i32, %c0_i32_0 : i32, i32
  }
  func.func @transform_5(%arg0: i32) -> (i32, i32) {
    %c0_i32 = arith.constant 0 : i32
    %c0_i32_0 = arith.constant 0 : i32
    %c0_i32_1 = arith.constant 0 : i32
    return %c0_i32, %c0_i32_0 : i32, i32
  }
  func.func @transform_6(%arg0: i32) -> (i32, i32) {
    %c0_i32 = arith.constant 0 : i32
    %c0_i32_0 = arith.constant 0 : i32
    %c0_i32_1 = arith.constant 0 : i32
    return %c0_i32, %c0_i32_0 : i32, i32
  }
  func.func @transform_7(%arg0: i32) -> (i32, i32) {
    %c0_i32 = arith.constant 0 : i32
    %c0_i32_0 = arith.constant 0 : i32
    %c0_i32_1 = arith.constant 0 : i32
    return %c0_i32, %c0_i32_0 : i32, i32
  }
  func.func @transform_8(%arg0: i32) -> (i32, i32) {
    %c0_i32 = arith.constant 0 : i32
    %c0_i32_0 = arith.constant 0 : i32
    %c0_i32_1 = arith.constant 0 : i32
    return %c0_i32, %c0_i32_0 : i32, i32
  }
  func.func @transform_9(%arg0: i32) -> (i32, i32) {
    %c0_i32 = arith.constant 0 : i32
    %c0_i32_0 = arith.constant 0 : i32
    %c0_i32_1 = arith.constant 0 : i32
    return %c0_i32, %c0_i32_0 : i32, i32
  }
  func.func @transform_10(%arg0: i32) -> (i32, i32) {
    %c0_i32 = arith.constant 0 : i32
    %c0_i32_0 = arith.constant 0 : i32
    %c0_i32_1 = arith.constant 0 : i32
    return %c0_i32, %c0_i32_0 : i32, i32
  }
  func.func @transform_11(%arg0: i32) -> (i32, i32) {
    %c0_i32 = arith.constant 0 : i32
    %c0_i32_0 = arith.constant 0 : i32
    %c0_i32_1 = arith.constant 0 : i32
    return %c0_i32, %c0_i32_0 : i32, i32
  }
  func.func @transform_12(%arg0: i32) -> (i32, i32) {
    %c0_i32 = arith.constant 0 : i32
    %c0_i32_0 = arith.constant 0 : i32
    %c0_i32_1 = arith.constant 0 : i32
    return %c0_i32, %c0_i32_0 : i32, i32
  }
  func.func @transform_13(%arg0: i32) -> (i32, i32) {
    %c0_i32 = arith.constant 0 : i32
    %c0_i32_0 = arith.constant 0 : i32
    %c0_i32_1 = arith.constant 0 : i32
    return %c0_i32, %c0_i32_0 : i32, i32
  }
  func.func @transform_14(%arg0: i32) -> (i32, i32) {
    %c0_i32 = arith.constant 0 : i32
    %c0_i32_0 = arith.constant 0 : i32
    %c0_i32_1 = arith.constant 0 : i32
    return %c0_i32, %c0_i32_0 : i32, i32
  }
  func.func @transform_15(%arg0: i32) -> (i32, i32) {
    %c0_i32 = arith.constant 0 : i32
    %c0_i32_0 = arith.constant 0 : i32
    %c0_i32_1 = arith.constant 0 : i32
    return %c0_i32, %c0_i32_0 : i32, i32
  }
  func.func @transform_16(%arg0: i32) -> (i32, i32, i32) {
    %c0_i32 = arith.constant 0 : i32
    %c0_i32_0 = arith.constant 0 : i32
    %c0_i32_1 = arith.constant 0 : i32
    %c0_i32_2 = arith.constant 0 : i32
    return %c0_i32, %c0_i32_0, %c0_i32_1 : i32, i32, i32
  }
  func.func @transform_17(%arg0: i32) -> (i32, i32, i32) {
    %c0_i32 = arith.constant 0 : i32
    %c0_i32_0 = arith.constant 0 : i32
    %c0_i32_1 = arith.constant 0 : i32
    %c0_i32_2 = arith.constant 0 : i32
    return %c0_i32, %c0_i32_0, %c0_i32_1 : i32, i32, i32
  }
  func.func @transform_18(%arg0: i32) -> (i32, i32, i32) {
    %c0_i32 = arith.constant 0 : i32
    %c0_i32_0 = arith.constant 0 : i32
    %c0_i32_1 = arith.constant 0 : i32
    %c0_i32_2 = arith.constant 0 : i32
    return %c0_i32, %c0_i32_0, %c0_i32_1 : i32, i32, i32
  }
  func.func @transform_19(%arg0: i32) -> (i32, i32, i32) {
    %c0_i32 = arith.constant 0 : i32
    %c0_i32_0 = arith.constant 0 : i32
    %c0_i32_1 = arith.constant 0 : i32
    %c0_i32_2 = arith.constant 0 : i32
    return %c0_i32, %c0_i32_0, %c0_i32_1 : i32, i32, i32
  }
  func.func @transform_20(%arg0: i32) -> (i32, i32, i32) {
    %c0_i32 = arith.constant 0 : i32
    %c0_i32_0 = arith.constant 0 : i32
    %c0_i32_1 = arith.constant 0 : i32
    %c0_i32_2 = arith.constant 0 : i32
    return %c0_i32, %c0_i32_0, %c0_i32_1 : i32, i32, i32
  }
  func.func @transform_21(%arg0: i32) -> (i32, i32, i32) {
    %c0_i32 = arith.constant 0 : i32
    %c0_i32_0 = arith.constant 0 : i32
    %c0_i32_1 = arith.constant 0 : i32
    %c0_i32_2 = arith.constant 0 : i32
    return %c0_i32, %c0_i32_0, %c0_i32_1 : i32, i32, i32
  }
  func.func @transform_22(%arg0: i32) -> (i32, i32, i32) {
    %c0_i32 = arith.constant 0 : i32
    %c0_i32_0 = arith.constant 0 : i32
    %c0_i32_1 = arith.constant 0 : i32
    %c0_i32_2 = arith.constant 0 : i32
    return %c0_i32, %c0_i32_0, %c0_i32_1 : i32, i32, i32
  }
  func.func @transform_23(%arg0: i32) -> (i32, i32, i32) {
    %c0_i32 = arith.constant 0 : i32
    %c0_i32_0 = arith.constant 0 : i32
    %c0_i32_1 = arith.constant 0 : i32
    %c0_i32_2 = arith.constant 0 : i32
    return %c0_i32, %c0_i32_0, %c0_i32_1 : i32, i32, i32
  }
  func.func @transform_24(%arg0: i32) -> (i32, i32, i32) {
    %c0_i32 = arith.constant 0 : i32
    %c0_i32_0 = arith.constant 0 : i32
    %c0_i32_1 = arith.constant 0 : i32
    %c0_i32_2 = arith.constant 0 : i32
    return %c0_i32, %c0_i32_0, %c0_i32_1 : i32, i32, i32
  }
  func.func @transform_25(%arg0: i32) -> (i32, i32, i32) {
    %c0_i32 = arith.constant 0 : i32
    %c0_i32_0 = arith.constant 0 : i32
    %c0_i32_1 = arith.constant 0 : i32
    %c0_i32_2 = arith.constant 0 : i32
    return %c0_i32, %c0_i32_0, %c0_i32_1 : i32, i32, i32
  }
  func.func @transform_26(%arg0: i32) -> (i32, i32, i32) {
    %c0_i32 = arith.constant 0 : i32
    %c0_i32_0 = arith.constant 0 : i32
    %c0_i32_1 = arith.constant 0 : i32
    %c0_i32_2 = arith.constant 0 : i32
    return %c0_i32, %c0_i32_0, %c0_i32_1 : i32, i32, i32
  }
  func.func @transform_27(%arg0: i32) -> (i32, i32, i32) {
    %c0_i32 = arith.constant 0 : i32
    %c0_i32_0 = arith.constant 0 : i32
    %c0_i32_1 = arith.constant 0 : i32
    %c0_i32_2 = arith.constant 0 : i32
    return %c0_i32, %c0_i32_0, %c0_i32_1 : i32, i32, i32
  }
  func.func @transform_28(%arg0: i32) -> (i32, i32, i32) {
    %c0_i32 = arith.constant 0 : i32
    %c0_i32_0 = arith.constant 0 : i32
    %c0_i32_1 = arith.constant 0 : i32
    %c0_i32_2 = arith.constant 0 : i32
    return %c0_i32, %c0_i32_0, %c0_i32_1 : i32, i32, i32
  }
  func.func @transform_29(%arg0: i32) -> (i32, i32) {
    %c0_i32 = arith.constant 0 : i32
    %c0_i32_0 = arith.constant 0 : i32
    %c0_i32_1 = arith.constant 0 : i32
    return %c0_i32, %c0_i32_0 : i32, i32
  }
  func.func @transform_30(%arg0: i32) -> (i32, i32) {
    %c0_i32 = arith.constant 0 : i32
    %c0_i32_0 = arith.constant 0 : i32
    %c0_i32_1 = arith.constant 0 : i32
    return %c0_i32, %c0_i32_0 : i32, i32
  }
  func.func @transform_31(%arg0: i32) -> (i32, i32, i32) {
    %c0_i32 = arith.constant 0 : i32
    %c0_i32_0 = arith.constant 0 : i32
    %c0_i32_1 = arith.constant 0 : i32
    return %arg0, %c0_i32, %c0_i32_0 : i32, i32, i32
  }
}

</mosaic_0001>

<llo_original>
// kernel: custom-call.3
$region0: #{custom-call.3}
  %s0 = inlined_call_operand.vmem [shape: u32[2], index: 0, kind: output, shape index: {}]

// kernel: forward.1
$region0: #{forward.1}
  #allocation0 [shape = 'u32[]', space=smem, size = 0x4, offset = 0x4, fixed_abs, tag = 'smem constant byte address 0x4 - core index']
  #allocation1 [shape = 'u32[144,128]{1,0:T(1,128)}', space=vmem, size = 0x12000, scoped, tag = 'internal scratch']
  %s0 = inlined_call_operand.smem [shape: u32[32], index: -1, kind: input, shape index: {}]
  %s1 = sld [smem:[%s0]]
  %s2 = scalar_lea.smem %s0, 1
  %s3 = sld [smem:[%s2]]
  %s4 = scalar_lea.smem %s0, 2
  %s5 = sld [smem:[%s4]]
  %s6 = scalar_lea.smem %s0, 3
  %s7 = sld [smem:[%s6]]
  %s8 = scalar_lea.smem %s0, 4
  %s9 = sld [smem:[%s8]]
  %s10 = scalar_lea.smem %s0, 5
  %s11 = sld [smem:[%s10]]
  %s12 = scalar_lea.smem %s0, 6
  %s13 = sld [smem:[%s12]]
  %s14 = scalar_lea.smem %s0, 7
  %s15 = sld [smem:[%s14]]
  %s16 = scalar_lea.smem %s0, 8
  %s17 = sld [smem:[%s16]]
  %s18 = scalar_lea.smem %s0, 9
  %s19 = sld [smem:[%s18]]
  %s20 = scalar_lea.smem %s0, 10
  %s21 = sld [smem:[%s20]]
  %s22 = scalar_lea.smem %s0, 11
  %s23 = sld [smem:[%s22]]
  %s24 = scalar_lea.smem %s0, 12
  %s25 = sld [smem:[%s24]]
  %s26 = scalar_lea.smem %s0, 13
  %s27 = sld [smem:[%s26]]
  %s28 = scalar_lea.smem %s0, 14
  %s29 = sld [smem:[%s28]]
  %s30 = scalar_lea.smem %s0, 15
  %s31 = sld [smem:[%s30]]
  %s32 = scalar_lea.smem %s0, 16
  %s33 = sld [smem:[%s32]]
  %s34 = scalar_lea.smem %s0, 17
  %s35 = sld [smem:[%s34]]
  %s36 = scalar_lea.smem %s0, 18
  %s37 = sld [smem:[%s36]]
  %s38 = scalar_lea.smem %s0, 19
  %s39 = sld [smem:[%s38]]
  %s40 = scalar_lea.smem %s0, 20
  %s41 = sld [smem:[%s40]]
  %s42 = scalar_lea.smem %s0, 21
  %s43 = sld [smem:[%s42]]
  %s44 = scalar_lea.smem %s0, 22
  %s45 = sld [smem:[%s44]]
  %s46 = scalar_lea.smem %s0, 23
  %s47 = sld [smem:[%s46]]
  %s48 = scalar_lea.smem %s0, 24
  %s49 = sld [smem:[%s48]]
  %s50 = scalar_lea.smem %s0, 25
  %s51 = sld [smem:[%s50]]
  %s52 = scalar_lea.smem %s0, 26
  %s53 = sld [smem:[%s52]]
  %s54 = scalar_lea.smem %s0, 27
  %s55 = sld [smem:[%s54]]
  %s56 = scalar_lea.smem %s0, 28
  %s57 = sld [smem:[%s56]]
  %s58 = scalar_lea.smem %s0, 29
  %s59 = sld [smem:[%s58]]
  %s60 = scalar_lea.smem %s0, 30
  %s61 = sld [smem:[%s60]]
  %s62 = scalar_lea.smem %s0, 31
  %s63 = sld [smem:[%s62]]
  %s64 = sld [smem:[#allocation0]]
  $region157: #{forward.1} parent=0
    _
  %s66 = ssub.s32 1, %s64
  %s67 = scalar_select 0, %s66, %s64
  loop: start=0, step=1, limit=4
  $region2: #{forward.1} parent=0 // loop_pre_header
    _
  $region3: #{forward.1} parent=0 // loop_header
    %s69 = sphi 0, %s73
    %p70 = scmp.ge.s32.totalorder %s69, 4
    %s79 = sphi 0, %s81
    %s82 = sphi 0, %s79
    %s83 = sphi 0, %s82
    %s99 = sphi 0, %s83
    %s105 = sphi 0, %s107
    %s108 = sphi 0, %s105
    %s109 = sphi 0, %s108
    %s125 = sphi 0, %s109
    %s129 = sphi 0, %s129
    %s131 = sphi 0, %s129
    %s132 = sphi 0, %s131
    %s146 = sphi 0, %s132
    %s150 = sphi 0, %s150
    %s152 = sphi 0, %s150
    %s153 = sphi 0, %s152
    %s167 = sphi 0, %s153
    %s171 = sphi 0, %s171
    %s173 = sphi 0, %s171
    %s174 = sphi 0, %s173
    %s188 = sphi 0, %s174
    %s192 = sphi 0, %s192
    %s194 = sphi 0, %s192
    %s195 = sphi 0, %s194
    %s209 = sphi 0, %s195
    %s213 = sphi 0, %s213
    %s215 = sphi 0, %s213
    %s216 = sphi 0, %s215
    %s230 = sphi 0, %s216
    %s234 = sphi 0, %s234
    %s236 = sphi 0, %s234
    %s237 = sphi 0, %s236
    %s251 = sphi 0, %s237
    %s255 = sphi 0, %s255
    %s257 = sphi 0, %s255
    %s258 = sphi 0, %s257
    %s272 = sphi 0, %s258
    %s276 = sphi 0, %s276
    %s278 = sphi 0, %s276
    %s279 = sphi 0, %s278
    %s293 = sphi 0, %s279
    %s297 = sphi 0, %s297
    %s299 = sphi 0, %s297
    %s300 = sphi 0, %s299
    %s314 = sphi 0, %s300
    %s318 = sphi 0, %s318
    %s320 = sphi 0, %s318
    %s321 = sphi 0, %s320
    %s335 = sphi 0, %s321
    %s339 = sphi 0, %s339
    %s341 = sphi 0, %s339
    %s342 = sphi 0, %s341
    %s356 = sphi 0, %s342
    %s360 = sphi 0, %s360
    %s362 = sphi 0, %s360
    %s363 = sphi 0, %s362
    %s377 = sphi 0, %s363
    %s381 = sphi 0, %s381
    %s383 = sphi 0, %s381
    %s384 = sphi 0, %s383
    %s398 = sphi 0, %s384
    %s402 = sphi 0, %s402
    %s404 = sphi 0, %s402
    %s405 = sphi 0, %s404
    %s419 = sphi 0, %s405
    %s423 = sphi 0, %s423
    %s425 = sphi 0, %s423
    %s426 = sphi 0, %s425
    %s440 = sphi 0, %s426
    %s444 = sphi 0, %s444
    %s446 = sphi 0, %s444
    %s447 = sphi 0, %s446
    %s461 = sphi 0, %s447
    %s465 = sphi 0, %s465
    %s467 = sphi 0, %s465
    %s468 = sphi 0, %s467
    %s482 = sphi 0, %s468
    %s486 = sphi 0, %s486
    %s488 = sphi 0, %s486
    %s489 = sphi 0, %s488
    %s503 = sphi 0, %s489
    %s507 = sphi 0, %s507
    %s509 = sphi 0, %s507
    %s510 = sphi 0, %s509
    %s524 = sphi 0, %s510
    %s528 = sphi 0, %s528
    %s530 = sphi 0, %s528
    %s531 = sphi 0, %s530
    %s545 = sphi 0, %s531
    %s549 = sphi 0, %s549
    %s551 = sphi 0, %s549
    %s552 = sphi 0, %s551
    %s566 = sphi 0, %s552
    %s570 = sphi 0, %s570
    %s572 = sphi 0, %s570
    %s573 = sphi 0, %s572
    %s587 = sphi 0, %s573
    %s591 = sphi 0, %s591
    %s593 = sphi 0, %s591
    %s594 = sphi 0, %s593
    %s608 = sphi 0, %s594
    %s612 = sphi 0, %s612
    %s614 = sphi 0, %s612
    %s615 = sphi 0, %s614
    %s629 = sphi 0, %s615
    %s633 = sphi 0, %s633
    %s635 = sphi 0, %s633
    %s636 = sphi 0, %s635
    %s650 = sphi 0, %s636
    %s654 = sphi 0, %s654
    %s656 = sphi 0, %s654
    %s657 = sphi 0, %s656
    %s671 = sphi 0, %s657
    %s675 = sphi 0, %s675
    %s677 = sphi 0, %s675
    %s678 = sphi 0, %s677
    %s692 = sphi 0, %s678
    %s696 = sphi 0, %s696
    %s698 = sphi 0, %s696
    %s699 = sphi 0, %s698
    %s713 = sphi 0, %s699
    %s717 = sphi 0, %s717
    %s719 = sphi 0, %s717
    %s720 = sphi 0, %s719
    %s734 = sphi 0, %s720
    %s740 = sphi 0, %s742
    %s743 = sphi 0, %s740
    %s744 = sphi 0, %s743
    %s760 = sphi 0, %s744
  $region4: #{forward.1} parent=0 // loop_header_branch
    %72 = sbr.rel (%p70) target = $region8
  $region5: #{forward.1} parent=0 // loop_body
    %s74 = ssub.s32 %s69, 1
    %s75 = ssub.s32 %s69, 2
    %s76 = sadd.s32 %s69, 1
    %s77 = ssub.s32 %s69, %s76
    %p78 = scmp.eq.s32.totalorder %s77, 0
    %s80 = sadd.s32 %s79, 1
    %s81 = scalar_select %p78, %s79, %s80
    %p84 = pneg %p78
    %p85 = scmp.eq.s32.totalorder %s69, 1
    %p86 = por %p84, %p85
    %p87 = scmp.ne.s32.totalorder %s79, %s82
    %p88 = scmp.eq.s32.totalorder %s69, 0
    %p89 = por %p87, %p88
    %p90 = scmp.ne.s32.totalorder %s79, %s82
    %p91 = scmp.eq.s32.totalorder %s74, 1
    %p92 = por %p90, %p91
    %p93 = scmp.ne.s32.totalorder %s82, %s83
    %p94 = scmp.eq.s32.totalorder %s74, 0
    %p95 = por %p93, %p94
    %p96 = scmp.ne.s32.totalorder %s82, %s83
    %p97 = scmp.eq.s32.totalorder %s75, 1
    %p98 = por %p96, %p97
    %p100 = scmp.ne.s32.totalorder %s83, %s99
    %p101 = scmp.eq.s32.totalorder %s75, 0
    %p102 = por %p100, %p101
    %s103 = ssub.s32 %s69, %s76
    %p104 = scmp.eq.s32.totalorder %s103, 0
    %s106 = sadd.s32 %s105, 1
    %s107 = scalar_select %p104, %s105, %s106
    %p110 = pneg %p104
    %p111 = scmp.eq.s32.totalorder %s69, 1
    %p112 = por %p110, %p111
    %p113 = scmp.ne.s32.totalorder %s105, %s108
    %p114 = scmp.eq.s32.totalorder %s69, 0
    %p115 = por %p113, %p114
    %p116 = scmp.ne.s32.totalorder %s105, %s108
    %p117 = scmp.eq.s32.totalorder %s74, 1
    %p118 = por %p116, %p117
    %p119 = scmp.ne.s32.totalorder %s108, %s109
    %p120 = scmp.eq.s32.totalorder %s74, 0
    %p121 = por %p119, %p120
    %p122 = scmp.ne.s32.totalorder %s108, %s109
    %p123 = scmp.eq.s32.totalorder %s75, 1
    %p124 = por %p122, %p123
    %p126 = scmp.ne.s32.totalorder %s109, %s125
    %p127 = scmp.eq.s32.totalorder %s75, 0
    %p128 = por %p126, %p127
    %s130 = sadd.s32 %s129, 1
    %p133 = scmp.eq.s32.totalorder %s69, 1
    %p134 = scmp.ne.s32.totalorder %s129, %s131
    %p135 = scmp.eq.s32.totalorder %s69, 0
    %p136 = por %p134, %p135
    %p137 = scmp.ne.s32.totalorder %s129, %s131
    %p138 = scmp.eq.s32.totalorder %s74, 1
    %p139 = por %p137, %p138
    %p140 = scmp.ne.s32.totalorder %s131, %s132
    %p141 = scmp.eq.s32.totalorder %s74, 0
    %p142 = por %p140, %p141
    %p143 = scmp.ne.s32.totalorder %s131, %s132
    %p144 = scmp.eq.s32.totalorder %s75, 1
    %p145 = por %p143, %p144
    %p147 = scmp.ne.s32.totalorder %s132, %s146
    %p148 = scmp.eq.s32.totalorder %s75, 0
    %p149 = por %p147, %p148
    %s151 = sadd.s32 %s150, 1
    %p154 = scmp.eq.s32.totalorder %s69, 1
    %p155 = scmp.ne.s32.totalorder %s150, %s152
    %p156 = scmp.eq.s32.totalorder %s69, 0
    %p157 = por %p155, %p156
    %p158 = scmp.ne.s32.totalorder %s150, %s152
    %p159 = scmp.eq.s32.totalorder %s74, 1
    %p160 = por %p158, %p159
    %p161 = scmp.ne.s32.totalorder %s152, %s153
    %p162 = scmp.eq.s32.totalorder %s74, 0
    %p163 = por %p161, %p162
    %p164 = scmp.ne.s32.totalorder %s152, %s153
    %p165 = scmp.eq.s32.totalorder %s75, 1
    %p166 = por %p164, %p165
    %p168 = scmp.ne.s32.totalorder %s153, %s167
    %p169 = scmp.eq.s32.totalorder %s75, 0
    %p170 = por %p168, %p169
    %s172 = sadd.s32 %s171, 1
    %p175 = scmp.eq.s32.totalorder %s69, 1
    %p176 = scmp.ne.s32.totalorder %s171, %s173
    %p177 = scmp.eq.s32.totalorder %s69, 0
    %p178 = por %p176, %p177
    %p179 = scmp.ne.s32.totalorder %s171, %s173
    %p180 = scmp.eq.s32.totalorder %s74, 1
    %p181 = por %p179, %p180
    %p182 = scmp.ne.s32.totalorder %s173, %s174
    %p183 = scmp.eq.s32.totalorder %s74, 0
    %p184 = por %p182, %p183
    %p185 = scmp.ne.s32.totalorder %s173, %s174
    %p186 = scmp.eq.s32.totalorder %s75, 1
    %p187 = por %p185, %p186
    %p189 = scmp.ne.s32.totalorder %s174, %s188
    %p190 = scmp.eq.s32.totalorder %s75, 0
    %p191 = por %p189, %p190
    %s193 = sadd.s32 %s192, 1
    %p196 = scmp.eq.s32.totalorder %s69, 1
    %p197 = scmp.ne.s32.totalorder %s192, %s194
    %p198 = scmp.eq.s32.totalorder %s69, 0
    %p199 = por %p197, %p198
    %p200 = scmp.ne.s32.totalorder %s192, %s194
    %p201 = scmp.eq.s32.totalorder %s74, 1
    %p202 = por %p200, %p201
    %p203 = scmp.ne.s32.totalorder %s194, %s195
    %p204 = scmp.eq.s32.totalorder %s74, 0
    %p205 = por %p203, %p204
    %p206 = scmp.ne.s32.totalorder %s194, %s195
    %p207 = scmp.eq.s32.totalorder %s75, 1
    %p208 = por %p206, %p207
    %p210 = scmp.ne.s32.totalorder %s195, %s209
    %p211 = scmp.eq.s32.totalorder %s75, 0
    %p212 = por %p210, %p211
    %s214 = sadd.s32 %s213, 1
    %p217 = scmp.eq.s32.totalorder %s69, 1
    %p218 = scmp.ne.s32.totalorder %s213, %s215
    %p219 = scmp.eq.s32.totalorder %s69, 0
    %p220 = por %p218, %p219
    %p221 = scmp.ne.s32.totalorder %s213, %s215
    %p222 = scmp.eq.s32.totalorder %s74, 1
    %p223 = por %p221, %p222
    %p224 = scmp.ne.s32.totalorder %s215, %s216
    %p225 = scmp.eq.s32.totalorder %s74, 0
    %p226 = por %p224, %p225
    %p227 = scmp.ne.s32.totalorder %s215, %s216
    %p228 = scmp.eq.s32.totalorder %s75, 1
    %p229 = por %p227, %p228
    %p231 = scmp.ne.s32.totalorder %s216, %s230
    %p232 = scmp.eq.s32.totalorder %s75, 0
    %p233 = por %p231, %p232
    %s235 = sadd.s32 %s234, 1
    %p238 = scmp.eq.s32.totalorder %s69, 1
    %p239 = scmp.ne.s32.totalorder %s234, %s236
    %p240 = scmp.eq.s32.totalorder %s69, 0
    %p241 = por %p239, %p240
    %p242 = scmp.ne.s32.totalorder %s234, %s236
    %p243 = scmp.eq.s32.totalorder %s74, 1
    %p244 = por %p242, %p243
    %p245 = scmp.ne.s32.totalorder %s236, %s237
    %p246 = scmp.eq.s32.totalorder %s74, 0
    %p247 = por %p245, %p246
    %p248 = scmp.ne.s32.totalorder %s236, %s237
    %p249 = scmp.eq.s32.totalorder %s75, 1
    %p250 = por %p248, %p249
    %p252 = scmp.ne.s32.totalorder %s237, %s251
    %p253 = scmp.eq.s32.totalorder %s75, 0
    %p254 = por %p252, %p253
    %s256 = sadd.s32 %s255, 1
    %p259 = scmp.eq.s32.totalorder %s69, 1
    %p260 = scmp.ne.s32.totalorder %s255, %s257
    %p261 = scmp.eq.s32.totalorder %s69, 0
    %p262 = por %p260, %p261
    %p263 = scmp.ne.s32.totalorder %s255, %s257
    %p264 = scmp.eq.s32.totalorder %s74, 1
    %p265 = por %p263, %p264
    %p266 = scmp.ne.s32.totalorder %s257, %s258
    %p267 = scmp.eq.s32.totalorder %s74, 0
    %p268 = por %p266, %p267
    %p269 = scmp.ne.s32.totalorder %s257, %s258
    %p270 = scmp.eq.s32.totalorder %s75, 1
    %p271 = por %p269, %p270
    %p273 = scmp.ne.s32.totalorder %s258, %s272
    %p274 = scmp.eq.s32.totalorder %s75, 0
    %p275 = por %p273, %p274
    %s277 = sadd.s32 %s276, 1
    %p280 = scmp.eq.s32.totalorder %s69, 1
    %p281 = scmp.ne.s32.totalorder %s276, %s278
    %p282 = scmp.eq.s32.totalorder %s69, 0
    %p283 = por %p281, %p282
    %p284 = scmp.ne.s32.totalorder %s276, %s278
    %p285 = scmp.eq.s32.totalorder %s74, 1
    %p286 = por %p284, %p285
    %p287 = scmp.ne.s32.totalorder %s278, %s279
    %p288 = scmp.eq.s32.totalorder %s74, 0
    %p289 = por %p287, %p288
    %p290 = scmp.ne.s32.totalorder %s278, %s279
    %p291 = scmp.eq.s32.totalorder %s75, 1
    %p292 = por %p290, %p291
    %p294 = scmp.ne.s32.totalorder %s279, %s293
    %p295 = scmp.eq.s32.totalorder %s75, 0
    %p296 = por %p294, %p295
    %s298 = sadd.s32 %s297, 1
    %p301 = scmp.eq.s32.totalorder %s69, 1
    %p302 = scmp.ne.s32.totalorder %s297, %s299
    %p303 = scmp.eq.s32.totalorder %s69, 0
    %p304 = por %p302, %p303
    %p305 = scmp.ne.s32.totalorder %s297, %s299
    %p306 = scmp.eq.s32.totalorder %s74, 1
    %p307 = por %p305, %p306
    %p308 = scmp.ne.s32.totalorder %s299, %s300
    %p309 = scmp.eq.s32.totalorder %s74, 0
    %p310 = por %p308, %p309
    %p311 = scmp.ne.s32.totalorder %s299, %s300
    %p312 = scmp.eq.s32.totalorder %s75, 1
    %p313 = por %p311, %p312
    %p315 = scmp.ne.s32.totalorder %s300, %s314
    %p316 = scmp.eq.s32.totalorder %s75, 0
    %p317 = por %p315, %p316
    %s319 = sadd.s32 %s318, 1
    %p322 = scmp.eq.s32.totalorder %s69, 1
    %p323 = scmp.ne.s32.totalorder %s318, %s320
    %p324 = scmp.eq.s32.totalorder %s69, 0
    %p325 = por %p323, %p324
    %p326 = scmp.ne.s32.totalorder %s318, %s320
    %p327 = scmp.eq.s32.totalorder %s74, 1
    %p328 = por %p326, %p327
    %p329 = scmp.ne.s32.totalorder %s320, %s321
    %p330 = scmp.eq.s32.totalorder %s74, 0
    %p331 = por %p329, %p330
    %p332 = scmp.ne.s32.totalorder %s320, %s321
    %p333 = scmp.eq.s32.totalorder %s75, 1
    %p334 = por %p332, %p333
    %p336 = scmp.ne.s32.totalorder %s321, %s335
    %p337 = scmp.eq.s32.totalorder %s75, 0
    %p338 = por %p336, %p337
    %s340 = sadd.s32 %s339, 1
    %p343 = scmp.eq.s32.totalorder %s69, 1
    %p344 = scmp.ne.s32.totalorder %s339, %s341
    %p345 = scmp.eq.s32.totalorder %s69, 0
    %p346 = por %p344, %p345
    %p347 = scmp.ne.s32.totalorder %s339, %s341
    %p348 = scmp.eq.s32.totalorder %s74, 1
    %p349 = por %p347, %p348
    %p350 = scmp.ne.s32.totalorder %s341, %s342
    %p351 = scmp.eq.s32.totalorder %s74, 0
    %p352 = por %p350, %p351
    %p353 = scmp.ne.s32.totalorder %s341, %s342
    %p354 = scmp.eq.s32.totalorder %s75, 1
    %p355 = por %p353, %p354
    %p357 = scmp.ne.s32.totalorder %s342, %s356
    %p358 = scmp.eq.s32.totalorder %s75, 0
    %p359 = por %p357, %p358
    %s361 = sadd.s32 %s360, 1
    %p364 = scmp.eq.s32.totalorder %s69, 1
    %p365 = scmp.ne.s32.totalorder %s360, %s362
    %p366 = scmp.eq.s32.totalorder %s69, 0
    %p367 = por %p365, %p366
    %p368 = scmp.ne.s32.totalorder %s360, %s362
    %p369 = scmp.eq.s32.totalorder %s74, 1
    %p370 = por %p368, %p369
    %p371 = scmp.ne.s32.totalorder %s362, %s363
    %p372 = scmp.eq.s32.totalorder %s74, 0
    %p373 = por %p371, %p372
    %p374 = scmp.ne.s32.totalorder %s362, %s363
    %p375 = scmp.eq.s32.totalorder %s75, 1
    %p376 = por %p374, %p375
    %p378 = scmp.ne.s32.totalorder %s363, %s377
    %p379 = scmp.eq.s32.totalorder %s75, 0
    %p380 = por %p378, %p379
    %s382 = sadd.s32 %s381, 1
    %p385 = scmp.eq.s32.totalorder %s69, 1
    %p386 = scmp.ne.s32.totalorder %s381, %s383
    %p387 = scmp.eq.s32.totalorder %s69, 0
    %p388 = por %p386, %p387
    %p389 = scmp.ne.s32.totalorder %s381, %s383
    %p390 = scmp.eq.s32.totalorder %s74, 1
    %p391 = por %p389, %p390
    %p392 = scmp.ne.s32.totalorder %s383, %s384
    %p393 = scmp.eq.s32.totalorder %s74, 0
    %p394 = por %p392, %p393
    %p395 = scmp.ne.s32.totalorder %s383, %s384
    %p396 = scmp.eq.s32.totalorder %s75, 1
    %p397 = por %p395, %p396
    %p399 = scmp.ne.s32.totalorder %s384, %s398
    %p400 = scmp.eq.s32.totalorder %s75, 0
    %p401 = por %p399, %p400
    %s403 = sadd.s32 %s402, 1
    %p406 = scmp.eq.s32.totalorder %s69, 1
    %p407 = scmp.ne.s32.totalorder %s402, %s404
    %p408 = scmp.eq.s32.totalorder %s69, 0
    %p409 = por %p407, %p408
    %p410 = scmp.ne.s32.totalorder %s402, %s404
    %p411 = scmp.eq.s32.totalorder %s74, 1
    %p412 = por %p410, %p411
    %p413 = scmp.ne.s32.totalorder %s404, %s405
    %p414 = scmp.eq.s32.totalorder %s74, 0
    %p415 = por %p413, %p414
    %p416 = scmp.ne.s32.totalorder %s404, %s405
    %p417 = scmp.eq.s32.totalorder %s75, 1
    %p418 = por %p416, %p417
    %p420 = scmp.ne.s32.totalorder %s405, %s419
    %p421 = scmp.eq.s32.totalorder %s75, 0
    %p422 = por %p420, %p421
    %s424 = sadd.s32 %s423, 1
    %p427 = scmp.eq.s32.totalorder %s69, 1
    %p428 = scmp.ne.s32.totalorder %s423, %s425
    %p429 = scmp.eq.s32.totalorder %s69, 0
    %p430 = por %p428, %p429
    %p431 = scmp.ne.s32.totalorder %s423, %s425
    %p432 = scmp.eq.s32.totalorder %s74, 1
    %p433 = por %p431, %p432
    %p434 = scmp.ne.s32.totalorder %s425, %s426
    %p435 = scmp.eq.s32.totalorder %s74, 0
    %p436 = por %p434, %p435
    %p437 = scmp.ne.s32.totalorder %s425, %s426
    %p438 = scmp.eq.s32.totalorder %s75, 1
    %p439 = por %p437, %p438
    %p441 = scmp.ne.s32.totalorder %s426, %s440
    %p442 = scmp.eq.s32.totalorder %s75, 0
    %p443 = por %p441, %p442
    %s445 = sadd.s32 %s444, 1
    %p448 = scmp.eq.s32.totalorder %s69, 1
    %p449 = scmp.ne.s32.totalorder %s444, %s446
    %p450 = scmp.eq.s32.totalorder %s69, 0
    %p451 = por %p449, %p450
    %p452 = scmp.ne.s32.totalorder %s444, %s446
    %p453 = scmp.eq.s32.totalorder %s74, 1
    %p454 = por %p452, %p453
    %p455 = scmp.ne.s32.totalorder %s446, %s447
    %p456 = scmp.eq.s32.totalorder %s74, 0
    %p457 = por %p455, %p456
    %p458 = scmp.ne.s32.totalorder %s446, %s447
    %p459 = scmp.eq.s32.totalorder %s75, 1
    %p460 = por %p458, %p459
    %p462 = scmp.ne.s32.totalorder %s447, %s461
    %p463 = scmp.eq.s32.totalorder %s75, 0
    %p464 = por %p462, %p463
    %s466 = sadd.s32 %s465, 1
    %p469 = scmp.eq.s32.totalorder %s69, 1
    %p470 = scmp.ne.s32.totalorder %s465, %s467
    %p471 = scmp.eq.s32.totalorder %s69, 0
    %p472 = por %p470, %p471
    %p473 = scmp.ne.s32.totalorder %s465, %s467
    %p474 = scmp.eq.s32.totalorder %s74, 1
    %p475 = por %p473, %p474
    %p476 = scmp.ne.s32.totalorder %s467, %s468
    %p477 = scmp.eq.s32.totalorder %s74, 0
    %p478 = por %p476, %p477
    %p479 = scmp.ne.s32.totalorder %s467, %s468
    %p480 = scmp.eq.s32.totalorder %s75, 1
    %p481 = por %p479, %p480
    %p483 = scmp.ne.s32.totalorder %s468, %s482
    %p484 = scmp.eq.s32.totalorder %s75, 0
    %p485 = por %p483, %p484
    %s487 = sadd.s32 %s486, 1
    %p490 = scmp.eq.s32.totalorder %s69, 1
    %p491 = scmp.ne.s32.totalorder %s486, %s488
    %p492 = scmp.eq.s32.totalorder %s69, 0
    %p493 = por %p491, %p492
    %p494 = scmp.ne.s32.totalorder %s486, %s488
    %p495 = scmp.eq.s32.totalorder %s74, 1
    %p496 = por %p494, %p495
    %p497 = scmp.ne.s32.totalorder %s488, %s489
    %p498 = scmp.eq.s32.totalorder %s74, 0
    %p499 = por %p497, %p498
    %p500 = scmp.ne.s32.totalorder %s488, %s489
    %p501 = scmp.eq.s32.totalorder %s75, 1
    %p502 = por %p500, %p501
    %p504 = scmp.ne.s32.totalorder %s489, %s503
    %p505 = scmp.eq.s32.totalorder %s75, 0
    %p506 = por %p504, %p505
    %s508 = sadd.s32 %s507, 1
    %p511 = scmp.eq.s32.totalorder %s69, 1
    %p512 = scmp.ne.s32.totalorder %s507, %s509
    %p513 = scmp.eq.s32.totalorder %s69, 0
    %p514 = por %p512, %p513
    %p515 = scmp.ne.s32.totalorder %s507, %s509
    %p516 = scmp.eq.s32.totalorder %s74, 1
    %p517 = por %p515, %p516
    %p518 = scmp.ne.s32.totalorder %s509, %s510
    %p519 = scmp.eq.s32.totalorder %s74, 0
    %p520 = por %p518, %p519
    %p521 = scmp.ne.s32.totalorder %s509, %s510
    %p522 = scmp.eq.s32.totalorder %s75, 1
    %p523 = por %p521, %p522
    %p525 = scmp.ne.s32.totalorder %s510, %s524
    %p526 = scmp.eq.s32.totalorder %s75, 0
    %p527 = por %p525, %p526
    %s529 = sadd.s32 %s528, 1
    %p532 = scmp.eq.s32.totalorder %s69, 1
    %p533 = scmp.ne.s32.totalorder %s528, %s530
    %p534 = scmp.eq.s32.totalorder %s69, 0
    %p535 = por %p533, %p534
    %p536 = scmp.ne.s32.totalorder %s528, %s530
    %p537 = scmp.eq.s32.totalorder %s74, 1
    %p538 = por %p536, %p537
    %p539 = scmp.ne.s32.totalorder %s530, %s531
    %p540 = scmp.eq.s32.totalorder %s74, 0
    %p541 = por %p539, %p540
    %p542 = scmp.ne.s32.totalorder %s530, %s531
    %p543 = scmp.eq.s32.totalorder %s75, 1
    %p544 = por %p542, %p543
    %p546 = scmp.ne.s32.totalorder %s531, %s545
    %p547 = scmp.eq.s32.totalorder %s75, 0
    %p548 = por %p546, %p547
    %s550 = sadd.s32 %s549, 1
    %p553 = scmp.eq.s32.totalorder %s69, 1
    %p554 = scmp.ne.s32.totalorder %s549, %s551
    %p555 = scmp.eq.s32.totalorder %s69, 0
    %p556 = por %p554, %p555
    %p557 = scmp.ne.s32.totalorder %s549, %s551
    %p558 = scmp.eq.s32.totalorder %s74, 1
    %p559 = por %p557, %p558
    %p560 = scmp.ne.s32.totalorder %s551, %s552
    %p561 = scmp.eq.s32.totalorder %s74, 0
    %p562 = por %p560, %p561
    %p563 = scmp.ne.s32.totalorder %s551, %s552
    %p564 = scmp.eq.s32.totalorder %s75, 1
    %p565 = por %p563, %p564
    %p567 = scmp.ne.s32.totalorder %s552, %s566
    %p568 = scmp.eq.s32.totalorder %s75, 0
    %p569 = por %p567, %p568
    %s571 = sadd.s32 %s570, 1
    %p574 = scmp.eq.s32.totalorder %s69, 1
    %p575 = scmp.ne.s32.totalorder %s570, %s572
    %p576 = scmp.eq.s32.totalorder %s69, 0
    %p577 = por %p575, %p576
    %p578 = scmp.ne.s32.totalorder %s570, %s572
    %p579 = scmp.eq.s32.totalorder %s74, 1
    %p580 = por %p578, %p579
    %p581 = scmp.ne.s32.totalorder %s572, %s573
    %p582 = scmp.eq.s32.totalorder %s74, 0
    %p583 = por %p581, %p582
    %p584 = scmp.ne.s32.totalorder %s572, %s573
    %p585 = scmp.eq.s32.totalorder %s75, 1
    %p586 = por %p584, %p585
    %p588 = scmp.ne.s32.totalorder %s573, %s587
    %p589 = scmp.eq.s32.totalorder %s75, 0
    %p590 = por %p588, %p589
    %s592 = sadd.s32 %s591, 1
    %p595 = scmp.eq.s32.totalorder %s69, 1
    %p596 = scmp.ne.s32.totalorder %s591, %s593
    %p597 = scmp.eq.s32.totalorder %s69, 0
    %p598 = por %p596, %p597
    %p599 = scmp.ne.s32.totalorder %s591, %s593
    %p600 = scmp.eq.s32.totalorder %s74, 1
    %p601 = por %p599, %p600
    %p602 = scmp.ne.s32.totalorder %s593, %s594
    %p603 = scmp.eq.s32.totalorder %s74, 0
    %p604 = por %p602, %p603
    %p605 = scmp.ne.s32.totalorder %s593, %s594
    %p606 = scmp.eq.s32.totalorder %s75, 1
    %p607 = por %p605, %p606
    %p609 = scmp.ne.s32.totalorder %s594, %s608
    %p610 = scmp.eq.s32.totalorder %s75, 0
    %p611 = por %p609, %p610
    %s613 = sadd.s32 %s612, 1
    %p616 = scmp.eq.s32.totalorder %s69, 1
    %p617 = scmp.ne.s32.totalorder %s612, %s614
    %p618 = scmp.eq.s32.totalorder %s69, 0
    %p619 = por %p617, %p618
    %p620 = scmp.ne.s32.totalorder %s612, %s614
    %p621 = scmp.eq.s32.totalorder %s74, 1
    %p622 = por %p620, %p621
    %p623 = scmp.ne.s32.totalorder %s614, %s615
    %p624 = scmp.eq.s32.totalorder %s74, 0
    %p625 = por %p623, %p624
    %p626 = scmp.ne.s32.totalorder %s614, %s615
    %p627 = scmp.eq.s32.totalorder %s75, 1
    %p628 = por %p626, %p627
    %p630 = scmp.ne.s32.totalorder %s615, %s629
    %p631 = scmp.eq.s32.totalorder %s75, 0
    %p632 = por %p630, %p631
    %s634 = sadd.s32 %s633, 1
    %p637 = scmp.eq.s32.totalorder %s69, 1
    %p638 = scmp.ne.s32.totalorder %s633, %s635
    %p639 = scmp.eq.s32.totalorder %s69, 0
    %p640 = por %p638, %p639
    %p641 = scmp.ne.s32.totalorder %s633, %s635
    %p642 = scmp.eq.s32.totalorder %s74, 1
    %p643 = por %p641, %p642
    %p644 = scmp.ne.s32.totalorder %s635, %s636
    %p645 = scmp.eq.s32.totalorder %s74, 0
    %p646 = por %p644, %p645
    %p647 = scmp.ne.s32.totalorder %s635, %s636
    %p648 = scmp.eq.s32.totalorder %s75, 1
    %p649 = por %p647, %p648
    %p651 = scmp.ne.s32.totalorder %s636, %s650
    %p652 = scmp.eq.s32.totalorder %s75, 0
    %p653 = por %p651, %p652
    %s655 = sadd.s32 %s654, 1
    %p658 = scmp.eq.s32.totalorder %s69, 1
    %p659 = scmp.ne.s32.totalorder %s654, %s656
    %p660 = scmp.eq.s32.totalorder %s69, 0
    %p661 = por %p659, %p660
    %p662 = scmp.ne.s32.totalorder %s654, %s656
    %p663 = scmp.eq.s32.totalorder %s74, 1
    %p664 = por %p662, %p663
    %p665 = scmp.ne.s32.totalorder %s656, %s657
    %p666 = scmp.eq.s32.totalorder %s74, 0
    %p667 = por %p665, %p666
    %p668 = scmp.ne.s32.totalorder %s656, %s657
    %p669 = scmp.eq.s32.totalorder %s75, 1
    %p670 = por %p668, %p669
    %p672 = scmp.ne.s32.totalorder %s657, %s671
    %p673 = scmp.eq.s32.totalorder %s75, 0
    %p674 = por %p672, %p673
    %s676 = sadd.s32 %s675, 1
    %p679 = scmp.eq.s32.totalorder %s69, 1
    %p680 = scmp.ne.s32.totalorder %s675, %s677
    %p681 = scmp.eq.s32.totalorder %s69, 0
    %p682 = por %p680, %p681
    %p683 = scmp.ne.s32.totalorder %s675, %s677
    %p684 = scmp.eq.s32.totalorder %s74, 1
    %p685 = por %p683, %p684
    %p686 = scmp.ne.s32.totalorder %s677, %s678
    %p687 = scmp.eq.s32.totalorder %s74, 0
    %p688 = por %p686, %p687
    %p689 = scmp.ne.s32.totalorder %s677, %s678
    %p690 = scmp.eq.s32.totalorder %s75, 1
    %p691 = por %p689, %p690
    %p693 = scmp.ne.s32.totalorder %s678, %s692
    %p694 = scmp.eq.s32.totalorder %s75, 0
    %p695 = por %p693, %p694
    %s697 = sadd.s32 %s696, 1
    %p700 = scmp.eq.s32.totalorder %s69, 1
    %p701 = scmp.ne.s32.totalorder %s696, %s698
    %p702 = scmp.eq.s32.totalorder %s69, 0
    %p703 = por %p701, %p702
    %p704 = scmp.ne.s32.totalorder %s696, %s698
    %p705 = scmp.eq.s32.totalorder %s74, 1
    %p706 = por %p704, %p705
    %p707 = scmp.ne.s32.totalorder %s698, %s699
    %p708 = scmp.eq.s32.totalorder %s74, 0
    %p709 = por %p707, %p708
    %p710 = scmp.ne.s32.totalorder %s698, %s699
    %p711 = scmp.eq.s32.totalorder %s75, 1
    %p712 = por %p710, %p711
    %p714 = scmp.ne.s32.totalorder %s699, %s713
    %p715 = scmp.eq.s32.totalorder %s75, 0
    %p716 = por %p714, %p715
    %s718 = sadd.s32 %s717, 1
    %p721 = scmp.eq.s32.totalorder %s69, 1
    %p722 = scmp.ne.s32.totalorder %s717, %s719
    %p723 = scmp.eq.s32.totalorder %s69, 0
    %p724 = por %p722, %p723
    %p725 = scmp.ne.s32.totalorder %s717, %s719
    %p726 = scmp.eq.s32.totalorder %s74, 1
    %p727 = por %p725, %p726
    %p728 = scmp.ne.s32.totalorder %s719, %s720
    %p729 = scmp.eq.s32.totalorder %s74, 0
    %p730 = por %p728, %p729
    %p731 = scmp.ne.s32.totalorder %s719, %s720
    %p732 = scmp.eq.s32.totalorder %s75, 1
    %p733 = por %p731, %p732
    %p735 = scmp.ne.s32.totalorder %s720, %s734
    %p736 = scmp.eq.s32.totalorder %s75, 0
    %p737 = por %p735, %p736
    %s738 = ssub.s32 %s69, %s76
    %p739 = scmp.eq.s32.totalorder %s738, 0
    %s741 = sadd.s32 %s740, 1
    %s742 = scalar_select %p739, %s740, %s741
    %p745 = pneg %p739
    %p746 = scmp.eq.s32.totalorder %s69, 1
    %p747 = por %p745, %p746
    %p748 = scmp.ne.s32.totalorder %s740, %s743
    %p749 = scmp.eq.s32.totalorder %s69, 0
    %p750 = por %p748, %p749
    %p751 = scmp.ne.s32.totalorder %s740, %s743
    %p752 = scmp.eq.s32.totalorder %s74, 1
    %p753 = por %p751, %p752
    %p754 = scmp.ne.s32.totalorder %s743, %s744
    %p755 = scmp.eq.s32.totalorder %s74, 0
    %p756 = por %p754, %p755
    %p757 = scmp.ne.s32.totalorder %s743, %s744
    %p758 = scmp.eq.s32.totalorder %s75, 1
    %p759 = por %p757, %p758
    %p761 = scmp.ne.s32.totalorder %s744, %s760
    %p762 = scmp.eq.s32.totalorder %s75, 0
    %p763 = por %p761, %p762
    %p764 = scmp.le.s32.totalorder 1, %s69
    %p765 = scmp.lt.s32.totalorder %s69, 3
    %p766 = pnand %p764, %p765
    %p767 = pneg %p766
    // Predicated region
    $region9: #{forward.1} parent=5 // pred_check
      _
    $region10: #{forward.1} parent=5 // pred_check_branch
      %769 = sbr.rel (%p766) target = $region12
    $region11: #{forward.1} parent=5 // pred_region
      %s770 = ssub.s32 %s69, 1
      // Predicated region
      $region13: #{forward.1} parent=11 // pred_check
        %p771 = pneg %p142
      $region14: #{forward.1} parent=11 // pred_check_branch
        %773 = sbr.rel (%p771) target = $region16
      $region15: #{forward.1} parent=11 // pred_region
        _
      $region16: #{forward.1} parent=11 // pred_fallthru
        _
      // Predicated region
      $region17: #{forward.1} parent=11 // pred_check
        %p774 = pneg %p163
      $region18: #{forward.1} parent=11 // pred_check_branch
        %776 = sbr.rel (%p774) target = $region20
      $region19: #{forward.1} parent=11 // pred_region
        _
      $region20: #{forward.1} parent=11 // pred_fallthru
        _
      // Predicated region
      $region21: #{forward.1} parent=11 // pred_check
        %p777 = pneg %p184
      $region22: #{forward.1} parent=11 // pred_check_branch
        %779 = sbr.rel (%p777) target = $region24
      $region23: #{forward.1} parent=11 // pred_region
        _
      $region24: #{forward.1} parent=11 // pred_fallthru
        _
      // Predicated region
      $region25: #{forward.1} parent=11 // pred_check
        %p780 = pneg %p205
      $region26: #{forward.1} parent=11 // pred_check_branch
        %782 = sbr.rel (%p780) target = $region28
      $region27: #{forward.1} parent=11 // pred_region
        _
      $region28: #{forward.1} parent=11 // pred_fallthru
        _
      // Predicated region
      $region29: #{forward.1} parent=11 // pred_check
        %p783 = pneg %p226
      $region30: #{forward.1} parent=11 // pred_check_branch
        %785 = sbr.rel (%p783) target = $region32
      $region31: #{forward.1} parent=11 // pred_region
        _
      $region32: #{forward.1} parent=11 // pred_fallthru
        _
      // Predicated region
      $region33: #{forward.1} parent=11 // pred_check
        %p786 = pneg %p247
      $region34: #{forward.1} parent=11 // pred_check_branch
        %788 = sbr.rel (%p786) target = $region36
      $region35: #{forward.1} parent=11 // pred_region
        _
      $region36: #{forward.1} parent=11 // pred_fallthru
        _
      // Predicated region
      $region37: #{forward.1} parent=11 // pred_check
        %p789 = pneg %p268
      $region38: #{forward.1} parent=11 // pred_check_branch
        %791 = sbr.rel (%p789) target = $region40
      $region39: #{forward.1} parent=11 // pred_region
        _
      $region40: #{forward.1} parent=11 // pred_fallthru
        _
      // Predicated region
      $region41: #{forward.1} parent=11 // pred_check
        %p792 = pneg %p289
      $region42: #{forward.1} parent=11 // pred_check_branch
        %794 = sbr.rel (%p792) target = $region44
      $region43: #{forward.1} parent=11 // pred_region
        _
      $region44: #{forward.1} parent=11 // pred_fallthru
        _
      // Predicated region
      $region45: #{forward.1} parent=11 // pred_check
        %p795 = pneg %p310
      $region46: #{forward.1} parent=11 // pred_check_branch
        %797 = sbr.rel (%p795) target = $region48
      $region47: #{forward.1} parent=11 // pred_region
        _
      $region48: #{forward.1} parent=11 // pred_fallthru
        _
      // Predicated region
      $region49: #{forward.1} parent=11 // pred_check
        %p798 = pneg %p331
      $region50: #{forward.1} parent=11 // pred_check_branch
        %800 = sbr.rel (%p798) target = $region52
      $region51: #{forward.1} parent=11 // pred_region
        _
      $region52: #{forward.1} parent=11 // pred_fallthru
        _
      // Predicated region
      $region53: #{forward.1} parent=11 // pred_check
        %p801 = pneg %p352
      $region54: #{forward.1} parent=11 // pred_check_branch
        %803 = sbr.rel (%p801) target = $region56
      $region55: #{forward.1} parent=11 // pred_region
        _
      $region56: #{forward.1} parent=11 // pred_fallthru
        _
      // Predicated region
      $region57: #{forward.1} parent=11 // pred_check
        %p804 = pneg %p373
      $region58: #{forward.1} parent=11 // pred_check_branch
        %806 = sbr.rel (%p804) target = $region60
      $region59: #{forward.1} parent=11 // pred_region
        _
      $region60: #{forward.1} parent=11 // pred_fallthru
        _
      // Predicated region
      $region61: #{forward.1} parent=11 // pred_check
        %p807 = pneg %p394
      $region62: #{forward.1} parent=11 // pred_check_branch
        %809 = sbr.rel (%p807) target = $region64
      $region63: #{forward.1} parent=11 // pred_region
        _
      $region64: #{forward.1} parent=11 // pred_fallthru
        _
      // Predicated region
      $region65: #{forward.1} parent=11 // pred_check
        %p810 = pneg %p415
      $region66: #{forward.1} parent=11 // pred_check_branch
        %812 = sbr.rel (%p810) target = $region68
      $region67: #{forward.1} parent=11 // pred_region
        _
      $region68: #{forward.1} parent=11 // pred_fallthru
        _
      // Predicated region
      $region69: #{forward.1} parent=11 // pred_check
        %p813 = pneg %p436
      $region70: #{forward.1} parent=11 // pred_check_branch
        %815 = sbr.rel (%p813) target = $region72
      $region71: #{forward.1} parent=11 // pred_region
        _
      $region72: #{forward.1} parent=11 // pred_fallthru
        _
      // Predicated region
      $region73: #{forward.1} parent=11 // pred_check
        %p816 = pneg %p457
      $region74: #{forward.1} parent=11 // pred_check_branch
        %818 = sbr.rel (%p816) target = $region76
      $region75: #{forward.1} parent=11 // pred_region
        _
      $region76: #{forward.1} parent=11 // pred_fallthru
        _
      // Predicated region
      $region77: #{forward.1} parent=11 // pred_check
        %p819 = pneg %p478
      $region78: #{forward.1} parent=11 // pred_check_branch
        %821 = sbr.rel (%p819) target = $region80
      $region79: #{forward.1} parent=11 // pred_region
        _
      $region80: #{forward.1} parent=11 // pred_fallthru
        _
      // Predicated region
      $region81: #{forward.1} parent=11 // pred_check
        %p822 = pneg %p499
      $region82: #{forward.1} parent=11 // pred_check_branch
        %824 = sbr.rel (%p822) target = $region84
      $region83: #{forward.1} parent=11 // pred_region
        _
      $region84: #{forward.1} parent=11 // pred_fallthru
        _
      // Predicated region
      $region85: #{forward.1} parent=11 // pred_check
        %p825 = pneg %p520
      $region86: #{forward.1} parent=11 // pred_check_branch
        %827 = sbr.rel (%p825) target = $region88
      $region87: #{forward.1} parent=11 // pred_region
        _
      $region88: #{forward.1} parent=11 // pred_fallthru
        _
      // Predicated region
      $region89: #{forward.1} parent=11 // pred_check
        %p828 = pneg %p541
      $region90: #{forward.1} parent=11 // pred_check_branch
        %830 = sbr.rel (%p828) target = $region92
      $region91: #{forward.1} parent=11 // pred_region
        _
      $region92: #{forward.1} parent=11 // pred_fallthru
        _
      // Predicated region
      $region93: #{forward.1} parent=11 // pred_check
        %p831 = pneg %p562
      $region94: #{forward.1} parent=11 // pred_check_branch
        %833 = sbr.rel (%p831) target = $region96
      $region95: #{forward.1} parent=11 // pred_region
        _
      $region96: #{forward.1} parent=11 // pred_fallthru
        _
      // Predicated region
      $region97: #{forward.1} parent=11 // pred_check
        %p834 = pneg %p583
      $region98: #{forward.1} parent=11 // pred_check_branch
        %836 = sbr.rel (%p834) target = $region100
      $region99: #{forward.1} parent=11 // pred_region
        _
      $region100: #{forward.1} parent=11 // pred_fallthru
        _
      // Predicated region
      $region101: #{forward.1} parent=11 // pred_check
        %p837 = pneg %p604
      $region102: #{forward.1} parent=11 // pred_check_branch
        %839 = sbr.rel (%p837) target = $region104
      $region103: #{forward.1} parent=11 // pred_region
        _
      $region104: #{forward.1} parent=11 // pred_fallthru
        _
      // Predicated region
      $region105: #{forward.1} parent=11 // pred_check
        %p840 = pneg %p625
      $region106: #{forward.1} parent=11 // pred_check_branch
        %842 = sbr.rel (%p840) target = $region108
      $region107: #{forward.1} parent=11 // pred_region
        _
      $region108: #{forward.1} parent=11 // pred_fallthru
        _
      // Predicated region
      $region109: #{forward.1} parent=11 // pred_check
        %p843 = pneg %p646
      $region110: #{forward.1} parent=11 // pred_check_branch
        %845 = sbr.rel (%p843) target = $region112
      $region111: #{forward.1} parent=11 // pred_region
        _
      $region112: #{forward.1} parent=11 // pred_fallthru
        _
      // Predicated region
      $region113: #{forward.1} parent=11 // pred_check
        %p846 = pneg %p667
      $region114: #{forward.1} parent=11 // pred_check_branch
        %848 = sbr.rel (%p846) target = $region116
      $region115: #{forward.1} parent=11 // pred_region
        _
      $region116: #{forward.1} parent=11 // pred_fallthru
        _
      // Predicated region
      $region117: #{forward.1} parent=11 // pred_check
        %p849 = pneg %p688
      $region118: #{forward.1} parent=11 // pred_check_branch
        %851 = sbr.rel (%p849) target = $region120
      $region119: #{forward.1} parent=11 // pred_region
        _
      $region120: #{forward.1} parent=11 // pred_fallthru
        _
      // Predicated region
      $region121: #{forward.1} parent=11 // pred_check
        %p852 = pneg %p709
      $region122: #{forward.1} parent=11 // pred_check_branch
        %854 = sbr.rel (%p852) target = $region124
      $region123: #{forward.1} parent=11 // pred_region
        _
      $region124: #{forward.1} parent=11 // pred_fallthru
        _
      // Predicated region
      $region125: #{forward.1} parent=11 // pred_check
        %p855 = pneg %p730
      $region126: #{forward.1} parent=11 // pred_check_branch
        %857 = sbr.rel (%p855) target = $region128
      $region127: #{forward.1} parent=11 // pred_region
        _
      $region128: #{forward.1} parent=11 // pred_fallthru
        _
    $region12: #{forward.1} parent=5 // pred_fallthru
      _
    %p858 = scmp.lt.s32.totalorder %s69, 2
    // Predicated region
    $region129: #{forward.1} parent=5 // pred_check
      %p859 = pneg %p858
    $region130: #{forward.1} parent=5 // pred_check_branch
      %861 = sbr.rel (%p859) target = $region132
    $region131: #{forward.1} parent=5 // pred_region
      // Predicated region
      $region133: #{forward.1} parent=131 // pred_check
        %p862 = pneg %p89
      $region134: #{forward.1} parent=131 // pred_check_branch
        %864 = sbr.rel (%p862) target = $region136
      $region135: #{forward.1} parent=131 // pred_region
        %p865 = scmp.lt.s32.totalorder %s69, 1
        %s866 = scalar_select %p865, %s69, 1
        %s867 = smul.addr %s866, 6
        %s868 = smul.addr %s867, 8
        %s869 = scalar_lea.vmem %s1, %s868
      $region136: #{forward.1} parent=131 // pred_fallthru
        _
      // Predicated region
      $region137: #{forward.1} parent=131 // pred_check
        %p870 = pneg %p115
      $region138: #{forward.1} parent=131 // pred_check_branch
        %872 = sbr.rel (%p870) target = $region140
      $region139: #{forward.1} parent=131 // pred_region
        %p873 = scmp.lt.s32.totalorder %s69, 1
        %s874 = scalar_select %p873, %s69, 1
        %s875 = smul.addr %s874, 2
        %s876 = smul.addr %s875, 2
        %s877 = scalar_lea.vmem %s3, %s876
      $region140: #{forward.1} parent=131 // pred_fallthru
        _
    $region132: #{forward.1} parent=5 // pred_fallthru
      _
    %p878 = scmp.le.s32.totalorder 1, %s69
    %p879 = scmp.lt.s32.totalorder %s69, 3
    %p880 = pnand %p878, %p879
    %p881 = pneg %p880
    // Predicated region
    $region141: #{forward.1} parent=5 // pred_check
      _
    $region142: #{forward.1} parent=5 // pred_check_branch
      %883 = sbr.rel (%p880) target = $region144
    $region143: #{forward.1} parent=5 // pred_region
      %s884 = ssub.s32 %s69, 1
      %p885 = scmp.lt.s32.totalorder %s74, 1
      %s886 = scalar_select %p885, %s74, 1
      %s887 = smul.addr %s886, 6
      %s888 = smul.addr %s887, 8
      %s889 = scalar_lea.vmem %s1, %s888
      %p890 = pneg %p95
      %p891 = pneg %p92
      %p892 = scmp.lt.s32.totalorder %s74, 1
      %s893 = scalar_select %p892, %s74, 1
      %s894 = smul.addr %s893, 2
      %s895 = smul.addr %s894, 2
      %s896 = scalar_lea.vmem %s3, %s895
      %p897 = pneg %p121
      %p898 = pneg %p118
      %p899 = pneg %p142
      %p900 = pneg %p139
      %p901 = pneg %p163
      %p902 = pneg %p160
      %p903 = pneg %p184
      %p904 = pneg %p181
      %p905 = pneg %p205
      %p906 = pneg %p202
      %p907 = pneg %p226
      %p908 = pneg %p223
      %p909 = pneg %p247
      %p910 = pneg %p244
      %p911 = pneg %p268
      %p912 = pneg %p265
      %p913 = pneg %p289
      %p914 = pneg %p286
      %p915 = pneg %p310
      %p916 = pneg %p307
      %p917 = pneg %p331
      %p918 = pneg %p328
      %p919 = pneg %p352
      %p920 = pneg %p349
      %p921 = pneg %p373
      %p922 = pneg %p370
      %p923 = pneg %p394
      %p924 = pneg %p391
      %p925 = pneg %p415
      %p926 = pneg %p412
      %p927 = pneg %p436
      %p928 = pneg %p433
      %p929 = pneg %p457
      %p930 = pneg %p454
      %p931 = pneg %p478
      %p932 = pneg %p475
      %p933 = pneg %p499
      %p934 = pneg %p496
      %p935 = pneg %p520
      %p936 = pneg %p517
      %p937 = pneg %p541
      %p938 = pneg %p538
      %p939 = pneg %p562
      %p940 = pneg %p559
      %p941 = pneg %p583
      %p942 = pneg %p580
      %p943 = pneg %p604
      %p944 = pneg %p601
      %p945 = pneg %p625
      %p946 = pneg %p622
      %p947 = pneg %p646
      %p948 = pneg %p643
      %p949 = pneg %p667
      %p950 = pneg %p664
      %p951 = pneg %p688
      %p952 = pneg %p685
      %p953 = pneg %p709
      %p954 = pneg %p706
      %p955 = pneg %p730
      %p956 = pneg %p727
      %p957 = pneg %p756
      %p958 = pneg %p753
      %p959 = scmp.lt.s32.totalorder %s74, 1
      %s960 = scalar_select %p959, %s74, 1
      %s961 = smul.addr %s960, 2
      %s962 = scalar_lea.vmem %s63, %s961
      %p963 = scmp.lt.s32.totalorder %s74, 1
      %s964 = scalar_select %p963, %s74, 1
      %s965 = smul.addr %s964, 6
      %s966 = smul.addr %s965, 8
      %s967 = scalar_lea.vmem %s1, %s966
      %p968 = scmp.lt.s32.totalorder %s74, 1
      %s969 = scalar_select %p968, %s74, 1
      %s970 = smul.addr %s969, 2
      %s971 = smul.addr %s970, 2
      %s972 = scalar_lea.vmem %s3, %s971
      %p973 = scmp.lt.s32.totalorder %s74, 1
      %s974 = scalar_select %p973, %s74, 1
      %s975 = smul.addr %s974, 2
      %s976 = scalar_lea.vmem %s63, %s975
      %v978 = vld [vmem:[%s967] sm:$0x1f]
      %v979 = vld [vmem:[%s967 + $0x8] sm:$0x1f]
      %v980 = vld [vmem:[%s967 + $0x10] sm:$0x1f]
      %v981 = vld [vmem:[%s967 + $0x18] sm:$0x1f]
      %v982 = vld [vmem:[%s967 + $0x20] sm:$0x1f]
      %v983 = vld [vmem:[%s967 + $0x28] sm:$0x1f]
      %v984 = vpack.c.bf16 %v978, %v978
      %v985 = vpack.c.bf16 %v979, %v979
      %v986 = vpack.c.bf16 %v980, %v980
      %v987 = vpack.c.bf16 %v981, %v981
      %v988 = vpack.c.bf16 %v982, %v982
      %v989 = vpack.c.bf16 %v983, %v983
      %v990 = vld [vmem:[%s5] sm:$0xff]
      %v991 = vld [vmem:[%s5 + $0x8] sm:$0xff]
      %v992 = vld [vmem:[%s5 + $0x10] sm:$0xff]
      %v993 = vld [vmem:[%s5 + $0x18] sm:$0xff]
      %v994 = vld [vmem:[%s5 + $0x20] sm:$0xff]
      %v995 = vld [vmem:[%s5 + $0x28] sm:$0xff]
      %v996 = vld [vmem:[%s5 + $0x30] sm:$0xff]
      %v997 = vld [vmem:[%s5 + $0x38] sm:$0xff]
      %v998 = vld [vmem:[%s5 + $0x40] sm:$0xff]
      %v999 = vld [vmem:[%s5 + $0x48] sm:$0xff]
      %v1000 = vld [vmem:[%s5 + $0x50] sm:$0xff]
      %v1001 = vld [vmem:[%s5 + $0x58] sm:$0xff]
      %v1002 = vld [vmem:[%s5 + $0x60] sm:$0xff]
      %v1003 = vld [vmem:[%s5 + $0x68] sm:$0xff]
      %v1004 = vld [vmem:[%s5 + $0x70] sm:$0xff]
      %v1005 = vld [vmem:[%s5 + $0x78] sm:$0xff]
      %v1006 = vld [vmem:[%s5 + $0x80] sm:$0xff]
      %v1007 = vld [vmem:[%s5 + $0x88] sm:$0xff]
      %v1008 = vld [vmem:[%s5 + $0x90] sm:$0xff]
      %v1009 = vld [vmem:[%s5 + $0x98] sm:$0xff]
      %v1010 = vld [vmem:[%s5 + $0xa0] sm:$0xff]
      %v1011 = vld [vmem:[%s5 + $0xa8] sm:$0xff]
      %v1012 = vld [vmem:[%s5 + $0xb0] sm:$0xff]
      %v1013 = vld [vmem:[%s5 + $0xb8] sm:$0xff]
      %v1014 = vld [vmem:[%s5 + $0xc0] sm:$0xff]
      %v1015 = vld [vmem:[%s5 + $0xc8] sm:$0xff]
      %v1016 = vld [vmem:[%s5 + $0xd0] sm:$0xff]
      %v1017 = vld [vmem:[%s5 + $0xd8] sm:$0xff]
      %v1018 = vld [vmem:[%s5 + $0xe0] sm:$0xff]
      %v1019 = vld [vmem:[%s5 + $0xe8] sm:$0xff]
      %v1020 = vld [vmem:[%s5 + $0xf0] sm:$0xff]
      %v1021 = vld [vmem:[%s5 + $0xf8] sm:$0xff]
      %v1022 = vld [vmem:[%s5 + $0x100] sm:$0xff]
      %v1023 = vld [vmem:[%s5 + $0x108] sm:$0xff]
      %v1024 = vld [vmem:[%s5 + $0x110] sm:$0xff]
      %v1025 = vld [vmem:[%s5 + $0x118] sm:$0xff]
      %v1026 = vld [vmem:[%s5 + $0x120] sm:$0xff]
      %v1027 = vld [vmem:[%s5 + $0x128] sm:$0xff]
      %v1028 = vld [vmem:[%s5 + $0x130] sm:$0xff]
      %v1029 = vld [vmem:[%s5 + $0x138] sm:$0xff]
      %v1030 = vld [vmem:[%s5 + $0x140] sm:$0xff]
      %v1031 = vld [vmem:[%s5 + $0x148] sm:$0xff]
      %v1032 = vld [vmem:[%s5 + $0x150] sm:$0xff]
      %v1033 = vld [vmem:[%s5 + $0x158] sm:$0xff]
      %v1034 = vld [vmem:[%s5 + $0x160] sm:$0xff]
      %v1035 = vld [vmem:[%s5 + $0x168] sm:$0xff]
      %v1036 = vld [vmem:[%s5 + $0x170] sm:$0xff]
      %v1037 = vld [vmem:[%s5 + $0x178] sm:$0xff]
      %v1038 = vld [vmem:[%s5 + $0x180] sm:$0xff]
      %v1039 = vld [vmem:[%s5 + $0x188] sm:$0xff]
      %v1040 = vld [vmem:[%s5 + $0x190] sm:$0xff]
      %v1041 = vld [vmem:[%s5 + $0x198] sm:$0xff]
      %v1042 = vld [vmem:[%s5 + $0x1a0] sm:$0xff]
      %v1043 = vld [vmem:[%s5 + $0x1a8] sm:$0xff]
      %v1044 = vld [vmem:[%s5 + $0x1b0] sm:$0xff]
      %v1045 = vld [vmem:[%s5 + $0x1b8] sm:$0xff]
      %v1046 = vld [vmem:[%s5 + $0x1c0] sm:$0xff]
      %v1047 = vld [vmem:[%s5 + $0x1c8] sm:$0xff]
      %v1048 = vld [vmem:[%s5 + $0x1d0] sm:$0xff]
      %v1049 = vld [vmem:[%s5 + $0x1d8] sm:$0xff]
      %v1050 = vld [vmem:[%s5 + $0x1e0] sm:$0xff]
      %v1051 = vld [vmem:[%s5 + $0x1e8] sm:$0xff]
      %v1052 = vld [vmem:[%s5 + $0x1f0] sm:$0xff]
      %v1053 = vld [vmem:[%s5 + $0x1f8] sm:$0xff]
      %v1054 = vld [vmem:[%s5 + $0x200] sm:$0xff]
      %v1055 = vld [vmem:[%s5 + $0x208] sm:$0xff]
      %v1056 = vld [vmem:[%s5 + $0x210] sm:$0xff]
      %v1057 = vld [vmem:[%s5 + $0x218] sm:$0xff]
      %v1058 = vld [vmem:[%s5 + $0x220] sm:$0xff]
      %v1059 = vld [vmem:[%s5 + $0x228] sm:$0xff]
      %v1060 = vld [vmem:[%s5 + $0x230] sm:$0xff]
      %v1061 = vld [vmem:[%s5 + $0x238] sm:$0xff]
      %v1062 = vld [vmem:[%s5 + $0x240] sm:$0xff]
      %v1063 = vld [vmem:[%s5 + $0x248] sm:$0xff]
      %v1064 = vld [vmem:[%s5 + $0x250] sm:$0xff]
      %v1065 = vld [vmem:[%s5 + $0x258] sm:$0xff]
      %v1066 = vld [vmem:[%s5 + $0x260] sm:$0xff]
      %v1067 = vld [vmem:[%s5 + $0x268] sm:$0xff]
      %v1068 = vld [vmem:[%s5 + $0x270] sm:$0xff]
      %v1069 = vld [vmem:[%s5 + $0x278] sm:$0xff]
      %v1070 = vld [vmem:[%s5 + $0x280] sm:$0xff]
      %v1071 = vld [vmem:[%s5 + $0x288] sm:$0xff]
      %v1072 = vld [vmem:[%s5 + $0x290] sm:$0xff]
      %v1073 = vld [vmem:[%s5 + $0x298] sm:$0xff]
      %v1074 = vld [vmem:[%s5 + $0x2a0] sm:$0xff]
      %v1075 = vld [vmem:[%s5 + $0x2a8] sm:$0xff]
      %v1076 = vld [vmem:[%s5 + $0x2b0] sm:$0xff]
      %v1077 = vld [vmem:[%s5 + $0x2b8] sm:$0xff]
      %v1078 = vld [vmem:[%s5 + $0x2c0] sm:$0xff]
      %v1079 = vld [vmem:[%s5 + $0x2c8] sm:$0xff]
      %v1080 = vld [vmem:[%s5 + $0x2d0] sm:$0xff]
      %v1081 = vld [vmem:[%s5 + $0x2d8] sm:$0xff]
      %v1082 = vld [vmem:[%s5 + $0x2e0] sm:$0xff]
      %v1083 = vld [vmem:[%s5 + $0x2e8] sm:$0xff]
      %v1084 = vld [vmem:[%s5 + $0x2f0] sm:$0xff]
      %v1085 = vld [vmem:[%s5 + $0x2f8] sm:$0xff]
      %v1086 = vld [vmem:[%s7] sm:$0x1f]
      %v1087 = vld [vmem:[%s7 + $0x8] sm:$0x1f]
      %v1184 = vunpack.c.l.b16 %v990
      %v1185 = vunpack.c.h.b16 %v990
      %v1186 = vunpack.c.l.b16 %v991
      %v1187 = vunpack.c.h.b16 %v991
      %v1188 = vunpack.c.l.b16 %v992
      %v1189 = vunpack.c.h.b16 %v992
      %v1190 = vunpack.c.l.b16 %v993
      %v1191 = vunpack.c.h.b16 %v993
      %v1192 = vunpack.c.l.b16 %v994
      %v1193 = vunpack.c.h.b16 %v994
      %v1194 = vunpack.c.l.b16 %v995
      %v1195 = vunpack.c.h.b16 %v995
      %v1196 = vunpack.c.l.b16 %v996
      %v1197 = vunpack.c.h.b16 %v996
      %v1198 = vunpack.c.l.b16 %v997
      %v1199 = vunpack.c.h.b16 %v997
      %v1200 = vunpack.c.l.b16 %v998
      %v1201 = vunpack.c.h.b16 %v998
      %v1202 = vunpack.c.l.b16 %v999
      %v1203 = vunpack.c.h.b16 %v999
      %v1204 = vunpack.c.l.b16 %v1000
      %v1205 = vunpack.c.h.b16 %v1000
      %v1206 = vunpack.c.l.b16 %v1001
      %v1207 = vunpack.c.h.b16 %v1001
      %v1208 = vunpack.c.l.b16 %v1002
      %v1209 = vunpack.c.h.b16 %v1002
      %v1210 = vunpack.c.l.b16 %v1003
      %v1211 = vunpack.c.h.b16 %v1003
      %v1212 = vunpack.c.l.b16 %v1004
      %v1213 = vunpack.c.h.b16 %v1004
      %v1214 = vunpack.c.l.b16 %v1005
      %v1215 = vunpack.c.h.b16 %v1005
      %v1216 = vunpack.c.l.b16 %v1006
      %v1217 = vunpack.c.h.b16 %v1006
      %v1218 = vunpack.c.l.b16 %v1007
      %v1219 = vunpack.c.h.b16 %v1007
      %v1220 = vunpack.c.l.b16 %v1008
      %v1221 = vunpack.c.h.b16 %v1008
      %v1222 = vunpack.c.l.b16 %v1009
      %v1223 = vunpack.c.h.b16 %v1009
      %v1224 = vunpack.c.l.b16 %v1010
      %v1225 = vunpack.c.h.b16 %v1010
      %v1226 = vunpack.c.l.b16 %v1011
      %v1227 = vunpack.c.h.b16 %v1011
      %v1228 = vunpack.c.l.b16 %v1012
      %v1229 = vunpack.c.h.b16 %v1012
      %v1230 = vunpack.c.l.b16 %v1013
      %v1231 = vunpack.c.h.b16 %v1013
      %v1232 = vunpack.c.l.b16 %v1014
      %v1233 = vunpack.c.h.b16 %v1014
      %v1234 = vunpack.c.l.b16 %v1015
      %v1235 = vunpack.c.h.b16 %v1015
      %v1236 = vunpack.c.l.b16 %v1016
      %v1237 = vunpack.c.h.b16 %v1016
      %v1238 = vunpack.c.l.b16 %v1017
      %v1239 = vunpack.c.h.b16 %v1017
      %v1240 = vunpack.c.l.b16 %v1018
      %v1241 = vunpack.c.h.b16 %v1018
      %v1242 = vunpack.c.l.b16 %v1019
      %v1243 = vunpack.c.h.b16 %v1019
      %v1244 = vunpack.c.l.b16 %v1020
      %v1245 = vunpack.c.h.b16 %v1020
      %v1246 = vunpack.c.l.b16 %v1021
      %v1247 = vunpack.c.h.b16 %v1021
      %v1248 = vunpack.c.l.b16 %v1022
      %v1249 = vunpack.c.h.b16 %v1022
      %v1250 = vunpack.c.l.b16 %v1023
      %v1251 = vunpack.c.h.b16 %v1023
      %v1252 = vunpack.c.l.b16 %v1024
      %v1253 = vunpack.c.h.b16 %v1024
      %v1254 = vunpack.c.l.b16 %v1025
      %v1255 = vunpack.c.h.b16 %v1025
      %v1256 = vunpack.c.l.b16 %v1026
      %v1257 = vunpack.c.h.b16 %v1026
      %v1258 = vunpack.c.l.b16 %v1027
      %v1259 = vunpack.c.h.b16 %v1027
      %v1260 = vunpack.c.l.b16 %v1028
      %v1261 = vunpack.c.h.b16 %v1028
      %v1262 = vunpack.c.l.b16 %v1029
      %v1263 = vunpack.c.h.b16 %v1029
      %v1264 = vunpack.c.l.b16 %v1030
      %v1265 = vunpack.c.h.b16 %v1030
      %v1266 = vunpack.c.l.b16 %v1031
      %v1267 = vunpack.c.h.b16 %v1031
      %v1268 = vunpack.c.l.b16 %v1032
      %v1269 = vunpack.c.h.b16 %v1032
      %v1270 = vunpack.c.l.b16 %v1033
      %v1271 = vunpack.c.h.b16 %v1033
      %v1272 = vunpack.c.l.b16 %v1034
      %v1273 = vunpack.c.h.b16 %v1034
      %v1274 = vunpack.c.l.b16 %v1035
      %v1275 = vunpack.c.h.b16 %v1035
      %v1276 = vunpack.c.l.b16 %v1036
      %v1277 = vunpack.c.h.b16 %v1036
      %v1278 = vunpack.c.l.b16 %v1037
      %v1279 = vunpack.c.h.b16 %v1037
      %v1280 = vunpack.c.l.b16 %v1038
      %v1281 = vunpack.c.h.b16 %v1038
      %v1282 = vunpack.c.l.b16 %v1039
      %v1283 = vunpack.c.h.b16 %v1039
      %v1284 = vunpack.c.l.b16 %v1040
      %v1285 = vunpack.c.h.b16 %v1040
      %v1286 = vunpack.c.l.b16 %v1041
      %v1287 = vunpack.c.h.b16 %v1041
      %v1288 = vunpack.c.l.b16 %v1042
      %v1289 = vunpack.c.h.b16 %v1042
      %v1290 = vunpack.c.l.b16 %v1043
      %v1291 = vunpack.c.h.b16 %v1043
      %v1292 = vunpack.c.l.b16 %v1044
      %v1293 = vunpack.c.h.b16 %v1044
      %v1294 = vunpack.c.l.b16 %v1045
      %v1295 = vunpack.c.h.b16 %v1045
      %v1296 = vunpack.c.l.b16 %v1046
      %v1297 = vunpack.c.h.b16 %v1046
      %v1298 = vunpack.c.l.b16 %v1047
      %v1299 = vunpack.c.h.b16 %v1047
      %v1300 = vunpack.c.l.b16 %v1048
      %v1301 = vunpack.c.h.b16 %v1048
      %v1302 = vunpack.c.l.b16 %v1049
      %v1303 = vunpack.c.h.b16 %v1049
      %v1304 = vunpack.c.l.b16 %v1050
      %v1305 = vunpack.c.h.b16 %v1050
      %v1306 = vunpack.c.l.b16 %v1051
      %v1307 = vunpack.c.h.b16 %v1051
      %v1308 = vunpack.c.l.b16 %v1052
      %v1309 = vunpack.c.h.b16 %v1052
      %v1310 = vunpack.c.l.b16 %v1053
      %v1311 = vunpack.c.h.b16 %v1053
      %v1312 = vunpack.c.l.b16 %v1054
      %v1313 = vunpack.c.h.b16 %v1054
      %v1314 = vunpack.c.l.b16 %v1055
      %v1315 = vunpack.c.h.b16 %v1055
      %v1316 = vunpack.c.l.b16 %v1056
      %v1317 = vunpack.c.h.b16 %v1056
      %v1318 = vunpack.c.l.b16 %v1057
      %v1319 = vunpack.c.h.b16 %v1057
      %v1320 = vunpack.c.l.b16 %v1058
      %v1321 = vunpack.c.h.b16 %v1058
      %v1322 = vunpack.c.l.b16 %v1059
      %v1323 = vunpack.c.h.b16 %v1059
      %v1324 = vunpack.c.l.b16 %v1060
      %v1325 = vunpack.c.h.b16 %v1060
      %v1326 = vunpack.c.l.b16 %v1061
      %v1327 = vunpack.c.h.b16 %v1061
      %v1328 = vunpack.c.l.b16 %v1062
      %v1329 = vunpack.c.h.b16 %v1062
      %v1330 = vunpack.c.l.b16 %v1063
      %v1331 = vunpack.c.h.b16 %v1063
      %v1332 = vunpack.c.l.b16 %v1064
      %v1333 = vunpack.c.h.b16 %v1064
      %v1334 = vunpack.c.l.b16 %v1065
      %v1335 = vunpack.c.h.b16 %v1065
      %v1336 = vunpack.c.l.b16 %v1066
      %v1337 = vunpack.c.h.b16 %v1066
      %v1338 = vunpack.c.l.b16 %v1067
      %v1339 = vunpack.c.h.b16 %v1067
      %v1340 = vunpack.c.l.b16 %v1068
      %v1341 = vunpack.c.h.b16 %v1068
      %v1342 = vunpack.c.l.b16 %v1069
      %v1343 = vunpack.c.h.b16 %v1069
      %v1344 = vunpack.c.l.b16 %v1070
      %v1345 = vunpack.c.h.b16 %v1070
      %v1346 = vunpack.c.l.b16 %v1071
      %v1347 = vunpack.c.h.b16 %v1071
      %v1348 = vunpack.c.l.b16 %v1072
      %v1349 = vunpack.c.h.b16 %v1072
      %v1350 = vunpack.c.l.b16 %v1073
      %v1351 = vunpack.c.h.b16 %v1073
      %v1352 = vunpack.c.l.b16 %v1074
      %v1353 = vunpack.c.h.b16 %v1074
      %v1354 = vunpack.c.l.b16 %v1075
      %v1355 = vunpack.c.h.b16 %v1075
      %v1356 = vunpack.c.l.b16 %v1076
      %v1357 = vunpack.c.h.b16 %v1076
      %v1358 = vunpack.c.l.b16 %v1077
      %v1359 = vunpack.c.h.b16 %v1077
      %v1360 = vunpack.c.l.b16 %v1078
      %v1361 = vunpack.c.h.b16 %v1078
      %v1362 = vunpack.c.l.b16 %v1079
      %v1363 = vunpack.c.h.b16 %v1079
      %v1364 = vunpack.c.l.b16 %v1080
      %v1365 = vunpack.c.h.b16 %v1080
      %v1366 = vunpack.c.l.b16 %v1081
      %v1367 = vunpack.c.h.b16 %v1081
      %v1368 = vunpack.c.l.b16 %v1082
      %v1369 = vunpack.c.h.b16 %v1082
      %v1370 = vunpack.c.l.b16 %v1083
      %v1371 = vunpack.c.h.b16 %v1083
      %v1372 = vunpack.c.l.b16 %v1084
      %v1373 = vunpack.c.h.b16 %v1084
      %v1374 = vunpack.c.l.b16 %v1085
      %v1375 = vunpack.c.h.b16 %v1085
      %v1376 = vpack.c.b16 %v1186, %v1184
      %v1377 = vpack.c.b16 %v1187, %v1185
      %v1378 = vpack.c.b16 %v1190, %v1188
      %v1379 = vpack.c.b16 %v1191, %v1189
      %v1380 = vpack.c.b16 %v1194, %v1192
      %v1381 = vpack.c.b16 %v1195, %v1193
      %v1382 = vpack.c.b16 %v1198, %v1196
      %v1383 = vpack.c.b16 %v1199, %v1197
      %v1384 = vpack.c.b16 %v1202, %v1200
      %v1385 = vpack.c.b16 %v1203, %v1201
      %v1386 = vpack.c.b16 %v1206, %v1204
      %v1387 = vpack.c.b16 %v1207, %v1205
      %v1388 = vpack.c.b16 %v1210, %v1208
      %v1389 = vpack.c.b16 %v1211, %v1209
      %v1390 = vpack.c.b16 %v1214, %v1212
      %v1391 = vpack.c.b16 %v1215, %v1213
      %v1392 = vpack.c.b16 %v1218, %v1216
      %v1393 = vpack.c.b16 %v1219, %v1217
      %v1394 = vpack.c.b16 %v1222, %v1220
      %v1395 = vpack.c.b16 %v1223, %v1221
      %v1396 = vpack.c.b16 %v1226, %v1224
      %v1397 = vpack.c.b16 %v1227, %v1225
      %v1398 = vpack.c.b16 %v1230, %v1228
      %v1399 = vpack.c.b16 %v1231, %v1229
      %v1400 = vpack.c.b16 %v1234, %v1232
      %v1401 = vpack.c.b16 %v1235, %v1233
      %v1402 = vpack.c.b16 %v1238, %v1236
      %v1403 = vpack.c.b16 %v1239, %v1237
      %v1404 = vpack.c.b16 %v1242, %v1240
      %v1405 = vpack.c.b16 %v1243, %v1241
      %v1406 = vpack.c.b16 %v1246, %v1244
      %v1407 = vpack.c.b16 %v1247, %v1245
      %v1408 = vpack.c.b16 %v1250, %v1248
      %v1409 = vpack.c.b16 %v1251, %v1249
      %v1410 = vpack.c.b16 %v1254, %v1252
      %v1411 = vpack.c.b16 %v1255, %v1253
      %v1412 = vpack.c.b16 %v1258, %v1256
      %v1413 = vpack.c.b16 %v1259, %v1257
      %v1414 = vpack.c.b16 %v1262, %v1260
      %v1415 = vpack.c.b16 %v1263, %v1261
      %v1416 = vpack.c.b16 %v1266, %v1264
      %v1417 = vpack.c.b16 %v1267, %v1265
      %v1418 = vpack.c.b16 %v1270, %v1268
      %v1419 = vpack.c.b16 %v1271, %v1269
      %v1420 = vpack.c.b16 %v1274, %v1272
      %v1421 = vpack.c.b16 %v1275, %v1273
      %v1422 = vpack.c.b16 %v1278, %v1276
      %v1423 = vpack.c.b16 %v1279, %v1277
      %v1424 = vpack.c.b16 %v1282, %v1280
      %v1425 = vpack.c.b16 %v1283, %v1281
      %v1426 = vpack.c.b16 %v1286, %v1284
      %v1427 = vpack.c.b16 %v1287, %v1285
      %v1428 = vpack.c.b16 %v1290, %v1288
      %v1429 = vpack.c.b16 %v1291, %v1289
      %v1430 = vpack.c.b16 %v1294, %v1292
      %v1431 = vpack.c.b16 %v1295, %v1293
      %v1432 = vpack.c.b16 %v1298, %v1296
      %v1433 = vpack.c.b16 %v1299, %v1297
      %v1434 = vpack.c.b16 %v1302, %v1300
      %v1435 = vpack.c.b16 %v1303, %v1301
      %v1436 = vpack.c.b16 %v1306, %v1304
      %v1437 = vpack.c.b16 %v1307, %v1305
      %v1438 = vpack.c.b16 %v1310, %v1308
      %v1439 = vpack.c.b16 %v1311, %v1309
      %v1440 = vpack.c.b16 %v1314, %v1312
      %v1441 = vpack.c.b16 %v1315, %v1313
      %v1442 = vpack.c.b16 %v1318, %v1316
      %v1443 = vpack.c.b16 %v1319, %v1317
      %v1444 = vpack.c.b16 %v1322, %v1320
      %v1445 = vpack.c.b16 %v1323, %v1321
      %v1446 = vpack.c.b16 %v1326, %v1324
      %v1447 = vpack.c.b16 %v1327, %v1325
      %v1448 = vpack.c.b16 %v1330, %v1328
      %v1449 = vpack.c.b16 %v1331, %v1329
      %v1450 = vpack.c.b16 %v1334, %v1332
      %v1451 = vpack.c.b16 %v1335, %v1333
      %v1452 = vpack.c.b16 %v1338, %v1336
      %v1453 = vpack.c.b16 %v1339, %v1337
      %v1454 = vpack.c.b16 %v1342, %v1340
      %v1455 = vpack.c.b16 %v1343, %v1341
      %v1456 = vpack.c.b16 %v1346, %v1344
      %v1457 = vpack.c.b16 %v1347, %v1345
      %v1458 = vpack.c.b16 %v1350, %v1348
      %v1459 = vpack.c.b16 %v1351, %v1349
      %v1460 = vpack.c.b16 %v1354, %v1352
      %v1461 = vpack.c.b16 %v1355, %v1353
      %v1462 = vpack.c.b16 %v1358, %v1356
      %v1463 = vpack.c.b16 %v1359, %v1357
      %v1464 = vpack.c.b16 %v1362, %v1360
      %v1465 = vpack.c.b16 %v1363, %v1361
      %v1466 = vpack.c.b16 %v1366, %v1364
      %v1467 = vpack.c.b16 %v1367, %v1365
      %v1468 = vpack.c.b16 %v1370, %v1368
      %v1469 = vpack.c.b16 %v1371, %v1369
      %v1470 = vpack.c.b16 %v1374, %v1372
      %v1471 = vpack.c.b16 %v1375, %v1373
      %1568 = vmatprep.subr.bf16.mxu0 %v1377
      %1569 = vmatpush1.bf16.msra.mxu0 %v1376
      %1570 = vmatprep.subr.bf16.mxu0 %v1379
      %1571 = vmatpush1.bf16.msra.mxu0 %v1378
      %1572 = vmatprep.subr.bf16.mxu0 %v1381
      %1573 = vmatpush1.bf16.msra.mxu0 %v1380
      %1574 = vmatprep.subr.bf16.mxu0 %v1383
      %1575 = vmatpush1.bf16.msra.mxu0 %v1382
      %1576 = vmatprep.subr.bf16.mxu0 %v1385
      %1577 = vmatpush1.bf16.msra.mxu0 %v1384
      %1578 = vmatprep.subr.bf16.mxu0 %v1387
      %1579 = vmatpush1.bf16.msra.mxu0 %v1386
      %1580 = vmatprep.subr.bf16.mxu0 %v1389
      %1581 = vmatpush1.bf16.msra.mxu0 %v1388
      %1582 = vmatprep.subr.bf16.mxu0 %v1391
      %1583 = vmatpush1.bf16.msra.mxu0 %v1390
      %1584 = vmatprep.subr.bf16.mxu0 %v1393
      %1585 = vmatpush1.bf16.msra.mxu0 %v1392
      %1586 = vmatprep.subr.bf16.mxu0 %v1395
      %1587 = vmatpush1.bf16.msra.mxu0 %v1394
      %1588 = vmatprep.subr.bf16.mxu0 %v1397
      %1589 = vmatpush1.bf16.msra.mxu0 %v1396
      %1590 = vmatprep.subr.bf16.mxu0 %v1399
      %1591 = vmatpush1.bf16.msra.mxu0 %v1398
      %1592 = vmatprep.subr.bf16.mxu0 %v1401
      %1593 = vmatpush1.bf16.msra.mxu0 %v1400
      %1594 = vmatprep.subr.bf16.mxu0 %v1403
      %1595 = vmatpush1.bf16.msra.mxu0 %v1402
      %1596 = vmatprep.subr.bf16.mxu0 %v1405
      %1597 = vmatpush1.bf16.msra.mxu0 %v1404
      %1598 = vmatprep.subr.bf16.mxu0 %v1407
      %1599 = vmatpush1.bf16.msra.mxu0 %v1406
      %1600 = vmatprep.mubr.bf16.mxu0 %v985
      %1601 = vmatmul.mubr.bf16.gmra.mrb[0].mxu0 %v984
      %v1602 = vpop.f32.mrb[0].mxu0
      %v1603 = vadd.f32 %v1086, %v1602
      %v1604 = vpop.f32.mrb[0].mxu0
      %v1605 = vadd.f32 %v1087, %v1604
      %v1606 = vpop.f32.mrb[0].mxu0
      %v1607 = vpop.f32.mrb[0].mxu0
      %1608 = vdwg.mxu0
      %1609 = vmatprep.subr.bf16.mxu0 %v1409
      %1610 = vmatpush1.bf16.msra.mxu0 %v1408
      %1611 = vmatprep.subr.bf16.mxu0 %v1411
      %1612 = vmatpush1.bf16.msra.mxu0 %v1410
      %1613 = vmatprep.subr.bf16.mxu0 %v1413
      %1614 = vmatpush1.bf16.msra.mxu0 %v1412
      %1615 = vmatprep.subr.bf16.mxu0 %v1415
      %1616 = vmatpush1.bf16.msra.mxu0 %v1414
      %1617 = vmatprep.subr.bf16.mxu0 %v1417
      %1618 = vmatpush1.bf16.msra.mxu0 %v1416
      %1619 = vmatprep.subr.bf16.mxu0 %v1419
      %1620 = vmatpush1.bf16.msra.mxu0 %v1418
      %1621 = vmatprep.subr.bf16.mxu0 %v1421
      %1622 = vmatpush1.bf16.msra.mxu0 %v1420
      %1623 = vmatprep.subr.bf16.mxu0 %v1423
      %1624 = vmatpush1.bf16.msra.mxu0 %v1422
      %1625 = vmatprep.subr.bf16.mxu0 %v1425
      %1626 = vmatpush1.bf16.msra.mxu0 %v1424
      %1627 = vmatprep.subr.bf16.mxu0 %v1427
      %1628 = vmatpush1.bf16.msra.mxu0 %v1426
      %1629 = vmatprep.subr.bf16.mxu0 %v1429
      %1630 = vmatpush1.bf16.msra.mxu0 %v1428
      %1631 = vmatprep.subr.bf16.mxu0 %v1431
      %1632 = vmatpush1.bf16.msra.mxu0 %v1430
      %1633 = vmatprep.subr.bf16.mxu0 %v1433
      %1634 = vmatpush1.bf16.msra.mxu0 %v1432
      %1635 = vmatprep.subr.bf16.mxu0 %v1435
      %1636 = vmatpush1.bf16.msra.mxu0 %v1434
      %1637 = vmatprep.subr.bf16.mxu0 %v1437
      %1638 = vmatpush1.bf16.msra.mxu0 %v1436
      %1639 = vmatprep.subr.bf16.mxu0 %v1439
      %1640 = vmatpush1.bf16.msra.mxu0 %v1438
      %1641 = vmatprep.mubr.bf16.mxu0 %v987
      %1642 = vmatmul.mubr.bf16.gmra.mrb[0].mxu0 %v986
      %v1643 = vpop.f32.mrb[0].mxu0
      %v1644 = vadd.f32 %v1603, %v1643
      %v1645 = vpop.f32.mrb[0].mxu0
      %v1646 = vadd.f32 %v1605, %v1645
      %v1647 = vpop.f32.mrb[0].mxu0
      %v1648 = vpop.f32.mrb[0].mxu0
      %1649 = vdwg.mxu0
      %1650 = vmatprep.subr.bf16.mxu0 %v1441
      %1651 = vmatpush1.bf16.msra.mxu0 %v1440
      %1652 = vmatprep.subr.bf16.mxu0 %v1443
      %1653 = vmatpush1.bf16.msra.mxu0 %v1442
      %1654 = vmatprep.subr.bf16.mxu0 %v1445
      %1655 = vmatpush1.bf16.msra.mxu0 %v1444
      %1656 = vmatprep.subr.bf16.mxu0 %v1447
      %1657 = vmatpush1.bf16.msra.mxu0 %v1446
      %1658 = vmatprep.subr.bf16.mxu0 %v1449
      %1659 = vmatpush1.bf16.msra.mxu0 %v1448
      %1660 = vmatprep.subr.bf16.mxu0 %v1451
      %1661 = vmatpush1.bf16.msra.mxu0 %v1450
      %1662 = vmatprep.subr.bf16.mxu0 %v1453
      %1663 = vmatpush1.bf16.msra.mxu0 %v1452
      %1664 = vmatprep.subr.bf16.mxu0 %v1455
      %1665 = vmatpush1.bf16.msra.mxu0 %v1454
      %1666 = vmatprep.subr.bf16.mxu0 %v1457
      %1667 = vmatpush1.bf16.msra.mxu0 %v1456
      %1668 = vmatprep.subr.bf16.mxu0 %v1459
      %1669 = vmatpush1.bf16.msra.mxu0 %v1458
      %1670 = vmatprep.subr.bf16.mxu0 %v1461
      %1671 = vmatpush1.bf16.msra.mxu0 %v1460
      %1672 = vmatprep.subr.bf16.mxu0 %v1463
      %1673 = vmatpush1.bf16.msra.mxu0 %v1462
      %1674 = vmatprep.subr.bf16.mxu0 %v1465
      %1675 = vmatpush1.bf16.msra.mxu0 %v1464
      %1676 = vmatprep.subr.bf16.mxu0 %v1467
      %1677 = vmatpush1.bf16.msra.mxu0 %v1466
      %1678 = vmatprep.subr.bf16.mxu0 %v1469
      %1679 = vmatpush1.bf16.msra.mxu0 %v1468
      %1680 = vmatprep.subr.bf16.mxu0 %v1471
      %1681 = vmatpush1.bf16.msra.mxu0 %v1470
      %1682 = vmatprep.mubr.bf16.mxu0 %v989
      %1683 = vmatmul.mubr.bf16.gmra.mrb[0].mxu0 %v988
      %v1684 = vpop.f32.mrb[0].mxu0
      %v1685 = vadd.f32 %v1644, %v1684
      %v1686 = vpop.f32.mrb[0].mxu0
      %v1687 = vadd.f32 %v1646, %v1686
      %v1688 = vpop.f32.mrb[0].mxu0
      %v1689 = vpop.f32.mrb[0].mxu0
      %1690 = vdwg.mxu0
      %v1691 = vpack.c.bf16 %v1685, %v1685
      %v1692 = vpack.c.bf16 %v1687, %v1687
      %v1693 = vld [vmem:[%s972] sm:$0xf]
      %v1696 = vunpack.c.l.s4 1983009808
      %v1697 = vunpack.c.0.s8 %v1696
      %v1698 = vlaneseq
      %v1699 = vshrl.u32 %v1698, 7
      %v1700 = vsub.s32 %v1697, %v1699
      %v1701 = vrot.slane %v1693, %v1700
      %v1702 = vcombine.high %v1701, %v1701
      %v1705 = vpack.c.bf16 %v1701, %v1701
      %v1706 = vpack.c.bf16 %v1702, %v1702
      %v1707 = vld [vmem:[%s9] sm:$0xff]
      %v1708 = vld [vmem:[%s9 + $0x8] sm:$0xff]
      %v1709 = vld [vmem:[%s9 + $0x10] sm:$0xff]
      %v1710 = vld [vmem:[%s9 + $0x18] sm:$0xff]
      %v1711 = vld [vmem:[%s9 + $0x20] sm:$0xff]
      %v1712 = vld [vmem:[%s9 + $0x28] sm:$0xff]
      %v1713 = vld [vmem:[%s9 + $0x30] sm:$0xff]
      %v1714 = vld [vmem:[%s9 + $0x38] sm:$0xff]
      %v1715 = vld [vmem:[%s9 + $0x40] sm:$0xff]
      %v1716 = vld [vmem:[%s9 + $0x48] sm:$0xff]
      %v1717 = vld [vmem:[%s9 + $0x50] sm:$0xff]
      %v1718 = vld [vmem:[%s9 + $0x58] sm:$0xff]
      %v1719 = vld [vmem:[%s9 + $0x60] sm:$0xff]
      %v1720 = vld [vmem:[%s9 + $0x68] sm:$0xff]
      %v1721 = vld [vmem:[%s9 + $0x70] sm:$0xff]
      %v1722 = vld [vmem:[%s9 + $0x78] sm:$0xff]
      %v1723 = vld [vmem:[%s9 + $0x80] sm:$0xff]
      %v1724 = vld [vmem:[%s9 + $0x88] sm:$0xff]
      %v1725 = vld [vmem:[%s9 + $0x90] sm:$0xff]
      %v1726 = vld [vmem:[%s9 + $0x98] sm:$0xff]
      %v1727 = vld [vmem:[%s9 + $0xa0] sm:$0xff]
      %v1728 = vld [vmem:[%s9 + $0xa8] sm:$0xff]
      %v1729 = vld [vmem:[%s9 + $0xb0] sm:$0xff]
      %v1730 = vld [vmem:[%s9 + $0xb8] sm:$0xff]
      %v1731 = vld [vmem:[%s11] sm:$0x3]
      %v1733 = vlaneseq
      %v1734 = vshrl.u32 %v1733, 7
      %v1735 = vsub.s32 0, %v1734
      %v1736 = vrot.slane %v1731, %v1735
      %v1737 = vlaneseq
      %v1738 = vshrl.u32 %v1737, 7
      %v1739 = vsub.s32 1, %v1738
      %v1740 = vrot.slane %v1731, %v1739
      %v1767 = vunpack.c.l.b16 %v1707
      %v1768 = vunpack.c.h.b16 %v1707
      %v1769 = vunpack.c.l.b16 %v1708
      %v1770 = vunpack.c.h.b16 %v1708
      %v1771 = vunpack.c.l.b16 %v1709
      %v1772 = vunpack.c.h.b16 %v1709
      %v1773 = vunpack.c.l.b16 %v1710
      %v1774 = vunpack.c.h.b16 %v1710
      %v1775 = vunpack.c.l.b16 %v1711
      %v1776 = vunpack.c.h.b16 %v1711
      %v1777 = vunpack.c.l.b16 %v1712
      %v1778 = vunpack.c.h.b16 %v1712
      %v1779 = vunpack.c.l.b16 %v1713
      %v1780 = vunpack.c.h.b16 %v1713
      %v1781 = vunpack.c.l.b16 %v1714
      %v1782 = vunpack.c.h.b16 %v1714
      %v1783 = vunpack.c.l.b16 %v1715
      %v1784 = vunpack.c.h.b16 %v1715
      %v1785 = vunpack.c.l.b16 %v1716
      %v1786 = vunpack.c.h.b16 %v1716
      %v1787 = vunpack.c.l.b16 %v1717
      %v1788 = vunpack.c.h.b16 %v1717
      %v1789 = vunpack.c.l.b16 %v1718
      %v1790 = vunpack.c.h.b16 %v1718
      %v1791 = vunpack.c.l.b16 %v1719
      %v1792 = vunpack.c.h.b16 %v1719
      %v1793 = vunpack.c.l.b16 %v1720
      %v1794 = vunpack.c.h.b16 %v1720
      %v1795 = vunpack.c.l.b16 %v1721
      %v1796 = vunpack.c.h.b16 %v1721
      %v1797 = vunpack.c.l.b16 %v1722
      %v1798 = vunpack.c.h.b16 %v1722
      %v1799 = vunpack.c.l.b16 %v1723
      %v1800 = vunpack.c.h.b16 %v1723
      %v1801 = vunpack.c.l.b16 %v1724
      %v1802 = vunpack.c.h.b16 %v1724
      %v1803 = vunpack.c.l.b16 %v1725
      %v1804 = vunpack.c.h.b16 %v1725
      %v1805 = vunpack.c.l.b16 %v1726
      %v1806 = vunpack.c.h.b16 %v1726
      %v1807 = vunpack.c.l.b16 %v1727
      %v1808 = vunpack.c.h.b16 %v1727
      %v1809 = vunpack.c.l.b16 %v1728
      %v1810 = vunpack.c.h.b16 %v1728
      %v1811 = vunpack.c.l.b16 %v1729
      %v1812 = vunpack.c.h.b16 %v1729
      %v1813 = vunpack.c.l.b16 %v1730
      %v1814 = vunpack.c.h.b16 %v1730
      %v1815 = vpack.c.b16 %v1769, %v1767
      %v1816 = vpack.c.b16 %v1770, %v1768
      %v1817 = vpack.c.b16 %v1773, %v1771
      %v1818 = vpack.c.b16 %v1774, %v1772
      %v1819 = vpack.c.b16 %v1777, %v1775
      %v1820 = vpack.c.b16 %v1778, %v1776
      %v1821 = vpack.c.b16 %v1781, %v1779
      %v1822 = vpack.c.b16 %v1782, %v1780
      %v1823 = vpack.c.b16 %v1785, %v1783
      %v1824 = vpack.c.b16 %v1786, %v1784
      %v1825 = vpack.c.b16 %v1789, %v1787
      %v1826 = vpack.c.b16 %v1790, %v1788
      %v1827 = vpack.c.b16 %v1793, %v1791
      %v1828 = vpack.c.b16 %v1794, %v1792
      %v1829 = vpack.c.b16 %v1797, %v1795
      %v1830 = vpack.c.b16 %v1798, %v1796
      %v1831 = vpack.c.b16 %v1801, %v1799
      %v1832 = vpack.c.b16 %v1802, %v1800
      %v1833 = vpack.c.b16 %v1805, %v1803
      %v1834 = vpack.c.b16 %v1806, %v1804
      %v1835 = vpack.c.b16 %v1809, %v1807
      %v1836 = vpack.c.b16 %v1810, %v1808
      %v1837 = vpack.c.b16 %v1813, %v1811
      %v1838 = vpack.c.b16 %v1814, %v1812
      %vm1863 = vcmask 523264
      %v1865 = vsel %vm1863, %v1692, 0
      %1867 = vmatprep.subr.bf16.mxu0 %v1816
      %1868 = vmatpush1.bf16.msra.mxu0 %v1815
      %1869 = vmatprep.subr.bf16.mxu0 %v1818
      %1870 = vmatpush1.bf16.msra.mxu0 %v1817
      %1871 = vmatprep.subr.bf16.mxu0 %v1820
      %1872 = vmatpush1.bf16.msra.mxu0 %v1819
      %1873 = vmatprep.subr.bf16.mxu0 %v1822
      %1874 = vmatpush1.bf16.msra.mxu0 %v1821
      %1875 = vmatprep.subr.bf16.mxu0 %v1824
      %1876 = vmatpush1.bf16.msra.mxu0 %v1823
      %1877 = vmatprep.subr.bf16.mxu0 %v1826
      %1878 = vmatpush1.bf16.msra.mxu0 %v1825
      %1879 = vmatprep.subr.bf16.mxu0 %v1828
      %1880 = vmatpush1.bf16.msra.mxu0 %v1827
      %1881 = vmatprep.subr.bf16.mxu0 %v1830
      %1882 = vmatpush1.bf16.msra.mxu0 %v1829
      %1883 = vmatprep.subr.bf16.mxu0 %v1832
      %1884 = vmatpush1.bf16.msra.mxu0 %v1831
      %1885 = vmatprep.subr.bf16.mxu0 %v1834
      %1886 = vmatpush1.bf16.msra.mxu0 %v1833
      %1887 = vmatprep.subr.bf16.mxu0 %v1836
      %1888 = vmatpush1.bf16.msra.mxu0 %v1835
      %1889 = vmatprep.subr.bf16.mxu0 %v1838
      %1890 = vmatpush1.bf16.msra.mxu0 %v1837
      %1891 = vmatprep.subr.bf16.mxu0 0
      %1892 = vmatpush1.bf16.msra.mxu0 0
      %1893 = vmatprep.subr.bf16.mxu0 0
      %1894 = vmatpush1.bf16.msra.mxu0 0
      %1895 = vmatprep.subr.bf16.mxu0 0
      %1896 = vmatpush1.bf16.msra.mxu0 0
      %1897 = vmatprep.subr.bf16.mxu0 0
      %1898 = vmatpush1.bf16.msra.mxu0 0
      %1899 = vmatprep.mubr.bf16.mxu0 %v1865
      %1900 = vmatmul.mubr.bf16.gmra.mrb[0].mxu0 %v1691
      %v1901 = vpop.f32.mrb[0].mxu0
      %v1902 = vadd.f32 %v1736, %v1901
      %v1903 = vpop.f32.mrb[0].mxu0
      %v1904 = vadd.f32 %v1740, %v1903
      %v1905 = vpop.f32.mrb[0].mxu0
      %v1906 = vpop.f32.mrb[0].mxu0
      %1907 = vdwg.mxu0
      %v1908 = vld [vmem:[%s13] sm:$0xff]
      %v1909 = vld [vmem:[%s13 + $0x8] sm:$0xff]
      %v1910 = vld [vmem:[%s13 + $0x10] sm:$0xff]
      %v1911 = vld [vmem:[%s13 + $0x18] sm:$0xff]
      %v1912 = vld [vmem:[%s13 + $0x20] sm:$0xff]
      %v1913 = vld [vmem:[%s13 + $0x28] sm:$0xff]
      %v1914 = vld [vmem:[%s13 + $0x30] sm:$0xff]
      %v1915 = vld [vmem:[%s13 + $0x38] sm:$0xff]
      %v1916 = vld [vmem:[%s13 + $0x40] sm:$0xff]
      %v1917 = vld [vmem:[%s13 + $0x48] sm:$0xff]
      %v1918 = vld [vmem:[%s13 + $0x50] sm:$0xff]
      %v1919 = vld [vmem:[%s13 + $0x58] sm:$0xff]
      %v1920 = vld [vmem:[%s13 + $0x60] sm:$0xff]
      %v1921 = vld [vmem:[%s13 + $0x68] sm:$0xff]
      %v1922 = vld [vmem:[%s13 + $0x70] sm:$0xff]
      %v1923 = vld [vmem:[%s13 + $0x78] sm:$0xff]
      %v1924 = vld [vmem:[%s13 + $0x80] sm:$0xff]
      %v1925 = vld [vmem:[%s13 + $0x88] sm:$0xff]
      %v1926 = vld [vmem:[%s13 + $0x90] sm:$0xff]
      %v1927 = vld [vmem:[%s13 + $0x98] sm:$0xff]
      %v1928 = vld [vmem:[%s13 + $0xa0] sm:$0xff]
      %v1929 = vld [vmem:[%s13 + $0xa8] sm:$0xff]
      %v1930 = vld [vmem:[%s13 + $0xb0] sm:$0xff]
      %v1931 = vld [vmem:[%s13 + $0xb8] sm:$0xff]
      %v1932 = vld [vmem:[%s15] sm:$0x3]
      %v1934 = vlaneseq
      %v1935 = vshrl.u32 %v1934, 7
      %v1936 = vsub.s32 0, %v1935
      %v1937 = vrot.slane %v1932, %v1936
      %v1938 = vlaneseq
      %v1939 = vshrl.u32 %v1938, 7
      %v1940 = vsub.s32 1, %v1939
      %v1941 = vrot.slane %v1932, %v1940
      %v1968 = vunpack.c.l.b16 %v1908
      %v1969 = vunpack.c.h.b16 %v1908
      %v1970 = vunpack.c.l.b16 %v1909
      %v1971 = vunpack.c.h.b16 %v1909
      %v1972 = vunpack.c.l.b16 %v1910
      %v1973 = vunpack.c.h.b16 %v1910
      %v1974 = vunpack.c.l.b16 %v1911
      %v1975 = vunpack.c.h.b16 %v1911
      %v1976 = vunpack.c.l.b16 %v1912
      %v1977 = vunpack.c.h.b16 %v1912
      %v1978 = vunpack.c.l.b16 %v1913
      %v1979 = vunpack.c.h.b16 %v1913
      %v1980 = vunpack.c.l.b16 %v1914
      %v1981 = vunpack.c.h.b16 %v1914
      %v1982 = vunpack.c.l.b16 %v1915
      %v1983 = vunpack.c.h.b16 %v1915
      %v1984 = vunpack.c.l.b16 %v1916
      %v1985 = vunpack.c.h.b16 %v1916
      %v1986 = vunpack.c.l.b16 %v1917
      %v1987 = vunpack.c.h.b16 %v1917
      %v1988 = vunpack.c.l.b16 %v1918
      %v1989 = vunpack.c.h.b16 %v1918
      %v1990 = vunpack.c.l.b16 %v1919
      %v1991 = vunpack.c.h.b16 %v1919
      %v1992 = vunpack.c.l.b16 %v1920
      %v1993 = vunpack.c.h.b16 %v1920
      %v1994 = vunpack.c.l.b16 %v1921
      %v1995 = vunpack.c.h.b16 %v1921
      %v1996 = vunpack.c.l.b16 %v1922
      %v1997 = vunpack.c.h.b16 %v1922
      %v1998 = vunpack.c.l.b16 %v1923
      %v1999 = vunpack.c.h.b16 %v1923
      %v2000 = vunpack.c.l.b16 %v1924
      %v2001 = vunpack.c.h.b16 %v1924
      %v2002 = vunpack.c.l.b16 %v1925
      %v2003 = vunpack.c.h.b16 %v1925
      %v2004 = vunpack.c.l.b16 %v1926
      %v2005 = vunpack.c.h.b16 %v1926
      %v2006 = vunpack.c.l.b16 %v1927
      %v2007 = vunpack.c.h.b16 %v1927
      %v2008 = vunpack.c.l.b16 %v1928
      %v2009 = vunpack.c.h.b16 %v1928
      %v2010 = vunpack.c.l.b16 %v1929
      %v2011 = vunpack.c.h.b16 %v1929
      %v2012 = vunpack.c.l.b16 %v1930
      %v2013 = vunpack.c.h.b16 %v1930
      %v2014 = vunpack.c.l.b16 %v1931
      %v2015 = vunpack.c.h.b16 %v1931
      %v2016 = vpack.c.b16 %v1970, %v1968
      %v2017 = vpack.c.b16 %v1971, %v1969
      %v2018 = vpack.c.b16 %v1974, %v1972
      %v2019 = vpack.c.b16 %v1975, %v1973
      %v2020 = vpack.c.b16 %v1978, %v1976
      %v2021 = vpack.c.b16 %v1979, %v1977
      %v2022 = vpack.c.b16 %v1982, %v1980
      %v2023 = vpack.c.b16 %v1983, %v1981
      %v2024 = vpack.c.b16 %v1986, %v1984
      %v2025 = vpack.c.b16 %v1987, %v1985
      %v2026 = vpack.c.b16 %v1990, %v1988
      %v2027 = vpack.c.b16 %v1991, %v1989
      %v2028 = vpack.c.b16 %v1994, %v1992
      %v2029 = vpack.c.b16 %v1995, %v1993
      %v2030 = vpack.c.b16 %v1998, %v1996
      %v2031 = vpack.c.b16 %v1999, %v1997
      %v2032 = vpack.c.b16 %v2002, %v2000
      %v2033 = vpack.c.b16 %v2003, %v2001
      %v2034 = vpack.c.b16 %v2006, %v2004
      %v2035 = vpack.c.b16 %v2007, %v2005
      %v2036 = vpack.c.b16 %v2010, %v2008
      %v2037 = vpack.c.b16 %v2011, %v2009
      %v2038 = vpack.c.b16 %v2014, %v2012
      %v2039 = vpack.c.b16 %v2015, %v2013
      %2064 = vmatprep.subr.bf16.mxu0 %v2017
      %2065 = vmatpush1.bf16.msra.mxu0 %v2016
      %2066 = vmatprep.subr.bf16.mxu0 %v2019
      %2067 = vmatpush1.bf16.msra.mxu0 %v2018
      %2068 = vmatprep.subr.bf16.mxu0 %v2021
      %2069 = vmatpush1.bf16.msra.mxu0 %v2020
      %2070 = vmatprep.subr.bf16.mxu0 %v2023
      %2071 = vmatpush1.bf16.msra.mxu0 %v2022
      %2072 = vmatprep.subr.bf16.mxu0 %v2025
      %2073 = vmatpush1.bf16.msra.mxu0 %v2024
      %2074 = vmatprep.subr.bf16.mxu0 %v2027
      %2075 = vmatpush1.bf16.msra.mxu0 %v2026
      %2076 = vmatprep.subr.bf16.mxu0 %v2029
      %2077 = vmatpush1.bf16.msra.mxu0 %v2028
      %2078 = vmatprep.subr.bf16.mxu0 %v2031
      %2079 = vmatpush1.bf16.msra.mxu0 %v2030
      %2080 = vmatprep.subr.bf16.mxu0 %v2033
      %2081 = vmatpush1.bf16.msra.mxu0 %v2032
      %2082 = vmatprep.subr.bf16.mxu0 %v2035
      %2083 = vmatpush1.bf16.msra.mxu0 %v2034
      %2084 = vmatprep.subr.bf16.mxu0 %v2037
      %2085 = vmatpush1.bf16.msra.mxu0 %v2036
      %2086 = vmatprep.subr.bf16.mxu0 %v2039
      %2087 = vmatpush1.bf16.msra.mxu0 %v2038
      %2088 = vmatprep.subr.bf16.mxu0 0
      %2089 = vmatpush1.bf16.msra.mxu0 0
      %2090 = vmatprep.subr.bf16.mxu0 0
      %2091 = vmatpush1.bf16.msra.mxu0 0
      %2092 = vmatprep.subr.bf16.mxu0 0
      %2093 = vmatpush1.bf16.msra.mxu0 0
      %2094 = vmatprep.subr.bf16.mxu0 0
      %2095 = vmatpush1.bf16.msra.mxu0 0
      %2096 = vmatprep.mubr.bf16.mxu0 %v1865
      %2097 = vmatmul.mubr.bf16.gmra.mrb[0].mxu0 %v1691
      %v2098 = vpop.f32.mrb[0].mxu0
      %v2099 = vadd.f32 %v1937, %v2098
      %v2100 = vpop.f32.mrb[0].mxu0
      %v2101 = vadd.f32 %v1941, %v2100
      %v2102 = vpop.f32.mrb[0].mxu0
      %v2103 = vpop.f32.mrb[0].mxu0
      %2104 = vdwg.mxu0
      %v2105 = vld [vmem:[%s17] sm:$0xff]
      %v2106 = vld [vmem:[%s17 + $0x8] sm:$0xff]
      %v2107 = vld [vmem:[%s17 + $0x10] sm:$0xff]
      %v2108 = vld [vmem:[%s17 + $0x18] sm:$0xff]
      %v2109 = vld [vmem:[%s17 + $0x20] sm:$0xff]
      %v2110 = vld [vmem:[%s17 + $0x28] sm:$0xff]
      %v2111 = vld [vmem:[%s17 + $0x30] sm:$0xff]
      %v2112 = vld [vmem:[%s17 + $0x38] sm:$0xff]
      %v2113 = vld [vmem:[%s17 + $0x40] sm:$0xff]
      %v2114 = vld [vmem:[%s17 + $0x48] sm:$0xff]
      %v2115 = vld [vmem:[%s17 + $0x50] sm:$0xff]
      %v2116 = vld [vmem:[%s17 + $0x58] sm:$0xff]
      %v2117 = vld [vmem:[%s17 + $0x60] sm:$0xff]
      %v2118 = vld [vmem:[%s17 + $0x68] sm:$0xff]
      %v2119 = vld [vmem:[%s17 + $0x70] sm:$0xff]
      %v2120 = vld [vmem:[%s17 + $0x78] sm:$0xff]
      %v2121 = vld [vmem:[%s17 + $0x80] sm:$0xff]
      %v2122 = vld [vmem:[%s17 + $0x88] sm:$0xff]
      %v2123 = vld [vmem:[%s17 + $0x90] sm:$0xff]
      %v2124 = vld [vmem:[%s17 + $0x98] sm:$0xff]
      %v2125 = vld [vmem:[%s17 + $0xa0] sm:$0xff]
      %v2126 = vld [vmem:[%s17 + $0xa8] sm:$0xff]
      %v2127 = vld [vmem:[%s17 + $0xb0] sm:$0xff]
      %v2128 = vld [vmem:[%s17 + $0xb8] sm:$0xff]
      %v2129 = vld [vmem:[%s19] sm:$0x3]
      %v2131 = vlaneseq
      %v2132 = vshrl.u32 %v2131, 7
      %v2133 = vsub.s32 0, %v2132
      %v2134 = vrot.slane %v2129, %v2133
      %v2135 = vlaneseq
      %v2136 = vshrl.u32 %v2135, 7
      %v2137 = vsub.s32 1, %v2136
      %v2138 = vrot.slane %v2129, %v2137
      %v2165 = vunpack.c.l.b16 %v2105
      %v2166 = vunpack.c.h.b16 %v2105
      %v2167 = vunpack.c.l.b16 %v2106
      %v2168 = vunpack.c.h.b16 %v2106
      %v2169 = vunpack.c.l.b16 %v2107
      %v2170 = vunpack.c.h.b16 %v2107
      %v2171 = vunpack.c.l.b16 %v2108
      %v2172 = vunpack.c.h.b16 %v2108
      %v2173 = vunpack.c.l.b16 %v2109
      %v2174 = vunpack.c.h.b16 %v2109
      %v2175 = vunpack.c.l.b16 %v2110
      %v2176 = vunpack.c.h.b16 %v2110
      %v2177 = vunpack.c.l.b16 %v2111
      %v2178 = vunpack.c.h.b16 %v2111
      %v2179 = vunpack.c.l.b16 %v2112
      %v2180 = vunpack.c.h.b16 %v2112
      %v2181 = vunpack.c.l.b16 %v2113
      %v2182 = vunpack.c.h.b16 %v2113
      %v2183 = vunpack.c.l.b16 %v2114
      %v2184 = vunpack.c.h.b16 %v2114
      %v2185 = vunpack.c.l.b16 %v2115
      %v2186 = vunpack.c.h.b16 %v2115
      %v2187 = vunpack.c.l.b16 %v2116
      %v2188 = vunpack.c.h.b16 %v2116
      %v2189 = vunpack.c.l.b16 %v2117
      %v2190 = vunpack.c.h.b16 %v2117
      %v2191 = vunpack.c.l.b16 %v2118
      %v2192 = vunpack.c.h.b16 %v2118
      %v2193 = vunpack.c.l.b16 %v2119
      %v2194 = vunpack.c.h.b16 %v2119
      %v2195 = vunpack.c.l.b16 %v2120
      %v2196 = vunpack.c.h.b16 %v2120
      %v2197 = vunpack.c.l.b16 %v2121
      %v2198 = vunpack.c.h.b16 %v2121
      %v2199 = vunpack.c.l.b16 %v2122
      %v2200 = vunpack.c.h.b16 %v2122
      %v2201 = vunpack.c.l.b16 %v2123
      %v2202 = vunpack.c.h.b16 %v2123
      %v2203 = vunpack.c.l.b16 %v2124
      %v2204 = vunpack.c.h.b16 %v2124
      %v2205 = vunpack.c.l.b16 %v2125
      %v2206 = vunpack.c.h.b16 %v2125
      %v2207 = vunpack.c.l.b16 %v2126
      %v2208 = vunpack.c.h.b16 %v2126
      %v2209 = vunpack.c.l.b16 %v2127
      %v2210 = vunpack.c.h.b16 %v2127
      %v2211 = vunpack.c.l.b16 %v2128
      %v2212 = vunpack.c.h.b16 %v2128
      %v2213 = vpack.c.b16 %v2167, %v2165
      %v2214 = vpack.c.b16 %v2168, %v2166
      %v2215 = vpack.c.b16 %v2171, %v2169
      %v2216 = vpack.c.b16 %v2172, %v2170
      %v2217 = vpack.c.b16 %v2175, %v2173
      %v2218 = vpack.c.b16 %v2176, %v2174
      %v2219 = vpack.c.b16 %v2179, %v2177
      %v2220 = vpack.c.b16 %v2180, %v2178
      %v2221 = vpack.c.b16 %v2183, %v2181
      %v2222 = vpack.c.b16 %v2184, %v2182
      %v2223 = vpack.c.b16 %v2187, %v2185
      %v2224 = vpack.c.b16 %v2188, %v2186
      %v2225 = vpack.c.b16 %v2191, %v2189
      %v2226 = vpack.c.b16 %v2192, %v2190
      %v2227 = vpack.c.b16 %v2195, %v2193
      %v2228 = vpack.c.b16 %v2196, %v2194
      %v2229 = vpack.c.b16 %v2199, %v2197
      %v2230 = vpack.c.b16 %v2200, %v2198
      %v2231 = vpack.c.b16 %v2203, %v2201
      %v2232 = vpack.c.b16 %v2204, %v2202
      %v2233 = vpack.c.b16 %v2207, %v2205
      %v2234 = vpack.c.b16 %v2208, %v2206
      %v2235 = vpack.c.b16 %v2211, %v2209
      %v2236 = vpack.c.b16 %v2212, %v2210
      %2261 = vmatprep.subr.bf16.mxu0 %v2214
      %2262 = vmatpush1.bf16.msra.mxu0 %v2213
      %2263 = vmatprep.subr.bf16.mxu0 %v2216
      %2264 = vmatpush1.bf16.msra.mxu0 %v2215
      %2265 = vmatprep.subr.bf16.mxu0 %v2218
      %2266 = vmatpush1.bf16.msra.mxu0 %v2217
      %2267 = vmatprep.subr.bf16.mxu0 %v2220
      %2268 = vmatpush1.bf16.msra.mxu0 %v2219
      %2269 = vmatprep.subr.bf16.mxu0 %v2222
      %2270 = vmatpush1.bf16.msra.mxu0 %v2221
      %2271 = vmatprep.subr.bf16.mxu0 %v2224
      %2272 = vmatpush1.bf16.msra.mxu0 %v2223
      %2273 = vmatprep.subr.bf16.mxu0 %v2226
      %2274 = vmatpush1.bf16.msra.mxu0 %v2225
      %2275 = vmatprep.subr.bf16.mxu0 %v2228
      %2276 = vmatpush1.bf16.msra.mxu0 %v2227
      %2277 = vmatprep.subr.bf16.mxu0 %v2230
      %2278 = vmatpush1.bf16.msra.mxu0 %v2229
      %2279 = vmatprep.subr.bf16.mxu0 %v2232
      %2280 = vmatpush1.bf16.msra.mxu0 %v2231
      %2281 = vmatprep.subr.bf16.mxu0 %v2234
      %2282 = vmatpush1.bf16.msra.mxu0 %v2233
      %2283 = vmatprep.subr.bf16.mxu0 %v2236
      %2284 = vmatpush1.bf16.msra.mxu0 %v2235
      %2285 = vmatprep.subr.bf16.mxu0 0
      %2286 = vmatpush1.bf16.msra.mxu0 0
      %2287 = vmatprep.subr.bf16.mxu0 0
      %2288 = vmatpush1.bf16.msra.mxu0 0
      %2289 = vmatprep.subr.bf16.mxu0 0
      %2290 = vmatpush1.bf16.msra.mxu0 0
      %2291 = vmatprep.subr.bf16.mxu0 0
      %2292 = vmatpush1.bf16.msra.mxu0 0
      %2293 = vmatprep.mubr.bf16.mxu0 %v1865
      %2294 = vmatmul.mubr.bf16.gmra.mrb[0].mxu0 %v1691
      %v2295 = vpop.f32.mrb[0].mxu0
      %v2296 = vadd.f32 %v2134, %v2295
      %v2297 = vpop.f32.mrb[0].mxu0
      %v2298 = vadd.f32 %v2138, %v2297
      %v2299 = vpop.f32.mrb[0].mxu0
      %v2300 = vpop.f32.mrb[0].mxu0
      %2301 = vdwg.mxu0
      %v2303 = vsel %vm1863, %v1706, 0
      %2305 = vmatprep.subr.bf16.mxu0 %v1816
      %2306 = vmatpush1.bf16.msra.mxu0 %v1815
      %2307 = vmatprep.subr.bf16.mxu0 %v1818
      %2308 = vmatpush1.bf16.msra.mxu0 %v1817
      %2309 = vmatprep.subr.bf16.mxu0 %v1820
      %2310 = vmatpush1.bf16.msra.mxu0 %v1819
      %2311 = vmatprep.subr.bf16.mxu0 %v1822
      %2312 = vmatpush1.bf16.msra.mxu0 %v1821
      %2313 = vmatprep.subr.bf16.mxu0 %v1824
      %2314 = vmatpush1.bf16.msra.mxu0 %v1823
      %2315 = vmatprep.subr.bf16.mxu0 %v1826
      %2316 = vmatpush1.bf16.msra.mxu0 %v1825
      %2317 = vmatprep.subr.bf16.mxu0 %v1828
      %2318 = vmatpush1.bf16.msra.mxu0 %v1827
      %2319 = vmatprep.subr.bf16.mxu0 %v1830
      %2320 = vmatpush1.bf16.msra.mxu0 %v1829
      %2321 = vmatprep.subr.bf16.mxu0 %v1832
      %2322 = vmatpush1.bf16.msra.mxu0 %v1831
      %2323 = vmatprep.subr.bf16.mxu0 %v1834
      %2324 = vmatpush1.bf16.msra.mxu0 %v1833
      %2325 = vmatprep.subr.bf16.mxu0 %v1836
      %2326 = vmatpush1.bf16.msra.mxu0 %v1835
      %2327 = vmatprep.subr.bf16.mxu0 %v1838
      %2328 = vmatpush1.bf16.msra.mxu0 %v1837
      %2329 = vmatprep.subr.bf16.mxu0 0
      %2330 = vmatpush1.bf16.msra.mxu0 0
      %2331 = vmatprep.subr.bf16.mxu0 0
      %2332 = vmatpush1.bf16.msra.mxu0 0
      %2333 = vmatprep.subr.bf16.mxu0 0
      %2334 = vmatpush1.bf16.msra.mxu0 0
      %2335 = vmatprep.subr.bf16.mxu0 0
      %2336 = vmatpush1.bf16.msra.mxu0 0
      %2337 = vmatprep.mubr.bf16.mxu0 %v2303
      %2338 = vmatmul.mubr.bf16.gmra.mrb[0].mxu0 %v1705
      %v2339 = vpop.f32.mrb[0].mxu0
      %v2340 = vadd.f32 %v1736, %v2339
      %v2341 = vpop.f32.mrb[0].mxu0
      %v2342 = vadd.f32 %v1740, %v2341
      %v2343 = vpop.f32.mrb[0].mxu0
      %v2344 = vpop.f32.mrb[0].mxu0
      %2345 = vdwg.mxu0
      %2346 = vmatprep.subr.bf16.mxu0 %v2017
      %2347 = vmatpush1.bf16.msra.mxu0 %v2016
      %2348 = vmatprep.subr.bf16.mxu0 %v2019
      %2349 = vmatpush1.bf16.msra.mxu0 %v2018
      %2350 = vmatprep.subr.bf16.mxu0 %v2021
      %2351 = vmatpush1.bf16.msra.mxu0 %v2020
      %2352 = vmatprep.subr.bf16.mxu0 %v2023
      %2353 = vmatpush1.bf16.msra.mxu0 %v2022
      %2354 = vmatprep.subr.bf16.mxu0 %v2025
      %2355 = vmatpush1.bf16.msra.mxu0 %v2024
      %2356 = vmatprep.subr.bf16.mxu0 %v2027
      %2357 = vmatpush1.bf16.msra.mxu0 %v2026
      %2358 = vmatprep.subr.bf16.mxu0 %v2029
      %2359 = vmatpush1.bf16.msra.mxu0 %v2028
      %2360 = vmatprep.subr.bf16.mxu0 %v2031
      %2361 = vmatpush1.bf16.msra.mxu0 %v2030
      %2362 = vmatprep.subr.bf16.mxu0 %v2033
      %2363 = vmatpush1.bf16.msra.mxu0 %v2032
      %2364 = vmatprep.subr.bf16.mxu0 %v2035
      %2365 = vmatpush1.bf16.msra.mxu0 %v2034
      %2366 = vmatprep.subr.bf16.mxu0 %v2037
      %2367 = vmatpush1.bf16.msra.mxu0 %v2036
      %2368 = vmatprep.subr.bf16.mxu0 %v2039
      %2369 = vmatpush1.bf16.msra.mxu0 %v2038
      %2370 = vmatprep.subr.bf16.mxu0 0
      %2371 = vmatpush1.bf16.msra.mxu0 0
      %2372 = vmatprep.subr.bf16.mxu0 0
      %2373 = vmatpush1.bf16.msra.mxu0 0
      %2374 = vmatprep.subr.bf16.mxu0 0
      %2375 = vmatpush1.bf16.msra.mxu0 0
      %2376 = vmatprep.subr.bf16.mxu0 0
      %2377 = vmatpush1.bf16.msra.mxu0 0
      %2378 = vmatprep.mubr.bf16.mxu0 %v2303
      %2379 = vmatmul.mubr.bf16.gmra.mrb[0].mxu0 %v1705
      %v2380 = vpop.f32.mrb[0].mxu0
      %v2381 = vadd.f32 %v1937, %v2380
      %v2382 = vpop.f32.mrb[0].mxu0
      %v2383 = vadd.f32 %v1941, %v2382
      %v2384 = vpop.f32.mrb[0].mxu0
      %v2385 = vpop.f32.mrb[0].mxu0
      %2386 = vdwg.mxu0
      %2387 = vmatprep.subr.bf16.mxu0 %v2214
      %2388 = vmatpush1.bf16.msra.mxu0 %v2213
      %2389 = vmatprep.subr.bf16.mxu0 %v2216
      %2390 = vmatpush1.bf16.msra.mxu0 %v2215
      %2391 = vmatprep.subr.bf16.mxu0 %v2218
      %2392 = vmatpush1.bf16.msra.mxu0 %v2217
      %2393 = vmatprep.subr.bf16.mxu0 %v2220
      %2394 = vmatpush1.bf16.msra.mxu0 %v2219
      %2395 = vmatprep.subr.bf16.mxu0 %v2222
      %2396 = vmatpush1.bf16.msra.mxu0 %v2221
      %2397 = vmatprep.subr.bf16.mxu0 %v2224
      %2398 = vmatpush1.bf16.msra.mxu0 %v2223
      %2399 = vmatprep.subr.bf16.mxu0 %v2226
      %2400 = vmatpush1.bf16.msra.mxu0 %v2225
      %2401 = vmatprep.subr.bf16.mxu0 %v2228
      %2402 = vmatpush1.bf16.msra.mxu0 %v2227
      %2403 = vmatprep.subr.bf16.mxu0 %v2230
      %2404 = vmatpush1.bf16.msra.mxu0 %v2229
      %2405 = vmatprep.subr.bf16.mxu0 %v2232
      %2406 = vmatpush1.bf16.msra.mxu0 %v2231
      %2407 = vmatprep.subr.bf16.mxu0 %v2234
      %2408 = vmatpush1.bf16.msra.mxu0 %v2233
      %2409 = vmatprep.subr.bf16.mxu0 %v2236
      %2410 = vmatpush1.bf16.msra.mxu0 %v2235
      %2411 = vmatprep.subr.bf16.mxu0 0
      %2412 = vmatpush1.bf16.msra.mxu0 0
      %2413 = vmatprep.subr.bf16.mxu0 0
      %2414 = vmatpush1.bf16.msra.mxu0 0
      %2415 = vmatprep.subr.bf16.mxu0 0
      %2416 = vmatpush1.bf16.msra.mxu0 0
      %2417 = vmatprep.subr.bf16.mxu0 0
      %2418 = vmatpush1.bf16.msra.mxu0 0
      %2419 = vmatprep.mubr.bf16.mxu0 %v2303
      %2420 = vmatmul.mubr.bf16.gmra.mrb[0].mxu0 %v1705
      %v2421 = vpop.f32.mrb[0].mxu0
      %v2422 = vadd.f32 %v2134, %v2421
      %v2423 = vpop.f32.mrb[0].mxu0
      %v2424 = vadd.f32 %v2138, %v2423
      %v2425 = vpop.f32.mrb[0].mxu0
      %v2426 = vpop.f32.mrb[0].mxu0
      %2427 = vdwg.mxu0
      %v2428 = vld [vmem:[%s25] sm:$0xff]
      %v2429 = vld [vmem:[%s25 + $0x8] sm:$0xff]
      %v2430 = vld [vmem:[%s25 + $0x10] sm:$0xff]
      %v2431 = vld [vmem:[%s25 + $0x18] sm:$0xff]
      %v2432 = vld [vmem:[%s25 + $0x20] sm:$0xff]
      %v2433 = vld [vmem:[%s25 + $0x28] sm:$0xff]
      %v2434 = vld [vmem:[%s25 + $0x30] sm:$0xff]
      %v2435 = vld [vmem:[%s25 + $0x38] sm:$0xff]
      %v2436 = vld [vmem:[%s25 + $0x40] sm:$0xff]
      %v2437 = vld [vmem:[%s25 + $0x48] sm:$0xff]
      %v2438 = vld [vmem:[%s25 + $0x50] sm:$0xff]
      %v2439 = vld [vmem:[%s25 + $0x58] sm:$0xff]
      %v2440 = vld [vmem:[%s25 + $0x60] sm:$0xff]
      %v2441 = vld [vmem:[%s25 + $0x68] sm:$0xff]
      %v2442 = vld [vmem:[%s25 + $0x70] sm:$0xff]
      %v2443 = vld [vmem:[%s25 + $0x78] sm:$0xff]
      %v2444 = vld [vmem:[%s25 + $0x80] sm:$0xff]
      %v2445 = vld [vmem:[%s25 + $0x88] sm:$0xff]
      %v2446 = vld [vmem:[%s25 + $0x90] sm:$0xff]
      %v2447 = vld [vmem:[%s25 + $0x98] sm:$0xff]
      %v2448 = vld [vmem:[%s25 + $0xa0] sm:$0xff]
      %v2449 = vld [vmem:[%s25 + $0xa8] sm:$0xff]
      %v2450 = vld [vmem:[%s25 + $0xb0] sm:$0xff]
      %v2451 = vld [vmem:[%s25 + $0xb8] sm:$0xff]
      %v2452 = vld [vmem:[%s25 + $0xc0] sm:$0xff]
      %v2453 = vld [vmem:[%s25 + $0xc8] sm:$0xff]
      %v2454 = vld [vmem:[%s25 + $0xd0] sm:$0xff]
      %v2455 = vld [vmem:[%s25 + $0xd8] sm:$0xff]
      %v2456 = vld [vmem:[%s25 + $0xe0] sm:$0xff]
      %v2457 = vld [vmem:[%s25 + $0xe8] sm:$0xff]
      %v2458 = vld [vmem:[%s25 + $0xf0] sm:$0xff]
      %v2459 = vld [vmem:[%s25 + $0xf8] sm:$0xff]
      %v2460 = vld [vmem:[%s27] sm:$0xff]
      %v2461 = vld [vmem:[%s27 + $0x8] sm:$0xff]
      %v2462 = vmul.f32 %v1902, %v2099
      %v2463 = vmul.f32 %v1904, %v2101
      %2464 = vmatprep.subr.mxu0 0.0
      %2465 = vmatpush1.msra.mxu0 %v2428
      %2466 = vmatprep.subr.mxu0 0.0
      %2467 = vmatpush1.msra.mxu0 %v2429
      %2468 = vmatprep.subr.mxu0 0.0
      %2469 = vmatpush1.msra.mxu0 %v2430
      %2470 = vmatprep.subr.mxu0 0.0
      %2471 = vmatpush1.msra.mxu0 %v2431
      %2472 = vmatprep.subr.mxu0 0.0
      %2473 = vmatpush1.msra.mxu0 %v2432
      %2474 = vmatprep.subr.mxu0 0.0
      %2475 = vmatpush1.msra.mxu0 %v2433
      %2476 = vmatprep.subr.mxu0 0.0
      %2477 = vmatpush1.msra.mxu0 %v2434
      %2478 = vmatprep.subr.mxu0 0.0
      %2479 = vmatpush1.msra.mxu0 %v2435
      %2480 = vmatprep.subr.mxu0 0.0
      %2481 = vmatpush1.msra.mxu0 %v2436
      %2482 = vmatprep.subr.mxu0 0.0
      %2483 = vmatpush1.msra.mxu0 %v2437
      %2484 = vmatprep.subr.mxu0 0.0
      %2485 = vmatpush1.msra.mxu0 %v2438
      %2486 = vmatprep.subr.mxu0 0.0
      %2487 = vmatpush1.msra.mxu0 %v2439
      %2488 = vmatprep.subr.mxu0 0.0
      %2489 = vmatpush1.msra.mxu0 %v2440
      %2490 = vmatprep.subr.mxu0 0.0
      %2491 = vmatpush1.msra.mxu0 %v2441
      %2492 = vmatprep.subr.mxu0 0.0
      %2493 = vmatpush1.msra.mxu0 %v2442
      %2494 = vmatprep.subr.mxu0 0.0
      %2495 = vmatpush1.msra.mxu0 %v2443
      %2496 = vmatprep.subr.mxu0 0.0
      %2497 = vmatpush1.msra.mxu0 %v2444
      %2498 = vmatprep.subr.mxu0 0.0
      %2499 = vmatpush1.msra.mxu0 %v2445
      %2500 = vmatprep.subr.mxu0 0.0
      %2501 = vmatpush1.msra.mxu0 %v2446
      %2502 = vmatprep.subr.mxu0 0.0
      %2503 = vmatpush1.msra.mxu0 %v2447
      %2504 = vmatprep.subr.mxu0 0.0
      %2505 = vmatpush1.msra.mxu0 %v2448
      %2506 = vmatprep.subr.mxu0 0.0
      %2507 = vmatpush1.msra.mxu0 %v2449
      %2508 = vmatprep.subr.mxu0 0.0
      %2509 = vmatpush1.msra.mxu0 %v2450
      %2510 = vmatprep.subr.mxu0 0.0
      %2511 = vmatpush1.msra.mxu0 %v2451
      %2512 = vmatprep.subr.mxu0 0.0
      %2513 = vmatpush1.msra.mxu0 %v2452
      %2514 = vmatprep.subr.mxu0 0.0
      %2515 = vmatpush1.msra.mxu0 %v2453
      %2516 = vmatprep.subr.mxu0 0.0
      %2517 = vmatpush1.msra.mxu0 %v2454
      %2518 = vmatprep.subr.mxu0 0.0
      %2519 = vmatpush1.msra.mxu0 %v2455
      %2520 = vmatprep.subr.mxu0 0.0
      %2521 = vmatpush1.msra.mxu0 %v2456
      %2522 = vmatprep.subr.mxu0 0.0
      %2523 = vmatpush1.msra.mxu0 %v2457
      %2524 = vmatprep.subr.mxu0 0.0
      %2525 = vmatpush1.msra.mxu0 %v2458
      %2526 = vmatprep.subr.mxu0 0.0
      %2527 = vmatpush1.msra.mxu0 %v2459
      %2528 = vmatprep.mubr.f32.mxu0 %v2463
      %2529 = vmatmul.mubr.f32.gmra.mrb[0].mxu0 %v2462
      %v2530 = vpop.f32.mrb[0].mxu0
      %v2531 = vadd.f32 0.0, %v2530
      %v2532 = vpop.f32.mrb[0].mxu0
      %2533 = vdwg.mxu0
      %v2534 = vmul.f32 %v2531, 0.17677669
      %v2535 = vlaneseq
      %v2536 = vshrl.u32 %v2535, 7
      %v2537 = vsub.s32 0, %v2536
      %v2538 = vrot.slane %v2381, %v2537
      %v2539 = vlaneseq
      %v2540 = vshrl.u32 %v2539, 7
      %v2541 = vsub.s32 0, %v2540
      %v2542 = vrot.slane %v2383, %v2541
      %v2543 = vmul.f32 %v1902, %v2538
      %v2544 = vmul.f32 %v1904, %v2542
      %2545 = vmatprep.subr.mxu0 0.0
      %2546 = vmatpush1.msra.mxu0 %v2428
      %2547 = vmatprep.subr.mxu0 0.0
      %2548 = vmatpush1.msra.mxu0 %v2429
      %2549 = vmatprep.subr.mxu0 0.0
      %2550 = vmatpush1.msra.mxu0 %v2430
      %2551 = vmatprep.subr.mxu0 0.0
      %2552 = vmatpush1.msra.mxu0 %v2431
      %2553 = vmatprep.subr.mxu0 0.0
      %2554 = vmatpush1.msra.mxu0 %v2432
      %2555 = vmatprep.subr.mxu0 0.0
      %2556 = vmatpush1.msra.mxu0 %v2433
      %2557 = vmatprep.subr.mxu0 0.0
      %2558 = vmatpush1.msra.mxu0 %v2434
      %2559 = vmatprep.subr.mxu0 0.0
      %2560 = vmatpush1.msra.mxu0 %v2435
      %2561 = vmatprep.subr.mxu0 0.0
      %2562 = vmatpush1.msra.mxu0 %v2436
      %2563 = vmatprep.subr.mxu0 0.0
      %2564 = vmatpush1.msra.mxu0 %v2437
      %2565 = vmatprep.subr.mxu0 0.0
      %2566 = vmatpush1.msra.mxu0 %v2438
      %2567 = vmatprep.subr.mxu0 0.0
      %2568 = vmatpush1.msra.mxu0 %v2439
      %2569 = vmatprep.subr.mxu0 0.0
      %2570 = vmatpush1.msra.mxu0 %v2440
      %2571 = vmatprep.subr.mxu0 0.0
      %2572 = vmatpush1.msra.mxu0 %v2441
      %2573 = vmatprep.subr.mxu0 0.0
      %2574 = vmatpush1.msra.mxu0 %v2442
      %2575 = vmatprep.subr.mxu0 0.0
      %2576 = vmatpush1.msra.mxu0 %v2443
      %2577 = vmatprep.subr.mxu0 0.0
      %2578 = vmatpush1.msra.mxu0 %v2444
      %2579 = vmatprep.subr.mxu0 0.0
      %2580 = vmatpush1.msra.mxu0 %v2445
      %2581 = vmatprep.subr.mxu0 0.0
      %2582 = vmatpush1.msra.mxu0 %v2446
      %2583 = vmatprep.subr.mxu0 0.0
      %2584 = vmatpush1.msra.mxu0 %v2447
      %2585 = vmatprep.subr.mxu0 0.0
      %2586 = vmatpush1.msra.mxu0 %v2448
      %2587 = vmatprep.subr.mxu0 0.0
      %2588 = vmatpush1.msra.mxu0 %v2449
      %2589 = vmatprep.subr.mxu0 0.0
      %2590 = vmatpush1.msra.mxu0 %v2450
      %2591 = vmatprep.subr.mxu0 0.0
      %2592 = vmatpush1.msra.mxu0 %v2451
      %2593 = vmatprep.subr.mxu0 0.0
      %2594 = vmatpush1.msra.mxu0 %v2452
      %2595 = vmatprep.subr.mxu0 0.0
      %2596 = vmatpush1.msra.mxu0 %v2453
      %2597 = vmatprep.subr.mxu0 0.0
      %2598 = vmatpush1.msra.mxu0 %v2454
      %2599 = vmatprep.subr.mxu0 0.0
      %2600 = vmatpush1.msra.mxu0 %v2455
      %2601 = vmatprep.subr.mxu0 0.0
      %2602 = vmatpush1.msra.mxu0 %v2456
      %2603 = vmatprep.subr.mxu0 0.0
      %2604 = vmatpush1.msra.mxu0 %v2457
      %2605 = vmatprep.subr.mxu0 0.0
      %2606 = vmatpush1.msra.mxu0 %v2458
      %2607 = vmatprep.subr.mxu0 0.0
      %2608 = vmatpush1.msra.mxu0 %v2459
      %2609 = vmatprep.mubr.f32.mxu0 %v2544
      %2610 = vmatmul.mubr.f32.gmra.mrb[0].mxu0 %v2543
      %v2611 = vpop.f32.mrb[0].mxu0
      %v2612 = vadd.f32 0.0, %v2611
      %v2613 = vpop.f32.mrb[0].mxu0
      %2614 = vdwg.mxu0
      %v2615 = vmul.f32 %v2612, 0.17677669
      %v2616 = vlaneseq
      %v2617 = vshrl.u32 %v2616, 7
      %v2618 = vsub.s32 1, %v2617
      %v2619 = vrot.slane %v2381, %v2618
      %v2620 = vlaneseq
      %v2621 = vshrl.u32 %v2620, 7
      %v2622 = vsub.s32 1, %v2621
      %v2623 = vrot.slane %v2383, %v2622
      %v2624 = vmul.f32 %v1902, %v2619
      %v2625 = vmul.f32 %v1904, %v2623
      %2626 = vmatprep.subr.mxu0 0.0
      %2627 = vmatpush1.msra.mxu0 %v2428
      %2628 = vmatprep.subr.mxu0 0.0
      %2629 = vmatpush1.msra.mxu0 %v2429
      %2630 = vmatprep.subr.mxu0 0.0
      %2631 = vmatpush1.msra.mxu0 %v2430
      %2632 = vmatprep.subr.mxu0 0.0
      %2633 = vmatpush1.msra.mxu0 %v2431
      %2634 = vmatprep.subr.mxu0 0.0
      %2635 = vmatpush1.msra.mxu0 %v2432
      %2636 = vmatprep.subr.mxu0 0.0
      %2637 = vmatpush1.msra.mxu0 %v2433
      %2638 = vmatprep.subr.mxu0 0.0
      %2639 = vmatpush1.msra.mxu0 %v2434
      %2640 = vmatprep.subr.mxu0 0.0
      %2641 = vmatpush1.msra.mxu0 %v2435
      %2642 = vmatprep.subr.mxu0 0.0
      %2643 = vmatpush1.msra.mxu0 %v2436
      %2644 = vmatprep.subr.mxu0 0.0
      %2645 = vmatpush1.msra.mxu0 %v2437
      %2646 = vmatprep.subr.mxu0 0.0
      %2647 = vmatpush1.msra.mxu0 %v2438
      %2648 = vmatprep.subr.mxu0 0.0
      %2649 = vmatpush1.msra.mxu0 %v2439
      %2650 = vmatprep.subr.mxu0 0.0
      %2651 = vmatpush1.msra.mxu0 %v2440
      %2652 = vmatprep.subr.mxu0 0.0
      %2653 = vmatpush1.msra.mxu0 %v2441
      %2654 = vmatprep.subr.mxu0 0.0
      %2655 = vmatpush1.msra.mxu0 %v2442
      %2656 = vmatprep.subr.mxu0 0.0
      %2657 = vmatpush1.msra.mxu0 %v2443
      %2658 = vmatprep.subr.mxu0 0.0
      %2659 = vmatpush1.msra.mxu0 %v2444
      %2660 = vmatprep.subr.mxu0 0.0
      %2661 = vmatpush1.msra.mxu0 %v2445
      %2662 = vmatprep.subr.mxu0 0.0
      %2663 = vmatpush1.msra.mxu0 %v2446
      %2664 = vmatprep.subr.mxu0 0.0
      %2665 = vmatpush1.msra.mxu0 %v2447
      %2666 = vmatprep.subr.mxu0 0.0
      %2667 = vmatpush1.msra.mxu0 %v2448
      %2668 = vmatprep.subr.mxu0 0.0
      %2669 = vmatpush1.msra.mxu0 %v2449
      %2670 = vmatprep.subr.mxu0 0.0
      %2671 = vmatpush1.msra.mxu0 %v2450
      %2672 = vmatprep.subr.mxu0 0.0
      %2673 = vmatpush1.msra.mxu0 %v2451
      %2674 = vmatprep.subr.mxu0 0.0
      %2675 = vmatpush1.msra.mxu0 %v2452
      %2676 = vmatprep.subr.mxu0 0.0
      %2677 = vmatpush1.msra.mxu0 %v2453
      %2678 = vmatprep.subr.mxu0 0.0
      %2679 = vmatpush1.msra.mxu0 %v2454
      %2680 = vmatprep.subr.mxu0 0.0
      %2681 = vmatpush1.msra.mxu0 %v2455
      %2682 = vmatprep.subr.mxu0 0.0
      %2683 = vmatpush1.msra.mxu0 %v2456
      %2684 = vmatprep.subr.mxu0 0.0
      %2685 = vmatpush1.msra.mxu0 %v2457
      %2686 = vmatprep.subr.mxu0 0.0
      %2687 = vmatpush1.msra.mxu0 %v2458
      %2688 = vmatprep.subr.mxu0 0.0
      %2689 = vmatpush1.msra.mxu0 %v2459
      %2690 = vmatprep.mubr.f32.mxu0 %v2625
      %2691 = vmatmul.mubr.f32.gmra.mrb[0].mxu0 %v2624
      %v2692 = vpop.f32.mrb[0].mxu0
      %v2693 = vadd.f32 0.0, %v2692
      %v2694 = vpop.f32.mrb[0].mxu0
      %2695 = vdwg.mxu0
      %v2696 = vmul.f32 %v2693, 0.17677669
      %v2697 = vlaneseq
      %v2698 = vshrl.u32 %v2697, 7
      %v2699 = vsub.s32 0, %v2698
      %v2700 = vrot.slane %v2340, %v2699
      %v2701 = vlaneseq
      %v2702 = vshrl.u32 %v2701, 7
      %v2703 = vsub.s32 0, %v2702
      %v2704 = vrot.slane %v2342, %v2703
      %v2705 = vmul.f32 %v2700, %v2099
      %v2706 = vmul.f32 %v2704, %v2101
      %2707 = vmatprep.subr.mxu0 0.0
      %2708 = vmatpush1.msra.mxu0 %v2428
      %2709 = vmatprep.subr.mxu0 0.0
      %2710 = vmatpush1.msra.mxu0 %v2429
      %2711 = vmatprep.subr.mxu0 0.0
      %2712 = vmatpush1.msra.mxu0 %v2430
      %2713 = vmatprep.subr.mxu0 0.0
      %2714 = vmatpush1.msra.mxu0 %v2431
      %2715 = vmatprep.subr.mxu0 0.0
      %2716 = vmatpush1.msra.mxu0 %v2432
      %2717 = vmatprep.subr.mxu0 0.0
      %2718 = vmatpush1.msra.mxu0 %v2433
      %2719 = vmatprep.subr.mxu0 0.0
      %2720 = vmatpush1.msra.mxu0 %v2434
      %2721 = vmatprep.subr.mxu0 0.0
      %2722 = vmatpush1.msra.mxu0 %v2435
      %2723 = vmatprep.subr.mxu0 0.0
      %2724 = vmatpush1.msra.mxu0 %v2436
      %2725 = vmatprep.subr.mxu0 0.0
      %2726 = vmatpush1.msra.mxu0 %v2437
      %2727 = vmatprep.subr.mxu0 0.0
      %2728 = vmatpush1.msra.mxu0 %v2438
      %2729 = vmatprep.subr.mxu0 0.0
      %2730 = vmatpush1.msra.mxu0 %v2439
      %2731 = vmatprep.subr.mxu0 0.0
      %2732 = vmatpush1.msra.mxu0 %v2440
      %2733 = vmatprep.subr.mxu0 0.0
      %2734 = vmatpush1.msra.mxu0 %v2441
      %2735 = vmatprep.subr.mxu0 0.0
      %2736 = vmatpush1.msra.mxu0 %v2442
      %2737 = vmatprep.subr.mxu0 0.0
      %2738 = vmatpush1.msra.mxu0 %v2443
      %2739 = vmatprep.subr.mxu0 0.0
      %2740 = vmatpush1.msra.mxu0 %v2444
      %2741 = vmatprep.subr.mxu0 0.0
      %2742 = vmatpush1.msra.mxu0 %v2445
      %2743 = vmatprep.subr.mxu0 0.0
      %2744 = vmatpush1.msra.mxu0 %v2446
      %2745 = vmatprep.subr.mxu0 0.0
      %2746 = vmatpush1.msra.mxu0 %v2447
      %2747 = vmatprep.subr.mxu0 0.0
      %2748 = vmatpush1.msra.mxu0 %v2448
      %2749 = vmatprep.subr.mxu0 0.0
      %2750 = vmatpush1.msra.mxu0 %v2449
      %2751 = vmatprep.subr.mxu0 0.0
      %2752 = vmatpush1.msra.mxu0 %v2450
      %2753 = vmatprep.subr.mxu0 0.0
      %2754 = vmatpush1.msra.mxu0 %v2451
      %2755 = vmatprep.subr.mxu0 0.0
      %2756 = vmatpush1.msra.mxu0 %v2452
      %2757 = vmatprep.subr.mxu0 0.0
      %2758 = vmatpush1.msra.mxu0 %v2453
      %2759 = vmatprep.subr.mxu0 0.0
      %2760 = vmatpush1.msra.mxu0 %v2454
      %2761 = vmatprep.subr.mxu0 0.0
      %2762 = vmatpush1.msra.mxu0 %v2455
      %2763 = vmatprep.subr.mxu0 0.0
      %2764 = vmatpush1.msra.mxu0 %v2456
      %2765 = vmatprep.subr.mxu0 0.0
      %2766 = vmatpush1.msra.mxu0 %v2457
      %2767 = vmatprep.subr.mxu0 0.0
      %2768 = vmatpush1.msra.mxu0 %v2458
      %2769 = vmatprep.subr.mxu0 0.0
      %2770 = vmatpush1.msra.mxu0 %v2459
      %2771 = vmatprep.mubr.f32.mxu0 %v2706
      %2772 = vmatmul.mubr.f32.gmra.mrb[0].mxu0 %v2705
      %v2773 = vpop.f32.mrb[0].mxu0
      %v2774 = vadd.f32 0.0, %v2773
      %v2775 = vpop.f32.mrb[0].mxu0
      %2776 = vdwg.mxu0
      %v2777 = vmul.f32 %v2774, 0.17677669
      %v2778 = vmul.f32 %v2340, %v2381
      %v2779 = vmul.f32 %v2342, %v2383
      %2780 = vmatprep.subr.mxu0 0.0
      %2781 = vmatpush1.msra.mxu0 %v2428
      %2782 = vmatprep.subr.mxu0 0.0
      %2783 = vmatpush1.msra.mxu0 %v2429
      %2784 = vmatprep.subr.mxu0 0.0
      %2785 = vmatpush1.msra.mxu0 %v2430
      %2786 = vmatprep.subr.mxu0 0.0
      %2787 = vmatpush1.msra.mxu0 %v2431
      %2788 = vmatprep.subr.mxu0 0.0
      %2789 = vmatpush1.msra.mxu0 %v2432
      %2790 = vmatprep.subr.mxu0 0.0
      %2791 = vmatpush1.msra.mxu0 %v2433
      %2792 = vmatprep.subr.mxu0 0.0
      %2793 = vmatpush1.msra.mxu0 %v2434
      %2794 = vmatprep.subr.mxu0 0.0
      %2795 = vmatpush1.msra.mxu0 %v2435
      %2796 = vmatprep.subr.mxu0 0.0
      %2797 = vmatpush1.msra.mxu0 %v2436
      %2798 = vmatprep.subr.mxu0 0.0
      %2799 = vmatpush1.msra.mxu0 %v2437
      %2800 = vmatprep.subr.mxu0 0.0
      %2801 = vmatpush1.msra.mxu0 %v2438
      %2802 = vmatprep.subr.mxu0 0.0
      %2803 = vmatpush1.msra.mxu0 %v2439
      %2804 = vmatprep.subr.mxu0 0.0
      %2805 = vmatpush1.msra.mxu0 %v2440
      %2806 = vmatprep.subr.mxu0 0.0
      %2807 = vmatpush1.msra.mxu0 %v2441
      %2808 = vmatprep.subr.mxu0 0.0
      %2809 = vmatpush1.msra.mxu0 %v2442
      %2810 = vmatprep.subr.mxu0 0.0
      %2811 = vmatpush1.msra.mxu0 %v2443
      %2812 = vmatprep.subr.mxu0 0.0
      %2813 = vmatpush1.msra.mxu0 %v2444
      %2814 = vmatprep.subr.mxu0 0.0
      %2815 = vmatpush1.msra.mxu0 %v2445
      %2816 = vmatprep.subr.mxu0 0.0
      %2817 = vmatpush1.msra.mxu0 %v2446
      %2818 = vmatprep.subr.mxu0 0.0
      %2819 = vmatpush1.msra.mxu0 %v2447
      %2820 = vmatprep.subr.mxu0 0.0
      %2821 = vmatpush1.msra.mxu0 %v2448
      %2822 = vmatprep.subr.mxu0 0.0
      %2823 = vmatpush1.msra.mxu0 %v2449
      %2824 = vmatprep.subr.mxu0 0.0
      %2825 = vmatpush1.msra.mxu0 %v2450
      %2826 = vmatprep.subr.mxu0 0.0
      %2827 = vmatpush1.msra.mxu0 %v2451
      %2828 = vmatprep.subr.mxu0 0.0
      %2829 = vmatpush1.msra.mxu0 %v2452
      %2830 = vmatprep.subr.mxu0 0.0
      %2831 = vmatpush1.msra.mxu0 %v2453
      %2832 = vmatprep.subr.mxu0 0.0
      %2833 = vmatpush1.msra.mxu0 %v2454
      %2834 = vmatprep.subr.mxu0 0.0
      %2835 = vmatpush1.msra.mxu0 %v2455
      %2836 = vmatprep.subr.mxu0 0.0
      %2837 = vmatpush1.msra.mxu0 %v2456
      %2838 = vmatprep.subr.mxu0 0.0
      %2839 = vmatpush1.msra.mxu0 %v2457
      %2840 = vmatprep.subr.mxu0 0.0
      %2841 = vmatpush1.msra.mxu0 %v2458
      %2842 = vmatprep.subr.mxu0 0.0
      %2843 = vmatpush1.msra.mxu0 %v2459
      %2844 = vmatprep.mubr.f32.mxu0 %v2779
      %2845 = vmatmul.mubr.f32.gmra.mrb[0].mxu0 %v2778
      %v2846 = vpop.f32.mrb[0].mxu0
      %v2847 = vadd.f32 0.0, %v2846
      %v2848 = vpop.f32.mrb[0].mxu0
      %2849 = vdwg.mxu0
      %v2850 = vmul.f32 %v2847, 0.17677669
      %v2853 = vrot.slane %v2381, 1
      %v2854 = vrot.slane %v2383, 1
      %v2857 = vmul.f32 %v2340, %v2853
      %v2858 = vmul.f32 %v2342, %v2854
      %2859 = vmatprep.subr.mxu0 0.0
      %2860 = vmatpush1.msra.mxu0 %v2428
      %2861 = vmatprep.subr.mxu0 0.0
      %2862 = vmatpush1.msra.mxu0 %v2429
      %2863 = vmatprep.subr.mxu0 0.0
      %2864 = vmatpush1.msra.mxu0 %v2430
      %2865 = vmatprep.subr.mxu0 0.0
      %2866 = vmatpush1.msra.mxu0 %v2431
      %2867 = vmatprep.subr.mxu0 0.0
      %2868 = vmatpush1.msra.mxu0 %v2432
      %2869 = vmatprep.subr.mxu0 0.0
      %2870 = vmatpush1.msra.mxu0 %v2433
      %2871 = vmatprep.subr.mxu0 0.0
      %2872 = vmatpush1.msra.mxu0 %v2434
      %2873 = vmatprep.subr.mxu0 0.0
      %2874 = vmatpush1.msra.mxu0 %v2435
      %2875 = vmatprep.subr.mxu0 0.0
      %2876 = vmatpush1.msra.mxu0 %v2436
      %2877 = vmatprep.subr.mxu0 0.0
      %2878 = vmatpush1.msra.mxu0 %v2437
      %2879 = vmatprep.subr.mxu0 0.0
      %2880 = vmatpush1.msra.mxu0 %v2438
      %2881 = vmatprep.subr.mxu0 0.0
      %2882 = vmatpush1.msra.mxu0 %v2439
      %2883 = vmatprep.subr.mxu0 0.0
      %2884 = vmatpush1.msra.mxu0 %v2440
      %2885 = vmatprep.subr.mxu0 0.0
      %2886 = vmatpush1.msra.mxu0 %v2441
      %2887 = vmatprep.subr.mxu0 0.0
      %2888 = vmatpush1.msra.mxu0 %v2442
      %2889 = vmatprep.subr.mxu0 0.0
      %2890 = vmatpush1.msra.mxu0 %v2443
      %2891 = vmatprep.subr.mxu0 0.0
      %2892 = vmatpush1.msra.mxu0 %v2444
      %2893 = vmatprep.subr.mxu0 0.0
      %2894 = vmatpush1.msra.mxu0 %v2445
      %2895 = vmatprep.subr.mxu0 0.0
      %2896 = vmatpush1.msra.mxu0 %v2446
      %2897 = vmatprep.subr.mxu0 0.0
      %2898 = vmatpush1.msra.mxu0 %v2447
      %2899 = vmatprep.subr.mxu0 0.0
      %2900 = vmatpush1.msra.mxu0 %v2448
      %2901 = vmatprep.subr.mxu0 0.0
      %2902 = vmatpush1.msra.mxu0 %v2449
      %2903 = vmatprep.subr.mxu0 0.0
      %2904 = vmatpush1.msra.mxu0 %v2450
      %2905 = vmatprep.subr.mxu0 0.0
      %2906 = vmatpush1.msra.mxu0 %v2451
      %2907 = vmatprep.subr.mxu0 0.0
      %2908 = vmatpush1.msra.mxu0 %v2452
      %2909 = vmatprep.subr.mxu0 0.0
      %2910 = vmatpush1.msra.mxu0 %v2453
      %2911 = vmatprep.subr.mxu0 0.0
      %2912 = vmatpush1.msra.mxu0 %v2454
      %2913 = vmatprep.subr.mxu0 0.0
      %2914 = vmatpush1.msra.mxu0 %v2455
      %2915 = vmatprep.subr.mxu0 0.0
      %2916 = vmatpush1.msra.mxu0 %v2456
      %2917 = vmatprep.subr.mxu0 0.0
      %2918 = vmatpush1.msra.mxu0 %v2457
      %2919 = vmatprep.subr.mxu0 0.0
      %2920 = vmatpush1.msra.mxu0 %v2458
      %2921 = vmatprep.subr.mxu0 0.0
      %2922 = vmatpush1.msra.mxu0 %v2459
      %2923 = vmatprep.mubr.f32.mxu0 %v2858
      %2924 = vmatmul.mubr.f32.gmra.mrb[0].mxu0 %v2857
      %v2925 = vpop.f32.mrb[0].mxu0
      %v2926 = vadd.f32 0.0, %v2925
      %v2927 = vpop.f32.mrb[0].mxu0
      %2928 = vdwg.mxu0
      %v2929 = vmul.f32 %v2926, 0.17677669
      %v2930 = vlaneseq
      %v2931 = vshrl.u32 %v2930, 7
      %v2932 = vsub.s32 1, %v2931
      %v2933 = vrot.slane %v2340, %v2932
      %v2934 = vlaneseq
      %v2935 = vshrl.u32 %v2934, 7
      %v2936 = vsub.s32 1, %v2935
      %v2937 = vrot.slane %v2342, %v2936
      %v2938 = vmul.f32 %v2933, %v2099
      %v2939 = vmul.f32 %v2937, %v2101
      %2940 = vmatprep.subr.mxu0 0.0
      %2941 = vmatpush1.msra.mxu0 %v2428
      %2942 = vmatprep.subr.mxu0 0.0
      %2943 = vmatpush1.msra.mxu0 %v2429
      %2944 = vmatprep.subr.mxu0 0.0
      %2945 = vmatpush1.msra.mxu0 %v2430
      %2946 = vmatprep.subr.mxu0 0.0
      %2947 = vmatpush1.msra.mxu0 %v2431
      %2948 = vmatprep.subr.mxu0 0.0
      %2949 = vmatpush1.msra.mxu0 %v2432
      %2950 = vmatprep.subr.mxu0 0.0
      %2951 = vmatpush1.msra.mxu0 %v2433
      %2952 = vmatprep.subr.mxu0 0.0
      %2953 = vmatpush1.msra.mxu0 %v2434
      %2954 = vmatprep.subr.mxu0 0.0
      %2955 = vmatpush1.msra.mxu0 %v2435
      %2956 = vmatprep.subr.mxu0 0.0
      %2957 = vmatpush1.msra.mxu0 %v2436
      %2958 = vmatprep.subr.mxu0 0.0
      %2959 = vmatpush1.msra.mxu0 %v2437
      %2960 = vmatprep.subr.mxu0 0.0
      %2961 = vmatpush1.msra.mxu0 %v2438
      %2962 = vmatprep.subr.mxu0 0.0
      %2963 = vmatpush1.msra.mxu0 %v2439
      %2964 = vmatprep.subr.mxu0 0.0
      %2965 = vmatpush1.msra.mxu0 %v2440
      %2966 = vmatprep.subr.mxu0 0.0
      %2967 = vmatpush1.msra.mxu0 %v2441
      %2968 = vmatprep.subr.mxu0 0.0
      %2969 = vmatpush1.msra.mxu0 %v2442
      %2970 = vmatprep.subr.mxu0 0.0
      %2971 = vmatpush1.msra.mxu0 %v2443
      %2972 = vmatprep.subr.mxu0 0.0
      %2973 = vmatpush1.msra.mxu0 %v2444
      %2974 = vmatprep.subr.mxu0 0.0
      %2975 = vmatpush1.msra.mxu0 %v2445
      %2976 = vmatprep.subr.mxu0 0.0
      %2977 = vmatpush1.msra.mxu0 %v2446
      %2978 = vmatprep.subr.mxu0 0.0
      %2979 = vmatpush1.msra.mxu0 %v2447
      %2980 = vmatprep.subr.mxu0 0.0
      %2981 = vmatpush1.msra.mxu0 %v2448
      %2982 = vmatprep.subr.mxu0 0.0
      %2983 = vmatpush1.msra.mxu0 %v2449
      %2984 = vmatprep.subr.mxu0 0.0
      %2985 = vmatpush1.msra.mxu0 %v2450
      %2986 = vmatprep.subr.mxu0 0.0
      %2987 = vmatpush1.msra.mxu0 %v2451
      %2988 = vmatprep.subr.mxu0 0.0
      %2989 = vmatpush1.msra.mxu0 %v2452
      %2990 = vmatprep.subr.mxu0 0.0
      %2991 = vmatpush1.msra.mxu0 %v2453
      %2992 = vmatprep.subr.mxu0 0.0
      %2993 = vmatpush1.msra.mxu0 %v2454
      %2994 = vmatprep.subr.mxu0 0.0
      %2995 = vmatpush1.msra.mxu0 %v2455
      %2996 = vmatprep.subr.mxu0 0.0
      %2997 = vmatpush1.msra.mxu0 %v2456
      %2998 = vmatprep.subr.mxu0 0.0
      %2999 = vmatpush1.msra.mxu0 %v2457
      %3000 = vmatprep.subr.mxu0 0.0
      %3001 = vmatpush1.msra.mxu0 %v2458
      %3002 = vmatprep.subr.mxu0 0.0
      %3003 = vmatpush1.msra.mxu0 %v2459
      %3004 = vmatprep.mubr.f32.mxu0 %v2939
      %3005 = vmatmul.mubr.f32.gmra.mrb[0].mxu0 %v2938
      %v3006 = vpop.f32.mrb[0].mxu0
      %v3007 = vadd.f32 0.0, %v3006
      %v3008 = vpop.f32.mrb[0].mxu0
      %3009 = vdwg.mxu0
      %v3010 = vmul.f32 %v3007, 0.17677669
      %v3011 = vrot.slane %v2381, 7
      %v3012 = vrot.slane %v2383, 7
      %v3015 = vmul.f32 %v2340, %v3011
      %v3016 = vmul.f32 %v2342, %v3012
      %v3019 = vrot.slane %v3015, 1
      %v3020 = vrot.slane %v3016, 1
      %3023 = vmatprep.subr.mxu0 0.0
      %3024 = vmatpush1.msra.mxu0 %v2428
      %3025 = vmatprep.subr.mxu0 0.0
      %3026 = vmatpush1.msra.mxu0 %v2429
      %3027 = vmatprep.subr.mxu0 0.0
      %3028 = vmatpush1.msra.mxu0 %v2430
      %3029 = vmatprep.subr.mxu0 0.0
      %3030 = vmatpush1.msra.mxu0 %v2431
      %3031 = vmatprep.subr.mxu0 0.0
      %3032 = vmatpush1.msra.mxu0 %v2432
      %3033 = vmatprep.subr.mxu0 0.0
      %3034 = vmatpush1.msra.mxu0 %v2433
      %3035 = vmatprep.subr.mxu0 0.0
      %3036 = vmatpush1.msra.mxu0 %v2434
      %3037 = vmatprep.subr.mxu0 0.0
      %3038 = vmatpush1.msra.mxu0 %v2435
      %3039 = vmatprep.subr.mxu0 0.0
      %3040 = vmatpush1.msra.mxu0 %v2436
      %3041 = vmatprep.subr.mxu0 0.0
      %3042 = vmatpush1.msra.mxu0 %v2437
      %3043 = vmatprep.subr.mxu0 0.0
      %3044 = vmatpush1.msra.mxu0 %v2438
      %3045 = vmatprep.subr.mxu0 0.0
      %3046 = vmatpush1.msra.mxu0 %v2439
      %3047 = vmatprep.subr.mxu0 0.0
      %3048 = vmatpush1.msra.mxu0 %v2440
      %3049 = vmatprep.subr.mxu0 0.0
      %3050 = vmatpush1.msra.mxu0 %v2441
      %3051 = vmatprep.subr.mxu0 0.0
      %3052 = vmatpush1.msra.mxu0 %v2442
      %3053 = vmatprep.subr.mxu0 0.0
      %3054 = vmatpush1.msra.mxu0 %v2443
      %3055 = vmatprep.subr.mxu0 0.0
      %3056 = vmatpush1.msra.mxu0 %v2444
      %3057 = vmatprep.subr.mxu0 0.0
      %3058 = vmatpush1.msra.mxu0 %v2445
      %3059 = vmatprep.subr.mxu0 0.0
      %3060 = vmatpush1.msra.mxu0 %v2446
      %3061 = vmatprep.subr.mxu0 0.0
      %3062 = vmatpush1.msra.mxu0 %v2447
      %3063 = vmatprep.subr.mxu0 0.0
      %3064 = vmatpush1.msra.mxu0 %v2448
      %3065 = vmatprep.subr.mxu0 0.0
      %3066 = vmatpush1.msra.mxu0 %v2449
      %3067 = vmatprep.subr.mxu0 0.0
      %3068 = vmatpush1.msra.mxu0 %v2450
      %3069 = vmatprep.subr.mxu0 0.0
      %3070 = vmatpush1.msra.mxu0 %v2451
      %3071 = vmatprep.subr.mxu0 0.0
      %3072 = vmatpush1.msra.mxu0 %v2452
      %3073 = vmatprep.subr.mxu0 0.0
      %3074 = vmatpush1.msra.mxu0 %v2453
      %3075 = vmatprep.subr.mxu0 0.0
      %3076 = vmatpush1.msra.mxu0 %v2454
      %3077 = vmatprep.subr.mxu0 0.0
      %3078 = vmatpush1.msra.mxu0 %v2455
      %3079 = vmatprep.subr.mxu0 0.0
      %3080 = vmatpush1.msra.mxu0 %v2456
      %3081 = vmatprep.subr.mxu0 0.0
      %3082 = vmatpush1.msra.mxu0 %v2457
      %3083 = vmatprep.subr.mxu0 0.0
      %3084 = vmatpush1.msra.mxu0 %v2458
      %3085 = vmatprep.subr.mxu0 0.0
      %3086 = vmatpush1.msra.mxu0 %v2459
      %3087 = vmatprep.mubr.f32.mxu0 %v3020
      %3088 = vmatmul.mubr.f32.gmra.mrb[0].mxu0 %v3019
      %v3089 = vpop.f32.mrb[0].mxu0
      %v3090 = vadd.f32 0.0, %v3089
      %v3091 = vpop.f32.mrb[0].mxu0
      %3092 = vdwg.mxu0
      %v3093 = vmul.f32 %v3090, 0.17677669
      %v3096 = vrot.slane %v2778, 1
      %v3097 = vrot.slane %v2779, 1
      %3100 = vmatprep.subr.mxu0 0.0
      %3101 = vmatpush1.msra.mxu0 %v2428
      %3102 = vmatprep.subr.mxu0 0.0
      %3103 = vmatpush1.msra.mxu0 %v2429
      %3104 = vmatprep.subr.mxu0 0.0
      %3105 = vmatpush1.msra.mxu0 %v2430
      %3106 = vmatprep.subr.mxu0 0.0
      %3107 = vmatpush1.msra.mxu0 %v2431
      %3108 = vmatprep.subr.mxu0 0.0
      %3109 = vmatpush1.msra.mxu0 %v2432
      %3110 = vmatprep.subr.mxu0 0.0
      %3111 = vmatpush1.msra.mxu0 %v2433
      %3112 = vmatprep.subr.mxu0 0.0
      %3113 = vmatpush1.msra.mxu0 %v2434
      %3114 = vmatprep.subr.mxu0 0.0
      %3115 = vmatpush1.msra.mxu0 %v2435
      %3116 = vmatprep.subr.mxu0 0.0
      %3117 = vmatpush1.msra.mxu0 %v2436
      %3118 = vmatprep.subr.mxu0 0.0
      %3119 = vmatpush1.msra.mxu0 %v2437
      %3120 = vmatprep.subr.mxu0 0.0
      %3121 = vmatpush1.msra.mxu0 %v2438
      %3122 = vmatprep.subr.mxu0 0.0
      %3123 = vmatpush1.msra.mxu0 %v2439
      %3124 = vmatprep.subr.mxu0 0.0
      %3125 = vmatpush1.msra.mxu0 %v2440
      %3126 = vmatprep.subr.mxu0 0.0
      %3127 = vmatpush1.msra.mxu0 %v2441
      %3128 = vmatprep.subr.mxu0 0.0
      %3129 = vmatpush1.msra.mxu0 %v2442
      %3130 = vmatprep.subr.mxu0 0.0
      %3131 = vmatpush1.msra.mxu0 %v2443
      %3132 = vmatprep.subr.mxu0 0.0
      %3133 = vmatpush1.msra.mxu0 %v2444
      %3134 = vmatprep.subr.mxu0 0.0
      %3135 = vmatpush1.msra.mxu0 %v2445
      %3136 = vmatprep.subr.mxu0 0.0
      %3137 = vmatpush1.msra.mxu0 %v2446
      %3138 = vmatprep.subr.mxu0 0.0
      %3139 = vmatpush1.msra.mxu0 %v2447
      %3140 = vmatprep.subr.mxu0 0.0
      %3141 = vmatpush1.msra.mxu0 %v2448
      %3142 = vmatprep.subr.mxu0 0.0
      %3143 = vmatpush1.msra.mxu0 %v2449
      %3144 = vmatprep.subr.mxu0 0.0
      %3145 = vmatpush1.msra.mxu0 %v2450
      %3146 = vmatprep.subr.mxu0 0.0
      %3147 = vmatpush1.msra.mxu0 %v2451
      %3148 = vmatprep.subr.mxu0 0.0
      %3149 = vmatpush1.msra.mxu0 %v2452
      %3150 = vmatprep.subr.mxu0 0.0
      %3151 = vmatpush1.msra.mxu0 %v2453
      %3152 = vmatprep.subr.mxu0 0.0
      %3153 = vmatpush1.msra.mxu0 %v2454
      %3154 = vmatprep.subr.mxu0 0.0
      %3155 = vmatpush1.msra.mxu0 %v2455
      %3156 = vmatprep.subr.mxu0 0.0
      %3157 = vmatpush1.msra.mxu0 %v2456
      %3158 = vmatprep.subr.mxu0 0.0
      %3159 = vmatpush1.msra.mxu0 %v2457
      %3160 = vmatprep.subr.mxu0 0.0
      %3161 = vmatpush1.msra.mxu0 %v2458
      %3162 = vmatprep.subr.mxu0 0.0
      %3163 = vmatpush1.msra.mxu0 %v2459
      %3164 = vmatprep.mubr.f32.mxu0 %v3097
      %3165 = vmatmul.mubr.f32.gmra.mrb[0].mxu0 %v3096
      %v3166 = vpop.f32.mrb[0].mxu0
      %v3167 = vadd.f32 0.0, %v3166
      %v3168 = vpop.f32.mrb[0].mxu0
      %3169 = vdwg.mxu0
      %v3170 = vmul.f32 %v3167, 0.17677669
      %v3171 = vmax.f32 %v2615, %v2696
      %v3172 = vmax.f32 %v2534, %v3171
      %v3173 = vsub.f32 %v2534, %v3172
      %v3174 = vmul.f32 %v3173, 1.442695
      %v3175 = vpow.pop %v3174
      %v3176 = vsub.f32 %v2615, %v3172
      %v3177 = vmul.f32 %v3176, 1.442695
      %v3178 = vpow.pop %v3177
      %v3179 = vsub.f32 %v2696, %v3172
      %v3180 = vmul.f32 %v3179, 1.442695
      %v3181 = vpow.pop %v3180
      %v3182 = vadd.f32 %v3175, %v3178
      %v3183 = vadd.f32 %v3182, %v3181
      %v3184 = vrcp.pop %v3183
      %v3185 = vmul.f32 %v3175, %v3184
      %v3186 = vmul.f32 %v3178, %v3184
      %v3187 = vmul.f32 %v3181, %v3184
      %v3188 = vmax.f32 %v2850, %v2929
      %v3189 = vlaneseq
      %v3190 = vshrl.u32 %v3189, 7
      %v3191 = vsub.s32 0, %v3190
      %v3192 = vrot.slane %v3188, %v3191
      %v3193 = vmax.f32 %v2777, %v3192
      %v3194 = vsub.f32 %v2777, %v3193
      %v3195 = vmul.f32 %v3194, 1.442695
      %v3196 = vpow.pop %v3195
      %v3197 = vlaneseq
      %v3198 = vshrl.u32 %v3197, 7
      %v3199 = vsub.s32 0, %v3198
      %v3200 = vrot.slane %v2850, %v3199
      %v3201 = vsub.f32 %v3200, %v3193
      %v3202 = vmul.f32 %v3201, 1.442695
      %v3203 = vpow.pop %v3202
      %v3204 = vlaneseq
      %v3205 = vshrl.u32 %v3204, 7
      %v3206 = vsub.s32 0, %v3205
      %v3207 = vrot.slane %v2929, %v3206
      %v3208 = vsub.f32 %v3207, %v3193
      %v3209 = vmul.f32 %v3208, 1.442695
      %v3210 = vpow.pop %v3209
      %v3211 = vadd.f32 %v3196, %v3203
      %v3212 = vadd.f32 %v3211, %v3210
      %v3213 = vrcp.pop %v3212
      %v3214 = vmul.f32 %v3196, %v3213
      %v3215 = vmul.f32 %v3203, %v3213
      %v3216 = vmul.f32 %v3210, %v3213
      %v3217 = vmax.f32 %v3093, %v3170
      %v3218 = vlaneseq
      %v3219 = vshrl.u32 %v3218, 7
      %v3220 = vsub.s32 0, %v3219
      %v3221 = vrot.slane %v3217, %v3220
      %v3222 = vmax.f32 %v3010, %v3221
      %v3223 = vsub.f32 %v3010, %v3222
      %v3224 = vmul.f32 %v3223, 1.442695
      %v3225 = vpow.pop %v3224
      %v3226 = vlaneseq
      %v3227 = vshrl.u32 %v3226, 7
      %v3228 = vsub.s32 0, %v3227
      %v3229 = vrot.slane %v3093, %v3228
      %v3230 = vsub.f32 %v3229, %v3222
      %v3231 = vmul.f32 %v3230, 1.442695
      %v3232 = vpow.pop %v3231
      %v3233 = vlaneseq
      %v3234 = vshrl.u32 %v3233, 7
      %v3235 = vsub.s32 0, %v3234
      %v3236 = vrot.slane %v3170, %v3235
      %v3237 = vsub.f32 %v3236, %v3222
      %v3238 = vmul.f32 %v3237, 1.442695
      %v3239 = vpow.pop %v3238
      %v3240 = vadd.f32 %v3225, %v3232
      %v3241 = vadd.f32 %v3240, %v3239
      %v3242 = vrcp.pop %v3241
      %v3243 = vmul.f32 %v3225, %v3242
      %v3244 = vmul.f32 %v3232, %v3242
      %v3245 = vmul.f32 %v3239, %v3242
      %v3246 = vadd.f32 %v3185, %v3214
      %v3247 = vadd.f32 %v3246, %v3243
      %v3248 = vadd.f32 %v3186, %v3215
      %v3249 = vadd.f32 %v3248, %v3244
      %v3250 = vadd.f32 %v3187, %v3216
      %v3251 = vadd.f32 %v3250, %v3245
      %vm3252 = vcmask 64512
      %v3254 = vsel %vm3252, %v3247, 0
      %3256 = vmatprep.subr.mxu0 %v2461
      %3257 = vmatpush1.msra.mxu0 %v2460
      %3258 = vmatprep.subr.mxu0 0.0
      %3259 = vmatpush1.msra.mxu0 0.0
      %3260 = vmatprep.subr.mxu0 0.0
      %3261 = vmatpush1.msra.mxu0 0.0
      %3262 = vmatprep.subr.mxu0 0.0
      %3263 = vmatpush1.msra.mxu0 0.0
      %3264 = vmatprep.subr.mxu0 0.0
      %3265 = vmatpush1.msra.mxu0 0.0
      %3266 = vmatprep.subr.mxu0 0.0
      %3267 = vmatpush1.msra.mxu0 0.0
      %3268 = vmatprep.subr.mxu0 0.0
      %3269 = vmatpush1.msra.mxu0 0.0
      %3270 = vmatprep.subr.mxu0 0.0
      %3271 = vmatpush1.msra.mxu0 0.0
      %3272 = vmatprep.subr.mxu0 0.0
      %3273 = vmatpush1.msra.mxu0 0.0
      %3274 = vmatprep.subr.mxu0 0.0
      %3275 = vmatpush1.msra.mxu0 0.0
      %3276 = vmatprep.subr.mxu0 0.0
      %3277 = vmatpush1.msra.mxu0 0.0
      %3278 = vmatprep.subr.mxu0 0.0
      %3279 = vmatpush1.msra.mxu0 0.0
      %3280 = vmatprep.subr.mxu0 0.0
      %3281 = vmatpush1.msra.mxu0 0.0
      %3282 = vmatprep.subr.mxu0 0.0
      %3283 = vmatpush1.msra.mxu0 0.0
      %3284 = vmatprep.subr.mxu0 0.0
      %3285 = vmatpush1.msra.mxu0 0.0
      %3286 = vmatprep.subr.mxu0 0.0
      %3287 = vmatpush1.msra.mxu0 0.0
      %3288 = vmatprep.subr.mxu0 0.0
      %3289 = vmatpush1.msra.mxu0 0.0
      %3290 = vmatprep.subr.mxu0 0.0
      %3291 = vmatpush1.msra.mxu0 0.0
      %3292 = vmatprep.subr.mxu0 0.0
      %3293 = vmatpush1.msra.mxu0 0.0
      %3294 = vmatprep.subr.mxu0 0.0
      %3295 = vmatpush1.msra.mxu0 0.0
      %3296 = vmatprep.subr.mxu0 0.0
      %3297 = vmatpush1.msra.mxu0 0.0
      %3298 = vmatprep.subr.mxu0 0.0
      %3299 = vmatpush1.msra.mxu0 0.0
      %3300 = vmatprep.subr.mxu0 0.0
      %3301 = vmatpush1.msra.mxu0 0.0
      %3302 = vmatprep.subr.mxu0 0.0
      %3303 = vmatpush1.msra.mxu0 0.0
      %3304 = vmatprep.subr.mxu0 0.0
      %3305 = vmatpush1.msra.mxu0 0.0
      %3306 = vmatprep.subr.mxu0 0.0
      %3307 = vmatpush1.msra.mxu0 0.0
      %3308 = vmatprep.subr.mxu0 0.0
      %3309 = vmatpush1.msra.mxu0 0.0
      %3310 = vmatprep.subr.mxu0 0.0
      %3311 = vmatpush1.msra.mxu0 0.0
      %3312 = vmatprep.subr.mxu0 0.0
      %3313 = vmatpush1.msra.mxu0 0.0
      %3314 = vmatprep.subr.mxu0 0.0
      %3315 = vmatpush1.msra.mxu0 0.0
      %3316 = vmatprep.subr.mxu0 0.0
      %3317 = vmatpush1.msra.mxu0 0.0
      %3318 = vmatprep.subr.mxu0 0.0
      %3319 = vmatpush1.msra.mxu0 0.0
      %3320 = vmatprep.mubr.f32.mxu0 0.0
      %3321 = vmatmul.mubr.f32.gmra.mrb[0].mxu0 %v3254
      %v3322 = vpop.f32.mrb[0].mxu0
      %v3323 = vadd.f32 0.0, %v3322
      %v3324 = vpop.f32.mrb[0].mxu0
      %v3325 = vadd.f32 0.0, %v3324
      %3326 = vdwg.mxu0
      %v3327 = vmul.f32 %v3323, %v2296
      %v3328 = vmul.f32 %v3325, %v2298
      %v3330 = vsel %vm3252, %v3249, 0
      %3332 = vmatprep.subr.mxu0 %v2461
      %3333 = vmatpush1.msra.mxu0 %v2460
      %3334 = vmatprep.subr.mxu0 0.0
      %3335 = vmatpush1.msra.mxu0 0.0
      %3336 = vmatprep.subr.mxu0 0.0
      %3337 = vmatpush1.msra.mxu0 0.0
      %3338 = vmatprep.subr.mxu0 0.0
      %3339 = vmatpush1.msra.mxu0 0.0
      %3340 = vmatprep.subr.mxu0 0.0
      %3341 = vmatpush1.msra.mxu0 0.0
      %3342 = vmatprep.subr.mxu0 0.0
      %3343 = vmatpush1.msra.mxu0 0.0
      %3344 = vmatprep.subr.mxu0 0.0
      %3345 = vmatpush1.msra.mxu0 0.0
      %3346 = vmatprep.subr.mxu0 0.0
      %3347 = vmatpush1.msra.mxu0 0.0
      %3348 = vmatprep.subr.mxu0 0.0
      %3349 = vmatpush1.msra.mxu0 0.0
      %3350 = vmatprep.subr.mxu0 0.0
      %3351 = vmatpush1.msra.mxu0 0.0
      %3352 = vmatprep.subr.mxu0 0.0
      %3353 = vmatpush1.msra.mxu0 0.0
      %3354 = vmatprep.subr.mxu0 0.0
      %3355 = vmatpush1.msra.mxu0 0.0
      %3356 = vmatprep.subr.mxu0 0.0
      %3357 = vmatpush1.msra.mxu0 0.0
      %3358 = vmatprep.subr.mxu0 0.0
      %3359 = vmatpush1.msra.mxu0 0.0
      %3360 = vmatprep.subr.mxu0 0.0
      %3361 = vmatpush1.msra.mxu0 0.0
      %3362 = vmatprep.subr.mxu0 0.0
      %3363 = vmatpush1.msra.mxu0 0.0
      %3364 = vmatprep.subr.mxu0 0.0
      %3365 = vmatpush1.msra.mxu0 0.0
      %3366 = vmatprep.subr.mxu0 0.0
      %3367 = vmatpush1.msra.mxu0 0.0
      %3368 = vmatprep.subr.mxu0 0.0
      %3369 = vmatpush1.msra.mxu0 0.0
      %3370 = vmatprep.subr.mxu0 0.0
      %3371 = vmatpush1.msra.mxu0 0.0
      %3372 = vmatprep.subr.mxu0 0.0
      %3373 = vmatpush1.msra.mxu0 0.0
      %3374 = vmatprep.subr.mxu0 0.0
      %3375 = vmatpush1.msra.mxu0 0.0
      %3376 = vmatprep.subr.mxu0 0.0
      %3377 = vmatpush1.msra.mxu0 0.0
      %3378 = vmatprep.subr.mxu0 0.0
      %3379 = vmatpush1.msra.mxu0 0.0
      %3380 = vmatprep.subr.mxu0 0.0
      %3381 = vmatpush1.msra.mxu0 0.0
      %3382 = vmatprep.subr.mxu0 0.0
      %3383 = vmatpush1.msra.mxu0 0.0
      %3384 = vmatprep.subr.mxu0 0.0
      %3385 = vmatpush1.msra.mxu0 0.0
      %3386 = vmatprep.subr.mxu0 0.0
      %3387 = vmatpush1.msra.mxu0 0.0
      %3388 = vmatprep.subr.mxu0 0.0
      %3389 = vmatpush1.msra.mxu0 0.0
      %3390 = vmatprep.subr.mxu0 0.0
      %3391 = vmatpush1.msra.mxu0 0.0
      %3392 = vmatprep.subr.mxu0 0.0
      %3393 = vmatpush1.msra.mxu0 0.0
      %3394 = vmatprep.subr.mxu0 0.0
      %3395 = vmatpush1.msra.mxu0 0.0
      %3396 = vmatprep.mubr.f32.mxu0 0.0
      %3397 = vmatmul.mubr.f32.gmra.mrb[0].mxu0 %v3330
      %v3398 = vpop.f32.mrb[0].mxu0
      %v3399 = vadd.f32 0.0, %v3398
      %v3400 = vpop.f32.mrb[0].mxu0
      %v3401 = vadd.f32 0.0, %v3400
      %3402 = vdwg.mxu0
      %v3403 = vlaneseq
      %v3404 = vshrl.u32 %v3403, 7
      %v3405 = vsub.s32 0, %v3404
      %v3406 = vrot.slane %v2422, %v3405
      %v3407 = vlaneseq
      %v3408 = vshrl.u32 %v3407, 7
      %v3409 = vsub.s32 0, %v3408
      %v3410 = vrot.slane %v2424, %v3409
      %v3411 = vmul.f32 %v3399, %v3406
      %v3412 = vmul.f32 %v3401, %v3410
      %v3413 = vadd.f32 %v3327, %v3411
      %v3414 = vadd.f32 %v3328, %v3412
      %v3416 = vsel %vm3252, %v3251, 0
      %3418 = vmatprep.subr.mxu0 %v2461
      %3419 = vmatpush1.msra.mxu0 %v2460
      %3420 = vmatprep.subr.mxu0 0.0
      %3421 = vmatpush1.msra.mxu0 0.0
      %3422 = vmatprep.subr.mxu0 0.0
      %3423 = vmatpush1.msra.mxu0 0.0
      %3424 = vmatprep.subr.mxu0 0.0
      %3425 = vmatpush1.msra.mxu0 0.0
      %3426 = vmatprep.subr.mxu0 0.0
      %3427 = vmatpush1.msra.mxu0 0.0
      %3428 = vmatprep.subr.mxu0 0.0
      %3429 = vmatpush1.msra.mxu0 0.0
      %3430 = vmatprep.subr.mxu0 0.0
      %3431 = vmatpush1.msra.mxu0 0.0
      %3432 = vmatprep.subr.mxu0 0.0
      %3433 = vmatpush1.msra.mxu0 0.0
      %3434 = vmatprep.subr.mxu0 0.0
      %3435 = vmatpush1.msra.mxu0 0.0
      %3436 = vmatprep.subr.mxu0 0.0
      %3437 = vmatpush1.msra.mxu0 0.0
      %3438 = vmatprep.subr.mxu0 0.0
      %3439 = vmatpush1.msra.mxu0 0.0
      %3440 = vmatprep.subr.mxu0 0.0
      %3441 = vmatpush1.msra.mxu0 0.0
      %3442 = vmatprep.subr.mxu0 0.0
      %3443 = vmatpush1.msra.mxu0 0.0
      %3444 = vmatprep.subr.mxu0 0.0
      %3445 = vmatpush1.msra.mxu0 0.0
      %3446 = vmatprep.subr.mxu0 0.0
      %3447 = vmatpush1.msra.mxu0 0.0
      %3448 = vmatprep.subr.mxu0 0.0
      %3449 = vmatpush1.msra.mxu0 0.0
      %3450 = vmatprep.subr.mxu0 0.0
      %3451 = vmatpush1.msra.mxu0 0.0
      %3452 = vmatprep.subr.mxu0 0.0
      %3453 = vmatpush1.msra.mxu0 0.0
      %3454 = vmatprep.subr.mxu0 0.0
      %3455 = vmatpush1.msra.mxu0 0.0
      %3456 = vmatprep.subr.mxu0 0.0
      %3457 = vmatpush1.msra.mxu0 0.0
      %3458 = vmatprep.subr.mxu0 0.0
      %3459 = vmatpush1.msra.mxu0 0.0
      %3460 = vmatprep.subr.mxu0 0.0
      %3461 = vmatpush1.msra.mxu0 0.0
      %3462 = vmatprep.subr.mxu0 0.0
      %3463 = vmatpush1.msra.mxu0 0.0
      %3464 = vmatprep.subr.mxu0 0.0
      %3465 = vmatpush1.msra.mxu0 0.0
      %3466 = vmatprep.subr.mxu0 0.0
      %3467 = vmatpush1.msra.mxu0 0.0
      %3468 = vmatprep.subr.mxu0 0.0
      %3469 = vmatpush1.msra.mxu0 0.0
      %3470 = vmatprep.subr.mxu0 0.0
      %3471 = vmatpush1.msra.mxu0 0.0
      %3472 = vmatprep.subr.mxu0 0.0
      %3473 = vmatpush1.msra.mxu0 0.0
      %3474 = vmatprep.subr.mxu0 0.0
      %3475 = vmatpush1.msra.mxu0 0.0
      %3476 = vmatprep.subr.mxu0 0.0
      %3477 = vmatpush1.msra.mxu0 0.0
      %3478 = vmatprep.subr.mxu0 0.0
      %3479 = vmatpush1.msra.mxu0 0.0
      %3480 = vmatprep.subr.mxu0 0.0
      %3481 = vmatpush1.msra.mxu0 0.0
      %3482 = vmatprep.mubr.f32.mxu0 0.0
      %3483 = vmatmul.mubr.f32.gmra.mrb[0].mxu0 %v3416
      %v3484 = vpop.f32.mrb[0].mxu0
      %v3485 = vadd.f32 0.0, %v3484
      %v3486 = vpop.f32.mrb[0].mxu0
      %v3487 = vadd.f32 0.0, %v3486
      %3488 = vdwg.mxu0
      %v3489 = vlaneseq
      %v3490 = vshrl.u32 %v3489, 7
      %v3491 = vsub.s32 1, %v3490
      %v3492 = vrot.slane %v2422, %v3491
      %v3493 = vlaneseq
      %v3494 = vshrl.u32 %v3493, 7
      %v3495 = vsub.s32 1, %v3494
      %v3496 = vrot.slane %v2424, %v3495
      %v3497 = vmul.f32 %v3485, %v3492
      %v3498 = vmul.f32 %v3487, %v3496
      %v3499 = vadd.f32 %v3413, %v3497
      %v3500 = vadd.f32 %v3414, %v3498
      %v3501 = vpack.c.bf16 %v3499, %v3499
      %v3502 = vpack.c.bf16 %v3500, %v3500
      %v3503 = vld [vmem:[%s21] sm:$0xff]
      %v3504 = vld [vmem:[%s21 + $0x8] sm:$0xff]
      %v3505 = vld [vmem:[%s21 + $0x10] sm:$0xff]
      %v3506 = vld [vmem:[%s21 + $0x18] sm:$0xff]
      %v3507 = vld [vmem:[%s21 + $0x20] sm:$0xff]
      %v3508 = vld [vmem:[%s21 + $0x28] sm:$0xff]
      %v3509 = vld [vmem:[%s21 + $0x30] sm:$0xff]
      %v3510 = vld [vmem:[%s21 + $0x38] sm:$0xff]
      %v3511 = vld [vmem:[%s21 + $0x40] sm:$0xff]
      %v3512 = vld [vmem:[%s21 + $0x48] sm:$0xff]
      %v3513 = vld [vmem:[%s21 + $0x50] sm:$0xff]
      %v3514 = vld [vmem:[%s21 + $0x58] sm:$0xff]
      %v3515 = vld [vmem:[%s21 + $0x60] sm:$0xff]
      %v3516 = vld [vmem:[%s21 + $0x68] sm:$0xff]
      %v3517 = vld [vmem:[%s21 + $0x70] sm:$0xff]
      %v3518 = vld [vmem:[%s21 + $0x78] sm:$0xff]
      %v3519 = vld [vmem:[%s21 + $0x80] sm:$0xff]
      %v3520 = vld [vmem:[%s21 + $0x88] sm:$0xff]
      %v3521 = vld [vmem:[%s21 + $0x90] sm:$0xff]
      %v3522 = vld [vmem:[%s21 + $0x98] sm:$0xff]
      %v3523 = vld [vmem:[%s21 + $0xa0] sm:$0xff]
      %v3524 = vld [vmem:[%s21 + $0xa8] sm:$0xff]
      %v3525 = vld [vmem:[%s21 + $0xb0] sm:$0xff]
      %v3526 = vld [vmem:[%s21 + $0xb8] sm:$0xff]
      %v3527 = vld [vmem:[%s21 + $0xc0] sm:$0xff]
      %v3528 = vld [vmem:[%s21 + $0xc8] sm:$0xff]
      %v3529 = vld [vmem:[%s21 + $0xd0] sm:$0xff]
      %v3530 = vld [vmem:[%s21 + $0xd8] sm:$0xff]
      %v3531 = vld [vmem:[%s21 + $0xe0] sm:$0xff]
      %v3532 = vld [vmem:[%s21 + $0xe8] sm:$0xff]
      %v3533 = vld [vmem:[%s21 + $0xf0] sm:$0xff]
      %v3534 = vld [vmem:[%s21 + $0xf8] sm:$0xff]
      %v3535 = vld [vmem:[%s23] sm:$0x3]
      %v3536 = vmul.f32 %v3535, 3.0
      %v3538 = vlaneseq
      %v3539 = vshrl.u32 %v3538, 7
      %v3540 = vsub.s32 0, %v3539
      %v3541 = vrot.slane %v3536, %v3540
      %v3542 = vlaneseq
      %v3543 = vshrl.u32 %v3542, 7
      %v3544 = vsub.s32 1, %v3543
      %v3545 = vrot.slane %v3536, %v3544
      %v3580 = vunpack.c.l.b16 %v3503
      %v3581 = vunpack.c.h.b16 %v3503
      %v3582 = vunpack.c.l.b16 %v3504
      %v3583 = vunpack.c.h.b16 %v3504
      %v3584 = vunpack.c.l.b16 %v3505
      %v3585 = vunpack.c.h.b16 %v3505
      %v3586 = vunpack.c.l.b16 %v3506
      %v3587 = vunpack.c.h.b16 %v3506
      %v3588 = vunpack.c.l.b16 %v3507
      %v3589 = vunpack.c.h.b16 %v3507
      %v3590 = vunpack.c.l.b16 %v3508
      %v3591 = vunpack.c.h.b16 %v3508
      %v3592 = vunpack.c.l.b16 %v3509
      %v3593 = vunpack.c.h.b16 %v3509
      %v3594 = vunpack.c.l.b16 %v3510
      %v3595 = vunpack.c.h.b16 %v3510
      %v3596 = vunpack.c.l.b16 %v3511
      %v3597 = vunpack.c.h.b16 %v3511
      %v3598 = vunpack.c.l.b16 %v3512
      %v3599 = vunpack.c.h.b16 %v3512
      %v3600 = vunpack.c.l.b16 %v3513
      %v3601 = vunpack.c.h.b16 %v3513
      %v3602 = vunpack.c.l.b16 %v3514
      %v3603 = vunpack.c.h.b16 %v3514
      %v3604 = vunpack.c.l.b16 %v3515
      %v3605 = vunpack.c.h.b16 %v3515
      %v3606 = vunpack.c.l.b16 %v3516
      %v3607 = vunpack.c.h.b16 %v3516
      %v3608 = vunpack.c.l.b16 %v3517
      %v3609 = vunpack.c.h.b16 %v3517
      %v3610 = vunpack.c.l.b16 %v3518
      %v3611 = vunpack.c.h.b16 %v3518
      %v3612 = vunpack.c.l.b16 %v3519
      %v3613 = vunpack.c.h.b16 %v3519
      %v3614 = vunpack.c.l.b16 %v3520
      %v3615 = vunpack.c.h.b16 %v3520
      %v3616 = vunpack.c.l.b16 %v3521
      %v3617 = vunpack.c.h.b16 %v3521
      %v3618 = vunpack.c.l.b16 %v3522
      %v3619 = vunpack.c.h.b16 %v3522
      %v3620 = vunpack.c.l.b16 %v3523
      %v3621 = vunpack.c.h.b16 %v3523
      %v3622 = vunpack.c.l.b16 %v3524
      %v3623 = vunpack.c.h.b16 %v3524
      %v3624 = vunpack.c.l.b16 %v3525
      %v3625 = vunpack.c.h.b16 %v3525
      %v3626 = vunpack.c.l.b16 %v3526
      %v3627 = vunpack.c.h.b16 %v3526
      %v3628 = vunpack.c.l.b16 %v3527
      %v3629 = vunpack.c.h.b16 %v3527
      %v3630 = vunpack.c.l.b16 %v3528
      %v3631 = vunpack.c.h.b16 %v3528
      %v3632 = vunpack.c.l.b16 %v3529
      %v3633 = vunpack.c.h.b16 %v3529
      %v3634 = vunpack.c.l.b16 %v3530
      %v3635 = vunpack.c.h.b16 %v3530
      %v3636 = vunpack.c.l.b16 %v3531
      %v3637 = vunpack.c.h.b16 %v3531
      %v3638 = vunpack.c.l.b16 %v3532
      %v3639 = vunpack.c.h.b16 %v3532
      %v3640 = vunpack.c.l.b16 %v3533
      %v3641 = vunpack.c.h.b16 %v3533
      %v3642 = vunpack.c.l.b16 %v3534
      %v3643 = vunpack.c.h.b16 %v3534
      %v3644 = vpack.c.b16 %v3582, %v3580
      %v3645 = vpack.c.b16 %v3583, %v3581
      %v3646 = vpack.c.b16 %v3586, %v3584
      %v3647 = vpack.c.b16 %v3587, %v3585
      %v3648 = vpack.c.b16 %v3590, %v3588
      %v3649 = vpack.c.b16 %v3591, %v3589
      %v3650 = vpack.c.b16 %v3594, %v3592
      %v3651 = vpack.c.b16 %v3595, %v3593
      %v3652 = vpack.c.b16 %v3598, %v3596
      %v3653 = vpack.c.b16 %v3599, %v3597
      %v3654 = vpack.c.b16 %v3602, %v3600
      %v3655 = vpack.c.b16 %v3603, %v3601
      %v3656 = vpack.c.b16 %v3606, %v3604
      %v3657 = vpack.c.b16 %v3607, %v3605
      %v3658 = vpack.c.b16 %v3610, %v3608
      %v3659 = vpack.c.b16 %v3611, %v3609
      %v3660 = vpack.c.b16 %v3614, %v3612
      %v3661 = vpack.c.b16 %v3615, %v3613
      %v3662 = vpack.c.b16 %v3618, %v3616
      %v3663 = vpack.c.b16 %v3619, %v3617
      %v3664 = vpack.c.b16 %v3622, %v3620
      %v3665 = vpack.c.b16 %v3623, %v3621
      %v3666 = vpack.c.b16 %v3626, %v3624
      %v3667 = vpack.c.b16 %v3627, %v3625
      %v3668 = vpack.c.b16 %v3630, %v3628
      %v3669 = vpack.c.b16 %v3631, %v3629
      %v3670 = vpack.c.b16 %v3634, %v3632
      %v3671 = vpack.c.b16 %v3635, %v3633
      %v3672 = vpack.c.b16 %v3638, %v3636
      %v3673 = vpack.c.b16 %v3639, %v3637
      %v3674 = vpack.c.b16 %v3642, %v3640
      %v3675 = vpack.c.b16 %v3643, %v3641
      %3708 = vmatprep.subr.bf16.mxu0 %v3645
      %3709 = vmatpush1.bf16.msra.mxu0 %v3644
      %3710 = vmatprep.subr.bf16.mxu0 %v3647
      %3711 = vmatpush1.bf16.msra.mxu0 %v3646
      %3712 = vmatprep.subr.bf16.mxu0 %v3649
      %3713 = vmatpush1.bf16.msra.mxu0 %v3648
      %3714 = vmatprep.subr.bf16.mxu0 %v3651
      %3715 = vmatpush1.bf16.msra.mxu0 %v3650
      %3716 = vmatprep.subr.bf16.mxu0 %v3653
      %3717 = vmatpush1.bf16.msra.mxu0 %v3652
      %3718 = vmatprep.subr.bf16.mxu0 %v3655
      %3719 = vmatpush1.bf16.msra.mxu0 %v3654
      %3720 = vmatprep.subr.bf16.mxu0 %v3657
      %3721 = vmatpush1.bf16.msra.mxu0 %v3656
      %3722 = vmatprep.subr.bf16.mxu0 %v3659
      %3723 = vmatpush1.bf16.msra.mxu0 %v3658
      %3724 = vmatprep.subr.bf16.mxu0 %v3661
      %3725 = vmatpush1.bf16.msra.mxu0 %v3660
      %3726 = vmatprep.subr.bf16.mxu0 %v3663
      %3727 = vmatpush1.bf16.msra.mxu0 %v3662
      %3728 = vmatprep.subr.bf16.mxu0 %v3665
      %3729 = vmatpush1.bf16.msra.mxu0 %v3664
      %3730 = vmatprep.subr.bf16.mxu0 %v3667
      %3731 = vmatpush1.bf16.msra.mxu0 %v3666
      %3732 = vmatprep.subr.bf16.mxu0 %v3669
      %3733 = vmatpush1.bf16.msra.mxu0 %v3668
      %3734 = vmatprep.subr.bf16.mxu0 %v3671
      %3735 = vmatpush1.bf16.msra.mxu0 %v3670
      %3736 = vmatprep.subr.bf16.mxu0 %v3673
      %3737 = vmatpush1.bf16.msra.mxu0 %v3672
      %3738 = vmatprep.subr.bf16.mxu0 %v3675
      %3739 = vmatpush1.bf16.msra.mxu0 %v3674
      %3740 = vmatprep.mubr.bf16.mxu0 %v3502
      %3741 = vmatmul.mubr.bf16.gmra.mrb[0].mxu0 %v3501
      %v3742 = vpop.f32.mrb[0].mxu0
      %v3743 = vadd.f32 %v3541, %v3742
      %v3744 = vpop.f32.mrb[0].mxu0
      %v3745 = vadd.f32 %v3545, %v3744
      %v3746 = vpop.f32.mrb[0].mxu0
      %v3747 = vpop.f32.mrb[0].mxu0
      %3748 = vdwg.mxu0
      %v3749 = vld [vmem:[%s29] sm:$0xff]
      %v3750 = vld [vmem:[%s29 + $0x8] sm:$0xff]
      %v3751 = vld [vmem:[%s29 + $0x10] sm:$0xff]
      %v3752 = vld [vmem:[%s29 + $0x18] sm:$0xff]
      %v3753 = vld [vmem:[%s29 + $0x20] sm:$0xff]
      %v3754 = vld [vmem:[%s29 + $0x28] sm:$0xff]
      %v3755 = vld [vmem:[%s29 + $0x30] sm:$0xff]
      %v3756 = vld [vmem:[%s29 + $0x38] sm:$0xff]
      %v3757 = vld [vmem:[%s29 + $0x40] sm:$0xff]
      %v3758 = vld [vmem:[%s29 + $0x48] sm:$0xff]
      %v3759 = vld [vmem:[%s29 + $0x50] sm:$0xff]
      %v3760 = vld [vmem:[%s29 + $0x58] sm:$0xff]
      %v3761 = vld [vmem:[%s29 + $0x60] sm:$0xff]
      %v3762 = vld [vmem:[%s29 + $0x68] sm:$0xff]
      %v3763 = vld [vmem:[%s29 + $0x70] sm:$0xff]
      %v3764 = vld [vmem:[%s29 + $0x78] sm:$0xff]
      %v3765 = vld [vmem:[%s29 + $0x80] sm:$0xff]
      %v3766 = vld [vmem:[%s29 + $0x88] sm:$0xff]
      %v3767 = vld [vmem:[%s29 + $0x90] sm:$0xff]
      %v3768 = vld [vmem:[%s29 + $0x98] sm:$0xff]
      %v3769 = vld [vmem:[%s29 + $0xa0] sm:$0xff]
      %v3770 = vld [vmem:[%s29 + $0xa8] sm:$0xff]
      %v3771 = vld [vmem:[%s29 + $0xb0] sm:$0xff]
      %v3772 = vld [vmem:[%s29 + $0xb8] sm:$0xff]
      %v3773 = vld [vmem:[%s31] sm:$0xff]
      %v3774 = vld [vmem:[%s31 + $0x8] sm:$0xff]
      %v3775 = vld [vmem:[%s31 + $0x10] sm:$0xf]
      %v3776 = vld [vmem:[%s31 + $0x18] sm:$0xf]
      %v3777 = vld [vmem:[%s33] sm:$0x3]
      %v3778 = vld [vmem:[%s35] sm:$0x3]
      %vm3779 = vcmask 1044480
      %v3780 = vsel %vm3779, %v3743, 0.0
      %vm3781 = vcmask 520192
      %v3782 = vsel %vm3781, %v3745, 0.0
      %v3783 = vadd.f32 %v3780, %v3782
      %3784 = vadd.xlane.f32.xlu0 %v3783
      %v3785 = vpop.xlane.xlu0 %3784
      %v3786 = vrcp.pop 192.0
      %v3787 = vmul.f32 %v3785, %v3786
      %v3788 = vsub.f32 %v3743, %v3787
      %v3789 = vsub.f32 %v3745, %v3787
      %v3790 = vmul.f32 %v3788, %v3788
      %v3791 = vmul.f32 %v3789, %v3789
      %v3792 = vsel %vm3779, %v3790, 0.0
      %v3793 = vsel %vm3781, %v3791, 0.0
      %v3794 = vadd.f32 %v3792, %v3793
      %3795 = vadd.xlane.f32.xlu0 %v3794
      %v3796 = vpop.xlane.xlu0 %3795
      %v3797 = vmul.f32 %v3796, %v3786
      %v3798 = vadd.f32 %v3797, 1e-05
      %v3799 = vrsqrt.pop %v3798
      %v3800 = vmul.f32 %v3788, %v3799
      %v3801 = vmul.f32 %v3789, %v3799
      %v3803 = vlaneseq
      %v3804 = vshrl.u32 %v3803, 7
      %v3805 = vsub.s32 0, %v3804
      %v3806 = vrot.slane %v3777, %v3805
      %v3807 = vlaneseq
      %v3808 = vshrl.u32 %v3807, 7
      %v3809 = vsub.s32 1, %v3808
      %v3810 = vrot.slane %v3777, %v3809
      %v3813 = vmul.f32 %v3800, %v3806
      %v3814 = vmul.f32 %v3801, %v3810
      %v3816 = vlaneseq
      %v3817 = vshrl.u32 %v3816, 7
      %v3818 = vsub.s32 0, %v3817
      %v3819 = vrot.slane %v3778, %v3818
      %v3820 = vlaneseq
      %v3821 = vshrl.u32 %v3820, 7
      %v3822 = vsub.s32 1, %v3821
      %v3823 = vrot.slane %v3778, %v3822
      %v3826 = vadd.f32 %v3813, %v3819
      %v3827 = vadd.f32 %v3814, %v3823
      %v3828 = vpack.c.bf16 %v3826, %v3826
      %v3829 = vpack.c.bf16 %v3827, %v3827
      %v3830 = vld [vmem:[%s37] sm:$0xff]
      %v3831 = vld [vmem:[%s37 + $0x8] sm:$0xff]
      %v3832 = vld [vmem:[%s37 + $0x10] sm:$0xff]
      %v3833 = vld [vmem:[%s37 + $0x18] sm:$0xff]
      %v3834 = vld [vmem:[%s37 + $0x20] sm:$0xff]
      %v3835 = vld [vmem:[%s37 + $0x28] sm:$0xff]
      %v3836 = vld [vmem:[%s37 + $0x30] sm:$0xff]
      %v3837 = vld [vmem:[%s37 + $0x38] sm:$0xff]
      %v3838 = vld [vmem:[%s37 + $0x40] sm:$0xff]
      %v3839 = vld [vmem:[%s37 + $0x48] sm:$0xff]
      %v3840 = vld [vmem:[%s37 + $0x50] sm:$0xff]
      %v3841 = vld [vmem:[%s37 + $0x58] sm:$0xff]
      %v3842 = vld [vmem:[%s37 + $0x60] sm:$0xff]
      %v3843 = vld [vmem:[%s37 + $0x68] sm:$0xff]
      %v3844 = vld [vmem:[%s37 + $0x70] sm:$0xff]
      %v3845 = vld [vmem:[%s37 + $0x78] sm:$0xff]
      %v3846 = vld [vmem:[%s37 + $0x80] sm:$0xff]
      %v3847 = vld [vmem:[%s37 + $0x88] sm:$0xff]
      %v3848 = vld [vmem:[%s37 + $0x90] sm:$0xff]
      %v3849 = vld [vmem:[%s37 + $0x98] sm:$0xff]
      %v3850 = vld [vmem:[%s37 + $0xa0] sm:$0xff]
      %v3851 = vld [vmem:[%s37 + $0xa8] sm:$0xff]
      %v3852 = vld [vmem:[%s37 + $0xb0] sm:$0xff]
      %v3853 = vld [vmem:[%s37 + $0xb8] sm:$0xff]
      %v3878 = vunpack.c.l.b16 %v3830
      %v3879 = vunpack.c.h.b16 %v3830
      %v3880 = vunpack.c.l.b16 %v3831
      %v3881 = vunpack.c.h.b16 %v3831
      %v3882 = vunpack.c.l.b16 %v3832
      %v3883 = vunpack.c.h.b16 %v3832
      %v3884 = vunpack.c.l.b16 %v3833
      %v3885 = vunpack.c.h.b16 %v3833
      %v3886 = vunpack.c.l.b16 %v3834
      %v3887 = vunpack.c.h.b16 %v3834
      %v3888 = vunpack.c.l.b16 %v3835
      %v3889 = vunpack.c.h.b16 %v3835
      %v3890 = vunpack.c.l.b16 %v3836
      %v3891 = vunpack.c.h.b16 %v3836
      %v3892 = vunpack.c.l.b16 %v3837
      %v3893 = vunpack.c.h.b16 %v3837
      %v3894 = vunpack.c.l.b16 %v3838
      %v3895 = vunpack.c.h.b16 %v3838
      %v3896 = vunpack.c.l.b16 %v3839
      %v3897 = vunpack.c.h.b16 %v3839
      %v3898 = vunpack.c.l.b16 %v3840
      %v3899 = vunpack.c.h.b16 %v3840
      %v3900 = vunpack.c.l.b16 %v3841
      %v3901 = vunpack.c.h.b16 %v3841
      %v3902 = vunpack.c.l.b16 %v3842
      %v3903 = vunpack.c.h.b16 %v3842
      %v3904 = vunpack.c.l.b16 %v3843
      %v3905 = vunpack.c.h.b16 %v3843
      %v3906 = vunpack.c.l.b16 %v3844
      %v3907 = vunpack.c.h.b16 %v3844
      %v3908 = vunpack.c.l.b16 %v3845
      %v3909 = vunpack.c.h.b16 %v3845
      %v3910 = vunpack.c.l.b16 %v3846
      %v3911 = vunpack.c.h.b16 %v3846
      %v3912 = vunpack.c.l.b16 %v3847
      %v3913 = vunpack.c.h.b16 %v3847
      %v3914 = vunpack.c.l.b16 %v3848
      %v3915 = vunpack.c.h.b16 %v3848
      %v3916 = vunpack.c.l.b16 %v3849
      %v3917 = vunpack.c.h.b16 %v3849
      %v3918 = vunpack.c.l.b16 %v3850
      %v3919 = vunpack.c.h.b16 %v3850
      %v3920 = vunpack.c.l.b16 %v3851
      %v3921 = vunpack.c.h.b16 %v3851
      %v3922 = vunpack.c.l.b16 %v3852
      %v3923 = vunpack.c.h.b16 %v3852
      %v3924 = vunpack.c.l.b16 %v3853
      %v3925 = vunpack.c.h.b16 %v3853
      %v3926 = vpack.c.b16 %v3880, %v3878
      %v3927 = vpack.c.b16 %v3881, %v3879
      %v3928 = vpack.c.b16 %v3884, %v3882
      %v3929 = vpack.c.b16 %v3885, %v3883
      %v3930 = vpack.c.b16 %v3888, %v3886
      %v3931 = vpack.c.b16 %v3889, %v3887
      %v3932 = vpack.c.b16 %v3892, %v3890
      %v3933 = vpack.c.b16 %v3893, %v3891
      %v3934 = vpack.c.b16 %v3896, %v3894
      %v3935 = vpack.c.b16 %v3897, %v3895
      %v3936 = vpack.c.b16 %v3900, %v3898
      %v3937 = vpack.c.b16 %v3901, %v3899
      %v3938 = vpack.c.b16 %v3904, %v3902
      %v3939 = vpack.c.b16 %v3905, %v3903
      %v3940 = vpack.c.b16 %v3908, %v3906
      %v3941 = vpack.c.b16 %v3909, %v3907
      %v3942 = vpack.c.b16 %v3912, %v3910
      %v3943 = vpack.c.b16 %v3913, %v3911
      %v3944 = vpack.c.b16 %v3916, %v3914
      %v3945 = vpack.c.b16 %v3917, %v3915
      %v3946 = vpack.c.b16 %v3920, %v3918
      %v3947 = vpack.c.b16 %v3921, %v3919
      %v3948 = vpack.c.b16 %v3924, %v3922
      %v3949 = vpack.c.b16 %v3925, %v3923
      %v3975 = vsel %vm1863, %v3829, 0
      %3977 = vmatprep.subr.bf16.mxu0 %v3927
      %3978 = vmatpush1.bf16.msra.mxu0 %v3926
      %3979 = vmatprep.subr.bf16.mxu0 %v3929
      %3980 = vmatpush1.bf16.msra.mxu0 %v3928
      %3981 = vmatprep.subr.bf16.mxu0 %v3931
      %3982 = vmatpush1.bf16.msra.mxu0 %v3930
      %3983 = vmatprep.subr.bf16.mxu0 %v3933
      %3984 = vmatpush1.bf16.msra.mxu0 %v3932
      %3985 = vmatprep.subr.bf16.mxu0 %v3935
      %3986 = vmatpush1.bf16.msra.mxu0 %v3934
      %3987 = vmatprep.subr.bf16.mxu0 %v3937
      %3988 = vmatpush1.bf16.msra.mxu0 %v3936
      %3989 = vmatprep.subr.bf16.mxu0 %v3939
      %3990 = vmatpush1.bf16.msra.mxu0 %v3938
      %3991 = vmatprep.subr.bf16.mxu0 %v3941
      %3992 = vmatpush1.bf16.msra.mxu0 %v3940
      %3993 = vmatprep.subr.bf16.mxu0 %v3943
      %3994 = vmatpush1.bf16.msra.mxu0 %v3942
      %3995 = vmatprep.subr.bf16.mxu0 %v3945
      %3996 = vmatpush1.bf16.msra.mxu0 %v3944
      %3997 = vmatprep.subr.bf16.mxu0 %v3947
      %3998 = vmatpush1.bf16.msra.mxu0 %v3946
      %3999 = vmatprep.subr.bf16.mxu0 %v3949
      %4000 = vmatpush1.bf16.msra.mxu0 %v3948
      %4001 = vmatprep.subr.bf16.mxu0 0
      %4002 = vmatpush1.bf16.msra.mxu0 0
      %4003 = vmatprep.subr.bf16.mxu0 0
      %4004 = vmatpush1.bf16.msra.mxu0 0
      %4005 = vmatprep.subr.bf16.mxu0 0
      %4006 = vmatpush1.bf16.msra.mxu0 0
      %4007 = vmatprep.subr.bf16.mxu0 0
      %4008 = vmatpush1.bf16.msra.mxu0 0
      %4009 = vmatprep.mubr.bf16.mxu0 %v3975
      %4010 = vmatmul.mubr.bf16.gmra.mrb[0].mxu0 %v3828
      %v4011 = vpop.f32.mrb[0].mxu0
      %v4012 = vadd.f32 0.0, %v4011
      %v4013 = vpop.f32.mrb[0].mxu0
      %v4014 = vadd.f32 0.0, %v4013
      %v4015 = vpop.f32.mrb[0].mxu0
      %v4016 = vpop.f32.mrb[0].mxu0
      %4017 = vdwg.mxu0
      %v4018 = vld [vmem:[%s39] sm:$0xff]
      %v4019 = vld [vmem:[%s39 + $0x8] sm:$0xff]
      %v4020 = vld [vmem:[%s39 + $0x10] sm:$0xff]
      %v4021 = vld [vmem:[%s39 + $0x18] sm:$0xff]
      %v4022 = vld [vmem:[%s39 + $0x20] sm:$0xff]
      %v4023 = vld [vmem:[%s39 + $0x28] sm:$0xff]
      %v4024 = vld [vmem:[%s39 + $0x30] sm:$0xff]
      %v4025 = vld [vmem:[%s39 + $0x38] sm:$0xff]
      %v4026 = vld [vmem:[%s39 + $0x40] sm:$0xff]
      %v4027 = vld [vmem:[%s39 + $0x48] sm:$0xff]
      %v4028 = vld [vmem:[%s39 + $0x50] sm:$0xff]
      %v4029 = vld [vmem:[%s39 + $0x58] sm:$0xff]
      %v4030 = vld [vmem:[%s39 + $0x60] sm:$0xff]
      %v4031 = vld [vmem:[%s39 + $0x68] sm:$0xff]
      %v4032 = vld [vmem:[%s39 + $0x70] sm:$0xff]
      %v4033 = vld [vmem:[%s39 + $0x78] sm:$0xff]
      %v4034 = vld [vmem:[%s39 + $0x80] sm:$0xff]
      %v4035 = vld [vmem:[%s39 + $0x88] sm:$0xff]
      %v4036 = vld [vmem:[%s39 + $0x90] sm:$0xff]
      %v4037 = vld [vmem:[%s39 + $0x98] sm:$0xff]
      %v4038 = vld [vmem:[%s39 + $0xa0] sm:$0xff]
      %v4039 = vld [vmem:[%s39 + $0xa8] sm:$0xff]
      %v4040 = vld [vmem:[%s39 + $0xb0] sm:$0xff]
      %v4041 = vld [vmem:[%s39 + $0xb8] sm:$0xff]
      %v4066 = vunpack.c.l.b16 %v4018
      %v4067 = vunpack.c.h.b16 %v4018
      %v4068 = vunpack.c.l.b16 %v4019
      %v4069 = vunpack.c.h.b16 %v4019
      %v4070 = vunpack.c.l.b16 %v4020
      %v4071 = vunpack.c.h.b16 %v4020
      %v4072 = vunpack.c.l.b16 %v4021
      %v4073 = vunpack.c.h.b16 %v4021
      %v4074 = vunpack.c.l.b16 %v4022
      %v4075 = vunpack.c.h.b16 %v4022
      %v4076 = vunpack.c.l.b16 %v4023
      %v4077 = vunpack.c.h.b16 %v4023
      %v4078 = vunpack.c.l.b16 %v4024
      %v4079 = vunpack.c.h.b16 %v4024
      %v4080 = vunpack.c.l.b16 %v4025
      %v4081 = vunpack.c.h.b16 %v4025
      %v4082 = vunpack.c.l.b16 %v4026
      %v4083 = vunpack.c.h.b16 %v4026
      %v4084 = vunpack.c.l.b16 %v4027
      %v4085 = vunpack.c.h.b16 %v4027
      %v4086 = vunpack.c.l.b16 %v4028
      %v4087 = vunpack.c.h.b16 %v4028
      %v4088 = vunpack.c.l.b16 %v4029
      %v4089 = vunpack.c.h.b16 %v4029
      %v4090 = vunpack.c.l.b16 %v4030
      %v4091 = vunpack.c.h.b16 %v4030
      %v4092 = vunpack.c.l.b16 %v4031
      %v4093 = vunpack.c.h.b16 %v4031
      %v4094 = vunpack.c.l.b16 %v4032
      %v4095 = vunpack.c.h.b16 %v4032
      %v4096 = vunpack.c.l.b16 %v4033
      %v4097 = vunpack.c.h.b16 %v4033
      %v4098 = vunpack.c.l.b16 %v4034
      %v4099 = vunpack.c.h.b16 %v4034
      %v4100 = vunpack.c.l.b16 %v4035
      %v4101 = vunpack.c.h.b16 %v4035
      %v4102 = vunpack.c.l.b16 %v4036
      %v4103 = vunpack.c.h.b16 %v4036
      %v4104 = vunpack.c.l.b16 %v4037
      %v4105 = vunpack.c.h.b16 %v4037
      %v4106 = vunpack.c.l.b16 %v4038
      %v4107 = vunpack.c.h.b16 %v4038
      %v4108 = vunpack.c.l.b16 %v4039
      %v4109 = vunpack.c.h.b16 %v4039
      %v4110 = vunpack.c.l.b16 %v4040
      %v4111 = vunpack.c.h.b16 %v4040
      %v4112 = vunpack.c.l.b16 %v4041
      %v4113 = vunpack.c.h.b16 %v4041
      %v4114 = vpack.c.b16 %v4068, %v4066
      %v4115 = vpack.c.b16 %v4069, %v4067
      %v4116 = vpack.c.b16 %v4072, %v4070
      %v4117 = vpack.c.b16 %v4073, %v4071
      %v4118 = vpack.c.b16 %v4076, %v4074
      %v4119 = vpack.c.b16 %v4077, %v4075
      %v4120 = vpack.c.b16 %v4080, %v4078
      %v4121 = vpack.c.b16 %v4081, %v4079
      %v4122 = vpack.c.b16 %v4084, %v4082
      %v4123 = vpack.c.b16 %v4085, %v4083
      %v4124 = vpack.c.b16 %v4088, %v4086
      %v4125 = vpack.c.b16 %v4089, %v4087
      %v4126 = vpack.c.b16 %v4092, %v4090
      %v4127 = vpack.c.b16 %v4093, %v4091
      %v4128 = vpack.c.b16 %v4096, %v4094
      %v4129 = vpack.c.b16 %v4097, %v4095
      %v4130 = vpack.c.b16 %v4100, %v4098
      %v4131 = vpack.c.b16 %v4101, %v4099
      %v4132 = vpack.c.b16 %v4104, %v4102
      %v4133 = vpack.c.b16 %v4105, %v4103
      %v4134 = vpack.c.b16 %v4108, %v4106
      %v4135 = vpack.c.b16 %v4109, %v4107
      %v4136 = vpack.c.b16 %v4112, %v4110
      %v4137 = vpack.c.b16 %v4113, %v4111
      %4162 = vmatprep.subr.bf16.mxu0 %v4115
      %4163 = vmatpush1.bf16.msra.mxu0 %v4114
      %4164 = vmatprep.subr.bf16.mxu0 %v4117
      %4165 = vmatpush1.bf16.msra.mxu0 %v4116
      %4166 = vmatprep.subr.bf16.mxu0 %v4119
      %4167 = vmatpush1.bf16.msra.mxu0 %v4118
      %4168 = vmatprep.subr.bf16.mxu0 %v4121
      %4169 = vmatpush1.bf16.msra.mxu0 %v4120
      %4170 = vmatprep.subr.bf16.mxu0 %v4123
      %4171 = vmatpush1.bf16.msra.mxu0 %v4122
      %4172 = vmatprep.subr.bf16.mxu0 %v4125
      %4173 = vmatpush1.bf16.msra.mxu0 %v4124
      %4174 = vmatprep.subr.bf16.mxu0 %v4127
      %4175 = vmatpush1.bf16.msra.mxu0 %v4126
      %4176 = vmatprep.subr.bf16.mxu0 %v4129
      %4177 = vmatpush1.bf16.msra.mxu0 %v4128
      %4178 = vmatprep.subr.bf16.mxu0 %v4131
      %4179 = vmatpush1.bf16.msra.mxu0 %v4130
      %4180 = vmatprep.subr.bf16.mxu0 %v4133
      %4181 = vmatpush1.bf16.msra.mxu0 %v4132
      %4182 = vmatprep.subr.bf16.mxu0 %v4135
      %4183 = vmatpush1.bf16.msra.mxu0 %v4134
      %4184 = vmatprep.subr.bf16.mxu0 %v4137
      %4185 = vmatpush1.bf16.msra.mxu0 %v4136
      %4186 = vmatprep.subr.bf16.mxu0 0
      %4187 = vmatpush1.bf16.msra.mxu0 0
      %4188 = vmatprep.subr.bf16.mxu0 0
      %4189 = vmatpush1.bf16.msra.mxu0 0
      %4190 = vmatprep.subr.bf16.mxu0 0
      %4191 = vmatpush1.bf16.msra.mxu0 0
      %4192 = vmatprep.subr.bf16.mxu0 0
      %4193 = vmatpush1.bf16.msra.mxu0 0
      %4194 = vmatprep.mubr.bf16.mxu0 %v3975
      %4195 = vmatmul.mubr.bf16.gmra.mrb[0].mxu0 %v3828
      %v4196 = vpop.f32.mrb[0].mxu0
      %v4197 = vadd.f32 0.0, %v4196
      %v4198 = vpop.f32.mrb[0].mxu0
      %v4199 = vadd.f32 0.0, %v4198
      %v4200 = vpop.f32.mrb[0].mxu0
      %v4201 = vpop.f32.mrb[0].mxu0
      %4202 = vdwg.mxu0
      %v4203 = vld [vmem:[%s41] sm:$0xff]
      %v4204 = vld [vmem:[%s41 + $0x8] sm:$0xff]
      %v4205 = vld [vmem:[%s41 + $0x10] sm:$0xff]
      %v4206 = vld [vmem:[%s41 + $0x18] sm:$0xff]
      %v4207 = vld [vmem:[%s41 + $0x20] sm:$0xff]
      %v4208 = vld [vmem:[%s41 + $0x28] sm:$0xff]
      %v4209 = vld [vmem:[%s41 + $0x30] sm:$0xff]
      %v4210 = vld [vmem:[%s41 + $0x38] sm:$0xff]
      %v4211 = vld [vmem:[%s41 + $0x40] sm:$0xff]
      %v4212 = vld [vmem:[%s41 + $0x48] sm:$0xff]
      %v4213 = vld [vmem:[%s41 + $0x50] sm:$0xff]
      %v4214 = vld [vmem:[%s41 + $0x58] sm:$0xff]
      %v4215 = vld [vmem:[%s41 + $0x60] sm:$0xff]
      %v4216 = vld [vmem:[%s41 + $0x68] sm:$0xff]
      %v4217 = vld [vmem:[%s41 + $0x70] sm:$0xff]
      %v4218 = vld [vmem:[%s41 + $0x78] sm:$0xff]
      %v4219 = vld [vmem:[%s41 + $0x80] sm:$0xff]
      %v4220 = vld [vmem:[%s41 + $0x88] sm:$0xff]
      %v4221 = vld [vmem:[%s41 + $0x90] sm:$0xff]
      %v4222 = vld [vmem:[%s41 + $0x98] sm:$0xff]
      %v4223 = vld [vmem:[%s41 + $0xa0] sm:$0xff]
      %v4224 = vld [vmem:[%s41 + $0xa8] sm:$0xff]
      %v4225 = vld [vmem:[%s41 + $0xb0] sm:$0xff]
      %v4226 = vld [vmem:[%s41 + $0xb8] sm:$0xff]
      %v4251 = vunpack.c.l.b16 %v4203
      %v4252 = vunpack.c.h.b16 %v4203
      %v4253 = vunpack.c.l.b16 %v4204
      %v4254 = vunpack.c.h.b16 %v4204
      %v4255 = vunpack.c.l.b16 %v4205
      %v4256 = vunpack.c.h.b16 %v4205
      %v4257 = vunpack.c.l.b16 %v4206
      %v4258 = vunpack.c.h.b16 %v4206
      %v4259 = vunpack.c.l.b16 %v4207
      %v4260 = vunpack.c.h.b16 %v4207
      %v4261 = vunpack.c.l.b16 %v4208
      %v4262 = vunpack.c.h.b16 %v4208
      %v4263 = vunpack.c.l.b16 %v4209
      %v4264 = vunpack.c.h.b16 %v4209
      %v4265 = vunpack.c.l.b16 %v4210
      %v4266 = vunpack.c.h.b16 %v4210
      %v4267 = vunpack.c.l.b16 %v4211
      %v4268 = vunpack.c.h.b16 %v4211
      %v4269 = vunpack.c.l.b16 %v4212
      %v4270 = vunpack.c.h.b16 %v4212
      %v4271 = vunpack.c.l.b16 %v4213
      %v4272 = vunpack.c.h.b16 %v4213
      %v4273 = vunpack.c.l.b16 %v4214
      %v4274 = vunpack.c.h.b16 %v4214
      %v4275 = vunpack.c.l.b16 %v4215
      %v4276 = vunpack.c.h.b16 %v4215
      %v4277 = vunpack.c.l.b16 %v4216
      %v4278 = vunpack.c.h.b16 %v4216
      %v4279 = vunpack.c.l.b16 %v4217
      %v4280 = vunpack.c.h.b16 %v4217
      %v4281 = vunpack.c.l.b16 %v4218
      %v4282 = vunpack.c.h.b16 %v4218
      %v4283 = vunpack.c.l.b16 %v4219
      %v4284 = vunpack.c.h.b16 %v4219
      %v4285 = vunpack.c.l.b16 %v4220
      %v4286 = vunpack.c.h.b16 %v4220
      %v4287 = vunpack.c.l.b16 %v4221
      %v4288 = vunpack.c.h.b16 %v4221
      %v4289 = vunpack.c.l.b16 %v4222
      %v4290 = vunpack.c.h.b16 %v4222
      %v4291 = vunpack.c.l.b16 %v4223
      %v4292 = vunpack.c.h.b16 %v4223
      %v4293 = vunpack.c.l.b16 %v4224
      %v4294 = vunpack.c.h.b16 %v4224
      %v4295 = vunpack.c.l.b16 %v4225
      %v4296 = vunpack.c.h.b16 %v4225
      %v4297 = vunpack.c.l.b16 %v4226
      %v4298 = vunpack.c.h.b16 %v4226
      %v4299 = vpack.c.b16 %v4253, %v4251
      %v4300 = vpack.c.b16 %v4254, %v4252
      %v4301 = vpack.c.b16 %v4257, %v4255
      %v4302 = vpack.c.b16 %v4258, %v4256
      %v4303 = vpack.c.b16 %v4261, %v4259
      %v4304 = vpack.c.b16 %v4262, %v4260
      %v4305 = vpack.c.b16 %v4265, %v4263
      %v4306 = vpack.c.b16 %v4266, %v4264
      %v4307 = vpack.c.b16 %v4269, %v4267
      %v4308 = vpack.c.b16 %v4270, %v4268
      %v4309 = vpack.c.b16 %v4273, %v4271
      %v4310 = vpack.c.b16 %v4274, %v4272
      %v4311 = vpack.c.b16 %v4277, %v4275
      %v4312 = vpack.c.b16 %v4278, %v4276
      %v4313 = vpack.c.b16 %v4281, %v4279
      %v4314 = vpack.c.b16 %v4282, %v4280
      %v4315 = vpack.c.b16 %v4285, %v4283
      %v4316 = vpack.c.b16 %v4286, %v4284
      %v4317 = vpack.c.b16 %v4289, %v4287
      %v4318 = vpack.c.b16 %v4290, %v4288
      %v4319 = vpack.c.b16 %v4293, %v4291
      %v4320 = vpack.c.b16 %v4294, %v4292
      %v4321 = vpack.c.b16 %v4297, %v4295
      %v4322 = vpack.c.b16 %v4298, %v4296
      %4347 = vmatprep.subr.bf16.mxu0 %v4300
      %4348 = vmatpush1.bf16.msra.mxu0 %v4299
      %4349 = vmatprep.subr.bf16.mxu0 %v4302
      %4350 = vmatpush1.bf16.msra.mxu0 %v4301
      %4351 = vmatprep.subr.bf16.mxu0 %v4304
      %4352 = vmatpush1.bf16.msra.mxu0 %v4303
      %4353 = vmatprep.subr.bf16.mxu0 %v4306
      %4354 = vmatpush1.bf16.msra.mxu0 %v4305
      %4355 = vmatprep.subr.bf16.mxu0 %v4308
      %4356 = vmatpush1.bf16.msra.mxu0 %v4307
      %4357 = vmatprep.subr.bf16.mxu0 %v4310
      %4358 = vmatpush1.bf16.msra.mxu0 %v4309
      %4359 = vmatprep.subr.bf16.mxu0 %v4312
      %4360 = vmatpush1.bf16.msra.mxu0 %v4311
      %4361 = vmatprep.subr.bf16.mxu0 %v4314
      %4362 = vmatpush1.bf16.msra.mxu0 %v4313
      %4363 = vmatprep.subr.bf16.mxu0 %v4316
      %4364 = vmatpush1.bf16.msra.mxu0 %v4315
      %4365 = vmatprep.subr.bf16.mxu0 %v4318
      %4366 = vmatpush1.bf16.msra.mxu0 %v4317
      %4367 = vmatprep.subr.bf16.mxu0 %v4320
      %4368 = vmatpush1.bf16.msra.mxu0 %v4319
      %4369 = vmatprep.subr.bf16.mxu0 %v4322
      %4370 = vmatpush1.bf16.msra.mxu0 %v4321
      %4371 = vmatprep.subr.bf16.mxu0 0
      %4372 = vmatpush1.bf16.msra.mxu0 0
      %4373 = vmatprep.subr.bf16.mxu0 0
      %4374 = vmatpush1.bf16.msra.mxu0 0
      %4375 = vmatprep.subr.bf16.mxu0 0
      %4376 = vmatpush1.bf16.msra.mxu0 0
      %4377 = vmatprep.subr.bf16.mxu0 0
      %4378 = vmatpush1.bf16.msra.mxu0 0
      %4379 = vmatprep.mubr.bf16.mxu0 %v3975
      %4380 = vmatmul.mubr.bf16.gmra.mrb[0].mxu0 %v3828
      %v4381 = vpop.f32.mrb[0].mxu0
      %v4382 = vadd.f32 0.0, %v4381
      %v4383 = vpop.f32.mrb[0].mxu0
      %v4384 = vadd.f32 0.0, %v4383
      %v4385 = vpop.f32.mrb[0].mxu0
      %v4386 = vpop.f32.mrb[0].mxu0
      %4387 = vdwg.mxu0
      %v4388 = vlaneseq
      %v4389 = vshrl.u32 %v4388, 7
      %v4390 = vsub.s32 0, %v4389
      %v4391 = vrot.slane %v4197, %v4390
      %v4392 = vlaneseq
      %v4393 = vshrl.u32 %v4392, 7
      %v4394 = vsub.s32 0, %v4393
      %v4395 = vrot.slane %v4199, %v4394
      %v4396 = vmul.f32 %v4012, %v4391
      %v4397 = vmul.f32 %v4014, %v4395
      %v4399 = vsel %vm1863, %v4397, 0
      %4401 = vmatprep.subr.mxu0 0.0
      %4402 = vmatpush1.msra.mxu0 %v3749
      %4403 = vmatprep.subr.mxu0 0.0
      %4404 = vmatpush1.msra.mxu0 %v3750
      %4405 = vmatprep.subr.mxu0 0.0
      %4406 = vmatpush1.msra.mxu0 %v3751
      %4407 = vmatprep.subr.mxu0 0.0
      %4408 = vmatpush1.msra.mxu0 %v3752
      %4409 = vmatprep.subr.mxu0 0.0
      %4410 = vmatpush1.msra.mxu0 %v3753
      %4411 = vmatprep.subr.mxu0 0.0
      %4412 = vmatpush1.msra.mxu0 %v3754
      %4413 = vmatprep.subr.mxu0 0.0
      %4414 = vmatpush1.msra.mxu0 %v3755
      %4415 = vmatprep.subr.mxu0 0.0
      %4416 = vmatpush1.msra.mxu0 %v3756
      %4417 = vmatprep.subr.mxu0 0.0
      %4418 = vmatpush1.msra.mxu0 %v3757
      %4419 = vmatprep.subr.mxu0 0.0
      %4420 = vmatpush1.msra.mxu0 %v3758
      %4421 = vmatprep.subr.mxu0 0.0
      %4422 = vmatpush1.msra.mxu0 %v3759
      %4423 = vmatprep.subr.mxu0 0.0
      %4424 = vmatpush1.msra.mxu0 %v3760
      %4425 = vmatprep.subr.mxu0 0.0
      %4426 = vmatpush1.msra.mxu0 %v3761
      %4427 = vmatprep.subr.mxu0 0.0
      %4428 = vmatpush1.msra.mxu0 %v3762
      %4429 = vmatprep.subr.mxu0 0.0
      %4430 = vmatpush1.msra.mxu0 %v3763
      %4431 = vmatprep.subr.mxu0 0.0
      %4432 = vmatpush1.msra.mxu0 %v3764
      %4433 = vmatprep.subr.mxu0 0.0
      %4434 = vmatpush1.msra.mxu0 %v3765
      %4435 = vmatprep.subr.mxu0 0.0
      %4436 = vmatpush1.msra.mxu0 %v3766
      %4437 = vmatprep.subr.mxu0 0.0
      %4438 = vmatpush1.msra.mxu0 %v3767
      %4439 = vmatprep.subr.mxu0 0.0
      %4440 = vmatpush1.msra.mxu0 %v3768
      %4441 = vmatprep.subr.mxu0 0.0
      %4442 = vmatpush1.msra.mxu0 %v3769
      %4443 = vmatprep.subr.mxu0 0.0
      %4444 = vmatpush1.msra.mxu0 %v3770
      %4445 = vmatprep.subr.mxu0 0.0
      %4446 = vmatpush1.msra.mxu0 %v3771
      %4447 = vmatprep.subr.mxu0 0.0
      %4448 = vmatpush1.msra.mxu0 %v3772
      %4449 = vmatprep.subr.mxu0 0.0
      %4450 = vmatpush1.msra.mxu0 0.0
      %4451 = vmatprep.subr.mxu0 0.0
      %4452 = vmatpush1.msra.mxu0 0.0
      %4453 = vmatprep.subr.mxu0 0.0
      %4454 = vmatpush1.msra.mxu0 0.0
      %4455 = vmatprep.subr.mxu0 0.0
      %4456 = vmatpush1.msra.mxu0 0.0
      %4457 = vmatprep.subr.mxu0 0.0
      %4458 = vmatpush1.msra.mxu0 0.0
      %4459 = vmatprep.subr.mxu0 0.0
      %4460 = vmatpush1.msra.mxu0 0.0
      %4461 = vmatprep.subr.mxu0 0.0
      %4462 = vmatpush1.msra.mxu0 0.0
      %4463 = vmatprep.subr.mxu0 0.0
      %4464 = vmatpush1.msra.mxu0 0.0
      %4465 = vmatprep.mubr.f32.mxu0 %v4399
      %4466 = vmatmul.mubr.f32.gmra.mrb[0].mxu0 %v4396
      %v4467 = vpop.f32.mrb[0].mxu0
      %v4468 = vadd.f32 0.0, %v4467
      %v4469 = vpop.f32.mrb[0].mxu0
      %4470 = vdwg.mxu0
      %v4471 = vmul.f32 %v4468, 0.25
      %v4472 = vlaneseq
      %v4473 = vshrl.u32 %v4472, 7
      %v4474 = vsub.s32 1, %v4473
      %v4475 = vrot.slane %v4197, %v4474
      %v4476 = vlaneseq
      %v4477 = vshrl.u32 %v4476, 7
      %v4478 = vsub.s32 1, %v4477
      %v4479 = vrot.slane %v4199, %v4478
      %v4480 = vmul.f32 %v4012, %v4475
      %v4481 = vmul.f32 %v4014, %v4479
      %v4483 = vsel %vm1863, %v4481, 0
      %4485 = vmatprep.subr.mxu0 0.0
      %4486 = vmatpush1.msra.mxu0 %v3749
      %4487 = vmatprep.subr.mxu0 0.0
      %4488 = vmatpush1.msra.mxu0 %v3750
      %4489 = vmatprep.subr.mxu0 0.0
      %4490 = vmatpush1.msra.mxu0 %v3751
      %4491 = vmatprep.subr.mxu0 0.0
      %4492 = vmatpush1.msra.mxu0 %v3752
      %4493 = vmatprep.subr.mxu0 0.0
      %4494 = vmatpush1.msra.mxu0 %v3753
      %4495 = vmatprep.subr.mxu0 0.0
      %4496 = vmatpush1.msra.mxu0 %v3754
      %4497 = vmatprep.subr.mxu0 0.0
      %4498 = vmatpush1.msra.mxu0 %v3755
      %4499 = vmatprep.subr.mxu0 0.0
      %4500 = vmatpush1.msra.mxu0 %v3756
      %4501 = vmatprep.subr.mxu0 0.0
      %4502 = vmatpush1.msra.mxu0 %v3757
      %4503 = vmatprep.subr.mxu0 0.0
      %4504 = vmatpush1.msra.mxu0 %v3758
      %4505 = vmatprep.subr.mxu0 0.0
      %4506 = vmatpush1.msra.mxu0 %v3759
      %4507 = vmatprep.subr.mxu0 0.0
      %4508 = vmatpush1.msra.mxu0 %v3760
      %4509 = vmatprep.subr.mxu0 0.0
      %4510 = vmatpush1.msra.mxu0 %v3761
      %4511 = vmatprep.subr.mxu0 0.0
      %4512 = vmatpush1.msra.mxu0 %v3762
      %4513 = vmatprep.subr.mxu0 0.0
      %4514 = vmatpush1.msra.mxu0 %v3763
      %4515 = vmatprep.subr.mxu0 0.0
      %4516 = vmatpush1.msra.mxu0 %v3764
      %4517 = vmatprep.subr.mxu0 0.0
      %4518 = vmatpush1.msra.mxu0 %v3765
      %4519 = vmatprep.subr.mxu0 0.0
      %4520 = vmatpush1.msra.mxu0 %v3766
      %4521 = vmatprep.subr.mxu0 0.0
      %4522 = vmatpush1.msra.mxu0 %v3767
      %4523 = vmatprep.subr.mxu0 0.0
      %4524 = vmatpush1.msra.mxu0 %v3768
      %4525 = vmatprep.subr.mxu0 0.0
      %4526 = vmatpush1.msra.mxu0 %v3769
      %4527 = vmatprep.subr.mxu0 0.0
      %4528 = vmatpush1.msra.mxu0 %v3770
      %4529 = vmatprep.subr.mxu0 0.0
      %4530 = vmatpush1.msra.mxu0 %v3771
      %4531 = vmatprep.subr.mxu0 0.0
      %4532 = vmatpush1.msra.mxu0 %v3772
      %4533 = vmatprep.subr.mxu0 0.0
      %4534 = vmatpush1.msra.mxu0 0.0
      %4535 = vmatprep.subr.mxu0 0.0
      %4536 = vmatpush1.msra.mxu0 0.0
      %4537 = vmatprep.subr.mxu0 0.0
      %4538 = vmatpush1.msra.mxu0 0.0
      %4539 = vmatprep.subr.mxu0 0.0
      %4540 = vmatpush1.msra.mxu0 0.0
      %4541 = vmatprep.subr.mxu0 0.0
      %4542 = vmatpush1.msra.mxu0 0.0
      %4543 = vmatprep.subr.mxu0 0.0
      %4544 = vmatpush1.msra.mxu0 0.0
      %4545 = vmatprep.subr.mxu0 0.0
      %4546 = vmatpush1.msra.mxu0 0.0
      %4547 = vmatprep.subr.mxu0 0.0
      %4548 = vmatpush1.msra.mxu0 0.0
      %4549 = vmatprep.mubr.f32.mxu0 %v4483
      %4550 = vmatmul.mubr.f32.gmra.mrb[0].mxu0 %v4480
      %v4551 = vpop.f32.mrb[0].mxu0
      %v4552 = vadd.f32 0.0, %v4551
      %v4553 = vpop.f32.mrb[0].mxu0
      %4554 = vdwg.mxu0
      %v4555 = vmul.f32 %v4552, 0.25
      %v4556 = vlaneseq
      %v4557 = vshrl.u32 %v4556, 7
      %v4558 = vsub.s32 2, %v4557
      %v4559 = vrot.slane %v4197, %v4558
      %v4560 = vlaneseq
      %v4561 = vshrl.u32 %v4560, 7
      %v4562 = vsub.s32 2, %v4561
      %v4563 = vrot.slane %v4199, %v4562
      %v4564 = vmul.f32 %v4012, %v4559
      %v4565 = vmul.f32 %v4014, %v4563
      %v4567 = vsel %vm1863, %v4565, 0
      %4569 = vmatprep.subr.mxu0 0.0
      %4570 = vmatpush1.msra.mxu0 %v3749
      %4571 = vmatprep.subr.mxu0 0.0
      %4572 = vmatpush1.msra.mxu0 %v3750
      %4573 = vmatprep.subr.mxu0 0.0
      %4574 = vmatpush1.msra.mxu0 %v3751
      %4575 = vmatprep.subr.mxu0 0.0
      %4576 = vmatpush1.msra.mxu0 %v3752
      %4577 = vmatprep.subr.mxu0 0.0
      %4578 = vmatpush1.msra.mxu0 %v3753
      %4579 = vmatprep.subr.mxu0 0.0
      %4580 = vmatpush1.msra.mxu0 %v3754
      %4581 = vmatprep.subr.mxu0 0.0
      %4582 = vmatpush1.msra.mxu0 %v3755
      %4583 = vmatprep.subr.mxu0 0.0
      %4584 = vmatpush1.msra.mxu0 %v3756
      %4585 = vmatprep.subr.mxu0 0.0
      %4586 = vmatpush1.msra.mxu0 %v3757
      %4587 = vmatprep.subr.mxu0 0.0
      %4588 = vmatpush1.msra.mxu0 %v3758
      %4589 = vmatprep.subr.mxu0 0.0
      %4590 = vmatpush1.msra.mxu0 %v3759
      %4591 = vmatprep.subr.mxu0 0.0
      %4592 = vmatpush1.msra.mxu0 %v3760
      %4593 = vmatprep.subr.mxu0 0.0
      %4594 = vmatpush1.msra.mxu0 %v3761
      %4595 = vmatprep.subr.mxu0 0.0
      %4596 = vmatpush1.msra.mxu0 %v3762
      %4597 = vmatprep.subr.mxu0 0.0
      %4598 = vmatpush1.msra.mxu0 %v3763
      %4599 = vmatprep.subr.mxu0 0.0
      %4600 = vmatpush1.msra.mxu0 %v3764
      %4601 = vmatprep.subr.mxu0 0.0
      %4602 = vmatpush1.msra.mxu0 %v3765
      %4603 = vmatprep.subr.mxu0 0.0
      %4604 = vmatpush1.msra.mxu0 %v3766
      %4605 = vmatprep.subr.mxu0 0.0
      %4606 = vmatpush1.msra.mxu0 %v3767
      %4607 = vmatprep.subr.mxu0 0.0
      %4608 = vmatpush1.msra.mxu0 %v3768
      %4609 = vmatprep.subr.mxu0 0.0
      %4610 = vmatpush1.msra.mxu0 %v3769
      %4611 = vmatprep.subr.mxu0 0.0
      %4612 = vmatpush1.msra.mxu0 %v3770
      %4613 = vmatprep.subr.mxu0 0.0
      %4614 = vmatpush1.msra.mxu0 %v3771
      %4615 = vmatprep.subr.mxu0 0.0
      %4616 = vmatpush1.msra.mxu0 %v3772
      %4617 = vmatprep.subr.mxu0 0.0
      %4618 = vmatpush1.msra.mxu0 0.0
      %4619 = vmatprep.subr.mxu0 0.0
      %4620 = vmatpush1.msra.mxu0 0.0
      %4621 = vmatprep.subr.mxu0 0.0
      %4622 = vmatpush1.msra.mxu0 0.0
      %4623 = vmatprep.subr.mxu0 0.0
      %4624 = vmatpush1.msra.mxu0 0.0
      %4625 = vmatprep.subr.mxu0 0.0
      %4626 = vmatpush1.msra.mxu0 0.0
      %4627 = vmatprep.subr.mxu0 0.0
      %4628 = vmatpush1.msra.mxu0 0.0
      %4629 = vmatprep.subr.mxu0 0.0
      %4630 = vmatpush1.msra.mxu0 0.0
      %4631 = vmatprep.subr.mxu0 0.0
      %4632 = vmatpush1.msra.mxu0 0.0
      %4633 = vmatprep.mubr.f32.mxu0 %v4567
      %4634 = vmatmul.mubr.f32.gmra.mrb[0].mxu0 %v4564
      %v4635 = vpop.f32.mrb[0].mxu0
      %v4636 = vadd.f32 0.0, %v4635
      %v4637 = vpop.f32.mrb[0].mxu0
      %4638 = vdwg.mxu0
      %v4639 = vmul.f32 %v4636, 0.25
      %v4640 = vlaneseq
      %v4641 = vshrl.u32 %v4640, 7
      %v4642 = vsub.s32 3, %v4641
      %v4643 = vrot.slane %v4197, %v4642
      %v4644 = vlaneseq
      %v4645 = vshrl.u32 %v4644, 7
      %v4646 = vsub.s32 3, %v4645
      %v4647 = vrot.slane %v4199, %v4646
      %v4648 = vmul.f32 %v4012, %v4643
      %v4649 = vmul.f32 %v4014, %v4647
      %v4651 = vsel %vm1863, %v4649, 0
      %4653 = vmatprep.subr.mxu0 0.0
      %4654 = vmatpush1.msra.mxu0 %v3749
      %4655 = vmatprep.subr.mxu0 0.0
      %4656 = vmatpush1.msra.mxu0 %v3750
      %4657 = vmatprep.subr.mxu0 0.0
      %4658 = vmatpush1.msra.mxu0 %v3751
      %4659 = vmatprep.subr.mxu0 0.0
      %4660 = vmatpush1.msra.mxu0 %v3752
      %4661 = vmatprep.subr.mxu0 0.0
      %4662 = vmatpush1.msra.mxu0 %v3753
      %4663 = vmatprep.subr.mxu0 0.0
      %4664 = vmatpush1.msra.mxu0 %v3754
      %4665 = vmatprep.subr.mxu0 0.0
      %4666 = vmatpush1.msra.mxu0 %v3755
      %4667 = vmatprep.subr.mxu0 0.0
      %4668 = vmatpush1.msra.mxu0 %v3756
      %4669 = vmatprep.subr.mxu0 0.0
      %4670 = vmatpush1.msra.mxu0 %v3757
      %4671 = vmatprep.subr.mxu0 0.0
      %4672 = vmatpush1.msra.mxu0 %v3758
      %4673 = vmatprep.subr.mxu0 0.0
      %4674 = vmatpush1.msra.mxu0 %v3759
      %4675 = vmatprep.subr.mxu0 0.0
      %4676 = vmatpush1.msra.mxu0 %v3760
      %4677 = vmatprep.subr.mxu0 0.0
      %4678 = vmatpush1.msra.mxu0 %v3761
      %4679 = vmatprep.subr.mxu0 0.0
      %4680 = vmatpush1.msra.mxu0 %v3762
      %4681 = vmatprep.subr.mxu0 0.0
      %4682 = vmatpush1.msra.mxu0 %v3763
      %4683 = vmatprep.subr.mxu0 0.0
      %4684 = vmatpush1.msra.mxu0 %v3764
      %4685 = vmatprep.subr.mxu0 0.0
      %4686 = vmatpush1.msra.mxu0 %v3765
      %4687 = vmatprep.subr.mxu0 0.0
      %4688 = vmatpush1.msra.mxu0 %v3766
      %4689 = vmatprep.subr.mxu0 0.0
      %4690 = vmatpush1.msra.mxu0 %v3767
      %4691 = vmatprep.subr.mxu0 0.0
      %4692 = vmatpush1.msra.mxu0 %v3768
      %4693 = vmatprep.subr.mxu0 0.0
      %4694 = vmatpush1.msra.mxu0 %v3769
      %4695 = vmatprep.subr.mxu0 0.0
      %4696 = vmatpush1.msra.mxu0 %v3770
      %4697 = vmatprep.subr.mxu0 0.0
      %4698 = vmatpush1.msra.mxu0 %v3771
      %4699 = vmatprep.subr.mxu0 0.0
      %4700 = vmatpush1.msra.mxu0 %v3772
      %4701 = vmatprep.subr.mxu0 0.0
      %4702 = vmatpush1.msra.mxu0 0.0
      %4703 = vmatprep.subr.mxu0 0.0
      %4704 = vmatpush1.msra.mxu0 0.0
      %4705 = vmatprep.subr.mxu0 0.0
      %4706 = vmatpush1.msra.mxu0 0.0
      %4707 = vmatprep.subr.mxu0 0.0
      %4708 = vmatpush1.msra.mxu0 0.0
      %4709 = vmatprep.subr.mxu0 0.0
      %4710 = vmatpush1.msra.mxu0 0.0
      %4711 = vmatprep.subr.mxu0 0.0
      %4712 = vmatpush1.msra.mxu0 0.0
      %4713 = vmatprep.subr.mxu0 0.0
      %4714 = vmatpush1.msra.mxu0 0.0
      %4715 = vmatprep.subr.mxu0 0.0
      %4716 = vmatpush1.msra.mxu0 0.0
      %4717 = vmatprep.mubr.f32.mxu0 %v4651
      %4718 = vmatmul.mubr.f32.gmra.mrb[0].mxu0 %v4648
      %v4719 = vpop.f32.mrb[0].mxu0
      %v4720 = vadd.f32 0.0, %v4719
      %v4721 = vpop.f32.mrb[0].mxu0
      %4722 = vdwg.mxu0
      %v4723 = vmul.f32 %v4720, 0.25
      %v4724 = vlaneseq
      %v4725 = vshrl.u32 %v4724, 7
      %v4726 = vsub.s32 4, %v4725
      %v4727 = vrot.slane %v4197, %v4726
      %v4728 = vlaneseq
      %v4729 = vshrl.u32 %v4728, 7
      %v4730 = vsub.s32 4, %v4729
      %v4731 = vrot.slane %v4199, %v4730
      %v4732 = vmul.f32 %v4012, %v4727
      %v4733 = vmul.f32 %v4014, %v4731
      %v4735 = vsel %vm1863, %v4733, 0
      %4737 = vmatprep.subr.mxu0 0.0
      %4738 = vmatpush1.msra.mxu0 %v3749
      %4739 = vmatprep.subr.mxu0 0.0
      %4740 = vmatpush1.msra.mxu0 %v3750
      %4741 = vmatprep.subr.mxu0 0.0
      %4742 = vmatpush1.msra.mxu0 %v3751
      %4743 = vmatprep.subr.mxu0 0.0
      %4744 = vmatpush1.msra.mxu0 %v3752
      %4745 = vmatprep.subr.mxu0 0.0
      %4746 = vmatpush1.msra.mxu0 %v3753
      %4747 = vmatprep.subr.mxu0 0.0
      %4748 = vmatpush1.msra.mxu0 %v3754
      %4749 = vmatprep.subr.mxu0 0.0
      %4750 = vmatpush1.msra.mxu0 %v3755
      %4751 = vmatprep.subr.mxu0 0.0
      %4752 = vmatpush1.msra.mxu0 %v3756
      %4753 = vmatprep.subr.mxu0 0.0
      %4754 = vmatpush1.msra.mxu0 %v3757
      %4755 = vmatprep.subr.mxu0 0.0
      %4756 = vmatpush1.msra.mxu0 %v3758
      %4757 = vmatprep.subr.mxu0 0.0
      %4758 = vmatpush1.msra.mxu0 %v3759
      %4759 = vmatprep.subr.mxu0 0.0
      %4760 = vmatpush1.msra.mxu0 %v3760
      %4761 = vmatprep.subr.mxu0 0.0
      %4762 = vmatpush1.msra.mxu0 %v3761
      %4763 = vmatprep.subr.mxu0 0.0
      %4764 = vmatpush1.msra.mxu0 %v3762
      %4765 = vmatprep.subr.mxu0 0.0
      %4766 = vmatpush1.msra.mxu0 %v3763
      %4767 = vmatprep.subr.mxu0 0.0
      %4768 = vmatpush1.msra.mxu0 %v3764
      %4769 = vmatprep.subr.mxu0 0.0
      %4770 = vmatpush1.msra.mxu0 %v3765
      %4771 = vmatprep.subr.mxu0 0.0
      %4772 = vmatpush1.msra.mxu0 %v3766
      %4773 = vmatprep.subr.mxu0 0.0
      %4774 = vmatpush1.msra.mxu0 %v3767
      %4775 = vmatprep.subr.mxu0 0.0
      %4776 = vmatpush1.msra.mxu0 %v3768
      %4777 = vmatprep.subr.mxu0 0.0
      %4778 = vmatpush1.msra.mxu0 %v3769
      %4779 = vmatprep.subr.mxu0 0.0
      %4780 = vmatpush1.msra.mxu0 %v3770
      %4781 = vmatprep.subr.mxu0 0.0
      %4782 = vmatpush1.msra.mxu0 %v3771
      %4783 = vmatprep.subr.mxu0 0.0
      %4784 = vmatpush1.msra.mxu0 %v3772
      %4785 = vmatprep.subr.mxu0 0.0
      %4786 = vmatpush1.msra.mxu0 0.0
      %4787 = vmatprep.subr.mxu0 0.0
      %4788 = vmatpush1.msra.mxu0 0.0
      %4789 = vmatprep.subr.mxu0 0.0
      %4790 = vmatpush1.msra.mxu0 0.0
      %4791 = vmatprep.subr.mxu0 0.0
      %4792 = vmatpush1.msra.mxu0 0.0
      %4793 = vmatprep.subr.mxu0 0.0
      %4794 = vmatpush1.msra.mxu0 0.0
      %4795 = vmatprep.subr.mxu0 0.0
      %4796 = vmatpush1.msra.mxu0 0.0
      %4797 = vmatprep.subr.mxu0 0.0
      %4798 = vmatpush1.msra.mxu0 0.0
      %4799 = vmatprep.subr.mxu0 0.0
      %4800 = vmatpush1.msra.mxu0 0.0
      %4801 = vmatprep.mubr.f32.mxu0 %v4735
      %4802 = vmatmul.mubr.f32.gmra.mrb[0].mxu0 %v4732
      %v4803 = vpop.f32.mrb[0].mxu0
      %v4804 = vadd.f32 0.0, %v4803
      %v4805 = vpop.f32.mrb[0].mxu0
      %4806 = vdwg.mxu0
      %v4807 = vmul.f32 %v4804, 0.25
      %v4808 = vmax.f32 %v4471, %v4555
      %v4809 = vmax.f32 %v4808, %v4639
      %v4810 = vmax.f32 %v4809, %v4723
      %v4811 = vmax.f32 %v4810, %v4807
      %v4812 = vsub.f32 %v4471, %v4811
      %v4813 = vmul.f32 %v4812, 1.442695
      %v4814 = vpow.pop %v4813
      %v4815 = vsub.f32 %v4555, %v4811
      %v4816 = vmul.f32 %v4815, 1.442695
      %v4817 = vpow.pop %v4816
      %v4818 = vsub.f32 %v4639, %v4811
      %v4819 = vmul.f32 %v4818, 1.442695
      %v4820 = vpow.pop %v4819
      %v4821 = vsub.f32 %v4723, %v4811
      %v4822 = vmul.f32 %v4821, 1.442695
      %v4823 = vpow.pop %v4822
      %v4824 = vsub.f32 %v4807, %v4811
      %v4825 = vmul.f32 %v4824, 1.442695
      %v4826 = vpow.pop %v4825
      %v4827 = vadd.f32 %v4814, %v4817
      %v4828 = vadd.f32 %v4827, %v4820
      %v4829 = vadd.f32 %v4828, %v4823
      %v4830 = vadd.f32 %v4829, %v4826
      %v4831 = vrcp.pop %v4830
      %v4832 = vmul.f32 %v4814, %v4831
      %vm4833 = vcmask 97280
      %v4835 = vsel %vm4833, %v4832, 0
      %vm4837 = vcmask 1043456
      %v4839 = vsel %vm4837, %v3775, 0
      %v4842 = vsel %vm4837, %v3776, 0
      %4844 = vmatprep.subr.mxu0 %v3774
      %4845 = vmatpush1.msra.mxu0 %v3773
      %4846 = vmatprep.subr.mxu0 %v4842
      %4847 = vmatpush1.msra.mxu0 %v4839
      %4848 = vmatprep.subr.mxu0 0.0
      %4849 = vmatpush1.msra.mxu0 0.0
      %4850 = vmatprep.subr.mxu0 0.0
      %4851 = vmatpush1.msra.mxu0 0.0
      %4852 = vmatprep.subr.mxu0 0.0
      %4853 = vmatpush1.msra.mxu0 0.0
      %4854 = vmatprep.subr.mxu0 0.0
      %4855 = vmatpush1.msra.mxu0 0.0
      %4856 = vmatprep.subr.mxu0 0.0
      %4857 = vmatpush1.msra.mxu0 0.0
      %4858 = vmatprep.subr.mxu0 0.0
      %4859 = vmatpush1.msra.mxu0 0.0
      %4860 = vmatprep.subr.mxu0 0.0
      %4861 = vmatpush1.msra.mxu0 0.0
      %4862 = vmatprep.subr.mxu0 0.0
      %4863 = vmatpush1.msra.mxu0 0.0
      %4864 = vmatprep.subr.mxu0 0.0
      %4865 = vmatpush1.msra.mxu0 0.0
      %4866 = vmatprep.subr.mxu0 0.0
      %4867 = vmatpush1.msra.mxu0 0.0
      %4868 = vmatprep.subr.mxu0 0.0
      %4869 = vmatpush1.msra.mxu0 0.0
      %4870 = vmatprep.subr.mxu0 0.0
      %4871 = vmatpush1.msra.mxu0 0.0
      %4872 = vmatprep.subr.mxu0 0.0
      %4873 = vmatpush1.msra.mxu0 0.0
      %4874 = vmatprep.subr.mxu0 0.0
      %4875 = vmatpush1.msra.mxu0 0.0
      %4876 = vmatprep.subr.mxu0 0.0
      %4877 = vmatpush1.msra.mxu0 0.0
      %4878 = vmatprep.subr.mxu0 0.0
      %4879 = vmatpush1.msra.mxu0 0.0
      %4880 = vmatprep.subr.mxu0 0.0
      %4881 = vmatpush1.msra.mxu0 0.0
      %4882 = vmatprep.subr.mxu0 0.0
      %4883 = vmatpush1.msra.mxu0 0.0
      %4884 = vmatprep.subr.mxu0 0.0
      %4885 = vmatpush1.msra.mxu0 0.0
      %4886 = vmatprep.subr.mxu0 0.0
      %4887 = vmatpush1.msra.mxu0 0.0
      %4888 = vmatprep.subr.mxu0 0.0
      %4889 = vmatpush1.msra.mxu0 0.0
      %4890 = vmatprep.subr.mxu0 0.0
      %4891 = vmatpush1.msra.mxu0 0.0
      %4892 = vmatprep.subr.mxu0 0.0
      %4893 = vmatpush1.msra.mxu0 0.0
      %4894 = vmatprep.subr.mxu0 0.0
      %4895 = vmatpush1.msra.mxu0 0.0
      %4896 = vmatprep.subr.mxu0 0.0
      %4897 = vmatpush1.msra.mxu0 0.0
      %4898 = vmatprep.subr.mxu0 0.0
      %4899 = vmatpush1.msra.mxu0 0.0
      %4900 = vmatprep.subr.mxu0 0.0
      %4901 = vmatpush1.msra.mxu0 0.0
      %4902 = vmatprep.subr.mxu0 0.0
      %4903 = vmatpush1.msra.mxu0 0.0
      %4904 = vmatprep.subr.mxu0 0.0
      %4905 = vmatpush1.msra.mxu0 0.0
      %4906 = vmatprep.subr.mxu0 0.0
      %4907 = vmatpush1.msra.mxu0 0.0
      %4908 = vmatprep.mubr.f32.mxu0 0.0
      %4909 = vmatmul.mubr.f32.gmra.mrb[0].mxu0 %v4835
      %v4910 = vpop.f32.mrb[0].mxu0
      %v4911 = vadd.f32 0.0, %v4910
      %v4912 = vpop.f32.mrb[0].mxu0
      %v4913 = vadd.f32 0.0, %v4912
      %4914 = vdwg.mxu0
      %v4915 = vlaneseq
      %v4916 = vshrl.u32 %v4915, 7
      %v4917 = vsub.s32 0, %v4916
      %v4918 = vrot.slane %v4382, %v4917
      %v4919 = vlaneseq
      %v4920 = vshrl.u32 %v4919, 7
      %v4921 = vsub.s32 0, %v4920
      %v4922 = vrot.slane %v4384, %v4921
      %v4923 = vmul.f32 %v4911, %v4918
      %v4924 = vmul.f32 %v4913, %v4922
      %v4925 = vadd.f32 %v4923, 0.0
      %v4926 = vadd.f32 %v4924, 0.0
      %v4927 = vmul.f32 %v4817, %v4831
      %v4929 = vsel %vm4833, %v4927, 0
      %4931 = vmatprep.subr.mxu0 %v3774
      %4932 = vmatpush1.msra.mxu0 %v3773
      %4933 = vmatprep.subr.mxu0 %v4842
      %4934 = vmatpush1.msra.mxu0 %v4839
      %4935 = vmatprep.subr.mxu0 0.0
      %4936 = vmatpush1.msra.mxu0 0.0
      %4937 = vmatprep.subr.mxu0 0.0
      %4938 = vmatpush1.msra.mxu0 0.0
      %4939 = vmatprep.subr.mxu0 0.0
      %4940 = vmatpush1.msra.mxu0 0.0
      %4941 = vmatprep.subr.mxu0 0.0
      %4942 = vmatpush1.msra.mxu0 0.0
      %4943 = vmatprep.subr.mxu0 0.0
      %4944 = vmatpush1.msra.mxu0 0.0
      %4945 = vmatprep.subr.mxu0 0.0
      %4946 = vmatpush1.msra.mxu0 0.0
      %4947 = vmatprep.subr.mxu0 0.0
      %4948 = vmatpush1.msra.mxu0 0.0
      %4949 = vmatprep.subr.mxu0 0.0
      %4950 = vmatpush1.msra.mxu0 0.0
      %4951 = vmatprep.subr.mxu0 0.0
      %4952 = vmatpush1.msra.mxu0 0.0
      %4953 = vmatprep.subr.mxu0 0.0
      %4954 = vmatpush1.msra.mxu0 0.0
      %4955 = vmatprep.subr.mxu0 0.0
      %4956 = vmatpush1.msra.mxu0 0.0
      %4957 = vmatprep.subr.mxu0 0.0
      %4958 = vmatpush1.msra.mxu0 0.0
      %4959 = vmatprep.subr.mxu0 0.0
      %4960 = vmatpush1.msra.mxu0 0.0
      %4961 = vmatprep.subr.mxu0 0.0
      %4962 = vmatpush1.msra.mxu0 0.0
      %4963 = vmatprep.subr.mxu0 0.0
      %4964 = vmatpush1.msra.mxu0 0.0
      %4965 = vmatprep.subr.mxu0 0.0
      %4966 = vmatpush1.msra.mxu0 0.0
      %4967 = vmatprep.subr.mxu0 0.0
      %4968 = vmatpush1.msra.mxu0 0.0
      %4969 = vmatprep.subr.mxu0 0.0
      %4970 = vmatpush1.msra.mxu0 0.0
      %4971 = vmatprep.subr.mxu0 0.0
      %4972 = vmatpush1.msra.mxu0 0.0
      %4973 = vmatprep.subr.mxu0 0.0
      %4974 = vmatpush1.msra.mxu0 0.0
      %4975 = vmatprep.subr.mxu0 0.0
      %4976 = vmatpush1.msra.mxu0 0.0
      %4977 = vmatprep.subr.mxu0 0.0
      %4978 = vmatpush1.msra.mxu0 0.0
      %4979 = vmatprep.subr.mxu0 0.0
      %4980 = vmatpush1.msra.mxu0 0.0
      %4981 = vmatprep.subr.mxu0 0.0
      %4982 = vmatpush1.msra.mxu0 0.0
      %4983 = vmatprep.subr.mxu0 0.0
      %4984 = vmatpush1.msra.mxu0 0.0
      %4985 = vmatprep.subr.mxu0 0.0
      %4986 = vmatpush1.msra.mxu0 0.0
      %4987 = vmatprep.subr.mxu0 0.0
      %4988 = vmatpush1.msra.mxu0 0.0
      %4989 = vmatprep.subr.mxu0 0.0
      %4990 = vmatpush1.msra.mxu0 0.0
      %4991 = vmatprep.subr.mxu0 0.0
      %4992 = vmatpush1.msra.mxu0 0.0
      %4993 = vmatprep.subr.mxu0 0.0
      %4994 = vmatpush1.msra.mxu0 0.0
      %4995 = vmatprep.mubr.f32.mxu0 0.0
      %4996 = vmatmul.mubr.f32.gmra.mrb[0].mxu0 %v4929
      %v4997 = vpop.f32.mrb[0].mxu0
      %v4998 = vadd.f32 0.0, %v4997
      %v4999 = vpop.f32.mrb[0].mxu0
      %v5000 = vadd.f32 0.0, %v4999
      %5001 = vdwg.mxu0
      %v5002 = vlaneseq
      %v5003 = vshrl.u32 %v5002, 7
      %v5004 = vsub.s32 1, %v5003
      %v5005 = vrot.slane %v4382, %v5004
      %v5006 = vlaneseq
      %v5007 = vshrl.u32 %v5006, 7
      %v5008 = vsub.s32 1, %v5007
      %v5009 = vrot.slane %v4384, %v5008
      %v5010 = vmul.f32 %v4998, %v5005
      %v5011 = vmul.f32 %v5000, %v5009
      %v5012 = vadd.f32 %v4925, %v5010
      %v5013 = vadd.f32 %v4926, %v5011
      %v5014 = vmul.f32 %v4820, %v4831
      %v5016 = vsel %vm4833, %v5014, 0
      %5018 = vmatprep.subr.mxu0 %v3774
      %5019 = vmatpush1.msra.mxu0 %v3773
      %5020 = vmatprep.subr.mxu0 %v4842
      %5021 = vmatpush1.msra.mxu0 %v4839
      %5022 = vmatprep.subr.mxu0 0.0
      %5023 = vmatpush1.msra.mxu0 0.0
      %5024 = vmatprep.subr.mxu0 0.0
      %5025 = vmatpush1.msra.mxu0 0.0
      %5026 = vmatprep.subr.mxu0 0.0
      %5027 = vmatpush1.msra.mxu0 0.0
      %5028 = vmatprep.subr.mxu0 0.0
      %5029 = vmatpush1.msra.mxu0 0.0
      %5030 = vmatprep.subr.mxu0 0.0
      %5031 = vmatpush1.msra.mxu0 0.0
      %5032 = vmatprep.subr.mxu0 0.0
      %5033 = vmatpush1.msra.mxu0 0.0
      %5034 = vmatprep.subr.mxu0 0.0
      %5035 = vmatpush1.msra.mxu0 0.0
      %5036 = vmatprep.subr.mxu0 0.0
      %5037 = vmatpush1.msra.mxu0 0.0
      %5038 = vmatprep.subr.mxu0 0.0
      %5039 = vmatpush1.msra.mxu0 0.0
      %5040 = vmatprep.subr.mxu0 0.0
      %5041 = vmatpush1.msra.mxu0 0.0
      %5042 = vmatprep.subr.mxu0 0.0
      %5043 = vmatpush1.msra.mxu0 0.0
      %5044 = vmatprep.subr.mxu0 0.0
      %5045 = vmatpush1.msra.mxu0 0.0
      %5046 = vmatprep.subr.mxu0 0.0
      %5047 = vmatpush1.msra.mxu0 0.0
      %5048 = vmatprep.subr.mxu0 0.0
      %5049 = vmatpush1.msra.mxu0 0.0
      %5050 = vmatprep.subr.mxu0 0.0
      %5051 = vmatpush1.msra.mxu0 0.0
      %5052 = vmatprep.subr.mxu0 0.0
      %5053 = vmatpush1.msra.mxu0 0.0
      %5054 = vmatprep.subr.mxu0 0.0
      %5055 = vmatpush1.msra.mxu0 0.0
      %5056 = vmatprep.subr.mxu0 0.0
      %5057 = vmatpush1.msra.mxu0 0.0
      %5058 = vmatprep.subr.mxu0 0.0
      %5059 = vmatpush1.msra.mxu0 0.0
      %5060 = vmatprep.subr.mxu0 0.0
      %5061 = vmatpush1.msra.mxu0 0.0
      %5062 = vmatprep.subr.mxu0 0.0
      %5063 = vmatpush1.msra.mxu0 0.0
      %5064 = vmatprep.subr.mxu0 0.0
      %5065 = vmatpush1.msra.mxu0 0.0
      %5066 = vmatprep.subr.mxu0 0.0
      %5067 = vmatpush1.msra.mxu0 0.0
      %5068 = vmatprep.subr.mxu0 0.0
      %5069 = vmatpush1.msra.mxu0 0.0
      %5070 = vmatprep.subr.mxu0 0.0
      %5071 = vmatpush1.msra.mxu0 0.0
      %5072 = vmatprep.subr.mxu0 0.0
      %5073 = vmatpush1.msra.mxu0 0.0
      %5074 = vmatprep.subr.mxu0 0.0
      %5075 = vmatpush1.msra.mxu0 0.0
      %5076 = vmatprep.subr.mxu0 0.0
      %5077 = vmatpush1.msra.mxu0 0.0
      %5078 = vmatprep.subr.mxu0 0.0
      %5079 = vmatpush1.msra.mxu0 0.0
      %5080 = vmatprep.subr.mxu0 0.0
      %5081 = vmatpush1.msra.mxu0 0.0
      %5082 = vmatprep.mubr.f32.mxu0 0.0
      %5083 = vmatmul.mubr.f32.gmra.mrb[0].mxu0 %v5016
      %v5084 = vpop.f32.mrb[0].mxu0
      %v5085 = vadd.f32 0.0, %v5084
      %v5086 = vpop.f32.mrb[0].mxu0
      %v5087 = vadd.f32 0.0, %v5086
      %5088 = vdwg.mxu0
      %v5089 = vlaneseq
      %v5090 = vshrl.u32 %v5089, 7
      %v5091 = vsub.s32 2, %v5090
      %v5092 = vrot.slane %v4382, %v5091
      %v5093 = vlaneseq
      %v5094 = vshrl.u32 %v5093, 7
      %v5095 = vsub.s32 2, %v5094
      %v5096 = vrot.slane %v4384, %v5095
      %v5097 = vmul.f32 %v5085, %v5092
      %v5098 = vmul.f32 %v5087, %v5096
      %v5099 = vadd.f32 %v5012, %v5097
      %v5100 = vadd.f32 %v5013, %v5098
      %v5101 = vmul.f32 %v4823, %v4831
      %v5103 = vsel %vm4833, %v5101, 0
      %5105 = vmatprep.subr.mxu0 %v3774
      %5106 = vmatpush1.msra.mxu0 %v3773
      %5107 = vmatprep.subr.mxu0 %v4842
      %5108 = vmatpush1.msra.mxu0 %v4839
      %5109 = vmatprep.subr.mxu0 0.0
      %5110 = vmatpush1.msra.mxu0 0.0
      %5111 = vmatprep.subr.mxu0 0.0
      %5112 = vmatpush1.msra.mxu0 0.0
      %5113 = vmatprep.subr.mxu0 0.0
      %5114 = vmatpush1.msra.mxu0 0.0
      %5115 = vmatprep.subr.mxu0 0.0
      %5116 = vmatpush1.msra.mxu0 0.0
      %5117 = vmatprep.subr.mxu0 0.0
      %5118 = vmatpush1.msra.mxu0 0.0
      %5119 = vmatprep.subr.mxu0 0.0
      %5120 = vmatpush1.msra.mxu0 0.0
      %5121 = vmatprep.subr.mxu0 0.0
      %5122 = vmatpush1.msra.mxu0 0.0
      %5123 = vmatprep.subr.mxu0 0.0
      %5124 = vmatpush1.msra.mxu0 0.0
      %5125 = vmatprep.subr.mxu0 0.0
      %5126 = vmatpush1.msra.mxu0 0.0
      %5127 = vmatprep.subr.mxu0 0.0
      %5128 = vmatpush1.msra.mxu0 0.0
      %5129 = vmatprep.subr.mxu0 0.0
      %5130 = vmatpush1.msra.mxu0 0.0
      %5131 = vmatprep.subr.mxu0 0.0
      %5132 = vmatpush1.msra.mxu0 0.0
      %5133 = vmatprep.subr.mxu0 0.0
      %5134 = vmatpush1.msra.mxu0 0.0
      %5135 = vmatprep.subr.mxu0 0.0
      %5136 = vmatpush1.msra.mxu0 0.0
      %5137 = vmatprep.subr.mxu0 0.0
      %5138 = vmatpush1.msra.mxu0 0.0
      %5139 = vmatprep.subr.mxu0 0.0
      %5140 = vmatpush1.msra.mxu0 0.0
      %5141 = vmatprep.subr.mxu0 0.0
      %5142 = vmatpush1.msra.mxu0 0.0
      %5143 = vmatprep.subr.mxu0 0.0
      %5144 = vmatpush1.msra.mxu0 0.0
      %5145 = vmatprep.subr.mxu0 0.0
      %5146 = vmatpush1.msra.mxu0 0.0
      %5147 = vmatprep.subr.mxu0 0.0
      %5148 = vmatpush1.msra.mxu0 0.0
      %5149 = vmatprep.subr.mxu0 0.0
      %5150 = vmatpush1.msra.mxu0 0.0
      %5151 = vmatprep.subr.mxu0 0.0
      %5152 = vmatpush1.msra.mxu0 0.0
      %5153 = vmatprep.subr.mxu0 0.0
      %5154 = vmatpush1.msra.mxu0 0.0
      %5155 = vmatprep.subr.mxu0 0.0
      %5156 = vmatpush1.msra.mxu0 0.0
      %5157 = vmatprep.subr.mxu0 0.0
      %5158 = vmatpush1.msra.mxu0 0.0
      %5159 = vmatprep.subr.mxu0 0.0
      %5160 = vmatpush1.msra.mxu0 0.0
      %5161 = vmatprep.subr.mxu0 0.0
      %5162 = vmatpush1.msra.mxu0 0.0
      %5163 = vmatprep.subr.mxu0 0.0
      %5164 = vmatpush1.msra.mxu0 0.0
      %5165 = vmatprep.subr.mxu0 0.0
      %5166 = vmatpush1.msra.mxu0 0.0
      %5167 = vmatprep.subr.mxu0 0.0
      %5168 = vmatpush1.msra.mxu0 0.0
      %5169 = vmatprep.mubr.f32.mxu0 0.0
      %5170 = vmatmul.mubr.f32.gmra.mrb[0].mxu0 %v5103
      %v5171 = vpop.f32.mrb[0].mxu0
      %v5172 = vadd.f32 0.0, %v5171
      %v5173 = vpop.f32.mrb[0].mxu0
      %v5174 = vadd.f32 0.0, %v5173
      %5175 = vdwg.mxu0
      %v5176 = vlaneseq
      %v5177 = vshrl.u32 %v5176, 7
      %v5178 = vsub.s32 3, %v5177
      %v5179 = vrot.slane %v4382, %v5178
      %v5180 = vlaneseq
      %v5181 = vshrl.u32 %v5180, 7
      %v5182 = vsub.s32 3, %v5181
      %v5183 = vrot.slane %v4384, %v5182
      %v5184 = vmul.f32 %v5172, %v5179
      %v5185 = vmul.f32 %v5174, %v5183
      %v5186 = vadd.f32 %v5099, %v5184
      %v5187 = vadd.f32 %v5100, %v5185
      %v5188 = vmul.f32 %v4826, %v4831
      %v5190 = vsel %vm4833, %v5188, 0
      %5192 = vmatprep.subr.mxu0 %v3774
      %5193 = vmatpush1.msra.mxu0 %v3773
      %5194 = vmatprep.subr.mxu0 %v4842
      %5195 = vmatpush1.msra.mxu0 %v4839
      %5196 = vmatprep.subr.mxu0 0.0
      %5197 = vmatpush1.msra.mxu0 0.0
      %5198 = vmatprep.subr.mxu0 0.0
      %5199 = vmatpush1.msra.mxu0 0.0
      %5200 = vmatprep.subr.mxu0 0.0
      %5201 = vmatpush1.msra.mxu0 0.0
      %5202 = vmatprep.subr.mxu0 0.0
      %5203 = vmatpush1.msra.mxu0 0.0
      %5204 = vmatprep.subr.mxu0 0.0
      %5205 = vmatpush1.msra.mxu0 0.0
      %5206 = vmatprep.subr.mxu0 0.0
      %5207 = vmatpush1.msra.mxu0 0.0
      %5208 = vmatprep.subr.mxu0 0.0
      %5209 = vmatpush1.msra.mxu0 0.0
      %5210 = vmatprep.subr.mxu0 0.0
      %5211 = vmatpush1.msra.mxu0 0.0
      %5212 = vmatprep.subr.mxu0 0.0
      %5213 = vmatpush1.msra.mxu0 0.0
      %5214 = vmatprep.subr.mxu0 0.0
      %5215 = vmatpush1.msra.mxu0 0.0
      %5216 = vmatprep.subr.mxu0 0.0
      %5217 = vmatpush1.msra.mxu0 0.0
      %5218 = vmatprep.subr.mxu0 0.0
      %5219 = vmatpush1.msra.mxu0 0.0
      %5220 = vmatprep.subr.mxu0 0.0
      %5221 = vmatpush1.msra.mxu0 0.0
      %5222 = vmatprep.subr.mxu0 0.0
      %5223 = vmatpush1.msra.mxu0 0.0
      %5224 = vmatprep.subr.mxu0 0.0
      %5225 = vmatpush1.msra.mxu0 0.0
      %5226 = vmatprep.subr.mxu0 0.0
      %5227 = vmatpush1.msra.mxu0 0.0
      %5228 = vmatprep.subr.mxu0 0.0
      %5229 = vmatpush1.msra.mxu0 0.0
      %5230 = vmatprep.subr.mxu0 0.0
      %5231 = vmatpush1.msra.mxu0 0.0
      %5232 = vmatprep.subr.mxu0 0.0
      %5233 = vmatpush1.msra.mxu0 0.0
      %5234 = vmatprep.subr.mxu0 0.0
      %5235 = vmatpush1.msra.mxu0 0.0
      %5236 = vmatprep.subr.mxu0 0.0
      %5237 = vmatpush1.msra.mxu0 0.0
      %5238 = vmatprep.subr.mxu0 0.0
      %5239 = vmatpush1.msra.mxu0 0.0
      %5240 = vmatprep.subr.mxu0 0.0
      %5241 = vmatpush1.msra.mxu0 0.0
      %5242 = vmatprep.subr.mxu0 0.0
      %5243 = vmatpush1.msra.mxu0 0.0
      %5244 = vmatprep.subr.mxu0 0.0
      %5245 = vmatpush1.msra.mxu0 0.0
      %5246 = vmatprep.subr.mxu0 0.0
      %5247 = vmatpush1.msra.mxu0 0.0
      %5248 = vmatprep.subr.mxu0 0.0
      %5249 = vmatpush1.msra.mxu0 0.0
      %5250 = vmatprep.subr.mxu0 0.0
      %5251 = vmatpush1.msra.mxu0 0.0
      %5252 = vmatprep.subr.mxu0 0.0
      %5253 = vmatpush1.msra.mxu0 0.0
      %5254 = vmatprep.subr.mxu0 0.0
      %5255 = vmatpush1.msra.mxu0 0.0
      %5256 = vmatprep.mubr.f32.mxu0 0.0
      %5257 = vmatmul.mubr.f32.gmra.mrb[0].mxu0 %v5190
      %v5258 = vpop.f32.mrb[0].mxu0
      %v5259 = vadd.f32 0.0, %v5258
      %v5260 = vpop.f32.mrb[0].mxu0
      %v5261 = vadd.f32 0.0, %v5260
      %5262 = vdwg.mxu0
      %v5263 = vlaneseq
      %v5264 = vshrl.u32 %v5263, 7
      %v5265 = vsub.s32 4, %v5264
      %v5266 = vrot.slane %v4382, %v5265
      %v5267 = vlaneseq
      %v5268 = vshrl.u32 %v5267, 7
      %v5269 = vsub.s32 4, %v5268
      %v5270 = vrot.slane %v4384, %v5269
      %v5271 = vmul.f32 %v5259, %v5266
      %v5272 = vmul.f32 %v5261, %v5270
      %v5273 = vadd.f32 %v5186, %v5271
      %v5274 = vadd.f32 %v5187, %v5272
      %v5275 = vpack.c.bf16 %v5273, %v5273
      %v5276 = vpack.c.bf16 %v5274, %v5274
      %v5277 = vld [vmem:[%s43] sm:$0xff]
      %v5278 = vld [vmem:[%s43 + $0x8] sm:$0xff]
      %v5279 = vld [vmem:[%s43 + $0x10] sm:$0xff]
      %v5280 = vld [vmem:[%s43 + $0x18] sm:$0xff]
      %v5281 = vld [vmem:[%s43 + $0x20] sm:$0xff]
      %v5282 = vld [vmem:[%s43 + $0x28] sm:$0xff]
      %v5283 = vld [vmem:[%s43 + $0x30] sm:$0xff]
      %v5284 = vld [vmem:[%s43 + $0x38] sm:$0xff]
      %v5285 = vld [vmem:[%s43 + $0x40] sm:$0xff]
      %v5286 = vld [vmem:[%s43 + $0x48] sm:$0xff]
      %v5287 = vld [vmem:[%s43 + $0x50] sm:$0xff]
      %v5288 = vld [vmem:[%s43 + $0x58] sm:$0xff]
      %v5289 = vld [vmem:[%s43 + $0x60] sm:$0xff]
      %v5290 = vld [vmem:[%s43 + $0x68] sm:$0xff]
      %v5291 = vld [vmem:[%s43 + $0x70] sm:$0xff]
      %v5292 = vld [vmem:[%s43 + $0x78] sm:$0xff]
      %v5293 = vld [vmem:[%s43 + $0x80] sm:$0xff]
      %v5294 = vld [vmem:[%s43 + $0x88] sm:$0xff]
      %v5295 = vld [vmem:[%s43 + $0x90] sm:$0xff]
      %v5296 = vld [vmem:[%s43 + $0x98] sm:$0xff]
      %v5297 = vld [vmem:[%s43 + $0xa0] sm:$0xff]
      %v5298 = vld [vmem:[%s43 + $0xa8] sm:$0xff]
      %v5299 = vld [vmem:[%s43 + $0xb0] sm:$0xff]
      %v5300 = vld [vmem:[%s43 + $0xb8] sm:$0xff]
      %v5301 = vld [vmem:[%s45] sm:$0x3]
      %v5303 = vlaneseq
      %v5304 = vshrl.u32 %v5303, 7
      %v5305 = vsub.s32 0, %v5304
      %v5306 = vrot.slane %v5301, %v5305
      %v5307 = vlaneseq
      %v5308 = vshrl.u32 %v5307, 7
      %v5309 = vsub.s32 1, %v5308
      %v5310 = vrot.slane %v5301, %v5309
      %v5337 = vunpack.c.l.b16 %v5277
      %v5338 = vunpack.c.h.b16 %v5277
      %v5339 = vunpack.c.l.b16 %v5278
      %v5340 = vunpack.c.h.b16 %v5278
      %v5341 = vunpack.c.l.b16 %v5279
      %v5342 = vunpack.c.h.b16 %v5279
      %v5343 = vunpack.c.l.b16 %v5280
      %v5344 = vunpack.c.h.b16 %v5280
      %v5345 = vunpack.c.l.b16 %v5281
      %v5346 = vunpack.c.h.b16 %v5281
      %v5347 = vunpack.c.l.b16 %v5282
      %v5348 = vunpack.c.h.b16 %v5282
      %v5349 = vunpack.c.l.b16 %v5283
      %v5350 = vunpack.c.h.b16 %v5283
      %v5351 = vunpack.c.l.b16 %v5284
      %v5352 = vunpack.c.h.b16 %v5284
      %v5353 = vunpack.c.l.b16 %v5285
      %v5354 = vunpack.c.h.b16 %v5285
      %v5355 = vunpack.c.l.b16 %v5286
      %v5356 = vunpack.c.h.b16 %v5286
      %v5357 = vunpack.c.l.b16 %v5287
      %v5358 = vunpack.c.h.b16 %v5287
      %v5359 = vunpack.c.l.b16 %v5288
      %v5360 = vunpack.c.h.b16 %v5288
      %v5361 = vunpack.c.l.b16 %v5289
      %v5362 = vunpack.c.h.b16 %v5289
      %v5363 = vunpack.c.l.b16 %v5290
      %v5364 = vunpack.c.h.b16 %v5290
      %v5365 = vunpack.c.l.b16 %v5291
      %v5366 = vunpack.c.h.b16 %v5291
      %v5367 = vunpack.c.l.b16 %v5292
      %v5368 = vunpack.c.h.b16 %v5292
      %v5369 = vunpack.c.l.b16 %v5293
      %v5370 = vunpack.c.h.b16 %v5293
      %v5371 = vunpack.c.l.b16 %v5294
      %v5372 = vunpack.c.h.b16 %v5294
      %v5373 = vunpack.c.l.b16 %v5295
      %v5374 = vunpack.c.h.b16 %v5295
      %v5375 = vunpack.c.l.b16 %v5296
      %v5376 = vunpack.c.h.b16 %v5296
      %v5377 = vunpack.c.l.b16 %v5297
      %v5378 = vunpack.c.h.b16 %v5297
      %v5379 = vunpack.c.l.b16 %v5298
      %v5380 = vunpack.c.h.b16 %v5298
      %v5381 = vunpack.c.l.b16 %v5299
      %v5382 = vunpack.c.h.b16 %v5299
      %v5383 = vunpack.c.l.b16 %v5300
      %v5384 = vunpack.c.h.b16 %v5300
      %v5385 = vpack.c.b16 %v5339, %v5337
      %v5386 = vpack.c.b16 %v5340, %v5338
      %v5387 = vpack.c.b16 %v5343, %v5341
      %v5388 = vpack.c.b16 %v5344, %v5342
      %v5389 = vpack.c.b16 %v5347, %v5345
      %v5390 = vpack.c.b16 %v5348, %v5346
      %v5391 = vpack.c.b16 %v5351, %v5349
      %v5392 = vpack.c.b16 %v5352, %v5350
      %v5393 = vpack.c.b16 %v5355, %v5353
      %v5394 = vpack.c.b16 %v5356, %v5354
      %v5395 = vpack.c.b16 %v5359, %v5357
      %v5396 = vpack.c.b16 %v5360, %v5358
      %v5397 = vpack.c.b16 %v5363, %v5361
      %v5398 = vpack.c.b16 %v5364, %v5362
      %v5399 = vpack.c.b16 %v5367, %v5365
      %v5400 = vpack.c.b16 %v5368, %v5366
      %v5401 = vpack.c.b16 %v5371, %v5369
      %v5402 = vpack.c.b16 %v5372, %v5370
      %v5403 = vpack.c.b16 %v5375, %v5373
      %v5404 = vpack.c.b16 %v5376, %v5374
      %v5405 = vpack.c.b16 %v5379, %v5377
      %v5406 = vpack.c.b16 %v5380, %v5378
      %v5407 = vpack.c.b16 %v5383, %v5381
      %v5408 = vpack.c.b16 %v5384, %v5382
      %v5434 = vsel %vm1863, %v5276, 0
      %5436 = vmatprep.subr.bf16.mxu0 %v5386
      %5437 = vmatpush1.bf16.msra.mxu0 %v5385
      %5438 = vmatprep.subr.bf16.mxu0 %v5388
      %5439 = vmatpush1.bf16.msra.mxu0 %v5387
      %5440 = vmatprep.subr.bf16.mxu0 %v5390
      %5441 = vmatpush1.bf16.msra.mxu0 %v5389
      %5442 = vmatprep.subr.bf16.mxu0 %v5392
      %5443 = vmatpush1.bf16.msra.mxu0 %v5391
      %5444 = vmatprep.subr.bf16.mxu0 %v5394
      %5445 = vmatpush1.bf16.msra.mxu0 %v5393
      %5446 = vmatprep.subr.bf16.mxu0 %v5396
      %5447 = vmatpush1.bf16.msra.mxu0 %v5395
      %5448 = vmatprep.subr.bf16.mxu0 %v5398
      %5449 = vmatpush1.bf16.msra.mxu0 %v5397
      %5450 = vmatprep.subr.bf16.mxu0 %v5400
      %5451 = vmatpush1.bf16.msra.mxu0 %v5399
      %5452 = vmatprep.subr.bf16.mxu0 %v5402
      %5453 = vmatpush1.bf16.msra.mxu0 %v5401
      %5454 = vmatprep.subr.bf16.mxu0 %v5404
      %5455 = vmatpush1.bf16.msra.mxu0 %v5403
      %5456 = vmatprep.subr.bf16.mxu0 %v5406
      %5457 = vmatpush1.bf16.msra.mxu0 %v5405
      %5458 = vmatprep.subr.bf16.mxu0 %v5408
      %5459 = vmatpush1.bf16.msra.mxu0 %v5407
      %5460 = vmatprep.subr.bf16.mxu0 0
      %5461 = vmatpush1.bf16.msra.mxu0 0
      %5462 = vmatprep.subr.bf16.mxu0 0
      %5463 = vmatpush1.bf16.msra.mxu0 0
      %5464 = vmatprep.subr.bf16.mxu0 0
      %5465 = vmatpush1.bf16.msra.mxu0 0
      %5466 = vmatprep.subr.bf16.mxu0 0
      %5467 = vmatpush1.bf16.msra.mxu0 0
      %5468 = vmatprep.mubr.bf16.mxu0 %v5434
      %5469 = vmatmul.mubr.bf16.gmra.mrb[0].mxu0 %v5275
      %v5470 = vpop.f32.mrb[0].mxu0
      %v5471 = vadd.f32 %v5306, %v5470
      %v5472 = vpop.f32.mrb[0].mxu0
      %v5473 = vadd.f32 %v5310, %v5472
      %v5474 = vpop.f32.mrb[0].mxu0
      %v5475 = vpop.f32.mrb[0].mxu0
      %5476 = vdwg.mxu0
      %v5477 = vadd.f32 %v3743, %v5471
      %v5478 = vadd.f32 %v3745, %v5473
      %v5479 = vld [vmem:[%s47] sm:$0x3]
      %v5480 = vld [vmem:[%s49] sm:$0x3]
      %v5481 = vsel %vm3779, %v5477, 0.0
      %v5482 = vsel %vm3781, %v5478, 0.0
      %v5483 = vadd.f32 %v5481, %v5482
      %5484 = vadd.xlane.f32.xlu0 %v5483
      %v5485 = vpop.xlane.xlu0 %5484
      %v5486 = vmul.f32 %v5485, %v3786
      %v5487 = vsub.f32 %v5477, %v5486
      %v5488 = vsub.f32 %v5478, %v5486
      %v5489 = vmul.f32 %v5487, %v5487
      %v5490 = vmul.f32 %v5488, %v5488
      %v5491 = vsel %vm3779, %v5489, 0.0
      %v5492 = vsel %vm3781, %v5490, 0.0
      %v5493 = vadd.f32 %v5491, %v5492
      %5494 = vadd.xlane.f32.xlu0 %v5493
      %v5495 = vpop.xlane.xlu0 %5494
      %v5496 = vmul.f32 %v5495, %v3786
      %v5497 = vadd.f32 %v5496, 1e-05
      %v5498 = vrsqrt.pop %v5497
      %v5499 = vmul.f32 %v5487, %v5498
      %v5500 = vmul.f32 %v5488, %v5498
      %v5502 = vlaneseq
      %v5503 = vshrl.u32 %v5502, 7
      %v5504 = vsub.s32 0, %v5503
      %v5505 = vrot.slane %v5479, %v5504
      %v5506 = vlaneseq
      %v5507 = vshrl.u32 %v5506, 7
      %v5508 = vsub.s32 1, %v5507
      %v5509 = vrot.slane %v5479, %v5508
      %v5512 = vmul.f32 %v5499, %v5505
      %v5513 = vmul.f32 %v5500, %v5509
      %v5515 = vlaneseq
      %v5516 = vshrl.u32 %v5515, 7
      %v5517 = vsub.s32 0, %v5516
      %v5518 = vrot.slane %v5480, %v5517
      %v5519 = vlaneseq
      %v5520 = vshrl.u32 %v5519, 7
      %v5521 = vsub.s32 1, %v5520
      %v5522 = vrot.slane %v5480, %v5521
      %v5525 = vadd.f32 %v5512, %v5518
      %v5526 = vadd.f32 %v5513, %v5522
      %v5527 = vpack.c.bf16 %v5525, %v5525
      %v5528 = vpack.c.bf16 %v5526, %v5526
      %v5529 = vld [vmem:[%s51] sm:$0xff]
      %v5530 = vld [vmem:[%s51 + $0x8] sm:$0xff]
      %v5531 = vld [vmem:[%s51 + $0x10] sm:$0xff]
      %v5532 = vld [vmem:[%s51 + $0x18] sm:$0xff]
      %v5533 = vld [vmem:[%s51 + $0x20] sm:$0xff]
      %v5534 = vld [vmem:[%s51 + $0x28] sm:$0xff]
      %v5535 = vld [vmem:[%s51 + $0x30] sm:$0xff]
      %v5536 = vld [vmem:[%s51 + $0x38] sm:$0xff]
      %v5537 = vld [vmem:[%s51 + $0x40] sm:$0xff]
      %v5538 = vld [vmem:[%s51 + $0x48] sm:$0xff]
      %v5539 = vld [vmem:[%s51 + $0x50] sm:$0xff]
      %v5540 = vld [vmem:[%s51 + $0x58] sm:$0xff]
      %v5541 = vld [vmem:[%s51 + $0x60] sm:$0xff]
      %v5542 = vld [vmem:[%s51 + $0x68] sm:$0xff]
      %v5543 = vld [vmem:[%s51 + $0x70] sm:$0xff]
      %v5544 = vld [vmem:[%s51 + $0x78] sm:$0xff]
      %v5545 = vld [vmem:[%s51 + $0x80] sm:$0xff]
      %v5546 = vld [vmem:[%s51 + $0x88] sm:$0xff]
      %v5547 = vld [vmem:[%s51 + $0x90] sm:$0xff]
      %v5548 = vld [vmem:[%s51 + $0x98] sm:$0xff]
      %v5549 = vld [vmem:[%s51 + $0xa0] sm:$0xff]
      %v5550 = vld [vmem:[%s51 + $0xa8] sm:$0xff]
      %v5551 = vld [vmem:[%s51 + $0xb0] sm:$0xff]
      %v5552 = vld [vmem:[%s51 + $0xb8] sm:$0xff]
      %v5553 = vld [vmem:[%s51 + $0xc0] sm:$0xff]
      %v5554 = vld [vmem:[%s51 + $0xc8] sm:$0xff]
      %v5555 = vld [vmem:[%s51 + $0xd0] sm:$0xff]
      %v5556 = vld [vmem:[%s51 + $0xd8] sm:$0xff]
      %v5557 = vld [vmem:[%s51 + $0xe0] sm:$0xff]
      %v5558 = vld [vmem:[%s51 + $0xe8] sm:$0xff]
      %v5559 = vld [vmem:[%s51 + $0xf0] sm:$0xff]
      %v5560 = vld [vmem:[%s51 + $0xf8] sm:$0xff]
      %v5561 = vld [vmem:[%s51 + $0x100] sm:$0xff]
      %v5562 = vld [vmem:[%s51 + $0x108] sm:$0xff]
      %v5563 = vld [vmem:[%s51 + $0x110] sm:$0xff]
      %v5564 = vld [vmem:[%s51 + $0x118] sm:$0xff]
      %v5565 = vld [vmem:[%s51 + $0x120] sm:$0xff]
      %v5566 = vld [vmem:[%s51 + $0x128] sm:$0xff]
      %v5567 = vld [vmem:[%s51 + $0x130] sm:$0xff]
      %v5568 = vld [vmem:[%s51 + $0x138] sm:$0xff]
      %v5569 = vld [vmem:[%s51 + $0x140] sm:$0xff]
      %v5570 = vld [vmem:[%s51 + $0x148] sm:$0xff]
      %v5571 = vld [vmem:[%s51 + $0x150] sm:$0xff]
      %v5572 = vld [vmem:[%s51 + $0x158] sm:$0xff]
      %v5573 = vld [vmem:[%s51 + $0x160] sm:$0xff]
      %v5574 = vld [vmem:[%s51 + $0x168] sm:$0xff]
      %v5575 = vld [vmem:[%s51 + $0x170] sm:$0xff]
      %v5576 = vld [vmem:[%s51 + $0x178] sm:$0xff]
      %v5577 = vld [vmem:[%s51 + $0x180] sm:$0xff]
      %v5578 = vld [vmem:[%s51 + $0x188] sm:$0xff]
      %v5579 = vld [vmem:[%s51 + $0x190] sm:$0xff]
      %v5580 = vld [vmem:[%s51 + $0x198] sm:$0xff]
      %v5581 = vld [vmem:[%s51 + $0x1a0] sm:$0xff]
      %v5582 = vld [vmem:[%s51 + $0x1a8] sm:$0xff]
      %v5583 = vld [vmem:[%s51 + $0x1b0] sm:$0xff]
      %v5584 = vld [vmem:[%s51 + $0x1b8] sm:$0xff]
      %v5585 = vld [vmem:[%s51 + $0x1c0] sm:$0xff]
      %v5586 = vld [vmem:[%s51 + $0x1c8] sm:$0xff]
      %v5587 = vld [vmem:[%s51 + $0x1d0] sm:$0xff]
      %v5588 = vld [vmem:[%s51 + $0x1d8] sm:$0xff]
      %v5589 = vld [vmem:[%s51 + $0x1e0] sm:$0xff]
      %v5590 = vld [vmem:[%s51 + $0x1e8] sm:$0xff]
      %v5591 = vld [vmem:[%s51 + $0x1f0] sm:$0xff]
      %v5592 = vld [vmem:[%s51 + $0x1f8] sm:$0xff]
      %v5593 = vld [vmem:[%s51 + $0x200] sm:$0xff]
      %v5594 = vld [vmem:[%s51 + $0x208] sm:$0xff]
      %v5595 = vld [vmem:[%s51 + $0x210] sm:$0xff]
      %v5596 = vld [vmem:[%s51 + $0x218] sm:$0xff]
      %v5597 = vld [vmem:[%s51 + $0x220] sm:$0xff]
      %v5598 = vld [vmem:[%s51 + $0x228] sm:$0xff]
      %v5599 = vld [vmem:[%s51 + $0x230] sm:$0xff]
      %v5600 = vld [vmem:[%s51 + $0x238] sm:$0xff]
      %v5601 = vld [vmem:[%s53] sm:$0x3f]
      %v5603 = vlaneseq
      %v5604 = vshrl.u32 %v5603, 7
      %v5605 = vsub.s32 0, %v5604
      %v5606 = vrot.slane %v5601, %v5605
      %v5607 = vlaneseq
      %v5608 = vshrl.u32 %v5607, 7
      %v5609 = vsub.s32 1, %v5608
      %v5610 = vrot.slane %v5601, %v5609
      %v5611 = vlaneseq
      %v5612 = vshrl.u32 %v5611, 7
      %v5613 = vsub.s32 2, %v5612
      %v5614 = vrot.slane %v5601, %v5613
      %v5615 = vlaneseq
      %v5616 = vshrl.u32 %v5615, 7
      %v5617 = vsub.s32 3, %v5616
      %v5618 = vrot.slane %v5601, %v5617
      %v5619 = vlaneseq
      %v5620 = vshrl.u32 %v5619, 7
      %v5621 = vsub.s32 4, %v5620
      %v5622 = vrot.slane %v5601, %v5621
      %v5623 = vlaneseq
      %v5624 = vshrl.u32 %v5623, 7
      %v5625 = vsub.s32 5, %v5624
      %v5626 = vrot.slane %v5601, %v5625
      %v5705 = vunpack.c.l.b16 %v5529
      %v5706 = vunpack.c.h.b16 %v5529
      %v5707 = vunpack.c.l.b16 %v5530
      %v5708 = vunpack.c.h.b16 %v5530
      %v5709 = vunpack.c.l.b16 %v5531
      %v5710 = vunpack.c.h.b16 %v5531
      %v5711 = vunpack.c.l.b16 %v5532
      %v5712 = vunpack.c.h.b16 %v5532
      %v5713 = vunpack.c.l.b16 %v5533
      %v5714 = vunpack.c.h.b16 %v5533
      %v5715 = vunpack.c.l.b16 %v5534
      %v5716 = vunpack.c.h.b16 %v5534
      %v5717 = vunpack.c.l.b16 %v5535
      %v5718 = vunpack.c.h.b16 %v5535
      %v5719 = vunpack.c.l.b16 %v5536
      %v5720 = vunpack.c.h.b16 %v5536
      %v5721 = vunpack.c.l.b16 %v5537
      %v5722 = vunpack.c.h.b16 %v5537
      %v5723 = vunpack.c.l.b16 %v5538
      %v5724 = vunpack.c.h.b16 %v5538
      %v5725 = vunpack.c.l.b16 %v5539
      %v5726 = vunpack.c.h.b16 %v5539
      %v5727 = vunpack.c.l.b16 %v5540
      %v5728 = vunpack.c.h.b16 %v5540
      %v5729 = vunpack.c.l.b16 %v5541
      %v5730 = vunpack.c.h.b16 %v5541
      %v5731 = vunpack.c.l.b16 %v5542
      %v5732 = vunpack.c.h.b16 %v5542
      %v5733 = vunpack.c.l.b16 %v5543
      %v5734 = vunpack.c.h.b16 %v5543
      %v5735 = vunpack.c.l.b16 %v5544
      %v5736 = vunpack.c.h.b16 %v5544
      %v5737 = vunpack.c.l.b16 %v5545
      %v5738 = vunpack.c.h.b16 %v5545
      %v5739 = vunpack.c.l.b16 %v5546
      %v5740 = vunpack.c.h.b16 %v5546
      %v5741 = vunpack.c.l.b16 %v5547
      %v5742 = vunpack.c.h.b16 %v5547
      %v5743 = vunpack.c.l.b16 %v5548
      %v5744 = vunpack.c.h.b16 %v5548
      %v5745 = vunpack.c.l.b16 %v5549
      %v5746 = vunpack.c.h.b16 %v5549
      %v5747 = vunpack.c.l.b16 %v5550
      %v5748 = vunpack.c.h.b16 %v5550
      %v5749 = vunpack.c.l.b16 %v5551
      %v5750 = vunpack.c.h.b16 %v5551
      %v5751 = vunpack.c.l.b16 %v5552
      %v5752 = vunpack.c.h.b16 %v5552
      %v5753 = vunpack.c.l.b16 %v5553
      %v5754 = vunpack.c.h.b16 %v5553
      %v5755 = vunpack.c.l.b16 %v5554
      %v5756 = vunpack.c.h.b16 %v5554
      %v5757 = vunpack.c.l.b16 %v5555
      %v5758 = vunpack.c.h.b16 %v5555
      %v5759 = vunpack.c.l.b16 %v5556
      %v5760 = vunpack.c.h.b16 %v5556
      %v5761 = vunpack.c.l.b16 %v5557
      %v5762 = vunpack.c.h.b16 %v5557
      %v5763 = vunpack.c.l.b16 %v5558
      %v5764 = vunpack.c.h.b16 %v5558
      %v5765 = vunpack.c.l.b16 %v5559
      %v5766 = vunpack.c.h.b16 %v5559
      %v5767 = vunpack.c.l.b16 %v5560
      %v5768 = vunpack.c.h.b16 %v5560
      %v5769 = vunpack.c.l.b16 %v5561
      %v5770 = vunpack.c.h.b16 %v5561
      %v5771 = vunpack.c.l.b16 %v5562
      %v5772 = vunpack.c.h.b16 %v5562
      %v5773 = vunpack.c.l.b16 %v5563
      %v5774 = vunpack.c.h.b16 %v5563
      %v5775 = vunpack.c.l.b16 %v5564
      %v5776 = vunpack.c.h.b16 %v5564
      %v5777 = vunpack.c.l.b16 %v5565
      %v5778 = vunpack.c.h.b16 %v5565
      %v5779 = vunpack.c.l.b16 %v5566
      %v5780 = vunpack.c.h.b16 %v5566
      %v5781 = vunpack.c.l.b16 %v5567
      %v5782 = vunpack.c.h.b16 %v5567
      %v5783 = vunpack.c.l.b16 %v5568
      %v5784 = vunpack.c.h.b16 %v5568
      %v5785 = vunpack.c.l.b16 %v5569
      %v5786 = vunpack.c.h.b16 %v5569
      %v5787 = vunpack.c.l.b16 %v5570
      %v5788 = vunpack.c.h.b16 %v5570
      %v5789 = vunpack.c.l.b16 %v5571
      %v5790 = vunpack.c.h.b16 %v5571
      %v5791 = vunpack.c.l.b16 %v5572
      %v5792 = vunpack.c.h.b16 %v5572
      %v5793 = vunpack.c.l.b16 %v5573
      %v5794 = vunpack.c.h.b16 %v5573
      %v5795 = vunpack.c.l.b16 %v5574
      %v5796 = vunpack.c.h.b16 %v5574
      %v5797 = vunpack.c.l.b16 %v5575
      %v5798 = vunpack.c.h.b16 %v5575
      %v5799 = vunpack.c.l.b16 %v5576
      %v5800 = vunpack.c.h.b16 %v5576
      %v5801 = vunpack.c.l.b16 %v5577
      %v5802 = vunpack.c.h.b16 %v5577
      %v5803 = vunpack.c.l.b16 %v5578
      %v5804 = vunpack.c.h.b16 %v5578
      %v5805 = vunpack.c.l.b16 %v5579
      %v5806 = vunpack.c.h.b16 %v5579
      %v5807 = vunpack.c.l.b16 %v5580
      %v5808 = vunpack.c.h.b16 %v5580
      %v5809 = vunpack.c.l.b16 %v5581
      %v5810 = vunpack.c.h.b16 %v5581
      %v5811 = vunpack.c.l.b16 %v5582
      %v5812 = vunpack.c.h.b16 %v5582
      %v5813 = vunpack.c.l.b16 %v5583
      %v5814 = vunpack.c.h.b16 %v5583
      %v5815 = vunpack.c.l.b16 %v5584
      %v5816 = vunpack.c.h.b16 %v5584
      %v5817 = vunpack.c.l.b16 %v5585
      %v5818 = vunpack.c.h.b16 %v5585
      %v5819 = vunpack.c.l.b16 %v5586
      %v5820 = vunpack.c.h.b16 %v5586
      %v5821 = vunpack.c.l.b16 %v5587
      %v5822 = vunpack.c.h.b16 %v5587
      %v5823 = vunpack.c.l.b16 %v5588
      %v5824 = vunpack.c.h.b16 %v5588
      %v5825 = vunpack.c.l.b16 %v5589
      %v5826 = vunpack.c.h.b16 %v5589
      %v5827 = vunpack.c.l.b16 %v5590
      %v5828 = vunpack.c.h.b16 %v5590
      %v5829 = vunpack.c.l.b16 %v5591
      %v5830 = vunpack.c.h.b16 %v5591
      %v5831 = vunpack.c.l.b16 %v5592
      %v5832 = vunpack.c.h.b16 %v5592
      %v5833 = vunpack.c.l.b16 %v5593
      %v5834 = vunpack.c.h.b16 %v5593
      %v5835 = vunpack.c.l.b16 %v5594
      %v5836 = vunpack.c.h.b16 %v5594
      %v5837 = vunpack.c.l.b16 %v5595
      %v5838 = vunpack.c.h.b16 %v5595
      %v5839 = vunpack.c.l.b16 %v5596
      %v5840 = vunpack.c.h.b16 %v5596
      %v5841 = vunpack.c.l.b16 %v5597
      %v5842 = vunpack.c.h.b16 %v5597
      %v5843 = vunpack.c.l.b16 %v5598
      %v5844 = vunpack.c.h.b16 %v5598
      %v5845 = vunpack.c.l.b16 %v5599
      %v5846 = vunpack.c.h.b16 %v5599
      %v5847 = vunpack.c.l.b16 %v5600
      %v5848 = vunpack.c.h.b16 %v5600
      %v5849 = vpack.c.b16 %v5711, %v5705
      %v5850 = vpack.c.b16 %v5712, %v5706
      %v5851 = vpack.c.b16 %v5713, %v5707
      %v5852 = vpack.c.b16 %v5714, %v5708
      %v5853 = vpack.c.b16 %v5715, %v5709
      %v5854 = vpack.c.b16 %v5716, %v5710
      %v5855 = vpack.c.b16 %v5723, %v5717
      %v5856 = vpack.c.b16 %v5724, %v5718
      %v5857 = vpack.c.b16 %v5725, %v5719
      %v5858 = vpack.c.b16 %v5726, %v5720
      %v5859 = vpack.c.b16 %v5727, %v5721
      %v5860 = vpack.c.b16 %v5728, %v5722
      %v5861 = vpack.c.b16 %v5735, %v5729
      %v5862 = vpack.c.b16 %v5736, %v5730
      %v5863 = vpack.c.b16 %v5737, %v5731
      %v5864 = vpack.c.b16 %v5738, %v5732
      %v5865 = vpack.c.b16 %v5739, %v5733
      %v5866 = vpack.c.b16 %v5740, %v5734
      %v5867 = vpack.c.b16 %v5747, %v5741
      %v5868 = vpack.c.b16 %v5748, %v5742
      %v5869 = vpack.c.b16 %v5749, %v5743
      %v5870 = vpack.c.b16 %v5750, %v5744
      %v5871 = vpack.c.b16 %v5751, %v5745
      %v5872 = vpack.c.b16 %v5752, %v5746
      %v5873 = vpack.c.b16 %v5759, %v5753
      %v5874 = vpack.c.b16 %v5760, %v5754
      %v5875 = vpack.c.b16 %v5761, %v5755
      %v5876 = vpack.c.b16 %v5762, %v5756
      %v5877 = vpack.c.b16 %v5763, %v5757
      %v5878 = vpack.c.b16 %v5764, %v5758
      %v5879 = vpack.c.b16 %v5771, %v5765
      %v5880 = vpack.c.b16 %v5772, %v5766
      %v5881 = vpack.c.b16 %v5773, %v5767
      %v5882 = vpack.c.b16 %v5774, %v5768
      %v5883 = vpack.c.b16 %v5775, %v5769
      %v5884 = vpack.c.b16 %v5776, %v5770
      %v5885 = vpack.c.b16 %v5783, %v5777
      %v5886 = vpack.c.b16 %v5784, %v5778
      %v5887 = vpack.c.b16 %v5785, %v5779
      %v5888 = vpack.c.b16 %v5786, %v5780
      %v5889 = vpack.c.b16 %v5787, %v5781
      %v5890 = vpack.c.b16 %v5788, %v5782
      %v5891 = vpack.c.b16 %v5795, %v5789
      %v5892 = vpack.c.b16 %v5796, %v5790
      %v5893 = vpack.c.b16 %v5797, %v5791
      %v5894 = vpack.c.b16 %v5798, %v5792
      %v5895 = vpack.c.b16 %v5799, %v5793
      %v5896 = vpack.c.b16 %v5800, %v5794
      %v5897 = vpack.c.b16 %v5807, %v5801
      %v5898 = vpack.c.b16 %v5808, %v5802
      %v5899 = vpack.c.b16 %v5809, %v5803
      %v5900 = vpack.c.b16 %v5810, %v5804
      %v5901 = vpack.c.b16 %v5811, %v5805
      %v5902 = vpack.c.b16 %v5812, %v5806
      %v5903 = vpack.c.b16 %v5819, %v5813
      %v5904 = vpack.c.b16 %v5820, %v5814
      %v5905 = vpack.c.b16 %v5821, %v5815
      %v5906 = vpack.c.b16 %v5822, %v5816
      %v5907 = vpack.c.b16 %v5823, %v5817
      %v5908 = vpack.c.b16 %v5824, %v5818
      %v5909 = vpack.c.b16 %v5831, %v5825
      %v5910 = vpack.c.b16 %v5832, %v5826
      %v5911 = vpack.c.b16 %v5833, %v5827
      %v5912 = vpack.c.b16 %v5834, %v5828
      %v5913 = vpack.c.b16 %v5835, %v5829
      %v5914 = vpack.c.b16 %v5836, %v5830
      %v5915 = vpack.c.b16 %v5843, %v5837
      %v5916 = vpack.c.b16 %v5844, %v5838
      %v5917 = vpack.c.b16 %v5845, %v5839
      %v5918 = vpack.c.b16 %v5846, %v5840
      %v5919 = vpack.c.b16 %v5847, %v5841
      %v5920 = vpack.c.b16 %v5848, %v5842
      %v5994 = vsel %vm1863, %v5528, 0
      %5996 = vmatprep.subr.bf16.mxu0 %v5850
      %5997 = vmatpush1.bf16.msra.mxu0 %v5849
      %5998 = vmatprep.subr.bf16.mxu0 %v5856
      %5999 = vmatpush1.bf16.msra.mxu0 %v5855
      %6000 = vmatprep.subr.bf16.mxu0 %v5862
      %6001 = vmatpush1.bf16.msra.mxu0 %v5861
      %6002 = vmatprep.subr.bf16.mxu0 %v5868
      %6003 = vmatpush1.bf16.msra.mxu0 %v5867
      %6004 = vmatprep.subr.bf16.mxu0 %v5874
      %6005 = vmatpush1.bf16.msra.mxu0 %v5873
      %6006 = vmatprep.subr.bf16.mxu0 %v5880
      %6007 = vmatpush1.bf16.msra.mxu0 %v5879
      %6008 = vmatprep.subr.bf16.mxu0 %v5886
      %6009 = vmatpush1.bf16.msra.mxu0 %v5885
      %6010 = vmatprep.subr.bf16.mxu0 %v5892
      %6011 = vmatpush1.bf16.msra.mxu0 %v5891
      %6012 = vmatprep.subr.bf16.mxu0 %v5898
      %6013 = vmatpush1.bf16.msra.mxu0 %v5897
      %6014 = vmatprep.subr.bf16.mxu0 %v5904
      %6015 = vmatpush1.bf16.msra.mxu0 %v5903
      %6016 = vmatprep.subr.bf16.mxu0 %v5910
      %6017 = vmatpush1.bf16.msra.mxu0 %v5909
      %6018 = vmatprep.subr.bf16.mxu0 %v5916
      %6019 = vmatpush1.bf16.msra.mxu0 %v5915
      %6020 = vmatprep.subr.bf16.mxu0 0
      %6021 = vmatpush1.bf16.msra.mxu0 0
      %6022 = vmatprep.subr.bf16.mxu0 0
      %6023 = vmatpush1.bf16.msra.mxu0 0
      %6024 = vmatprep.subr.bf16.mxu0 0
      %6025 = vmatpush1.bf16.msra.mxu0 0
      %6026 = vmatprep.subr.bf16.mxu0 0
      %6027 = vmatpush1.bf16.msra.mxu0 0
      %6028 = vmatprep.mubr.bf16.mxu0 %v5994
      %6029 = vmatmul.mubr.bf16.gmra.mrb[0].mxu0 %v5527
      %v6030 = vpop.f32.mrb[0].mxu0
      %v6031 = vadd.f32 %v5606, %v6030
      %v6032 = vpop.f32.mrb[0].mxu0
      %v6033 = vadd.f32 %v5610, %v6032
      %v6034 = vpop.f32.mrb[0].mxu0
      %v6035 = vpop.f32.mrb[0].mxu0
      %6036 = vdwg.mxu0
      %6037 = vmatprep.subr.bf16.mxu0 %v5852
      %6038 = vmatpush1.bf16.msra.mxu0 %v5851
      %6039 = vmatprep.subr.bf16.mxu0 %v5858
      %6040 = vmatpush1.bf16.msra.mxu0 %v5857
      %6041 = vmatprep.subr.bf16.mxu0 %v5864
      %6042 = vmatpush1.bf16.msra.mxu0 %v5863
      %6043 = vmatprep.subr.bf16.mxu0 %v5870
      %6044 = vmatpush1.bf16.msra.mxu0 %v5869
      %6045 = vmatprep.subr.bf16.mxu0 %v5876
      %6046 = vmatpush1.bf16.msra.mxu0 %v5875
      %6047 = vmatprep.subr.bf16.mxu0 %v5882
      %6048 = vmatpush1.bf16.msra.mxu0 %v5881
      %6049 = vmatprep.subr.bf16.mxu0 %v5888
      %6050 = vmatpush1.bf16.msra.mxu0 %v5887
      %6051 = vmatprep.subr.bf16.mxu0 %v5894
      %6052 = vmatpush1.bf16.msra.mxu0 %v5893
      %6053 = vmatprep.subr.bf16.mxu0 %v5900
      %6054 = vmatpush1.bf16.msra.mxu0 %v5899
      %6055 = vmatprep.subr.bf16.mxu0 %v5906
      %6056 = vmatpush1.bf16.msra.mxu0 %v5905
      %6057 = vmatprep.subr.bf16.mxu0 %v5912
      %6058 = vmatpush1.bf16.msra.mxu0 %v5911
      %6059 = vmatprep.subr.bf16.mxu0 %v5918
      %6060 = vmatpush1.bf16.msra.mxu0 %v5917
      %6061 = vmatprep.subr.bf16.mxu0 0
      %6062 = vmatpush1.bf16.msra.mxu0 0
      %6063 = vmatprep.subr.bf16.mxu0 0
      %6064 = vmatpush1.bf16.msra.mxu0 0
      %6065 = vmatprep.subr.bf16.mxu0 0
      %6066 = vmatpush1.bf16.msra.mxu0 0
      %6067 = vmatprep.subr.bf16.mxu0 0
      %6068 = vmatpush1.bf16.msra.mxu0 0
      %6069 = vmatprep.mubr.bf16.mxu0 %v5994
      %6070 = vmatmul.mubr.bf16.gmra.mrb[0].mxu0 %v5527
      %v6071 = vpop.f32.mrb[0].mxu0
      %v6072 = vadd.f32 %v5614, %v6071
      %v6073 = vpop.f32.mrb[0].mxu0
      %v6074 = vadd.f32 %v5618, %v6073
      %v6075 = vpop.f32.mrb[0].mxu0
      %v6076 = vpop.f32.mrb[0].mxu0
      %6077 = vdwg.mxu0
      %6078 = vmatprep.subr.bf16.mxu0 %v5854
      %6079 = vmatpush1.bf16.msra.mxu0 %v5853
      %6080 = vmatprep.subr.bf16.mxu0 %v5860
      %6081 = vmatpush1.bf16.msra.mxu0 %v5859
      %6082 = vmatprep.subr.bf16.mxu0 %v5866
      %6083 = vmatpush1.bf16.msra.mxu0 %v5865
      %6084 = vmatprep.subr.bf16.mxu0 %v5872
      %6085 = vmatpush1.bf16.msra.mxu0 %v5871
      %6086 = vmatprep.subr.bf16.mxu0 %v5878
      %6087 = vmatpush1.bf16.msra.mxu0 %v5877
      %6088 = vmatprep.subr.bf16.mxu0 %v5884
      %6089 = vmatpush1.bf16.msra.mxu0 %v5883
      %6090 = vmatprep.subr.bf16.mxu0 %v5890
      %6091 = vmatpush1.bf16.msra.mxu0 %v5889
      %6092 = vmatprep.subr.bf16.mxu0 %v5896
      %6093 = vmatpush1.bf16.msra.mxu0 %v5895
      %6094 = vmatprep.subr.bf16.mxu0 %v5902
      %6095 = vmatpush1.bf16.msra.mxu0 %v5901
      %6096 = vmatprep.subr.bf16.mxu0 %v5908
      %6097 = vmatpush1.bf16.msra.mxu0 %v5907
      %6098 = vmatprep.subr.bf16.mxu0 %v5914
      %6099 = vmatpush1.bf16.msra.mxu0 %v5913
      %6100 = vmatprep.subr.bf16.mxu0 %v5920
      %6101 = vmatpush1.bf16.msra.mxu0 %v5919
      %6102 = vmatprep.subr.bf16.mxu0 0
      %6103 = vmatpush1.bf16.msra.mxu0 0
      %6104 = vmatprep.subr.bf16.mxu0 0
      %6105 = vmatpush1.bf16.msra.mxu0 0
      %6106 = vmatprep.subr.bf16.mxu0 0
      %6107 = vmatpush1.bf16.msra.mxu0 0
      %6108 = vmatprep.subr.bf16.mxu0 0
      %6109 = vmatpush1.bf16.msra.mxu0 0
      %6110 = vmatprep.mubr.bf16.mxu0 %v5994
      %6111 = vmatmul.mubr.bf16.gmra.mrb[0].mxu0 %v5527
      %v6112 = vpop.f32.mrb[0].mxu0
      %v6113 = vadd.f32 %v5622, %v6112
      %v6114 = vpop.f32.mrb[0].mxu0
      %v6115 = vadd.f32 %v5626, %v6114
      %v6116 = vpop.f32.mrb[0].mxu0
      %v6117 = vpop.f32.mrb[0].mxu0
      %6118 = vdwg.mxu0
      %v6119 = vmul.f32 %v6031, 0.5
      %v6120 = vmul.f32 %v6033, 0.5
      %v6121 = vmul.f32 %v6072, 0.5
      %v6122 = vmul.f32 %v6074, 0.5
      %v6123 = vmul.f32 %v6113, 0.5
      %v6124 = vmul.f32 %v6115, 0.5
      %v6125 = vmul.f32 %v6031, 0.70710677
      %v6126 = vmul.f32 %v6033, 0.70710677
      %v6127 = vmul.f32 %v6072, 0.70710677
      %v6128 = vmul.f32 %v6074, 0.70710677
      %v6129 = vmul.f32 %v6113, 0.70710677
      %v6130 = vmul.f32 %v6115, 0.70710677
      %v6131 = verf.f32.pop %v6125
      %v6132 = verf.f32.pop %v6126
      %v6133 = verf.f32.pop %v6127
      %v6134 = verf.f32.pop %v6128
      %v6135 = verf.f32.pop %v6129
      %v6136 = verf.f32.pop %v6130
      %v6137 = vadd.f32 %v6131, 1.0
      %v6138 = vadd.f32 %v6132, 1.0
      %v6139 = vadd.f32 %v6133, 1.0
      %v6140 = vadd.f32 %v6134, 1.0
      %v6141 = vadd.f32 %v6135, 1.0
      %v6142 = vadd.f32 %v6136, 1.0
      %v6143 = vmul.f32 %v6119, %v6137
      %v6144 = vmul.f32 %v6120, %v6138
      %v6145 = vmul.f32 %v6121, %v6139
      %v6146 = vmul.f32 %v6122, %v6140
      %v6147 = vmul.f32 %v6123, %v6141
      %v6148 = vmul.f32 %v6124, %v6142
      %v6149 = vpack.c.bf16 %v6143, %v6143
      %v6150 = vpack.c.bf16 %v6144, %v6144
      %v6151 = vpack.c.bf16 %v6145, %v6145
      %v6152 = vpack.c.bf16 %v6146, %v6146
      %v6153 = vpack.c.bf16 %v6147, %v6147
      %v6154 = vpack.c.bf16 %v6148, %v6148
      %v6155 = vld [vmem:[%s55] sm:$0xff]
      %v6156 = vld [vmem:[%s55 + $0x8] sm:$0xff]
      %v6157 = vld [vmem:[%s55 + $0x10] sm:$0xff]
      %v6158 = vld [vmem:[%s55 + $0x18] sm:$0xff]
      %v6159 = vld [vmem:[%s55 + $0x20] sm:$0xff]
      %v6160 = vld [vmem:[%s55 + $0x28] sm:$0xff]
      %v6161 = vld [vmem:[%s55 + $0x30] sm:$0xff]
      %v6162 = vld [vmem:[%s55 + $0x38] sm:$0xff]
      %v6163 = vld [vmem:[%s55 + $0x40] sm:$0xff]
      %v6164 = vld [vmem:[%s55 + $0x48] sm:$0xff]
      %v6165 = vld [vmem:[%s55 + $0x50] sm:$0xff]
      %v6166 = vld [vmem:[%s55 + $0x58] sm:$0xff]
      %v6167 = vld [vmem:[%s55 + $0x60] sm:$0xff]
      %v6168 = vld [vmem:[%s55 + $0x68] sm:$0xff]
      %v6169 = vld [vmem:[%s55 + $0x70] sm:$0xff]
      %v6170 = vld [vmem:[%s55 + $0x78] sm:$0xff]
      %v6171 = vld [vmem:[%s55 + $0x80] sm:$0xff]
      %v6172 = vld [vmem:[%s55 + $0x88] sm:$0xff]
      %v6173 = vld [vmem:[%s55 + $0x90] sm:$0xff]
      %v6174 = vld [vmem:[%s55 + $0x98] sm:$0xff]
      %v6175 = vld [vmem:[%s55 + $0xa0] sm:$0xff]
      %v6176 = vld [vmem:[%s55 + $0xa8] sm:$0xff]
      %v6177 = vld [vmem:[%s55 + $0xb0] sm:$0xff]
      %v6178 = vld [vmem:[%s55 + $0xb8] sm:$0xff]
      %v6179 = vld [vmem:[%s55 + $0xc0] sm:$0xff]
      %v6180 = vld [vmem:[%s55 + $0xc8] sm:$0xff]
      %v6181 = vld [vmem:[%s55 + $0xd0] sm:$0xff]
      %v6182 = vld [vmem:[%s55 + $0xd8] sm:$0xff]
      %v6183 = vld [vmem:[%s55 + $0xe0] sm:$0xff]
      %v6184 = vld [vmem:[%s55 + $0xe8] sm:$0xff]
      %v6185 = vld [vmem:[%s55 + $0xf0] sm:$0xff]
      %v6186 = vld [vmem:[%s55 + $0xf8] sm:$0xff]
      %v6187 = vld [vmem:[%s55 + $0x100] sm:$0xff]
      %v6188 = vld [vmem:[%s55 + $0x108] sm:$0xff]
      %v6189 = vld [vmem:[%s55 + $0x110] sm:$0xff]
      %v6190 = vld [vmem:[%s55 + $0x118] sm:$0xff]
      %v6191 = vld [vmem:[%s55 + $0x120] sm:$0xff]
      %v6192 = vld [vmem:[%s55 + $0x128] sm:$0xff]
      %v6193 = vld [vmem:[%s55 + $0x130] sm:$0xff]
      %v6194 = vld [vmem:[%s55 + $0x138] sm:$0xff]
      %v6195 = vld [vmem:[%s55 + $0x140] sm:$0xff]
      %v6196 = vld [vmem:[%s55 + $0x148] sm:$0xff]
      %v6197 = vld [vmem:[%s55 + $0x150] sm:$0xff]
      %v6198 = vld [vmem:[%s55 + $0x158] sm:$0xff]
      %v6199 = vld [vmem:[%s55 + $0x160] sm:$0xff]
      %v6200 = vld [vmem:[%s55 + $0x168] sm:$0xff]
      %v6201 = vld [vmem:[%s55 + $0x170] sm:$0xff]
      %v6202 = vld [vmem:[%s55 + $0x178] sm:$0xff]
      %v6203 = vld [vmem:[%s55 + $0x180] sm:$0xff]
      %v6204 = vld [vmem:[%s55 + $0x188] sm:$0xff]
      %v6205 = vld [vmem:[%s55 + $0x190] sm:$0xff]
      %v6206 = vld [vmem:[%s55 + $0x198] sm:$0xff]
      %v6207 = vld [vmem:[%s55 + $0x1a0] sm:$0xff]
      %v6208 = vld [vmem:[%s55 + $0x1a8] sm:$0xff]
      %v6209 = vld [vmem:[%s55 + $0x1b0] sm:$0xff]
      %v6210 = vld [vmem:[%s55 + $0x1b8] sm:$0xff]
      %v6211 = vld [vmem:[%s55 + $0x1c0] sm:$0xff]
      %v6212 = vld [vmem:[%s55 + $0x1c8] sm:$0xff]
      %v6213 = vld [vmem:[%s55 + $0x1d0] sm:$0xff]
      %v6214 = vld [vmem:[%s55 + $0x1d8] sm:$0xff]
      %v6215 = vld [vmem:[%s55 + $0x1e0] sm:$0xff]
      %v6216 = vld [vmem:[%s55 + $0x1e8] sm:$0xff]
      %v6217 = vld [vmem:[%s55 + $0x1f0] sm:$0xff]
      %v6218 = vld [vmem:[%s55 + $0x1f8] sm:$0xff]
      %v6219 = vld [vmem:[%s55 + $0x200] sm:$0xff]
      %v6220 = vld [vmem:[%s55 + $0x208] sm:$0xff]
      %v6221 = vld [vmem:[%s55 + $0x210] sm:$0xff]
      %v6222 = vld [vmem:[%s55 + $0x218] sm:$0xff]
      %v6223 = vld [vmem:[%s55 + $0x220] sm:$0xff]
      %v6224 = vld [vmem:[%s55 + $0x228] sm:$0xff]
      %v6225 = vld [vmem:[%s55 + $0x230] sm:$0xff]
      %v6226 = vld [vmem:[%s55 + $0x238] sm:$0xff]
      %v6227 = vld [vmem:[%s55 + $0x240] sm:$0xff]
      %v6228 = vld [vmem:[%s55 + $0x248] sm:$0xff]
      %v6229 = vld [vmem:[%s55 + $0x250] sm:$0xff]
      %v6230 = vld [vmem:[%s55 + $0x258] sm:$0xff]
      %v6231 = vld [vmem:[%s55 + $0x260] sm:$0xff]
      %v6232 = vld [vmem:[%s55 + $0x268] sm:$0xff]
      %v6233 = vld [vmem:[%s55 + $0x270] sm:$0xff]
      %v6234 = vld [vmem:[%s55 + $0x278] sm:$0xff]
      %v6235 = vld [vmem:[%s55 + $0x280] sm:$0xff]
      %v6236 = vld [vmem:[%s55 + $0x288] sm:$0xff]
      %v6237 = vld [vmem:[%s55 + $0x290] sm:$0xff]
      %v6238 = vld [vmem:[%s55 + $0x298] sm:$0xff]
      %v6239 = vld [vmem:[%s55 + $0x2a0] sm:$0xff]
      %v6240 = vld [vmem:[%s55 + $0x2a8] sm:$0xff]
      %v6241 = vld [vmem:[%s55 + $0x2b0] sm:$0xff]
      %v6242 = vld [vmem:[%s55 + $0x2b8] sm:$0xff]
      %v6243 = vld [vmem:[%s55 + $0x2c0] sm:$0xff]
      %v6244 = vld [vmem:[%s55 + $0x2c8] sm:$0xff]
      %v6245 = vld [vmem:[%s55 + $0x2d0] sm:$0xff]
      %v6246 = vld [vmem:[%s55 + $0x2d8] sm:$0xff]
      %v6247 = vld [vmem:[%s55 + $0x2e0] sm:$0xff]
      %v6248 = vld [vmem:[%s55 + $0x2e8] sm:$0xff]
      %v6249 = vld [vmem:[%s55 + $0x2f0] sm:$0xff]
      %v6250 = vld [vmem:[%s55 + $0x2f8] sm:$0xff]
      %v6251 = vld [vmem:[%s57] sm:$0x3]
      %v6253 = vlaneseq
      %v6254 = vshrl.u32 %v6253, 7
      %v6255 = vsub.s32 0, %v6254
      %v6256 = vrot.slane %v6251, %v6255
      %v6257 = vlaneseq
      %v6258 = vshrl.u32 %v6257, 7
      %v6259 = vsub.s32 1, %v6258
      %v6260 = vrot.slane %v6251, %v6259
      %v6359 = vunpack.c.l.b16 %v6155
      %v6360 = vunpack.c.h.b16 %v6155
      %v6361 = vunpack.c.l.b16 %v6156
      %v6362 = vunpack.c.h.b16 %v6156
      %v6363 = vunpack.c.l.b16 %v6157
      %v6364 = vunpack.c.h.b16 %v6157
      %v6365 = vunpack.c.l.b16 %v6158
      %v6366 = vunpack.c.h.b16 %v6158
      %v6367 = vunpack.c.l.b16 %v6159
      %v6368 = vunpack.c.h.b16 %v6159
      %v6369 = vunpack.c.l.b16 %v6160
      %v6370 = vunpack.c.h.b16 %v6160
      %v6371 = vunpack.c.l.b16 %v6161
      %v6372 = vunpack.c.h.b16 %v6161
      %v6373 = vunpack.c.l.b16 %v6162
      %v6374 = vunpack.c.h.b16 %v6162
      %v6375 = vunpack.c.l.b16 %v6163
      %v6376 = vunpack.c.h.b16 %v6163
      %v6377 = vunpack.c.l.b16 %v6164
      %v6378 = vunpack.c.h.b16 %v6164
      %v6379 = vunpack.c.l.b16 %v6165
      %v6380 = vunpack.c.h.b16 %v6165
      %v6381 = vunpack.c.l.b16 %v6166
      %v6382 = vunpack.c.h.b16 %v6166
      %v6383 = vunpack.c.l.b16 %v6167
      %v6384 = vunpack.c.h.b16 %v6167
      %v6385 = vunpack.c.l.b16 %v6168
      %v6386 = vunpack.c.h.b16 %v6168
      %v6387 = vunpack.c.l.b16 %v6169
      %v6388 = vunpack.c.h.b16 %v6169
      %v6389 = vunpack.c.l.b16 %v6170
      %v6390 = vunpack.c.h.b16 %v6170
      %v6391 = vunpack.c.l.b16 %v6171
      %v6392 = vunpack.c.h.b16 %v6171
      %v6393 = vunpack.c.l.b16 %v6172
      %v6394 = vunpack.c.h.b16 %v6172
      %v6395 = vunpack.c.l.b16 %v6173
      %v6396 = vunpack.c.h.b16 %v6173
      %v6397 = vunpack.c.l.b16 %v6174
      %v6398 = vunpack.c.h.b16 %v6174
      %v6399 = vunpack.c.l.b16 %v6175
      %v6400 = vunpack.c.h.b16 %v6175
      %v6401 = vunpack.c.l.b16 %v6176
      %v6402 = vunpack.c.h.b16 %v6176
      %v6403 = vunpack.c.l.b16 %v6177
      %v6404 = vunpack.c.h.b16 %v6177
      %v6405 = vunpack.c.l.b16 %v6178
      %v6406 = vunpack.c.h.b16 %v6178
      %v6407 = vunpack.c.l.b16 %v6179
      %v6408 = vunpack.c.h.b16 %v6179
      %v6409 = vunpack.c.l.b16 %v6180
      %v6410 = vunpack.c.h.b16 %v6180
      %v6411 = vunpack.c.l.b16 %v6181
      %v6412 = vunpack.c.h.b16 %v6181
      %v6413 = vunpack.c.l.b16 %v6182
      %v6414 = vunpack.c.h.b16 %v6182
      %v6415 = vunpack.c.l.b16 %v6183
      %v6416 = vunpack.c.h.b16 %v6183
      %v6417 = vunpack.c.l.b16 %v6184
      %v6418 = vunpack.c.h.b16 %v6184
      %v6419 = vunpack.c.l.b16 %v6185
      %v6420 = vunpack.c.h.b16 %v6185
      %v6421 = vunpack.c.l.b16 %v6186
      %v6422 = vunpack.c.h.b16 %v6186
      %v6423 = vunpack.c.l.b16 %v6187
      %v6424 = vunpack.c.h.b16 %v6187
      %v6425 = vunpack.c.l.b16 %v6188
      %v6426 = vunpack.c.h.b16 %v6188
      %v6427 = vunpack.c.l.b16 %v6189
      %v6428 = vunpack.c.h.b16 %v6189
      %v6429 = vunpack.c.l.b16 %v6190
      %v6430 = vunpack.c.h.b16 %v6190
      %v6431 = vunpack.c.l.b16 %v6191
      %v6432 = vunpack.c.h.b16 %v6191
      %v6433 = vunpack.c.l.b16 %v6192
      %v6434 = vunpack.c.h.b16 %v6192
      %v6435 = vunpack.c.l.b16 %v6193
      %v6436 = vunpack.c.h.b16 %v6193
      %v6437 = vunpack.c.l.b16 %v6194
      %v6438 = vunpack.c.h.b16 %v6194
      %v6439 = vunpack.c.l.b16 %v6195
      %v6440 = vunpack.c.h.b16 %v6195
      %v6441 = vunpack.c.l.b16 %v6196
      %v6442 = vunpack.c.h.b16 %v6196
      %v6443 = vunpack.c.l.b16 %v6197
      %v6444 = vunpack.c.h.b16 %v6197
      %v6445 = vunpack.c.l.b16 %v6198
      %v6446 = vunpack.c.h.b16 %v6198
      %v6447 = vunpack.c.l.b16 %v6199
      %v6448 = vunpack.c.h.b16 %v6199
      %v6449 = vunpack.c.l.b16 %v6200
      %v6450 = vunpack.c.h.b16 %v6200
      %v6451 = vunpack.c.l.b16 %v6201
      %v6452 = vunpack.c.h.b16 %v6201
      %v6453 = vunpack.c.l.b16 %v6202
      %v6454 = vunpack.c.h.b16 %v6202
      %v6455 = vunpack.c.l.b16 %v6203
      %v6456 = vunpack.c.h.b16 %v6203
      %v6457 = vunpack.c.l.b16 %v6204
      %v6458 = vunpack.c.h.b16 %v6204
      %v6459 = vunpack.c.l.b16 %v6205
      %v6460 = vunpack.c.h.b16 %v6205
      %v6461 = vunpack.c.l.b16 %v6206
      %v6462 = vunpack.c.h.b16 %v6206
      %v6463 = vunpack.c.l.b16 %v6207
      %v6464 = vunpack.c.h.b16 %v6207
      %v6465 = vunpack.c.l.b16 %v6208
      %v6466 = vunpack.c.h.b16 %v6208
      %v6467 = vunpack.c.l.b16 %v6209
      %v6468 = vunpack.c.h.b16 %v6209
      %v6469 = vunpack.c.l.b16 %v6210
      %v6470 = vunpack.c.h.b16 %v6210
      %v6471 = vunpack.c.l.b16 %v6211
      %v6472 = vunpack.c.h.b16 %v6211
      %v6473 = vunpack.c.l.b16 %v6212
      %v6474 = vunpack.c.h.b16 %v6212
      %v6475 = vunpack.c.l.b16 %v6213
      %v6476 = vunpack.c.h.b16 %v6213
      %v6477 = vunpack.c.l.b16 %v6214
      %v6478 = vunpack.c.h.b16 %v6214
      %v6479 = vunpack.c.l.b16 %v6215
      %v6480 = vunpack.c.h.b16 %v6215
      %v6481 = vunpack.c.l.b16 %v6216
      %v6482 = vunpack.c.h.b16 %v6216
      %v6483 = vunpack.c.l.b16 %v6217
      %v6484 = vunpack.c.h.b16 %v6217
      %v6485 = vunpack.c.l.b16 %v6218
      %v6486 = vunpack.c.h.b16 %v6218
      %v6487 = vunpack.c.l.b16 %v6219
      %v6488 = vunpack.c.h.b16 %v6219
      %v6489 = vunpack.c.l.b16 %v6220
      %v6490 = vunpack.c.h.b16 %v6220
      %v6491 = vunpack.c.l.b16 %v6221
      %v6492 = vunpack.c.h.b16 %v6221
      %v6493 = vunpack.c.l.b16 %v6222
      %v6494 = vunpack.c.h.b16 %v6222
      %v6495 = vunpack.c.l.b16 %v6223
      %v6496 = vunpack.c.h.b16 %v6223
      %v6497 = vunpack.c.l.b16 %v6224
      %v6498 = vunpack.c.h.b16 %v6224
      %v6499 = vunpack.c.l.b16 %v6225
      %v6500 = vunpack.c.h.b16 %v6225
      %v6501 = vunpack.c.l.b16 %v6226
      %v6502 = vunpack.c.h.b16 %v6226
      %v6503 = vunpack.c.l.b16 %v6227
      %v6504 = vunpack.c.h.b16 %v6227
      %v6505 = vunpack.c.l.b16 %v6228
      %v6506 = vunpack.c.h.b16 %v6228
      %v6507 = vunpack.c.l.b16 %v6229
      %v6508 = vunpack.c.h.b16 %v6229
      %v6509 = vunpack.c.l.b16 %v6230
      %v6510 = vunpack.c.h.b16 %v6230
      %v6511 = vunpack.c.l.b16 %v6231
      %v6512 = vunpack.c.h.b16 %v6231
      %v6513 = vunpack.c.l.b16 %v6232
      %v6514 = vunpack.c.h.b16 %v6232
      %v6515 = vunpack.c.l.b16 %v6233
      %v6516 = vunpack.c.h.b16 %v6233
      %v6517 = vunpack.c.l.b16 %v6234
      %v6518 = vunpack.c.h.b16 %v6234
      %v6519 = vunpack.c.l.b16 %v6235
      %v6520 = vunpack.c.h.b16 %v6235
      %v6521 = vunpack.c.l.b16 %v6236
      %v6522 = vunpack.c.h.b16 %v6236
      %v6523 = vunpack.c.l.b16 %v6237
      %v6524 = vunpack.c.h.b16 %v6237
      %v6525 = vunpack.c.l.b16 %v6238
      %v6526 = vunpack.c.h.b16 %v6238
      %v6527 = vunpack.c.l.b16 %v6239
      %v6528 = vunpack.c.h.b16 %v6239
      %v6529 = vunpack.c.l.b16 %v6240
      %v6530 = vunpack.c.h.b16 %v6240
      %v6531 = vunpack.c.l.b16 %v6241
      %v6532 = vunpack.c.h.b16 %v6241
      %v6533 = vunpack.c.l.b16 %v6242
      %v6534 = vunpack.c.h.b16 %v6242
      %v6535 = vunpack.c.l.b16 %v6243
      %v6536 = vunpack.c.h.b16 %v6243
      %v6537 = vunpack.c.l.b16 %v6244
      %v6538 = vunpack.c.h.b16 %v6244
      %v6539 = vunpack.c.l.b16 %v6245
      %v6540 = vunpack.c.h.b16 %v6245
      %v6541 = vunpack.c.l.b16 %v6246
      %v6542 = vunpack.c.h.b16 %v6246
      %v6543 = vunpack.c.l.b16 %v6247
      %v6544 = vunpack.c.h.b16 %v6247
      %v6545 = vunpack.c.l.b16 %v6248
      %v6546 = vunpack.c.h.b16 %v6248
      %v6547 = vunpack.c.l.b16 %v6249
      %v6548 = vunpack.c.h.b16 %v6249
      %v6549 = vunpack.c.l.b16 %v6250
      %v6550 = vunpack.c.h.b16 %v6250
      %v6551 = vpack.c.b16 %v6361, %v6359
      %v6552 = vpack.c.b16 %v6362, %v6360
      %v6553 = vpack.c.b16 %v6365, %v6363
      %v6554 = vpack.c.b16 %v6366, %v6364
      %v6555 = vpack.c.b16 %v6369, %v6367
      %v6556 = vpack.c.b16 %v6370, %v6368
      %v6557 = vpack.c.b16 %v6373, %v6371
      %v6558 = vpack.c.b16 %v6374, %v6372
      %v6559 = vpack.c.b16 %v6377, %v6375
      %v6560 = vpack.c.b16 %v6378, %v6376
      %v6561 = vpack.c.b16 %v6381, %v6379
      %v6562 = vpack.c.b16 %v6382, %v6380
      %v6563 = vpack.c.b16 %v6385, %v6383
      %v6564 = vpack.c.b16 %v6386, %v6384
      %v6565 = vpack.c.b16 %v6389, %v6387
      %v6566 = vpack.c.b16 %v6390, %v6388
      %v6567 = vpack.c.b16 %v6393, %v6391
      %v6568 = vpack.c.b16 %v6394, %v6392
      %v6569 = vpack.c.b16 %v6397, %v6395
      %v6570 = vpack.c.b16 %v6398, %v6396
      %v6571 = vpack.c.b16 %v6401, %v6399
      %v6572 = vpack.c.b16 %v6402, %v6400
      %v6573 = vpack.c.b16 %v6405, %v6403
      %v6574 = vpack.c.b16 %v6406, %v6404
      %v6575 = vpack.c.b16 %v6409, %v6407
      %v6576 = vpack.c.b16 %v6410, %v6408
      %v6577 = vpack.c.b16 %v6413, %v6411
      %v6578 = vpack.c.b16 %v6414, %v6412
      %v6579 = vpack.c.b16 %v6417, %v6415
      %v6580 = vpack.c.b16 %v6418, %v6416
      %v6581 = vpack.c.b16 %v6421, %v6419
      %v6582 = vpack.c.b16 %v6422, %v6420
      %v6583 = vpack.c.b16 %v6425, %v6423
      %v6584 = vpack.c.b16 %v6426, %v6424
      %v6585 = vpack.c.b16 %v6429, %v6427
      %v6586 = vpack.c.b16 %v6430, %v6428
      %v6587 = vpack.c.b16 %v6433, %v6431
      %v6588 = vpack.c.b16 %v6434, %v6432
      %v6589 = vpack.c.b16 %v6437, %v6435
      %v6590 = vpack.c.b16 %v6438, %v6436
      %v6591 = vpack.c.b16 %v6441, %v6439
      %v6592 = vpack.c.b16 %v6442, %v6440
      %v6593 = vpack.c.b16 %v6445, %v6443
      %v6594 = vpack.c.b16 %v6446, %v6444
      %v6595 = vpack.c.b16 %v6449, %v6447
      %v6596 = vpack.c.b16 %v6450, %v6448
      %v6597 = vpack.c.b16 %v6453, %v6451
      %v6598 = vpack.c.b16 %v6454, %v6452
      %v6599 = vpack.c.b16 %v6457, %v6455
      %v6600 = vpack.c.b16 %v6458, %v6456
      %v6601 = vpack.c.b16 %v6461, %v6459
      %v6602 = vpack.c.b16 %v6462, %v6460
      %v6603 = vpack.c.b16 %v6465, %v6463
      %v6604 = vpack.c.b16 %v6466, %v6464
      %v6605 = vpack.c.b16 %v6469, %v6467
      %v6606 = vpack.c.b16 %v6470, %v6468
      %v6607 = vpack.c.b16 %v6473, %v6471
      %v6608 = vpack.c.b16 %v6474, %v6472
      %v6609 = vpack.c.b16 %v6477, %v6475
      %v6610 = vpack.c.b16 %v6478, %v6476
      %v6611 = vpack.c.b16 %v6481, %v6479
      %v6612 = vpack.c.b16 %v6482, %v6480
      %v6613 = vpack.c.b16 %v6485, %v6483
      %v6614 = vpack.c.b16 %v6486, %v6484
      %v6615 = vpack.c.b16 %v6489, %v6487
      %v6616 = vpack.c.b16 %v6490, %v6488
      %v6617 = vpack.c.b16 %v6493, %v6491
      %v6618 = vpack.c.b16 %v6494, %v6492
      %v6619 = vpack.c.b16 %v6497, %v6495
      %v6620 = vpack.c.b16 %v6498, %v6496
      %v6621 = vpack.c.b16 %v6501, %v6499
      %v6622 = vpack.c.b16 %v6502, %v6500
      %v6623 = vpack.c.b16 %v6505, %v6503
      %v6624 = vpack.c.b16 %v6506, %v6504
      %v6625 = vpack.c.b16 %v6509, %v6507
      %v6626 = vpack.c.b16 %v6510, %v6508
      %v6627 = vpack.c.b16 %v6513, %v6511
      %v6628 = vpack.c.b16 %v6514, %v6512
      %v6629 = vpack.c.b16 %v6517, %v6515
      %v6630 = vpack.c.b16 %v6518, %v6516
      %v6631 = vpack.c.b16 %v6521, %v6519
      %v6632 = vpack.c.b16 %v6522, %v6520
      %v6633 = vpack.c.b16 %v6525, %v6523
      %v6634 = vpack.c.b16 %v6526, %v6524
      %v6635 = vpack.c.b16 %v6529, %v6527
      %v6636 = vpack.c.b16 %v6530, %v6528
      %v6637 = vpack.c.b16 %v6533, %v6531
      %v6638 = vpack.c.b16 %v6534, %v6532
      %v6639 = vpack.c.b16 %v6537, %v6535
      %v6640 = vpack.c.b16 %v6538, %v6536
      %v6641 = vpack.c.b16 %v6541, %v6539
      %v6642 = vpack.c.b16 %v6542, %v6540
      %v6643 = vpack.c.b16 %v6545, %v6543
      %v6644 = vpack.c.b16 %v6546, %v6544
      %v6645 = vpack.c.b16 %v6549, %v6547
      %v6646 = vpack.c.b16 %v6550, %v6548
      %6743 = vmatprep.subr.bf16.mxu0 %v6552
      %6744 = vmatpush1.bf16.msra.mxu0 %v6551
      %6745 = vmatprep.subr.bf16.mxu0 %v6554
      %6746 = vmatpush1.bf16.msra.mxu0 %v6553
      %6747 = vmatprep.subr.bf16.mxu0 %v6556
      %6748 = vmatpush1.bf16.msra.mxu0 %v6555
      %6749 = vmatprep.subr.bf16.mxu0 %v6558
      %6750 = vmatpush1.bf16.msra.mxu0 %v6557
      %6751 = vmatprep.subr.bf16.mxu0 %v6560
      %6752 = vmatpush1.bf16.msra.mxu0 %v6559
      %6753 = vmatprep.subr.bf16.mxu0 %v6562
      %6754 = vmatpush1.bf16.msra.mxu0 %v6561
      %6755 = vmatprep.subr.bf16.mxu0 %v6564
      %6756 = vmatpush1.bf16.msra.mxu0 %v6563
      %6757 = vmatprep.subr.bf16.mxu0 %v6566
      %6758 = vmatpush1.bf16.msra.mxu0 %v6565
      %6759 = vmatprep.subr.bf16.mxu0 %v6568
      %6760 = vmatpush1.bf16.msra.mxu0 %v6567
      %6761 = vmatprep.subr.bf16.mxu0 %v6570
      %6762 = vmatpush1.bf16.msra.mxu0 %v6569
      %6763 = vmatprep.subr.bf16.mxu0 %v6572
      %6764 = vmatpush1.bf16.msra.mxu0 %v6571
      %6765 = vmatprep.subr.bf16.mxu0 %v6574
      %6766 = vmatpush1.bf16.msra.mxu0 %v6573
      %6767 = vmatprep.subr.bf16.mxu0 %v6576
      %6768 = vmatpush1.bf16.msra.mxu0 %v6575
      %6769 = vmatprep.subr.bf16.mxu0 %v6578
      %6770 = vmatpush1.bf16.msra.mxu0 %v6577
      %6771 = vmatprep.subr.bf16.mxu0 %v6580
      %6772 = vmatpush1.bf16.msra.mxu0 %v6579
      %6773 = vmatprep.subr.bf16.mxu0 %v6582
      %6774 = vmatpush1.bf16.msra.mxu0 %v6581
      %6775 = vmatprep.mubr.bf16.mxu0 %v6150
      %6776 = vmatmul.mubr.bf16.gmra.mrb[0].mxu0 %v6149
      %v6777 = vpop.f32.mrb[0].mxu0
      %v6778 = vadd.f32 %v6256, %v6777
      %v6779 = vpop.f32.mrb[0].mxu0
      %v6780 = vadd.f32 %v6260, %v6779
      %v6781 = vpop.f32.mrb[0].mxu0
      %v6782 = vpop.f32.mrb[0].mxu0
      %6783 = vdwg.mxu0
      %6784 = vmatprep.subr.bf16.mxu0 %v6584
      %6785 = vmatpush1.bf16.msra.mxu0 %v6583
      %6786 = vmatprep.subr.bf16.mxu0 %v6586
      %6787 = vmatpush1.bf16.msra.mxu0 %v6585
      %6788 = vmatprep.subr.bf16.mxu0 %v6588
      %6789 = vmatpush1.bf16.msra.mxu0 %v6587
      %6790 = vmatprep.subr.bf16.mxu0 %v6590
      %6791 = vmatpush1.bf16.msra.mxu0 %v6589
      %6792 = vmatprep.subr.bf16.mxu0 %v6592
      %6793 = vmatpush1.bf16.msra.mxu0 %v6591
      %6794 = vmatprep.subr.bf16.mxu0 %v6594
      %6795 = vmatpush1.bf16.msra.mxu0 %v6593
      %6796 = vmatprep.subr.bf16.mxu0 %v6596
      %6797 = vmatpush1.bf16.msra.mxu0 %v6595
      %6798 = vmatprep.subr.bf16.mxu0 %v6598
      %6799 = vmatpush1.bf16.msra.mxu0 %v6597
      %6800 = vmatprep.subr.bf16.mxu0 %v6600
      %6801 = vmatpush1.bf16.msra.mxu0 %v6599
      %6802 = vmatprep.subr.bf16.mxu0 %v6602
      %6803 = vmatpush1.bf16.msra.mxu0 %v6601
      %6804 = vmatprep.subr.bf16.mxu0 %v6604
      %6805 = vmatpush1.bf16.msra.mxu0 %v6603
      %6806 = vmatprep.subr.bf16.mxu0 %v6606
      %6807 = vmatpush1.bf16.msra.mxu0 %v6605
      %6808 = vmatprep.subr.bf16.mxu0 %v6608
      %6809 = vmatpush1.bf16.msra.mxu0 %v6607
      %6810 = vmatprep.subr.bf16.mxu0 %v6610
      %6811 = vmatpush1.bf16.msra.mxu0 %v6609
      %6812 = vmatprep.subr.bf16.mxu0 %v6612
      %6813 = vmatpush1.bf16.msra.mxu0 %v6611
      %6814 = vmatprep.subr.bf16.mxu0 %v6614
      %6815 = vmatpush1.bf16.msra.mxu0 %v6613
      %6816 = vmatprep.mubr.bf16.mxu0 %v6152
      %6817 = vmatmul.mubr.bf16.gmra.mrb[0].mxu0 %v6151
      %v6818 = vpop.f32.mrb[0].mxu0
      %v6819 = vadd.f32 %v6778, %v6818
      %v6820 = vpop.f32.mrb[0].mxu0
      %v6821 = vadd.f32 %v6780, %v6820
      %v6822 = vpop.f32.mrb[0].mxu0
      %v6823 = vpop.f32.mrb[0].mxu0
      %6824 = vdwg.mxu0
      %6825 = vmatprep.subr.bf16.mxu0 %v6616
      %6826 = vmatpush1.bf16.msra.mxu0 %v6615
      %6827 = vmatprep.subr.bf16.mxu0 %v6618
      %6828 = vmatpush1.bf16.msra.mxu0 %v6617
      %6829 = vmatprep.subr.bf16.mxu0 %v6620
      %6830 = vmatpush1.bf16.msra.mxu0 %v6619
      %6831 = vmatprep.subr.bf16.mxu0 %v6622
      %6832 = vmatpush1.bf16.msra.mxu0 %v6621
      %6833 = vmatprep.subr.bf16.mxu0 %v6624
      %6834 = vmatpush1.bf16.msra.mxu0 %v6623
      %6835 = vmatprep.subr.bf16.mxu0 %v6626
      %6836 = vmatpush1.bf16.msra.mxu0 %v6625
      %6837 = vmatprep.subr.bf16.mxu0 %v6628
      %6838 = vmatpush1.bf16.msra.mxu0 %v6627
      %6839 = vmatprep.subr.bf16.mxu0 %v6630
      %6840 = vmatpush1.bf16.msra.mxu0 %v6629
      %6841 = vmatprep.subr.bf16.mxu0 %v6632
      %6842 = vmatpush1.bf16.msra.mxu0 %v6631
      %6843 = vmatprep.subr.bf16.mxu0 %v6634
      %6844 = vmatpush1.bf16.msra.mxu0 %v6633
      %6845 = vmatprep.subr.bf16.mxu0 %v6636
      %6846 = vmatpush1.bf16.msra.mxu0 %v6635
      %6847 = vmatprep.subr.bf16.mxu0 %v6638
      %6848 = vmatpush1.bf16.msra.mxu0 %v6637
      %6849 = vmatprep.subr.bf16.mxu0 %v6640
      %6850 = vmatpush1.bf16.msra.mxu0 %v6639
      %6851 = vmatprep.subr.bf16.mxu0 %v6642
      %6852 = vmatpush1.bf16.msra.mxu0 %v6641
      %6853 = vmatprep.subr.bf16.mxu0 %v6644
      %6854 = vmatpush1.bf16.msra.mxu0 %v6643
      %6855 = vmatprep.subr.bf16.mxu0 %v6646
      %6856 = vmatpush1.bf16.msra.mxu0 %v6645
      %6857 = vmatprep.mubr.bf16.mxu0 %v6154
      %6858 = vmatmul.mubr.bf16.gmra.mrb[0].mxu0 %v6153
      %v6859 = vpop.f32.mrb[0].mxu0
      %v6860 = vadd.f32 %v6819, %v6859
      %v6861 = vpop.f32.mrb[0].mxu0
      %v6862 = vadd.f32 %v6821, %v6861
      %v6863 = vpop.f32.mrb[0].mxu0
      %v6864 = vpop.f32.mrb[0].mxu0
      %6865 = vdwg.mxu0
      %v6866 = vadd.f32 %v5477, %v6860
      %v6867 = vadd.f32 %v5478, %v6862
      %s6868 = scalar_lea.vmem %s33, 2
      %v6869 = vld [vmem:[%s6868] sm:$0x3]
      %s6870 = scalar_lea.vmem %s35, 2
      %v6871 = vld [vmem:[%s6870] sm:$0x3]
      %v6872 = vsel %vm3779, %v6866, 0.0
      %v6873 = vsel %vm3781, %v6867, 0.0
      %v6874 = vadd.f32 %v6872, %v6873
      %6875 = vadd.xlane.f32.xlu0 %v6874
      %v6876 = vpop.xlane.xlu0 %6875
      %v6877 = vmul.f32 %v6876, %v3786
      %v6878 = vsub.f32 %v6866, %v6877
      %v6879 = vsub.f32 %v6867, %v6877
      %v6880 = vmul.f32 %v6878, %v6878
      %v6881 = vmul.f32 %v6879, %v6879
      %v6882 = vsel %vm3779, %v6880, 0.0
      %v6883 = vsel %vm3781, %v6881, 0.0
      %v6884 = vadd.f32 %v6882, %v6883
      %6885 = vadd.xlane.f32.xlu0 %v6884
      %v6886 = vpop.xlane.xlu0 %6885
      %v6887 = vmul.f32 %v6886, %v3786
      %v6888 = vadd.f32 %v6887, 1e-05
      %v6889 = vrsqrt.pop %v6888
      %v6890 = vmul.f32 %v6878, %v6889
      %v6891 = vmul.f32 %v6879, %v6889
      %v6893 = vlaneseq
      %v6894 = vshrl.u32 %v6893, 7
      %v6895 = vsub.s32 0, %v6894
      %v6896 = vrot.slane %v6869, %v6895
      %v6897 = vlaneseq
      %v6898 = vshrl.u32 %v6897, 7
      %v6899 = vsub.s32 1, %v6898
      %v6900 = vrot.slane %v6869, %v6899
      %v6903 = vmul.f32 %v6890, %v6896
      %v6904 = vmul.f32 %v6891, %v6900
      %v6906 = vlaneseq
      %v6907 = vshrl.u32 %v6906, 7
      %v6908 = vsub.s32 0, %v6907
      %v6909 = vrot.slane %v6871, %v6908
      %v6910 = vlaneseq
      %v6911 = vshrl.u32 %v6910, 7
      %v6912 = vsub.s32 1, %v6911
      %v6913 = vrot.slane %v6871, %v6912
      %v6916 = vadd.f32 %v6903, %v6909
      %v6917 = vadd.f32 %v6904, %v6913
      %v6918 = vpack.c.bf16 %v6916, %v6916
      %v6919 = vpack.c.bf16 %v6917, %v6917
      %s6920 = scalar_lea.vmem %s37, 192
      %v6921 = vld [vmem:[%s6920] sm:$0xff]
      %v6922 = vld [vmem:[%s6920 + $0x8] sm:$0xff]
      %v6923 = vld [vmem:[%s6920 + $0x10] sm:$0xff]
      %v6924 = vld [vmem:[%s6920 + $0x18] sm:$0xff]
      %v6925 = vld [vmem:[%s6920 + $0x20] sm:$0xff]
      %v6926 = vld [vmem:[%s6920 + $0x28] sm:$0xff]
      %v6927 = vld [vmem:[%s6920 + $0x30] sm:$0xff]
      %v6928 = vld [vmem:[%s6920 + $0x38] sm:$0xff]
      %v6929 = vld [vmem:[%s6920 + $0x40] sm:$0xff]
      %v6930 = vld [vmem:[%s6920 + $0x48] sm:$0xff]
      %v6931 = vld [vmem:[%s6920 + $0x50] sm:$0xff]
      %v6932 = vld [vmem:[%s6920 + $0x58] sm:$0xff]
      %v6933 = vld [vmem:[%s6920 + $0x60] sm:$0xff]
      %v6934 = vld [vmem:[%s6920 + $0x68] sm:$0xff]
      %v6935 = vld [vmem:[%s6920 + $0x70] sm:$0xff]
      %v6936 = vld [vmem:[%s6920 + $0x78] sm:$0xff]
      %v6937 = vld [vmem:[%s6920 + $0x80] sm:$0xff]
      %v6938 = vld [vmem:[%s6920 + $0x88] sm:$0xff]
      %v6939 = vld [vmem:[%s6920 + $0x90] sm:$0xff]
      %v6940 = vld [vmem:[%s6920 + $0x98] sm:$0xff]
      %v6941 = vld [vmem:[%s6920 + $0xa0] sm:$0xff]
      %v6942 = vld [vmem:[%s6920 + $0xa8] sm:$0xff]
      %v6943 = vld [vmem:[%s6920 + $0xb0] sm:$0xff]
      %v6944 = vld [vmem:[%s6920 + $0xb8] sm:$0xff]
      %v6969 = vunpack.c.l.b16 %v6921
      %v6970 = vunpack.c.h.b16 %v6921
      %v6971 = vunpack.c.l.b16 %v6922
      %v6972 = vunpack.c.h.b16 %v6922
      %v6973 = vunpack.c.l.b16 %v6923
      %v6974 = vunpack.c.h.b16 %v6923
      %v6975 = vunpack.c.l.b16 %v6924
      %v6976 = vunpack.c.h.b16 %v6924
      %v6977 = vunpack.c.l.b16 %v6925
      %v6978 = vunpack.c.h.b16 %v6925
      %v6979 = vunpack.c.l.b16 %v6926
      %v6980 = vunpack.c.h.b16 %v6926
      %v6981 = vunpack.c.l.b16 %v6927
      %v6982 = vunpack.c.h.b16 %v6927
      %v6983 = vunpack.c.l.b16 %v6928
      %v6984 = vunpack.c.h.b16 %v6928
      %v6985 = vunpack.c.l.b16 %v6929
      %v6986 = vunpack.c.h.b16 %v6929
      %v6987 = vunpack.c.l.b16 %v6930
      %v6988 = vunpack.c.h.b16 %v6930
      %v6989 = vunpack.c.l.b16 %v6931
      %v6990 = vunpack.c.h.b16 %v6931
      %v6991 = vunpack.c.l.b16 %v6932
      %v6992 = vunpack.c.h.b16 %v6932
      %v6993 = vunpack.c.l.b16 %v6933
      %v6994 = vunpack.c.h.b16 %v6933
      %v6995 = vunpack.c.l.b16 %v6934
      %v6996 = vunpack.c.h.b16 %v6934
      %v6997 = vunpack.c.l.b16 %v6935
      %v6998 = vunpack.c.h.b16 %v6935
      %v6999 = vunpack.c.l.b16 %v6936
      %v7000 = vunpack.c.h.b16 %v6936
      %v7001 = vunpack.c.l.b16 %v6937
      %v7002 = vunpack.c.h.b16 %v6937
      %v7003 = vunpack.c.l.b16 %v6938
      %v7004 = vunpack.c.h.b16 %v6938
      %v7005 = vunpack.c.l.b16 %v6939
      %v7006 = vunpack.c.h.b16 %v6939
      %v7007 = vunpack.c.l.b16 %v6940
      %v7008 = vunpack.c.h.b16 %v6940
      %v7009 = vunpack.c.l.b16 %v6941
      %v7010 = vunpack.c.h.b16 %v6941
      %v7011 = vunpack.c.l.b16 %v6942
      %v7012 = vunpack.c.h.b16 %v6942
      %v7013 = vunpack.c.l.b16 %v6943
      %v7014 = vunpack.c.h.b16 %v6943
      %v7015 = vunpack.c.l.b16 %v6944
      %v7016 = vunpack.c.h.b16 %v6944
      %v7017 = vpack.c.b16 %v6971, %v6969
      %v7018 = vpack.c.b16 %v6972, %v6970
      %v7019 = vpack.c.b16 %v6975, %v6973
      %v7020 = vpack.c.b16 %v6976, %v6974
      %v7021 = vpack.c.b16 %v6979, %v6977
      %v7022 = vpack.c.b16 %v6980, %v6978
      %v7023 = vpack.c.b16 %v6983, %v6981
      %v7024 = vpack.c.b16 %v6984, %v6982
      %v7025 = vpack.c.b16 %v6987, %v6985
      %v7026 = vpack.c.b16 %v6988, %v6986
      %v7027 = vpack.c.b16 %v6991, %v6989
      %v7028 = vpack.c.b16 %v6992, %v6990
      %v7029 = vpack.c.b16 %v6995, %v6993
      %v7030 = vpack.c.b16 %v6996, %v6994
      %v7031 = vpack.c.b16 %v6999, %v6997
      %v7032 = vpack.c.b16 %v7000, %v6998
      %v7033 = vpack.c.b16 %v7003, %v7001
      %v7034 = vpack.c.b16 %v7004, %v7002
      %v7035 = vpack.c.b16 %v7007, %v7005
      %v7036 = vpack.c.b16 %v7008, %v7006
      %v7037 = vpack.c.b16 %v7011, %v7009
      %v7038 = vpack.c.b16 %v7012, %v7010
      %v7039 = vpack.c.b16 %v7015, %v7013
      %v7040 = vpack.c.b16 %v7016, %v7014
      %v7066 = vsel %vm1863, %v6919, 0
      %7068 = vmatprep.subr.bf16.mxu0 %v7018
      %7069 = vmatpush1.bf16.msra.mxu0 %v7017
      %7070 = vmatprep.subr.bf16.mxu0 %v7020
      %7071 = vmatpush1.bf16.msra.mxu0 %v7019
      %7072 = vmatprep.subr.bf16.mxu0 %v7022
      %7073 = vmatpush1.bf16.msra.mxu0 %v7021
      %7074 = vmatprep.subr.bf16.mxu0 %v7024
      %7075 = vmatpush1.bf16.msra.mxu0 %v7023
      %7076 = vmatprep.subr.bf16.mxu0 %v7026
      %7077 = vmatpush1.bf16.msra.mxu0 %v7025
      %7078 = vmatprep.subr.bf16.mxu0 %v7028
      %7079 = vmatpush1.bf16.msra.mxu0 %v7027
      %7080 = vmatprep.subr.bf16.mxu0 %v7030
      %7081 = vmatpush1.bf16.msra.mxu0 %v7029
      %7082 = vmatprep.subr.bf16.mxu0 %v7032
      %7083 = vmatpush1.bf16.msra.mxu0 %v7031
      %7084 = vmatprep.subr.bf16.mxu0 %v7034
      %7085 = vmatpush1.bf16.msra.mxu0 %v7033
      %7086 = vmatprep.subr.bf16.mxu0 %v7036
      %7087 = vmatpush1.bf16.msra.mxu0 %v7035
      %7088 = vmatprep.subr.bf16.mxu0 %v7038
      %7089 = vmatpush1.bf16.msra.mxu0 %v7037
      %7090 = vmatprep.subr.bf16.mxu0 %v7040
      %7091 = vmatpush1.bf16.msra.mxu0 %v7039
      %7092 = vmatprep.subr.bf16.mxu0 0
      %7093 = vmatpush1.bf16.msra.mxu0 0
      %7094 = vmatprep.subr.bf16.mxu0 0
      %7095 = vmatpush1.bf16.msra.mxu0 0
      %7096 = vmatprep.subr.bf16.mxu0 0
      %7097 = vmatpush1.bf16.msra.mxu0 0
      %7098 = vmatprep.subr.bf16.mxu0 0
      %7099 = vmatpush1.bf16.msra.mxu0 0
      %7100 = vmatprep.mubr.bf16.mxu0 %v7066
      %7101 = vmatmul.mubr.bf16.gmra.mrb[0].mxu0 %v6918
      %v7102 = vpop.f32.mrb[0].mxu0
      %v7103 = vadd.f32 0.0, %v7102
      %v7104 = vpop.f32.mrb[0].mxu0
      %v7105 = vadd.f32 0.0, %v7104
      %v7106 = vpop.f32.mrb[0].mxu0
      %v7107 = vpop.f32.mrb[0].mxu0
      %7108 = vdwg.mxu0
      %s7109 = scalar_lea.vmem %s39, 192
      %v7110 = vld [vmem:[%s7109] sm:$0xff]
      %v7111 = vld [vmem:[%s7109 + $0x8] sm:$0xff]
      %v7112 = vld [vmem:[%s7109 + $0x10] sm:$0xff]
      %v7113 = vld [vmem:[%s7109 + $0x18] sm:$0xff]
      %v7114 = vld [vmem:[%s7109 + $0x20] sm:$0xff]
      %v7115 = vld [vmem:[%s7109 + $0x28] sm:$0xff]
      %v7116 = vld [vmem:[%s7109 + $0x30] sm:$0xff]
      %v7117 = vld [vmem:[%s7109 + $0x38] sm:$0xff]
      %v7118 = vld [vmem:[%s7109 + $0x40] sm:$0xff]
      %v7119 = vld [vmem:[%s7109 + $0x48] sm:$0xff]
      %v7120 = vld [vmem:[%s7109 + $0x50] sm:$0xff]
      %v7121 = vld [vmem:[%s7109 + $0x58] sm:$0xff]
      %v7122 = vld [vmem:[%s7109 + $0x60] sm:$0xff]
      %v7123 = vld [vmem:[%s7109 + $0x68] sm:$0xff]
      %v7124 = vld [vmem:[%s7109 + $0x70] sm:$0xff]
      %v7125 = vld [vmem:[%s7109 + $0x78] sm:$0xff]
      %v7126 = vld [vmem:[%s7109 + $0x80] sm:$0xff]
      %v7127 = vld [vmem:[%s7109 + $0x88] sm:$0xff]
      %v7128 = vld [vmem:[%s7109 + $0x90] sm:$0xff]
      %v7129 = vld [vmem:[%s7109 + $0x98] sm:$0xff]
      %v7130 = vld [vmem:[%s7109 + $0xa0] sm:$0xff]
      %v7131 = vld [vmem:[%s7109 + $0xa8] sm:$0xff]
      %v7132 = vld [vmem:[%s7109 + $0xb0] sm:$0xff]
      %v7133 = vld [vmem:[%s7109 + $0xb8] sm:$0xff]
      %v7158 = vunpack.c.l.b16 %v7110
      %v7159 = vunpack.c.h.b16 %v7110
      %v7160 = vunpack.c.l.b16 %v7111
      %v7161 = vunpack.c.h.b16 %v7111
      %v7162 = vunpack.c.l.b16 %v7112
      %v7163 = vunpack.c.h.b16 %v7112
      %v7164 = vunpack.c.l.b16 %v7113
      %v7165 = vunpack.c.h.b16 %v7113
      %v7166 = vunpack.c.l.b16 %v7114
      %v7167 = vunpack.c.h.b16 %v7114
      %v7168 = vunpack.c.l.b16 %v7115
      %v7169 = vunpack.c.h.b16 %v7115
      %v7170 = vunpack.c.l.b16 %v7116
      %v7171 = vunpack.c.h.b16 %v7116
      %v7172 = vunpack.c.l.b16 %v7117
      %v7173 = vunpack.c.h.b16 %v7117
      %v7174 = vunpack.c.l.b16 %v7118
      %v7175 = vunpack.c.h.b16 %v7118
      %v7176 = vunpack.c.l.b16 %v7119
      %v7177 = vunpack.c.h.b16 %v7119
      %v7178 = vunpack.c.l.b16 %v7120
      %v7179 = vunpack.c.h.b16 %v7120
      %v7180 = vunpack.c.l.b16 %v7121
      %v7181 = vunpack.c.h.b16 %v7121
      %v7182 = vunpack.c.l.b16 %v7122
      %v7183 = vunpack.c.h.b16 %v7122
      %v7184 = vunpack.c.l.b16 %v7123
      %v7185 = vunpack.c.h.b16 %v7123
      %v7186 = vunpack.c.l.b16 %v7124
      %v7187 = vunpack.c.h.b16 %v7124
      %v7188 = vunpack.c.l.b16 %v7125
      %v7189 = vunpack.c.h.b16 %v7125
      %v7190 = vunpack.c.l.b16 %v7126
      %v7191 = vunpack.c.h.b16 %v7126
      %v7192 = vunpack.c.l.b16 %v7127
      %v7193 = vunpack.c.h.b16 %v7127
      %v7194 = vunpack.c.l.b16 %v7128
      %v7195 = vunpack.c.h.b16 %v7128
      %v7196 = vunpack.c.l.b16 %v7129
      %v7197 = vunpack.c.h.b16 %v7129
      %v7198 = vunpack.c.l.b16 %v7130
      %v7199 = vunpack.c.h.b16 %v7130
      %v7200 = vunpack.c.l.b16 %v7131
      %v7201 = vunpack.c.h.b16 %v7131
      %v7202 = vunpack.c.l.b16 %v7132
      %v7203 = vunpack.c.h.b16 %v7132
      %v7204 = vunpack.c.l.b16 %v7133
      %v7205 = vunpack.c.h.b16 %v7133
      %v7206 = vpack.c.b16 %v7160, %v7158
      %v7207 = vpack.c.b16 %v7161, %v7159
      %v7208 = vpack.c.b16 %v7164, %v7162
      %v7209 = vpack.c.b16 %v7165, %v7163
      %v7210 = vpack.c.b16 %v7168, %v7166
      %v7211 = vpack.c.b16 %v7169, %v7167
      %v7212 = vpack.c.b16 %v7172, %v7170
      %v7213 = vpack.c.b16 %v7173, %v7171
      %v7214 = vpack.c.b16 %v7176, %v7174
      %v7215 = vpack.c.b16 %v7177, %v7175
      %v7216 = vpack.c.b16 %v7180, %v7178
      %v7217 = vpack.c.b16 %v7181, %v7179
      %v7218 = vpack.c.b16 %v7184, %v7182
      %v7219 = vpack.c.b16 %v7185, %v7183
      %v7220 = vpack.c.b16 %v7188, %v7186
      %v7221 = vpack.c.b16 %v7189, %v7187
      %v7222 = vpack.c.b16 %v7192, %v7190
      %v7223 = vpack.c.b16 %v7193, %v7191
      %v7224 = vpack.c.b16 %v7196, %v7194
      %v7225 = vpack.c.b16 %v7197, %v7195
      %v7226 = vpack.c.b16 %v7200, %v7198
      %v7227 = vpack.c.b16 %v7201, %v7199
      %v7228 = vpack.c.b16 %v7204, %v7202
      %v7229 = vpack.c.b16 %v7205, %v7203
      %7254 = vmatprep.subr.bf16.mxu0 %v7207
      %7255 = vmatpush1.bf16.msra.mxu0 %v7206
      %7256 = vmatprep.subr.bf16.mxu0 %v7209
      %7257 = vmatpush1.bf16.msra.mxu0 %v7208
      %7258 = vmatprep.subr.bf16.mxu0 %v7211
      %7259 = vmatpush1.bf16.msra.mxu0 %v7210
      %7260 = vmatprep.subr.bf16.mxu0 %v7213
      %7261 = vmatpush1.bf16.msra.mxu0 %v7212
      %7262 = vmatprep.subr.bf16.mxu0 %v7215
      %7263 = vmatpush1.bf16.msra.mxu0 %v7214
      %7264 = vmatprep.subr.bf16.mxu0 %v7217
      %7265 = vmatpush1.bf16.msra.mxu0 %v7216
      %7266 = vmatprep.subr.bf16.mxu0 %v7219
      %7267 = vmatpush1.bf16.msra.mxu0 %v7218
      %7268 = vmatprep.subr.bf16.mxu0 %v7221
      %7269 = vmatpush1.bf16.msra.mxu0 %v7220
      %7270 = vmatprep.subr.bf16.mxu0 %v7223
      %7271 = vmatpush1.bf16.msra.mxu0 %v7222
      %7272 = vmatprep.subr.bf16.mxu0 %v7225
      %7273 = vmatpush1.bf16.msra.mxu0 %v7224
      %7274 = vmatprep.subr.bf16.mxu0 %v7227
      %7275 = vmatpush1.bf16.msra.mxu0 %v7226
      %7276 = vmatprep.subr.bf16.mxu0 %v7229
      %7277 = vmatpush1.bf16.msra.mxu0 %v7228
      %7278 = vmatprep.subr.bf16.mxu0 0
      %7279 = vmatpush1.bf16.msra.mxu0 0
      %7280 = vmatprep.subr.bf16.mxu0 0
      %7281 = vmatpush1.bf16.msra.mxu0 0
      %7282 = vmatprep.subr.bf16.mxu0 0
      %7283 = vmatpush1.bf16.msra.mxu0 0
      %7284 = vmatprep.subr.bf16.mxu0 0
      %7285 = vmatpush1.bf16.msra.mxu0 0
      %7286 = vmatprep.mubr.bf16.mxu0 %v7066
      %7287 = vmatmul.mubr.bf16.gmra.mrb[0].mxu0 %v6918
      %v7288 = vpop.f32.mrb[0].mxu0
      %v7289 = vadd.f32 0.0, %v7288
      %v7290 = vpop.f32.mrb[0].mxu0
      %v7291 = vadd.f32 0.0, %v7290
      %v7292 = vpop.f32.mrb[0].mxu0
      %v7293 = vpop.f32.mrb[0].mxu0
      %7294 = vdwg.mxu0
      %s7295 = scalar_lea.vmem %s41, 192
      %v7296 = vld [vmem:[%s7295] sm:$0xff]
      %v7297 = vld [vmem:[%s7295 + $0x8] sm:$0xff]
      %v7298 = vld [vmem:[%s7295 + $0x10] sm:$0xff]
      %v7299 = vld [vmem:[%s7295 + $0x18] sm:$0xff]
      %v7300 = vld [vmem:[%s7295 + $0x20] sm:$0xff]
      %v7301 = vld [vmem:[%s7295 + $0x28] sm:$0xff]
      %v7302 = vld [vmem:[%s7295 + $0x30] sm:$0xff]
      %v7303 = vld [vmem:[%s7295 + $0x38] sm:$0xff]
      %v7304 = vld [vmem:[%s7295 + $0x40] sm:$0xff]
      %v7305 = vld [vmem:[%s7295 + $0x48] sm:$0xff]
      %v7306 = vld [vmem:[%s7295 + $0x50] sm:$0xff]
      %v7307 = vld [vmem:[%s7295 + $0x58] sm:$0xff]
      %v7308 = vld [vmem:[%s7295 + $0x60] sm:$0xff]
      %v7309 = vld [vmem:[%s7295 + $0x68] sm:$0xff]
      %v7310 = vld [vmem:[%s7295 + $0x70] sm:$0xff]
      %v7311 = vld [vmem:[%s7295 + $0x78] sm:$0xff]
      %v7312 = vld [vmem:[%s7295 + $0x80] sm:$0xff]
      %v7313 = vld [vmem:[%s7295 + $0x88] sm:$0xff]
      %v7314 = vld [vmem:[%s7295 + $0x90] sm:$0xff]
      %v7315 = vld [vmem:[%s7295 + $0x98] sm:$0xff]
      %v7316 = vld [vmem:[%s7295 + $0xa0] sm:$0xff]
      %v7317 = vld [vmem:[%s7295 + $0xa8] sm:$0xff]
      %v7318 = vld [vmem:[%s7295 + $0xb0] sm:$0xff]
      %v7319 = vld [vmem:[%s7295 + $0xb8] sm:$0xff]
      %v7344 = vunpack.c.l.b16 %v7296
      %v7345 = vunpack.c.h.b16 %v7296
      %v7346 = vunpack.c.l.b16 %v7297
      %v7347 = vunpack.c.h.b16 %v7297
      %v7348 = vunpack.c.l.b16 %v7298
      %v7349 = vunpack.c.h.b16 %v7298
      %v7350 = vunpack.c.l.b16 %v7299
      %v7351 = vunpack.c.h.b16 %v7299
      %v7352 = vunpack.c.l.b16 %v7300
      %v7353 = vunpack.c.h.b16 %v7300
      %v7354 = vunpack.c.l.b16 %v7301
      %v7355 = vunpack.c.h.b16 %v7301
      %v7356 = vunpack.c.l.b16 %v7302
      %v7357 = vunpack.c.h.b16 %v7302
      %v7358 = vunpack.c.l.b16 %v7303
      %v7359 = vunpack.c.h.b16 %v7303
      %v7360 = vunpack.c.l.b16 %v7304
      %v7361 = vunpack.c.h.b16 %v7304
      %v7362 = vunpack.c.l.b16 %v7305
      %v7363 = vunpack.c.h.b16 %v7305
      %v7364 = vunpack.c.l.b16 %v7306
      %v7365 = vunpack.c.h.b16 %v7306
      %v7366 = vunpack.c.l.b16 %v7307
      %v7367 = vunpack.c.h.b16 %v7307
      %v7368 = vunpack.c.l.b16 %v7308
      %v7369 = vunpack.c.h.b16 %v7308
      %v7370 = vunpack.c.l.b16 %v7309
      %v7371 = vunpack.c.h.b16 %v7309
      %v7372 = vunpack.c.l.b16 %v7310
      %v7373 = vunpack.c.h.b16 %v7310
      %v7374 = vunpack.c.l.b16 %v7311
      %v7375 = vunpack.c.h.b16 %v7311
      %v7376 = vunpack.c.l.b16 %v7312
      %v7377 = vunpack.c.h.b16 %v7312
      %v7378 = vunpack.c.l.b16 %v7313
      %v7379 = vunpack.c.h.b16 %v7313
      %v7380 = vunpack.c.l.b16 %v7314
      %v7381 = vunpack.c.h.b16 %v7314
      %v7382 = vunpack.c.l.b16 %v7315
      %v7383 = vunpack.c.h.b16 %v7315
      %v7384 = vunpack.c.l.b16 %v7316
      %v7385 = vunpack.c.h.b16 %v7316
      %v7386 = vunpack.c.l.b16 %v7317
      %v7387 = vunpack.c.h.b16 %v7317
      %v7388 = vunpack.c.l.b16 %v7318
      %v7389 = vunpack.c.h.b16 %v7318
      %v7390 = vunpack.c.l.b16 %v7319
      %v7391 = vunpack.c.h.b16 %v7319
      %v7392 = vpack.c.b16 %v7346, %v7344
      %v7393 = vpack.c.b16 %v7347, %v7345
      %v7394 = vpack.c.b16 %v7350, %v7348
      %v7395 = vpack.c.b16 %v7351, %v7349
      %v7396 = vpack.c.b16 %v7354, %v7352
      %v7397 = vpack.c.b16 %v7355, %v7353
      %v7398 = vpack.c.b16 %v7358, %v7356
      %v7399 = vpack.c.b16 %v7359, %v7357
      %v7400 = vpack.c.b16 %v7362, %v7360
      %v7401 = vpack.c.b16 %v7363, %v7361
      %v7402 = vpack.c.b16 %v7366, %v7364
      %v7403 = vpack.c.b16 %v7367, %v7365
      %v7404 = vpack.c.b16 %v7370, %v7368
      %v7405 = vpack.c.b16 %v7371, %v7369
      %v7406 = vpack.c.b16 %v7374, %v7372
      %v7407 = vpack.c.b16 %v7375, %v7373
      %v7408 = vpack.c.b16 %v7378, %v7376
      %v7409 = vpack.c.b16 %v7379, %v7377
      %v7410 = vpack.c.b16 %v7382, %v7380
      %v7411 = vpack.c.b16 %v7383, %v7381
      %v7412 = vpack.c.b16 %v7386, %v7384
      %v7413 = vpack.c.b16 %v7387, %v7385
      %v7414 = vpack.c.b16 %v7390, %v7388
      %v7415 = vpack.c.b16 %v7391, %v7389
      %7440 = vmatprep.subr.bf16.mxu0 %v7393
      %7441 = vmatpush1.bf16.msra.mxu0 %v7392
      %7442 = vmatprep.subr.bf16.mxu0 %v7395
      %7443 = vmatpush1.bf16.msra.mxu0 %v7394
      %7444 = vmatprep.subr.bf16.mxu0 %v7397
      %7445 = vmatpush1.bf16.msra.mxu0 %v7396
      %7446 = vmatprep.subr.bf16.mxu0 %v7399
      %7447 = vmatpush1.bf16.msra.mxu0 %v7398
      %7448 = vmatprep.subr.bf16.mxu0 %v7401
      %7449 = vmatpush1.bf16.msra.mxu0 %v7400
      %7450 = vmatprep.subr.bf16.mxu0 %v7403
      %7451 = vmatpush1.bf16.msra.mxu0 %v7402
      %7452 = vmatprep.subr.bf16.mxu0 %v7405
      %7453 = vmatpush1.bf16.msra.mxu0 %v7404
      %7454 = vmatprep.subr.bf16.mxu0 %v7407
      %7455 = vmatpush1.bf16.msra.mxu0 %v7406
      %7456 = vmatprep.subr.bf16.mxu0 %v7409
      %7457 = vmatpush1.bf16.msra.mxu0 %v7408
      %7458 = vmatprep.subr.bf16.mxu0 %v7411
      %7459 = vmatpush1.bf16.msra.mxu0 %v7410
      %7460 = vmatprep.subr.bf16.mxu0 %v7413
      %7461 = vmatpush1.bf16.msra.mxu0 %v7412
      %7462 = vmatprep.subr.bf16.mxu0 %v7415
      %7463 = vmatpush1.bf16.msra.mxu0 %v7414
      %7464 = vmatprep.subr.bf16.mxu0 0
      %7465 = vmatpush1.bf16.msra.mxu0 0
      %7466 = vmatprep.subr.bf16.mxu0 0
      %7467 = vmatpush1.bf16.msra.mxu0 0
      %7468 = vmatprep.subr.bf16.mxu0 0
      %7469 = vmatpush1.bf16.msra.mxu0 0
      %7470 = vmatprep.subr.bf16.mxu0 0
      %7471 = vmatpush1.bf16.msra.mxu0 0
      %7472 = vmatprep.mubr.bf16.mxu0 %v7066
      %7473 = vmatmul.mubr.bf16.gmra.mrb[0].mxu0 %v6918
      %v7474 = vpop.f32.mrb[0].mxu0
      %v7475 = vadd.f32 0.0, %v7474
      %v7476 = vpop.f32.mrb[0].mxu0
      %v7477 = vadd.f32 0.0, %v7476
      %v7478 = vpop.f32.mrb[0].mxu0
      %v7479 = vpop.f32.mrb[0].mxu0
      %7480 = vdwg.mxu0
      %v7481 = vlaneseq
      %v7482 = vshrl.u32 %v7481, 7
      %v7483 = vsub.s32 0, %v7482
      %v7484 = vrot.slane %v7289, %v7483
      %v7485 = vlaneseq
      %v7486 = vshrl.u32 %v7485, 7
      %v7487 = vsub.s32 0, %v7486
      %v7488 = vrot.slane %v7291, %v7487
      %v7489 = vmul.f32 %v7103, %v7484
      %v7490 = vmul.f32 %v7105, %v7488
      %v7492 = vsel %vm1863, %v7490, 0
      %7494 = vmatprep.subr.mxu0 0.0
      %7495 = vmatpush1.msra.mxu0 %v3749
      %7496 = vmatprep.subr.mxu0 0.0
      %7497 = vmatpush1.msra.mxu0 %v3750
      %7498 = vmatprep.subr.mxu0 0.0
      %7499 = vmatpush1.msra.mxu0 %v3751
      %7500 = vmatprep.subr.mxu0 0.0
      %7501 = vmatpush1.msra.mxu0 %v3752
      %7502 = vmatprep.subr.mxu0 0.0
      %7503 = vmatpush1.msra.mxu0 %v3753
      %7504 = vmatprep.subr.mxu0 0.0
      %7505 = vmatpush1.msra.mxu0 %v3754
      %7506 = vmatprep.subr.mxu0 0.0
      %7507 = vmatpush1.msra.mxu0 %v3755
      %7508 = vmatprep.subr.mxu0 0.0
      %7509 = vmatpush1.msra.mxu0 %v3756
      %7510 = vmatprep.subr.mxu0 0.0
      %7511 = vmatpush1.msra.mxu0 %v3757
      %7512 = vmatprep.subr.mxu0 0.0
      %7513 = vmatpush1.msra.mxu0 %v3758
      %7514 = vmatprep.subr.mxu0 0.0
      %7515 = vmatpush1.msra.mxu0 %v3759
      %7516 = vmatprep.subr.mxu0 0.0
      %7517 = vmatpush1.msra.mxu0 %v3760
      %7518 = vmatprep.subr.mxu0 0.0
      %7519 = vmatpush1.msra.mxu0 %v3761
      %7520 = vmatprep.subr.mxu0 0.0
      %7521 = vmatpush1.msra.mxu0 %v3762
      %7522 = vmatprep.subr.mxu0 0.0
      %7523 = vmatpush1.msra.mxu0 %v3763
      %7524 = vmatprep.subr.mxu0 0.0
      %7525 = vmatpush1.msra.mxu0 %v3764
      %7526 = vmatprep.subr.mxu0 0.0
      %7527 = vmatpush1.msra.mxu0 %v3765
      %7528 = vmatprep.subr.mxu0 0.0
      %7529 = vmatpush1.msra.mxu0 %v3766
      %7530 = vmatprep.subr.mxu0 0.0
      %7531 = vmatpush1.msra.mxu0 %v3767
      %7532 = vmatprep.subr.mxu0 0.0
      %7533 = vmatpush1.msra.mxu0 %v3768
      %7534 = vmatprep.subr.mxu0 0.0
      %7535 = vmatpush1.msra.mxu0 %v3769
      %7536 = vmatprep.subr.mxu0 0.0
      %7537 = vmatpush1.msra.mxu0 %v3770
      %7538 = vmatprep.subr.mxu0 0.0
      %7539 = vmatpush1.msra.mxu0 %v3771
      %7540 = vmatprep.subr.mxu0 0.0
      %7541 = vmatpush1.msra.mxu0 %v3772
      %7542 = vmatprep.subr.mxu0 0.0
      %7543 = vmatpush1.msra.mxu0 0.0
      %7544 = vmatprep.subr.mxu0 0.0
      %7545 = vmatpush1.msra.mxu0 0.0
      %7546 = vmatprep.subr.mxu0 0.0
      %7547 = vmatpush1.msra.mxu0 0.0
      %7548 = vmatprep.subr.mxu0 0.0
      %7549 = vmatpush1.msra.mxu0 0.0
      %7550 = vmatprep.subr.mxu0 0.0
      %7551 = vmatpush1.msra.mxu0 0.0
      %7552 = vmatprep.subr.mxu0 0.0
      %7553 = vmatpush1.msra.mxu0 0.0
      %7554 = vmatprep.subr.mxu0 0.0
      %7555 = vmatpush1.msra.mxu0 0.0
      %7556 = vmatprep.subr.mxu0 0.0
      %7557 = vmatpush1.msra.mxu0 0.0
      %7558 = vmatprep.mubr.f32.mxu0 %v7492
      %7559 = vmatmul.mubr.f32.gmra.mrb[0].mxu0 %v7489
      %v7560 = vpop.f32.mrb[0].mxu0
      %v7561 = vadd.f32 0.0, %v7560
      %v7562 = vpop.f32.mrb[0].mxu0
      %7563 = vdwg.mxu0
      %v7564 = vmul.f32 %v7561, 0.25
      %v7565 = vlaneseq
      %v7566 = vshrl.u32 %v7565, 7
      %v7567 = vsub.s32 1, %v7566
      %v7568 = vrot.slane %v7289, %v7567
      %v7569 = vlaneseq
      %v7570 = vshrl.u32 %v7569, 7
      %v7571 = vsub.s32 1, %v7570
      %v7572 = vrot.slane %v7291, %v7571
      %v7573 = vmul.f32 %v7103, %v7568
      %v7574 = vmul.f32 %v7105, %v7572
      %v7576 = vsel %vm1863, %v7574, 0
      %7578 = vmatprep.subr.mxu0 0.0
      %7579 = vmatpush1.msra.mxu0 %v3749
      %7580 = vmatprep.subr.mxu0 0.0
      %7581 = vmatpush1.msra.mxu0 %v3750
      %7582 = vmatprep.subr.mxu0 0.0
      %7583 = vmatpush1.msra.mxu0 %v3751
      %7584 = vmatprep.subr.mxu0 0.0
      %7585 = vmatpush1.msra.mxu0 %v3752
      %7586 = vmatprep.subr.mxu0 0.0
      %7587 = vmatpush1.msra.mxu0 %v3753
      %7588 = vmatprep.subr.mxu0 0.0
      %7589 = vmatpush1.msra.mxu0 %v3754
      %7590 = vmatprep.subr.mxu0 0.0
      %7591 = vmatpush1.msra.mxu0 %v3755
      %7592 = vmatprep.subr.mxu0 0.0
      %7593 = vmatpush1.msra.mxu0 %v3756
      %7594 = vmatprep.subr.mxu0 0.0
      %7595 = vmatpush1.msra.mxu0 %v3757
      %7596 = vmatprep.subr.mxu0 0.0
      %7597 = vmatpush1.msra.mxu0 %v3758
      %7598 = vmatprep.subr.mxu0 0.0
      %7599 = vmatpush1.msra.mxu0 %v3759
      %7600 = vmatprep.subr.mxu0 0.0
      %7601 = vmatpush1.msra.mxu0 %v3760
      %7602 = vmatprep.subr.mxu0 0.0
      %7603 = vmatpush1.msra.mxu0 %v3761
      %7604 = vmatprep.subr.mxu0 0.0
      %7605 = vmatpush1.msra.mxu0 %v3762
      %7606 = vmatprep.subr.mxu0 0.0
      %7607 = vmatpush1.msra.mxu0 %v3763
      %7608 = vmatprep.subr.mxu0 0.0
      %7609 = vmatpush1.msra.mxu0 %v3764
      %7610 = vmatprep.subr.mxu0 0.0
      %7611 = vmatpush1.msra.mxu0 %v3765
      %7612 = vmatprep.subr.mxu0 0.0
      %7613 = vmatpush1.msra.mxu0 %v3766
      %7614 = vmatprep.subr.mxu0 0.0
      %7615 = vmatpush1.msra.mxu0 %v3767
      %7616 = vmatprep.subr.mxu0 0.0
      %7617 = vmatpush1.msra.mxu0 %v3768
      %7618 = vmatprep.subr.mxu0 0.0
      %7619 = vmatpush1.msra.mxu0 %v3769
      %7620 = vmatprep.subr.mxu0 0.0
      %7621 = vmatpush1.msra.mxu0 %v3770
      %7622 = vmatprep.subr.mxu0 0.0
      %7623 = vmatpush1.msra.mxu0 %v3771
      %7624 = vmatprep.subr.mxu0 0.0
      %7625 = vmatpush1.msra.mxu0 %v3772
      %7626 = vmatprep.subr.mxu0 0.0
      %7627 = vmatpush1.msra.mxu0 0.0
      %7628 = vmatprep.subr.mxu0 0.0
      %7629 = vmatpush1.msra.mxu0 0.0
      %7630 = vmatprep.subr.mxu0 0.0
      %7631 = vmatpush1.msra.mxu0 0.0
      %7632 = vmatprep.subr.mxu0 0.0
      %7633 = vmatpush1.msra.mxu0 0.0
      %7634 = vmatprep.subr.mxu0 0.0
      %7635 = vmatpush1.msra.mxu0 0.0
      %7636 = vmatprep.subr.mxu0 0.0
      %7637 = vmatpush1.msra.mxu0 0.0
      %7638 = vmatprep.subr.mxu0 0.0
      %7639 = vmatpush1.msra.mxu0 0.0
      %7640 = vmatprep.subr.mxu0 0.0
      %7641 = vmatpush1.msra.mxu0 0.0
      %7642 = vmatprep.mubr.f32.mxu0 %v7576
      %7643 = vmatmul.mubr.f32.gmra.mrb[0].mxu0 %v7573
      %v7644 = vpop.f32.mrb[0].mxu0
      %v7645 = vadd.f32 0.0, %v7644
      %v7646 = vpop.f32.mrb[0].mxu0
      %7647 = vdwg.mxu0
      %v7648 = vmul.f32 %v7645, 0.25
      %v7649 = vlaneseq
      %v7650 = vshrl.u32 %v7649, 7
      %v7651 = vsub.s32 2, %v7650
      %v7652 = vrot.slane %v7289, %v7651
      %v7653 = vlaneseq
      %v7654 = vshrl.u32 %v7653, 7
      %v7655 = vsub.s32 2, %v7654
      %v7656 = vrot.slane %v7291, %v7655
      %v7657 = vmul.f32 %v7103, %v7652
      %v7658 = vmul.f32 %v7105, %v7656
      %v7660 = vsel %vm1863, %v7658, 0
      %7662 = vmatprep.subr.mxu0 0.0
      %7663 = vmatpush1.msra.mxu0 %v3749
      %7664 = vmatprep.subr.mxu0 0.0
      %7665 = vmatpush1.msra.mxu0 %v3750
      %7666 = vmatprep.subr.mxu0 0.0
      %7667 = vmatpush1.msra.mxu0 %v3751
      %7668 = vmatprep.subr.mxu0 0.0
      %7669 = vmatpush1.msra.mxu0 %v3752
      %7670 = vmatprep.subr.mxu0 0.0
      %7671 = vmatpush1.msra.mxu0 %v3753
      %7672 = vmatprep.subr.mxu0 0.0
      %7673 = vmatpush1.msra.mxu0 %v3754
      %7674 = vmatprep.subr.mxu0 0.0
      %7675 = vmatpush1.msra.mxu0 %v3755
      %7676 = vmatprep.subr.mxu0 0.0
      %7677 = vmatpush1.msra.mxu0 %v3756
      %7678 = vmatprep.subr.mxu0 0.0
      %7679 = vmatpush1.msra.mxu0 %v3757
      %7680 = vmatprep.subr.mxu0 0.0
      %7681 = vmatpush1.msra.mxu0 %v3758
      %7682 = vmatprep.subr.mxu0 0.0
      %7683 = vmatpush1.msra.mxu0 %v3759
      %7684 = vmatprep.subr.mxu0 0.0
      %7685 = vmatpush1.msra.mxu0 %v3760
      %7686 = vmatprep.subr.mxu0 0.0
      %7687 = vmatpush1.msra.mxu0 %v3761
      %7688 = vmatprep.subr.mxu0 0.0
      %7689 = vmatpush1.msra.mxu0 %v3762
      %7690 = vmatprep.subr.mxu0 0.0
      %7691 = vmatpush1.msra.mxu0 %v3763
      %7692 = vmatprep.subr.mxu0 0.0
      %7693 = vmatpush1.msra.mxu0 %v3764
      %7694 = vmatprep.subr.mxu0 0.0
      %7695 = vmatpush1.msra.mxu0 %v3765
      %7696 = vmatprep.subr.mxu0 0.0
      %7697 = vmatpush1.msra.mxu0 %v3766
      %7698 = vmatprep.subr.mxu0 0.0
      %7699 = vmatpush1.msra.mxu0 %v3767
      %7700 = vmatprep.subr.mxu0 0.0
      %7701 = vmatpush1.msra.mxu0 %v3768
      %7702 = vmatprep.subr.mxu0 0.0
      %7703 = vmatpush1.msra.mxu0 %v3769
      %7704 = vmatprep.subr.mxu0 0.0
      %7705 = vmatpush1.msra.mxu0 %v3770
      %7706 = vmatprep.subr.mxu0 0.0
      %7707 = vmatpush1.msra.mxu0 %v3771
      %7708 = vmatprep.subr.mxu0 0.0
      %7709 = vmatpush1.msra.mxu0 %v3772
      %7710 = vmatprep.subr.mxu0 0.0
      %7711 = vmatpush1.msra.mxu0 0.0
      %7712 = vmatprep.subr.mxu0 0.0
      %7713 = vmatpush1.msra.mxu0 0.0
      %7714 = vmatprep.subr.mxu0 0.0
      %7715 = vmatpush1.msra.mxu0 0.0
      %7716 = vmatprep.subr.mxu0 0.0
      %7717 = vmatpush1.msra.mxu0 0.0
      %7718 = vmatprep.subr.mxu0 0.0
      %7719 = vmatpush1.msra.mxu0 0.0
      %7720 = vmatprep.subr.mxu0 0.0
      %7721 = vmatpush1.msra.mxu0 0.0
      %7722 = vmatprep.subr.mxu0 0.0
      %7723 = vmatpush1.msra.mxu0 0.0
      %7724 = vmatprep.subr.mxu0 0.0
      %7725 = vmatpush1.msra.mxu0 0.0
      %7726 = vmatprep.mubr.f32.mxu0 %v7660
      %7727 = vmatmul.mubr.f32.gmra.mrb[0].mxu0 %v7657
      %v7728 = vpop.f32.mrb[0].mxu0
      %v7729 = vadd.f32 0.0, %v7728
      %v7730 = vpop.f32.mrb[0].mxu0
      %7731 = vdwg.mxu0
      %v7732 = vmul.f32 %v7729, 0.25
      %v7733 = vlaneseq
      %v7734 = vshrl.u32 %v7733, 7
      %v7735 = vsub.s32 3, %v7734
      %v7736 = vrot.slane %v7289, %v7735
      %v7737 = vlaneseq
      %v7738 = vshrl.u32 %v7737, 7
      %v7739 = vsub.s32 3, %v7738
      %v7740 = vrot.slane %v7291, %v7739
      %v7741 = vmul.f32 %v7103, %v7736
      %v7742 = vmul.f32 %v7105, %v7740
      %v7744 = vsel %vm1863, %v7742, 0
      %7746 = vmatprep.subr.mxu0 0.0
      %7747 = vmatpush1.msra.mxu0 %v3749
      %7748 = vmatprep.subr.mxu0 0.0
      %7749 = vmatpush1.msra.mxu0 %v3750
      %7750 = vmatprep.subr.mxu0 0.0
      %7751 = vmatpush1.msra.mxu0 %v3751
      %7752 = vmatprep.subr.mxu0 0.0
      %7753 = vmatpush1.msra.mxu0 %v3752
      %7754 = vmatprep.subr.mxu0 0.0
      %7755 = vmatpush1.msra.mxu0 %v3753
      %7756 = vmatprep.subr.mxu0 0.0
      %7757 = vmatpush1.msra.mxu0 %v3754
      %7758 = vmatprep.subr.mxu0 0.0
      %7759 = vmatpush1.msra.mxu0 %v3755
      %7760 = vmatprep.subr.mxu0 0.0
      %7761 = vmatpush1.msra.mxu0 %v3756
      %7762 = vmatprep.subr.mxu0 0.0
      %7763 = vmatpush1.msra.mxu0 %v3757
      %7764 = vmatprep.subr.mxu0 0.0
      %7765 = vmatpush1.msra.mxu0 %v3758
      %7766 = vmatprep.subr.mxu0 0.0
      %7767 = vmatpush1.msra.mxu0 %v3759
      %7768 = vmatprep.subr.mxu0 0.0
      %7769 = vmatpush1.msra.mxu0 %v3760
      %7770 = vmatprep.subr.mxu0 0.0
      %7771 = vmatpush1.msra.mxu0 %v3761
      %7772 = vmatprep.subr.mxu0 0.0
      %7773 = vmatpush1.msra.mxu0 %v3762
      %7774 = vmatprep.subr.mxu0 0.0
      %7775 = vmatpush1.msra.mxu0 %v3763
      %7776 = vmatprep.subr.mxu0 0.0
      %7777 = vmatpush1.msra.mxu0 %v3764
      %7778 = vmatprep.subr.mxu0 0.0
      %7779 = vmatpush1.msra.mxu0 %v3765
      %7780 = vmatprep.subr.mxu0 0.0
      %7781 = vmatpush1.msra.mxu0 %v3766
      %7782 = vmatprep.subr.mxu0 0.0
      %7783 = vmatpush1.msra.mxu0 %v3767
      %7784 = vmatprep.subr.mxu0 0.0
      %7785 = vmatpush1.msra.mxu0 %v3768
      %7786 = vmatprep.subr.mxu0 0.0
      %7787 = vmatpush1.msra.mxu0 %v3769
      %7788 = vmatprep.subr.mxu0 0.0
      %7789 = vmatpush1.msra.mxu0 %v3770
      %7790 = vmatprep.subr.mxu0 0.0
      %7791 = vmatpush1.msra.mxu0 %v3771
      %7792 = vmatprep.subr.mxu0 0.0
      %7793 = vmatpush1.msra.mxu0 %v3772
      %7794 = vmatprep.subr.mxu0 0.0
      %7795 = vmatpush1.msra.mxu0 0.0
      %7796 = vmatprep.subr.mxu0 0.0
      %7797 = vmatpush1.msra.mxu0 0.0
      %7798 = vmatprep.subr.mxu0 0.0
      %7799 = vmatpush1.msra.mxu0 0.0
      %7800 = vmatprep.subr.mxu0 0.0
      %7801 = vmatpush1.msra.mxu0 0.0
      %7802 = vmatprep.subr.mxu0 0.0
      %7803 = vmatpush1.msra.mxu0 0.0
      %7804 = vmatprep.subr.mxu0 0.0
      %7805 = vmatpush1.msra.mxu0 0.0
      %7806 = vmatprep.subr.mxu0 0.0
      %7807 = vmatpush1.msra.mxu0 0.0
      %7808 = vmatprep.subr.mxu0 0.0
      %7809 = vmatpush1.msra.mxu0 0.0
      %7810 = vmatprep.mubr.f32.mxu0 %v7744
      %7811 = vmatmul.mubr.f32.gmra.mrb[0].mxu0 %v7741
      %v7812 = vpop.f32.mrb[0].mxu0
      %v7813 = vadd.f32 0.0, %v7812
      %v7814 = vpop.f32.mrb[0].mxu0
      %7815 = vdwg.mxu0
      %v7816 = vmul.f32 %v7813, 0.25
      %v7817 = vlaneseq
      %v7818 = vshrl.u32 %v7817, 7
      %v7819 = vsub.s32 4, %v7818
      %v7820 = vrot.slane %v7289, %v7819
      %v7821 = vlaneseq
      %v7822 = vshrl.u32 %v7821, 7
      %v7823 = vsub.s32 4, %v7822
      %v7824 = vrot.slane %v7291, %v7823
      %v7825 = vmul.f32 %v7103, %v7820
      %v7826 = vmul.f32 %v7105, %v7824
      %v7828 = vsel %vm1863, %v7826, 0
      %7830 = vmatprep.subr.mxu0 0.0
      %7831 = vmatpush1.msra.mxu0 %v3749
      %7832 = vmatprep.subr.mxu0 0.0
      %7833 = vmatpush1.msra.mxu0 %v3750
      %7834 = vmatprep.subr.mxu0 0.0
      %7835 = vmatpush1.msra.mxu0 %v3751
      %7836 = vmatprep.subr.mxu0 0.0
      %7837 = vmatpush1.msra.mxu0 %v3752
      %7838 = vmatprep.subr.mxu0 0.0
      %7839 = vmatpush1.msra.mxu0 %v3753
      %7840 = vmatprep.subr.mxu0 0.0
      %7841 = vmatpush1.msra.mxu0 %v3754
      %7842 = vmatprep.subr.mxu0 0.0
      %7843 = vmatpush1.msra.mxu0 %v3755
      %7844 = vmatprep.subr.mxu0 0.0
      %7845 = vmatpush1.msra.mxu0 %v3756
      %7846 = vmatprep.subr.mxu0 0.0
      %7847 = vmatpush1.msra.mxu0 %v3757
      %7848 = vmatprep.subr.mxu0 0.0
      %7849 = vmatpush1.msra.mxu0 %v3758
      %7850 = vmatprep.subr.mxu0 0.0
      %7851 = vmatpush1.msra.mxu0 %v3759
      %7852 = vmatprep.subr.mxu0 0.0
      %7853 = vmatpush1.msra.mxu0 %v3760
      %7854 = vmatprep.subr.mxu0 0.0
      %7855 = vmatpush1.msra.mxu0 %v3761
      %7856 = vmatprep.subr.mxu0 0.0
      %7857 = vmatpush1.msra.mxu0 %v3762
      %7858 = vmatprep.subr.mxu0 0.0
      %7859 = vmatpush1.msra.mxu0 %v3763
      %7860 = vmatprep.subr.mxu0 0.0
      %7861 = vmatpush1.msra.mxu0 %v3764
      %7862 = vmatprep.subr.mxu0 0.0
      %7863 = vmatpush1.msra.mxu0 %v3765
      %7864 = vmatprep.subr.mxu0 0.0
      %7865 = vmatpush1.msra.mxu0 %v3766
      %7866 = vmatprep.subr.mxu0 0.0
      %7867 = vmatpush1.msra.mxu0 %v3767
      %7868 = vmatprep.subr.mxu0 0.0
      %7869 = vmatpush1.msra.mxu0 %v3768
      %7870 = vmatprep.subr.mxu0 0.0
      %7871 = vmatpush1.msra.mxu0 %v3769
      %7872 = vmatprep.subr.mxu0 0.0
      %7873 = vmatpush1.msra.mxu0 %v3770
      %7874 = vmatprep.subr.mxu0 0.0
      %7875 = vmatpush1.msra.mxu0 %v3771
      %7876 = vmatprep.subr.mxu0 0.0
      %7877 = vmatpush1.msra.mxu0 %v3772
      %7878 = vmatprep.subr.mxu0 0.0
      %7879 = vmatpush1.msra.mxu0 0.0
      %7880 = vmatprep.subr.mxu0 0.0
      %7881 = vmatpush1.msra.mxu0 0.0
      %7882 = vmatprep.subr.mxu0 0.0
      %7883 = vmatpush1.msra.mxu0 0.0
      %7884 = vmatprep.subr.mxu0 0.0
      %7885 = vmatpush1.msra.mxu0 0.0
      %7886 = vmatprep.subr.mxu0 0.0
      %7887 = vmatpush1.msra.mxu0 0.0
      %7888 = vmatprep.subr.mxu0 0.0
      %7889 = vmatpush1.msra.mxu0 0.0
      %7890 = vmatprep.subr.mxu0 0.0
      %7891 = vmatpush1.msra.mxu0 0.0
      %7892 = vmatprep.subr.mxu0 0.0
      %7893 = vmatpush1.msra.mxu0 0.0
      %7894 = vmatprep.mubr.f32.mxu0 %v7828
      %7895 = vmatmul.mubr.f32.gmra.mrb[0].mxu0 %v7825
      %v7896 = vpop.f32.mrb[0].mxu0
      %v7897 = vadd.f32 0.0, %v7896
      %v7898 = vpop.f32.mrb[0].mxu0
      %7899 = vdwg.mxu0
      %v7900 = vmul.f32 %v7897, 0.25
      %v7901 = vmax.f32 %v7564, %v7648
      %v7902 = vmax.f32 %v7901, %v7732
      %v7903 = vmax.f32 %v7902, %v7816
      %v7904 = vmax.f32 %v7903, %v7900
      %v7905 = vsub.f32 %v7564, %v7904
      %v7906 = vmul.f32 %v7905, 1.442695
      %v7907 = vpow.pop %v7906
      %v7908 = vsub.f32 %v7648, %v7904
      %v7909 = vmul.f32 %v7908, 1.442695
      %v7910 = vpow.pop %v7909
      %v7911 = vsub.f32 %v7732, %v7904
      %v7912 = vmul.f32 %v7911, 1.442695
      %v7913 = vpow.pop %v7912
      %v7914 = vsub.f32 %v7816, %v7904
      %v7915 = vmul.f32 %v7914, 1.442695
      %v7916 = vpow.pop %v7915
      %v7917 = vsub.f32 %v7900, %v7904
      %v7918 = vmul.f32 %v7917, 1.442695
      %v7919 = vpow.pop %v7918
      %v7920 = vadd.f32 %v7907, %v7910
      %v7921 = vadd.f32 %v7920, %v7913
      %v7922 = vadd.f32 %v7921, %v7916
      %v7923 = vadd.f32 %v7922, %v7919
      %v7924 = vrcp.pop %v7923
      %v7925 = vmul.f32 %v7907, %v7924
      %v7927 = vsel %vm4833, %v7925, 0
      %7929 = vmatprep.subr.mxu0 %v3774
      %7930 = vmatpush1.msra.mxu0 %v3773
      %7931 = vmatprep.subr.mxu0 %v4842
      %7932 = vmatpush1.msra.mxu0 %v4839
      %7933 = vmatprep.subr.mxu0 0.0
      %7934 = vmatpush1.msra.mxu0 0.0
      %7935 = vmatprep.subr.mxu0 0.0
      %7936 = vmatpush1.msra.mxu0 0.0
      %7937 = vmatprep.subr.mxu0 0.0
      %7938 = vmatpush1.msra.mxu0 0.0
      %7939 = vmatprep.subr.mxu0 0.0
      %7940 = vmatpush1.msra.mxu0 0.0
      %7941 = vmatprep.subr.mxu0 0.0
      %7942 = vmatpush1.msra.mxu0 0.0
      %7943 = vmatprep.subr.mxu0 0.0
      %7944 = vmatpush1.msra.mxu0 0.0
      %7945 = vmatprep.subr.mxu0 0.0
      %7946 = vmatpush1.msra.mxu0 0.0
      %7947 = vmatprep.subr.mxu0 0.0
      %7948 = vmatpush1.msra.mxu0 0.0
      %7949 = vmatprep.subr.mxu0 0.0
      %7950 = vmatpush1.msra.mxu0 0.0
      %7951 = vmatprep.subr.mxu0 0.0
      %7952 = vmatpush1.msra.mxu0 0.0
      %7953 = vmatprep.subr.mxu0 0.0
      %7954 = vmatpush1.msra.mxu0 0.0
      %7955 = vmatprep.subr.mxu0 0.0
      %7956 = vmatpush1.msra.mxu0 0.0
      %7957 = vmatprep.subr.mxu0 0.0
      %7958 = vmatpush1.msra.mxu0 0.0
      %7959 = vmatprep.subr.mxu0 0.0
      %7960 = vmatpush1.msra.mxu0 0.0
      %7961 = vmatprep.subr.mxu0 0.0
      %7962 = vmatpush1.msra.mxu0 0.0
      %7963 = vmatprep.subr.mxu0 0.0
      %7964 = vmatpush1.msra.mxu0 0.0
      %7965 = vmatprep.subr.mxu0 0.0
      %7966 = vmatpush1.msra.mxu0 0.0
      %7967 = vmatprep.subr.mxu0 0.0
      %7968 = vmatpush1.msra.mxu0 0.0
      %7969 = vmatprep.subr.mxu0 0.0
      %7970 = vmatpush1.msra.mxu0 0.0
      %7971 = vmatprep.subr.mxu0 0.0
      %7972 = vmatpush1.msra.mxu0 0.0
      %7973 = vmatprep.subr.mxu0 0.0
      %7974 = vmatpush1.msra.mxu0 0.0
      %7975 = vmatprep.subr.mxu0 0.0
      %7976 = vmatpush1.msra.mxu0 0.0
      %7977 = vmatprep.subr.mxu0 0.0
      %7978 = vmatpush1.msra.mxu0 0.0
      %7979 = vmatprep.subr.mxu0 0.0
      %7980 = vmatpush1.msra.mxu0 0.0
      %7981 = vmatprep.subr.mxu0 0.0
      %7982 = vmatpush1.msra.mxu0 0.0
      %7983 = vmatprep.subr.mxu0 0.0
      %7984 = vmatpush1.msra.mxu0 0.0
      %7985 = vmatprep.subr.mxu0 0.0
      %7986 = vmatpush1.msra.mxu0 0.0
      %7987 = vmatprep.subr.mxu0 0.0
      %7988 = vmatpush1.msra.mxu0 0.0
      %7989 = vmatprep.subr.mxu0 0.0
      %7990 = vmatpush1.msra.mxu0 0.0
      %7991 = vmatprep.subr.mxu0 0.0
      %7992 = vmatpush1.msra.mxu0 0.0
      %7993 = vmatprep.mubr.f32.mxu0 0.0
      %7994 = vmatmul.mubr.f32.gmra.mrb[0].mxu0 %v7927
      %v7995 = vpop.f32.mrb[0].mxu0
      %v7996 = vadd.f32 0.0, %v7995
      %v7997 = vpop.f32.mrb[0].mxu0
      %v7998 = vadd.f32 0.0, %v7997
      %7999 = vdwg.mxu0
      %v8000 = vlaneseq
      %v8001 = vshrl.u32 %v8000, 7
      %v8002 = vsub.s32 0, %v8001
      %v8003 = vrot.slane %v7475, %v8002
      %v8004 = vlaneseq
      %v8005 = vshrl.u32 %v8004, 7
      %v8006 = vsub.s32 0, %v8005
      %v8007 = vrot.slane %v7477, %v8006
      %v8008 = vmul.f32 %v7996, %v8003
      %v8009 = vmul.f32 %v7998, %v8007
      %v8010 = vadd.f32 %v8008, 0.0
      %v8011 = vadd.f32 %v8009, 0.0
      %v8012 = vmul.f32 %v7910, %v7924
      %v8014 = vsel %vm4833, %v8012, 0
      %8016 = vmatprep.subr.mxu0 %v3774
      %8017 = vmatpush1.msra.mxu0 %v3773
      %8018 = vmatprep.subr.mxu0 %v4842
      %8019 = vmatpush1.msra.mxu0 %v4839
      %8020 = vmatprep.subr.mxu0 0.0
      %8021 = vmatpush1.msra.mxu0 0.0
      %8022 = vmatprep.subr.mxu0 0.0
      %8023 = vmatpush1.msra.mxu0 0.0
      %8024 = vmatprep.subr.mxu0 0.0
      %8025 = vmatpush1.msra.mxu0 0.0
      %8026 = vmatprep.subr.mxu0 0.0
      %8027 = vmatpush1.msra.mxu0 0.0
      %8028 = vmatprep.subr.mxu0 0.0
      %8029 = vmatpush1.msra.mxu0 0.0
      %8030 = vmatprep.subr.mxu0 0.0
      %8031 = vmatpush1.msra.mxu0 0.0
      %8032 = vmatprep.subr.mxu0 0.0
      %8033 = vmatpush1.msra.mxu0 0.0
      %8034 = vmatprep.subr.mxu0 0.0
      %8035 = vmatpush1.msra.mxu0 0.0
      %8036 = vmatprep.subr.mxu0 0.0
      %8037 = vmatpush1.msra.mxu0 0.0
      %8038 = vmatprep.subr.mxu0 0.0
      %8039 = vmatpush1.msra.mxu0 0.0
      %8040 = vmatprep.subr.mxu0 0.0
      %8041 = vmatpush1.msra.mxu0 0.0
      %8042 = vmatprep.subr.mxu0 0.0
      %8043 = vmatpush1.msra.mxu0 0.0
      %8044 = vmatprep.subr.mxu0 0.0
      %8045 = vmatpush1.msra.mxu0 0.0
      %8046 = vmatprep.subr.mxu0 0.0
      %8047 = vmatpush1.msra.mxu0 0.0
      %8048 = vmatprep.subr.mxu0 0.0
      %8049 = vmatpush1.msra.mxu0 0.0
      %8050 = vmatprep.subr.mxu0 0.0
      %8051 = vmatpush1.msra.mxu0 0.0
      %8052 = vmatprep.subr.mxu0 0.0
      %8053 = vmatpush1.msra.mxu0 0.0
      %8054 = vmatprep.subr.mxu0 0.0
      %8055 = vmatpush1.msra.mxu0 0.0
      %8056 = vmatprep.subr.mxu0 0.0
      %8057 = vmatpush1.msra.mxu0 0.0
      %8058 = vmatprep.subr.mxu0 0.0
      %8059 = vmatpush1.msra.mxu0 0.0
      %8060 = vmatprep.subr.mxu0 0.0
      %8061 = vmatpush1.msra.mxu0 0.0
      %8062 = vmatprep.subr.mxu0 0.0
      %8063 = vmatpush1.msra.mxu0 0.0
      %8064 = vmatprep.subr.mxu0 0.0
      %8065 = vmatpush1.msra.mxu0 0.0
      %8066 = vmatprep.subr.mxu0 0.0
      %8067 = vmatpush1.msra.mxu0 0.0
      %8068 = vmatprep.subr.mxu0 0.0
      %8069 = vmatpush1.msra.mxu0 0.0
      %8070 = vmatprep.subr.mxu0 0.0
      %8071 = vmatpush1.msra.mxu0 0.0
      %8072 = vmatprep.subr.mxu0 0.0
      %8073 = vmatpush1.msra.mxu0 0.0
      %8074 = vmatprep.subr.mxu0 0.0
      %8075 = vmatpush1.msra.mxu0 0.0
      %8076 = vmatprep.subr.mxu0 0.0
      %8077 = vmatpush1.msra.mxu0 0.0
      %8078 = vmatprep.subr.mxu0 0.0
      %8079 = vmatpush1.msra.mxu0 0.0
      %8080 = vmatprep.mubr.f32.mxu0 0.0
      %8081 = vmatmul.mubr.f32.gmra.mrb[0].mxu0 %v8014
      %v8082 = vpop.f32.mrb[0].mxu0
      %v8083 = vadd.f32 0.0, %v8082
      %v8084 = vpop.f32.mrb[0].mxu0
      %v8085 = vadd.f32 0.0, %v8084
      %8086 = vdwg.mxu0
      %v8087 = vlaneseq
      %v8088 = vshrl.u32 %v8087, 7
      %v8089 = vsub.s32 1, %v8088
      %v8090 = vrot.slane %v7475, %v8089
      %v8091 = vlaneseq
      %v8092 = vshrl.u32 %v8091, 7
      %v8093 = vsub.s32 1, %v8092
      %v8094 = vrot.slane %v7477, %v8093
      %v8095 = vmul.f32 %v8083, %v8090
      %v8096 = vmul.f32 %v8085, %v8094
      %v8097 = vadd.f32 %v8010, %v8095
      %v8098 = vadd.f32 %v8011, %v8096
      %v8099 = vmul.f32 %v7913, %v7924
      %v8101 = vsel %vm4833, %v8099, 0
      %8103 = vmatprep.subr.mxu0 %v3774
      %8104 = vmatpush1.msra.mxu0 %v3773
      %8105 = vmatprep.subr.mxu0 %v4842
      %8106 = vmatpush1.msra.mxu0 %v4839
      %8107 = vmatprep.subr.mxu0 0.0
      %8108 = vmatpush1.msra.mxu0 0.0
      %8109 = vmatprep.subr.mxu0 0.0
      %8110 = vmatpush1.msra.mxu0 0.0
      %8111 = vmatprep.subr.mxu0 0.0
      %8112 = vmatpush1.msra.mxu0 0.0
      %8113 = vmatprep.subr.mxu0 0.0
      %8114 = vmatpush1.msra.mxu0 0.0
      %8115 = vmatprep.subr.mxu0 0.0
      %8116 = vmatpush1.msra.mxu0 0.0
      %8117 = vmatprep.subr.mxu0 0.0
      %8118 = vmatpush1.msra.mxu0 0.0
      %8119 = vmatprep.subr.mxu0 0.0
      %8120 = vmatpush1.msra.mxu0 0.0
      %8121 = vmatprep.subr.mxu0 0.0
      %8122 = vmatpush1.msra.mxu0 0.0
      %8123 = vmatprep.subr.mxu0 0.0
      %8124 = vmatpush1.msra.mxu0 0.0
      %8125 = vmatprep.subr.mxu0 0.0
      %8126 = vmatpush1.msra.mxu0 0.0
      %8127 = vmatprep.subr.mxu0 0.0
      %8128 = vmatpush1.msra.mxu0 0.0
      %8129 = vmatprep.subr.mxu0 0.0
      %8130 = vmatpush1.msra.mxu0 0.0
      %8131 = vmatprep.subr.mxu0 0.0
      %8132 = vmatpush1.msra.mxu0 0.0
      %8133 = vmatprep.subr.mxu0 0.0
      %8134 = vmatpush1.msra.mxu0 0.0
      %8135 = vmatprep.subr.mxu0 0.0
      %8136 = vmatpush1.msra.mxu0 0.0
      %8137 = vmatprep.subr.mxu0 0.0
      %8138 = vmatpush1.msra.mxu0 0.0
      %8139 = vmatprep.subr.mxu0 0.0
      %8140 = vmatpush1.msra.mxu0 0.0
      %8141 = vmatprep.subr.mxu0 0.0
      %8142 = vmatpush1.msra.mxu0 0.0
      %8143 = vmatprep.subr.mxu0 0.0
      %8144 = vmatpush1.msra.mxu0 0.0
      %8145 = vmatprep.subr.mxu0 0.0
      %8146 = vmatpush1.msra.mxu0 0.0
      %8147 = vmatprep.subr.mxu0 0.0
      %8148 = vmatpush1.msra.mxu0 0.0
      %8149 = vmatprep.subr.mxu0 0.0
      %8150 = vmatpush1.msra.mxu0 0.0
      %8151 = vmatprep.subr.mxu0 0.0
      %8152 = vmatpush1.msra.mxu0 0.0
      %8153 = vmatprep.subr.mxu0 0.0
      %8154 = vmatpush1.msra.mxu0 0.0
      %8155 = vmatprep.subr.mxu0 0.0
      %8156 = vmatpush1.msra.mxu0 0.0
      %8157 = vmatprep.subr.mxu0 0.0
      %8158 = vmatpush1.msra.mxu0 0.0
      %8159 = vmatprep.subr.mxu0 0.0
      %8160 = vmatpush1.msra.mxu0 0.0
      %8161 = vmatprep.subr.mxu0 0.0
      %8162 = vmatpush1.msra.mxu0 0.0
      %8163 = vmatprep.subr.mxu0 0.0
      %8164 = vmatpush1.msra.mxu0 0.0
      %8165 = vmatprep.subr.mxu0 0.0
      %8166 = vmatpush1.msra.mxu0 0.0
      %8167 = vmatprep.mubr.f32.mxu0 0.0
      %8168 = vmatmul.mubr.f32.gmra.mrb[0].mxu0 %v8101
      %v8169 = vpop.f32.mrb[0].mxu0
      %v8170 = vadd.f32 0.0, %v8169
      %v8171 = vpop.f32.mrb[0].mxu0
      %v8172 = vadd.f32 0.0, %v8171
      %8173 = vdwg.mxu0
      %v8174 = vlaneseq
      %v8175 = vshrl.u32 %v8174, 7
      %v8176 = vsub.s32 2, %v8175
      %v8177 = vrot.slane %v7475, %v8176
      %v8178 = vlaneseq
      %v8179 = vshrl.u32 %v8178, 7
      %v8180 = vsub.s32 2, %v8179
      %v8181 = vrot.slane %v7477, %v8180
      %v8182 = vmul.f32 %v8170, %v8177
      %v8183 = vmul.f32 %v8172, %v8181
      %v8184 = vadd.f32 %v8097, %v8182
      %v8185 = vadd.f32 %v8098, %v8183
      %v8186 = vmul.f32 %v7916, %v7924
      %v8188 = vsel %vm4833, %v8186, 0
      %8190 = vmatprep.subr.mxu0 %v3774
      %8191 = vmatpush1.msra.mxu0 %v3773
      %8192 = vmatprep.subr.mxu0 %v4842
      %8193 = vmatpush1.msra.mxu0 %v4839
      %8194 = vmatprep.subr.mxu0 0.0
      %8195 = vmatpush1.msra.mxu0 0.0
      %8196 = vmatprep.subr.mxu0 0.0
      %8197 = vmatpush1.msra.mxu0 0.0
      %8198 = vmatprep.subr.mxu0 0.0
      %8199 = vmatpush1.msra.mxu0 0.0
      %8200 = vmatprep.subr.mxu0 0.0
      %8201 = vmatpush1.msra.mxu0 0.0
      %8202 = vmatprep.subr.mxu0 0.0
      %8203 = vmatpush1.msra.mxu0 0.0
      %8204 = vmatprep.subr.mxu0 0.0
      %8205 = vmatpush1.msra.mxu0 0.0
      %8206 = vmatprep.subr.mxu0 0.0
      %8207 = vmatpush1.msra.mxu0 0.0
      %8208 = vmatprep.subr.mxu0 0.0
      %8209 = vmatpush1.msra.mxu0 0.0
      %8210 = vmatprep.subr.mxu0 0.0
      %8211 = vmatpush1.msra.mxu0 0.0
      %8212 = vmatprep.subr.mxu0 0.0
      %8213 = vmatpush1.msra.mxu0 0.0
      %8214 = vmatprep.subr.mxu0 0.0
      %8215 = vmatpush1.msra.mxu0 0.0
      %8216 = vmatprep.subr.mxu0 0.0
      %8217 = vmatpush1.msra.mxu0 0.0
      %8218 = vmatprep.subr.mxu0 0.0
      %8219 = vmatpush1.msra.mxu0 0.0
      %8220 = vmatprep.subr.mxu0 0.0
      %8221 = vmatpush1.msra.mxu0 0.0
      %8222 = vmatprep.subr.mxu0 0.0
      %8223 = vmatpush1.msra.mxu0 0.0
      %8224 = vmatprep.subr.mxu0 0.0
      %8225 = vmatpush1.msra.mxu0 0.0
      %8226 = vmatprep.subr.mxu0 0.0
      %8227 = vmatpush1.msra.mxu0 0.0
      %8228 = vmatprep.subr.mxu0 0.0
      %8229 = vmatpush1.msra.mxu0 0.0
      %8230 = vmatprep.subr.mxu0 0.0
      %8231 = vmatpush1.msra.mxu0 0.0
      %8232 = vmatprep.subr.mxu0 0.0
      %8233 = vmatpush1.msra.mxu0 0.0
      %8234 = vmatprep.subr.mxu0 0.0
      %8235 = vmatpush1.msra.mxu0 0.0
      %8236 = vmatprep.subr.mxu0 0.0
      %8237 = vmatpush1.msra.mxu0 0.0
      %8238 = vmatprep.subr.mxu0 0.0
      %8239 = vmatpush1.msra.mxu0 0.0
      %8240 = vmatprep.subr.mxu0 0.0
      %8241 = vmatpush1.msra.mxu0 0.0
      %8242 = vmatprep.subr.mxu0 0.0
      %8243 = vmatpush1.msra.mxu0 0.0
      %8244 = vmatprep.subr.mxu0 0.0
      %8245 = vmatpush1.msra.mxu0 0.0
      %8246 = vmatprep.subr.mxu0 0.0
      %8247 = vmatpush1.msra.mxu0 0.0
      %8248 = vmatprep.subr.mxu0 0.0
      %8249 = vmatpush1.msra.mxu0 0.0
      %8250 = vmatprep.subr.mxu0 0.0
      %8251 = vmatpush1.msra.mxu0 0.0
      %8252 = vmatprep.subr.mxu0 0.0
      %8253 = vmatpush1.msra.mxu0 0.0
      %8254 = vmatprep.mubr.f32.mxu0 0.0
      %8255 = vmatmul.mubr.f32.gmra.mrb[0].mxu0 %v8188
      %v8256 = vpop.f32.mrb[0].mxu0
      %v8257 = vadd.f32 0.0, %v8256
      %v8258 = vpop.f32.mrb[0].mxu0
      %v8259 = vadd.f32 0.0, %v8258
      %8260 = vdwg.mxu0
      %v8261 = vlaneseq
      %v8262 = vshrl.u32 %v8261, 7
      %v8263 = vsub.s32 3, %v8262
      %v8264 = vrot.slane %v7475, %v8263
      %v8265 = vlaneseq
      %v8266 = vshrl.u32 %v8265, 7
      %v8267 = vsub.s32 3, %v8266
      %v8268 = vrot.slane %v7477, %v8267
      %v8269 = vmul.f32 %v8257, %v8264
      %v8270 = vmul.f32 %v8259, %v8268
      %v8271 = vadd.f32 %v8184, %v8269
      %v8272 = vadd.f32 %v8185, %v8270
      %v8273 = vmul.f32 %v7919, %v7924
      %v8275 = vsel %vm4833, %v8273, 0
      %8277 = vmatprep.subr.mxu0 %v3774
      %8278 = vmatpush1.msra.mxu0 %v3773
      %8279 = vmatprep.subr.mxu0 %v4842
      %8280 = vmatpush1.msra.mxu0 %v4839
      %8281 = vmatprep.subr.mxu0 0.0
      %8282 = vmatpush1.msra.mxu0 0.0
      %8283 = vmatprep.subr.mxu0 0.0
      %8284 = vmatpush1.msra.mxu0 0.0
      %8285 = vmatprep.subr.mxu0 0.0
      %8286 = vmatpush1.msra.mxu0 0.0
      %8287 = vmatprep.subr.mxu0 0.0
      %8288 = vmatpush1.msra.mxu0 0.0
      %8289 = vmatprep.subr.mxu0 0.0
      %8290 = vmatpush1.msra.mxu0 0.0
      %8291 = vmatprep.subr.mxu0 0.0
      %8292 = vmatpush1.msra.mxu0 0.0
      %8293 = vmatprep.subr.mxu0 0.0
      %8294 = vmatpush1.msra.mxu0 0.0
      %8295 = vmatprep.subr.mxu0 0.0
      %8296 = vmatpush1.msra.mxu0 0.0
      %8297 = vmatprep.subr.mxu0 0.0
      %8298 = vmatpush1.msra.mxu0 0.0
      %8299 = vmatprep.subr.mxu0 0.0
      %8300 = vmatpush1.msra.mxu0 0.0
      %8301 = vmatprep.subr.mxu0 0.0
      %8302 = vmatpush1.msra.mxu0 0.0
      %8303 = vmatprep.subr.mxu0 0.0
      %8304 = vmatpush1.msra.mxu0 0.0
      %8305 = vmatprep.subr.mxu0 0.0
      %8306 = vmatpush1.msra.mxu0 0.0
      %8307 = vmatprep.subr.mxu0 0.0
      %8308 = vmatpush1.msra.mxu0 0.0
      %8309 = vmatprep.subr.mxu0 0.0
      %8310 = vmatpush1.msra.mxu0 0.0
      %8311 = vmatprep.subr.mxu0 0.0
      %8312 = vmatpush1.msra.mxu0 0.0
      %8313 = vmatprep.subr.mxu0 0.0
      %8314 = vmatpush1.msra.mxu0 0.0
      %8315 = vmatprep.subr.mxu0 0.0
      %8316 = vmatpush1.msra.mxu0 0.0
      %8317 = vmatprep.subr.mxu0 0.0
      %8318 = vmatpush1.msra.mxu0 0.0
      %8319 = vmatprep.subr.mxu0 0.0
      %8320 = vmatpush1.msra.mxu0 0.0
      %8321 = vmatprep.subr.mxu0 0.0
      %8322 = vmatpush1.msra.mxu0 0.0
      %8323 = vmatprep.subr.mxu0 0.0
      %8324 = vmatpush1.msra.mxu0 0.0
      %8325 = vmatprep.subr.mxu0 0.0
      %8326 = vmatpush1.msra.mxu0 0.0
      %8327 = vmatprep.subr.mxu0 0.0
      %8328 = vmatpush1.msra.mxu0 0.0
      %8329 = vmatprep.subr.mxu0 0.0
      %8330 = vmatpush1.msra.mxu0 0.0
      %8331 = vmatprep.subr.mxu0 0.0
      %8332 = vmatpush1.msra.mxu0 0.0
      %8333 = vmatprep.subr.mxu0 0.0
      %8334 = vmatpush1.msra.mxu0 0.0
      %8335 = vmatprep.subr.mxu0 0.0
      %8336 = vmatpush1.msra.mxu0 0.0
      %8337 = vmatprep.subr.mxu0 0.0
      %8338 = vmatpush1.msra.mxu0 0.0
      %8339 = vmatprep.subr.mxu0 0.0
      %8340 = vmatpush1.msra.mxu0 0.0
      %8341 = vmatprep.mubr.f32.mxu0 0.0
      %8342 = vmatmul.mubr.f32.gmra.mrb[0].mxu0 %v8275
      %v8343 = vpop.f32.mrb[0].mxu0
      %v8344 = vadd.f32 0.0, %v8343
      %v8345 = vpop.f32.mrb[0].mxu0
      %v8346 = vadd.f32 0.0, %v8345
      %8347 = vdwg.mxu0
      %v8348 = vlaneseq
      %v8349 = vshrl.u32 %v8348, 7
      %v8350 = vsub.s32 4, %v8349
      %v8351 = vrot.slane %v7475, %v8350
      %v8352 = vlaneseq
      %v8353 = vshrl.u32 %v8352, 7
      %v8354 = vsub.s32 4, %v8353
      %v8355 = vrot.slane %v7477, %v8354
      %v8356 = vmul.f32 %v8344, %v8351
      %v8357 = vmul.f32 %v8346, %v8355
      %v8358 = vadd.f32 %v8271, %v8356
      %v8359 = vadd.f32 %v8272, %v8357
      %v8360 = vpack.c.bf16 %v8358, %v8358
      %v8361 = vpack.c.bf16 %v8359, %v8359
      %s8362 = scalar_lea.vmem %s43, 192
      %v8363 = vld [vmem:[%s8362] sm:$0xff]
      %v8364 = vld [vmem:[%s8362 + $0x8] sm:$0xff]
      %v8365 = vld [vmem:[%s8362 + $0x10] sm:$0xff]
      %v8366 = vld [vmem:[%s8362 + $0x18] sm:$0xff]
      %v8367 = vld [vmem:[%s8362 + $0x20] sm:$0xff]
      %v8368 = vld [vmem:[%s8362 + $0x28] sm:$0xff]
      %v8369 = vld [vmem:[%s8362 + $0x30] sm:$0xff]
      %v8370 = vld [vmem:[%s8362 + $0x38] sm:$0xff]
      %v8371 = vld [vmem:[%s8362 + $0x40] sm:$0xff]
      %v8372 = vld [vmem:[%s8362 + $0x48] sm:$0xff]
      %v8373 = vld [vmem:[%s8362 + $0x50] sm:$0xff]
      %v8374 = vld [vmem:[%s8362 + $0x58] sm:$0xff]
      %v8375 = vld [vmem:[%s8362 + $0x60] sm:$0xff]
      %v8376 = vld [vmem:[%s8362 + $0x68] sm:$0xff]
      %v8377 = vld [vmem:[%s8362 + $0x70] sm:$0xff]
      %v8378 = vld [vmem:[%s8362 + $0x78] sm:$0xff]
      %v8379 = vld [vmem:[%s8362 + $0x80] sm:$0xff]
      %v8380 = vld [vmem:[%s8362 + $0x88] sm:$0xff]
      %v8381 = vld [vmem:[%s8362 + $0x90] sm:$0xff]
      %v8382 = vld [vmem:[%s8362 + $0x98] sm:$0xff]
      %v8383 = vld [vmem:[%s8362 + $0xa0] sm:$0xff]
      %v8384 = vld [vmem:[%s8362 + $0xa8] sm:$0xff]
      %v8385 = vld [vmem:[%s8362 + $0xb0] sm:$0xff]
      %v8386 = vld [vmem:[%s8362 + $0xb8] sm:$0xff]
      %s8387 = scalar_lea.vmem %s45, 2
      %v8388 = vld [vmem:[%s8387] sm:$0x3]
      %v8390 = vlaneseq
      %v8391 = vshrl.u32 %v8390, 7
      %v8392 = vsub.s32 0, %v8391
      %v8393 = vrot.slane %v8388, %v8392
      %v8394 = vlaneseq
      %v8395 = vshrl.u32 %v8394, 7
      %v8396 = vsub.s32 1, %v8395
      %v8397 = vrot.slane %v8388, %v8396
      %v8424 = vunpack.c.l.b16 %v8363
      %v8425 = vunpack.c.h.b16 %v8363
      %v8426 = vunpack.c.l.b16 %v8364
      %v8427 = vunpack.c.h.b16 %v8364
      %v8428 = vunpack.c.l.b16 %v8365
      %v8429 = vunpack.c.h.b16 %v8365
      %v8430 = vunpack.c.l.b16 %v8366
      %v8431 = vunpack.c.h.b16 %v8366
      %v8432 = vunpack.c.l.b16 %v8367
      %v8433 = vunpack.c.h.b16 %v8367
      %v8434 = vunpack.c.l.b16 %v8368
      %v8435 = vunpack.c.h.b16 %v8368
      %v8436 = vunpack.c.l.b16 %v8369
      %v8437 = vunpack.c.h.b16 %v8369
      %v8438 = vunpack.c.l.b16 %v8370
      %v8439 = vunpack.c.h.b16 %v8370
      %v8440 = vunpack.c.l.b16 %v8371
      %v8441 = vunpack.c.h.b16 %v8371
      %v8442 = vunpack.c.l.b16 %v8372
      %v8443 = vunpack.c.h.b16 %v8372
      %v8444 = vunpack.c.l.b16 %v8373
      %v8445 = vunpack.c.h.b16 %v8373
      %v8446 = vunpack.c.l.b16 %v8374
      %v8447 = vunpack.c.h.b16 %v8374
      %v8448 = vunpack.c.l.b16 %v8375
      %v8449 = vunpack.c.h.b16 %v8375
      %v8450 = vunpack.c.l.b16 %v8376
      %v8451 = vunpack.c.h.b16 %v8376
      %v8452 = vunpack.c.l.b16 %v8377
      %v8453 = vunpack.c.h.b16 %v8377
      %v8454 = vunpack.c.l.b16 %v8378
      %v8455 = vunpack.c.h.b16 %v8378
      %v8456 = vunpack.c.l.b16 %v8379
      %v8457 = vunpack.c.h.b16 %v8379
      %v8458 = vunpack.c.l.b16 %v8380
      %v8459 = vunpack.c.h.b16 %v8380
      %v8460 = vunpack.c.l.b16 %v8381
      %v8461 = vunpack.c.h.b16 %v8381
      %v8462 = vunpack.c.l.b16 %v8382
      %v8463 = vunpack.c.h.b16 %v8382
      %v8464 = vunpack.c.l.b16 %v8383
      %v8465 = vunpack.c.h.b16 %v8383
      %v8466 = vunpack.c.l.b16 %v8384
      %v8467 = vunpack.c.h.b16 %v8384
      %v8468 = vunpack.c.l.b16 %v8385
      %v8469 = vunpack.c.h.b16 %v8385
      %v8470 = vunpack.c.l.b16 %v8386
      %v8471 = vunpack.c.h.b16 %v8386
      %v8472 = vpack.c.b16 %v8426, %v8424
      %v8473 = vpack.c.b16 %v8427, %v8425
      %v8474 = vpack.c.b16 %v8430, %v8428
      %v8475 = vpack.c.b16 %v8431, %v8429
      %v8476 = vpack.c.b16 %v8434, %v8432
      %v8477 = vpack.c.b16 %v8435, %v8433
      %v8478 = vpack.c.b16 %v8438, %v8436
      %v8479 = vpack.c.b16 %v8439, %v8437
      %v8480 = vpack.c.b16 %v8442, %v8440
      %v8481 = vpack.c.b16 %v8443, %v8441
      %v8482 = vpack.c.b16 %v8446, %v8444
      %v8483 = vpack.c.b16 %v8447, %v8445
      %v8484 = vpack.c.b16 %v8450, %v8448
      %v8485 = vpack.c.b16 %v8451, %v8449
      %v8486 = vpack.c.b16 %v8454, %v8452
      %v8487 = vpack.c.b16 %v8455, %v8453
      %v8488 = vpack.c.b16 %v8458, %v8456
      %v8489 = vpack.c.b16 %v8459, %v8457
      %v8490 = vpack.c.b16 %v8462, %v8460
      %v8491 = vpack.c.b16 %v8463, %v8461
      %v8492 = vpack.c.b16 %v8466, %v8464
      %v8493 = vpack.c.b16 %v8467, %v8465
      %v8494 = vpack.c.b16 %v8470, %v8468
      %v8495 = vpack.c.b16 %v8471, %v8469
      %v8521 = vsel %vm1863, %v8361, 0
      %8523 = vmatprep.subr.bf16.mxu0 %v8473
      %8524 = vmatpush1.bf16.msra.mxu0 %v8472
      %8525 = vmatprep.subr.bf16.mxu0 %v8475
      %8526 = vmatpush1.bf16.msra.mxu0 %v8474
      %8527 = vmatprep.subr.bf16.mxu0 %v8477
      %8528 = vmatpush1.bf16.msra.mxu0 %v8476
      %8529 = vmatprep.subr.bf16.mxu0 %v8479
      %8530 = vmatpush1.bf16.msra.mxu0 %v8478
      %8531 = vmatprep.subr.bf16.mxu0 %v8481
      %8532 = vmatpush1.bf16.msra.mxu0 %v8480
      %8533 = vmatprep.subr.bf16.mxu0 %v8483
      %8534 = vmatpush1.bf16.msra.mxu0 %v8482
      %8535 = vmatprep.subr.bf16.mxu0 %v8485
      %8536 = vmatpush1.bf16.msra.mxu0 %v8484
      %8537 = vmatprep.subr.bf16.mxu0 %v8487
      %8538 = vmatpush1.bf16.msra.mxu0 %v8486
      %8539 = vmatprep.subr.bf16.mxu0 %v8489
      %8540 = vmatpush1.bf16.msra.mxu0 %v8488
      %8541 = vmatprep.subr.bf16.mxu0 %v8491
      %8542 = vmatpush1.bf16.msra.mxu0 %v8490
      %8543 = vmatprep.subr.bf16.mxu0 %v8493
      %8544 = vmatpush1.bf16.msra.mxu0 %v8492
      %8545 = vmatprep.subr.bf16.mxu0 %v8495
      %8546 = vmatpush1.bf16.msra.mxu0 %v8494
      %8547 = vmatprep.subr.bf16.mxu0 0
      %8548 = vmatpush1.bf16.msra.mxu0 0
      %8549 = vmatprep.subr.bf16.mxu0 0
      %8550 = vmatpush1.bf16.msra.mxu0 0
      %8551 = vmatprep.subr.bf16.mxu0 0
      %8552 = vmatpush1.bf16.msra.mxu0 0
      %8553 = vmatprep.subr.bf16.mxu0 0
      %8554 = vmatpush1.bf16.msra.mxu0 0
      %8555 = vmatprep.mubr.bf16.mxu0 %v8521
      %8556 = vmatmul.mubr.bf16.gmra.mrb[0].mxu0 %v8360
      %v8557 = vpop.f32.mrb[0].mxu0
      %v8558 = vadd.f32 %v8393, %v8557
      %v8559 = vpop.f32.mrb[0].mxu0
      %v8560 = vadd.f32 %v8397, %v8559
      %v8561 = vpop.f32.mrb[0].mxu0
      %v8562 = vpop.f32.mrb[0].mxu0
      %8563 = vdwg.mxu0
      %v8564 = vadd.f32 %v6866, %v8558
      %v8565 = vadd.f32 %v6867, %v8560
      %s8566 = scalar_lea.vmem %s47, 2
      %v8567 = vld [vmem:[%s8566] sm:$0x3]
      %s8568 = scalar_lea.vmem %s49, 2
      %v8569 = vld [vmem:[%s8568] sm:$0x3]
      %v8570 = vsel %vm3779, %v8564, 0.0
      %v8571 = vsel %vm3781, %v8565, 0.0
      %v8572 = vadd.f32 %v8570, %v8571
      %8573 = vadd.xlane.f32.xlu0 %v8572
      %v8574 = vpop.xlane.xlu0 %8573
      %v8575 = vmul.f32 %v8574, %v3786
      %v8576 = vsub.f32 %v8564, %v8575
      %v8577 = vsub.f32 %v8565, %v8575
      %v8578 = vmul.f32 %v8576, %v8576
      %v8579 = vmul.f32 %v8577, %v8577
      %v8580 = vsel %vm3779, %v8578, 0.0
      %v8581 = vsel %vm3781, %v8579, 0.0
      %v8582 = vadd.f32 %v8580, %v8581
      %8583 = vadd.xlane.f32.xlu0 %v8582
      %v8584 = vpop.xlane.xlu0 %8583
      %v8585 = vmul.f32 %v8584, %v3786
      %v8586 = vadd.f32 %v8585, 1e-05
      %v8587 = vrsqrt.pop %v8586
      %v8588 = vmul.f32 %v8576, %v8587
      %v8589 = vmul.f32 %v8577, %v8587
      %v8591 = vlaneseq
      %v8592 = vshrl.u32 %v8591, 7
      %v8593 = vsub.s32 0, %v8592
      %v8594 = vrot.slane %v8567, %v8593
      %v8595 = vlaneseq
      %v8596 = vshrl.u32 %v8595, 7
      %v8597 = vsub.s32 1, %v8596
      %v8598 = vrot.slane %v8567, %v8597
      %v8601 = vmul.f32 %v8588, %v8594
      %v8602 = vmul.f32 %v8589, %v8598
      %v8604 = vlaneseq
      %v8605 = vshrl.u32 %v8604, 7
      %v8606 = vsub.s32 0, %v8605
      %v8607 = vrot.slane %v8569, %v8606
      %v8608 = vlaneseq
      %v8609 = vshrl.u32 %v8608, 7
      %v8610 = vsub.s32 1, %v8609
      %v8611 = vrot.slane %v8569, %v8610
      %v8614 = vadd.f32 %v8601, %v8607
      %v8615 = vadd.f32 %v8602, %v8611
      %v8616 = vpack.c.bf16 %v8614, %v8614
      %v8617 = vpack.c.bf16 %v8615, %v8615
      %s8618 = scalar_lea.vmem %s51, 576
      %v8619 = vld [vmem:[%s8618] sm:$0xff]
      %v8620 = vld [vmem:[%s8618 + $0x8] sm:$0xff]
      %v8621 = vld [vmem:[%s8618 + $0x10] sm:$0xff]
      %v8622 = vld [vmem:[%s8618 + $0x18] sm:$0xff]
      %v8623 = vld [vmem:[%s8618 + $0x20] sm:$0xff]
      %v8624 = vld [vmem:[%s8618 + $0x28] sm:$0xff]
      %v8625 = vld [vmem:[%s8618 + $0x30] sm:$0xff]
      %v8626 = vld [vmem:[%s8618 + $0x38] sm:$0xff]
      %v8627 = vld [vmem:[%s8618 + $0x40] sm:$0xff]
      %v8628 = vld [vmem:[%s8618 + $0x48] sm:$0xff]
      %v8629 = vld [vmem:[%s8618 + $0x50] sm:$0xff]
      %v8630 = vld [vmem:[%s8618 + $0x58] sm:$0xff]
      %v8631 = vld [vmem:[%s8618 + $0x60] sm:$0xff]
      %v8632 = vld [vmem:[%s8618 + $0x68] sm:$0xff]
      %v8633 = vld [vmem:[%s8618 + $0x70] sm:$0xff]
      %v8634 = vld [vmem:[%s8618 + $0x78] sm:$0xff]
      %v8635 = vld [vmem:[%s8618 + $0x80] sm:$0xff]
      %v8636 = vld [vmem:[%s8618 + $0x88] sm:$0xff]
      %v8637 = vld [vmem:[%s8618 + $0x90] sm:$0xff]
      %v8638 = vld [vmem:[%s8618 + $0x98] sm:$0xff]
      %v8639 = vld [vmem:[%s8618 + $0xa0] sm:$0xff]
      %v8640 = vld [vmem:[%s8618 + $0xa8] sm:$0xff]
      %v8641 = vld [vmem:[%s8618 + $0xb0] sm:$0xff]
      %v8642 = vld [vmem:[%s8618 + $0xb8] sm:$0xff]
      %v8643 = vld [vmem:[%s8618 + $0xc0] sm:$0xff]
      %v8644 = vld [vmem:[%s8618 + $0xc8] sm:$0xff]
      %v8645 = vld [vmem:[%s8618 + $0xd0] sm:$0xff]
      %v8646 = vld [vmem:[%s8618 + $0xd8] sm:$0xff]
      %v8647 = vld [vmem:[%s8618 + $0xe0] sm:$0xff]
      %v8648 = vld [vmem:[%s8618 + $0xe8] sm:$0xff]
      %v8649 = vld [vmem:[%s8618 + $0xf0] sm:$0xff]
      %v8650 = vld [vmem:[%s8618 + $0xf8] sm:$0xff]
      %v8651 = vld [vmem:[%s8618 + $0x100] sm:$0xff]
      %v8652 = vld [vmem:[%s8618 + $0x108] sm:$0xff]
      %v8653 = vld [vmem:[%s8618 + $0x110] sm:$0xff]
      %v8654 = vld [vmem:[%s8618 + $0x118] sm:$0xff]
      %v8655 = vld [vmem:[%s8618 + $0x120] sm:$0xff]
      %v8656 = vld [vmem:[%s8618 + $0x128] sm:$0xff]
      %v8657 = vld [vmem:[%s8618 + $0x130] sm:$0xff]
      %v8658 = vld [vmem:[%s8618 + $0x138] sm:$0xff]
      %v8659 = vld [vmem:[%s8618 + $0x140] sm:$0xff]
      %v8660 = vld [vmem:[%s8618 + $0x148] sm:$0xff]
      %v8661 = vld [vmem:[%s8618 + $0x150] sm:$0xff]
      %v8662 = vld [vmem:[%s8618 + $0x158] sm:$0xff]
      %v8663 = vld [vmem:[%s8618 + $0x160] sm:$0xff]
      %v8664 = vld [vmem:[%s8618 + $0x168] sm:$0xff]
      %v8665 = vld [vmem:[%s8618 + $0x170] sm:$0xff]
      %v8666 = vld [vmem:[%s8618 + $0x178] sm:$0xff]
      %v8667 = vld [vmem:[%s8618 + $0x180] sm:$0xff]
      %v8668 = vld [vmem:[%s8618 + $0x188] sm:$0xff]
      %v8669 = vld [vmem:[%s8618 + $0x190] sm:$0xff]
      %v8670 = vld [vmem:[%s8618 + $0x198] sm:$0xff]
      %v8671 = vld [vmem:[%s8618 + $0x1a0] sm:$0xff]
      %v8672 = vld [vmem:[%s8618 + $0x1a8] sm:$0xff]
      %v8673 = vld [vmem:[%s8618 + $0x1b0] sm:$0xff]
      %v8674 = vld [vmem:[%s8618 + $0x1b8] sm:$0xff]
      %v8675 = vld [vmem:[%s8618 + $0x1c0] sm:$0xff]
      %v8676 = vld [vmem:[%s8618 + $0x1c8] sm:$0xff]
      %v8677 = vld [vmem:[%s8618 + $0x1d0] sm:$0xff]
      %v8678 = vld [vmem:[%s8618 + $0x1d8] sm:$0xff]
      %v8679 = vld [vmem:[%s8618 + $0x1e0] sm:$0xff]
      %v8680 = vld [vmem:[%s8618 + $0x1e8] sm:$0xff]
      %v8681 = vld [vmem:[%s8618 + $0x1f0] sm:$0xff]
      %v8682 = vld [vmem:[%s8618 + $0x1f8] sm:$0xff]
      %v8683 = vld [vmem:[%s8618 + $0x200] sm:$0xff]
      %v8684 = vld [vmem:[%s8618 + $0x208] sm:$0xff]
      %v8685 = vld [vmem:[%s8618 + $0x210] sm:$0xff]
      %v8686 = vld [vmem:[%s8618 + $0x218] sm:$0xff]
      %v8687 = vld [vmem:[%s8618 + $0x220] sm:$0xff]
      %v8688 = vld [vmem:[%s8618 + $0x228] sm:$0xff]
      %v8689 = vld [vmem:[%s8618 + $0x230] sm:$0xff]
      %v8690 = vld [vmem:[%s8618 + $0x238] sm:$0xff]
      %s8691 = scalar_lea.vmem %s53, 6
      %v8692 = vld [vmem:[%s8691] sm:$0x3f]
      %v8694 = vlaneseq
      %v8695 = vshrl.u32 %v8694, 7
      %v8696 = vsub.s32 0, %v8695
      %v8697 = vrot.slane %v8692, %v8696
      %v8698 = vlaneseq
      %v8699 = vshrl.u32 %v8698, 7
      %v8700 = vsub.s32 1, %v8699
      %v8701 = vrot.slane %v8692, %v8700
      %v8702 = vlaneseq
      %v8703 = vshrl.u32 %v8702, 7
      %v8704 = vsub.s32 2, %v8703
      %v8705 = vrot.slane %v8692, %v8704
      %v8706 = vlaneseq
      %v8707 = vshrl.u32 %v8706, 7
      %v8708 = vsub.s32 3, %v8707
      %v8709 = vrot.slane %v8692, %v8708
      %v8710 = vlaneseq
      %v8711 = vshrl.u32 %v8710, 7
      %v8712 = vsub.s32 4, %v8711
      %v8713 = vrot.slane %v8692, %v8712
      %v8714 = vlaneseq
      %v8715 = vshrl.u32 %v8714, 7
      %v8716 = vsub.s32 5, %v8715
      %v8717 = vrot.slane %v8692, %v8716
      %v8796 = vunpack.c.l.b16 %v8619
      %v8797 = vunpack.c.h.b16 %v8619
      %v8798 = vunpack.c.l.b16 %v8620
      %v8799 = vunpack.c.h.b16 %v8620
      %v8800 = vunpack.c.l.b16 %v8621
      %v8801 = vunpack.c.h.b16 %v8621
      %v8802 = vunpack.c.l.b16 %v8622
      %v8803 = vunpack.c.h.b16 %v8622
      %v8804 = vunpack.c.l.b16 %v8623
      %v8805 = vunpack.c.h.b16 %v8623
      %v8806 = vunpack.c.l.b16 %v8624
      %v8807 = vunpack.c.h.b16 %v8624
      %v8808 = vunpack.c.l.b16 %v8625
      %v8809 = vunpack.c.h.b16 %v8625
      %v8810 = vunpack.c.l.b16 %v8626
      %v8811 = vunpack.c.h.b16 %v8626
      %v8812 = vunpack.c.l.b16 %v8627
      %v8813 = vunpack.c.h.b16 %v8627
      %v8814 = vunpack.c.l.b16 %v8628
      %v8815 = vunpack.c.h.b16 %v8628
      %v8816 = vunpack.c.l.b16 %v8629
      %v8817 = vunpack.c.h.b16 %v8629
      %v8818 = vunpack.c.l.b16 %v8630
      %v8819 = vunpack.c.h.b16 %v8630
      %v8820 = vunpack.c.l.b16 %v8631
      %v8821 = vunpack.c.h.b16 %v8631
      %v8822 = vunpack.c.l.b16 %v8632
      %v8823 = vunpack.c.h.b16 %v8632
      %v8824 = vunpack.c.l.b16 %v8633
      %v8825 = vunpack.c.h.b16 %v8633
      %v8826 = vunpack.c.l.b16 %v8634
      %v8827 = vunpack.c.h.b16 %v8634
      %v8828 = vunpack.c.l.b16 %v8635
      %v8829 = vunpack.c.h.b16 %v8635
      %v8830 = vunpack.c.l.b16 %v8636
      %v8831 = vunpack.c.h.b16 %v8636
      %v8832 = vunpack.c.l.b16 %v8637
      %v8833 = vunpack.c.h.b16 %v8637
      %v8834 = vunpack.c.l.b16 %v8638
      %v8835 = vunpack.c.h.b16 %v8638
      %v8836 = vunpack.c.l.b16 %v8639
      %v8837 = vunpack.c.h.b16 %v8639
      %v8838 = vunpack.c.l.b16 %v8640
      %v8839 = vunpack.c.h.b16 %v8640
      %v8840 = vunpack.c.l.b16 %v8641
      %v8841 = vunpack.c.h.b16 %v8641
      %v8842 = vunpack.c.l.b16 %v8642
      %v8843 = vunpack.c.h.b16 %v8642
      %v8844 = vunpack.c.l.b16 %v8643
      %v8845 = vunpack.c.h.b16 %v8643
      %v8846 = vunpack.c.l.b16 %v8644
      %v8847 = vunpack.c.h.b16 %v8644
      %v8848 = vunpack.c.l.b16 %v8645
      %v8849 = vunpack.c.h.b16 %v8645
      %v8850 = vunpack.c.l.b16 %v8646
      %v8851 = vunpack.c.h.b16 %v8646
      %v8852 = vunpack.c.l.b16 %v8647
      %v8853 = vunpack.c.h.b16 %v8647
      %v8854 = vunpack.c.l.b16 %v8648
      %v8855 = vunpack.c.h.b16 %v8648
      %v8856 = vunpack.c.l.b16 %v8649
      %v8857 = vunpack.c.h.b16 %v8649
      %v8858 = vunpack.c.l.b16 %v8650
      %v8859 = vunpack.c.h.b16 %v8650
      %v8860 = vunpack.c.l.b16 %v8651
      %v8861 = vunpack.c.h.b16 %v8651
      %v8862 = vunpack.c.l.b16 %v8652
      %v8863 = vunpack.c.h.b16 %v8652
      %v8864 = vunpack.c.l.b16 %v8653
      %v8865 = vunpack.c.h.b16 %v8653
      %v8866 = vunpack.c.l.b16 %v8654
      %v8867 = vunpack.c.h.b16 %v8654
      %v8868 = vunpack.c.l.b16 %v8655
      %v8869 = vunpack.c.h.b16 %v8655
      %v8870 = vunpack.c.l.b16 %v8656
      %v8871 = vunpack.c.h.b16 %v8656
      %v8872 = vunpack.c.l.b16 %v8657
      %v8873 = vunpack.c.h.b16 %v8657
      %v8874 = vunpack.c.l.b16 %v8658
      %v8875 = vunpack.c.h.b16 %v8658
      %v8876 = vunpack.c.l.b16 %v8659
      %v8877 = vunpack.c.h.b16 %v8659
      %v8878 = vunpack.c.l.b16 %v8660
      %v8879 = vunpack.c.h.b16 %v8660
      %v8880 = vunpack.c.l.b16 %v8661
      %v8881 = vunpack.c.h.b16 %v8661
      %v8882 = vunpack.c.l.b16 %v8662
      %v8883 = vunpack.c.h.b16 %v8662
      %v8884 = vunpack.c.l.b16 %v8663
      %v8885 = vunpack.c.h.b16 %v8663
      %v8886 = vunpack.c.l.b16 %v8664
      %v8887 = vunpack.c.h.b16 %v8664
      %v8888 = vunpack.c.l.b16 %v8665
      %v8889 = vunpack.c.h.b16 %v8665
      %v8890 = vunpack.c.l.b16 %v8666
      %v8891 = vunpack.c.h.b16 %v8666
      %v8892 = vunpack.c.l.b16 %v8667
      %v8893 = vunpack.c.h.b16 %v8667
      %v8894 = vunpack.c.l.b16 %v8668
      %v8895 = vunpack.c.h.b16 %v8668
      %v8896 = vunpack.c.l.b16 %v8669
      %v8897 = vunpack.c.h.b16 %v8669
      %v8898 = vunpack.c.l.b16 %v8670
      %v8899 = vunpack.c.h.b16 %v8670
      %v8900 = vunpack.c.l.b16 %v8671
      %v8901 = vunpack.c.h.b16 %v8671
      %v8902 = vunpack.c.l.b16 %v8672
      %v8903 = vunpack.c.h.b16 %v8672
      %v8904 = vunpack.c.l.b16 %v8673
      %v8905 = vunpack.c.h.b16 %v8673
      %v8906 = vunpack.c.l.b16 %v8674
      %v8907 = vunpack.c.h.b16 %v8674
      %v8908 = vunpack.c.l.b16 %v8675
      %v8909 = vunpack.c.h.b16 %v8675
      %v8910 = vunpack.c.l.b16 %v8676
      %v8911 = vunpack.c.h.b16 %v8676
      %v8912 = vunpack.c.l.b16 %v8677
      %v8913 = vunpack.c.h.b16 %v8677
      %v8914 = vunpack.c.l.b16 %v8678
      %v8915 = vunpack.c.h.b16 %v8678
      %v8916 = vunpack.c.l.b16 %v8679
      %v8917 = vunpack.c.h.b16 %v8679
      %v8918 = vunpack.c.l.b16 %v8680
      %v8919 = vunpack.c.h.b16 %v8680
      %v8920 = vunpack.c.l.b16 %v8681
      %v8921 = vunpack.c.h.b16 %v8681
      %v8922 = vunpack.c.l.b16 %v8682
      %v8923 = vunpack.c.h.b16 %v8682
      %v8924 = vunpack.c.l.b16 %v8683
      %v8925 = vunpack.c.h.b16 %v8683
      %v8926 = vunpack.c.l.b16 %v8684
      %v8927 = vunpack.c.h.b16 %v8684
      %v8928 = vunpack.c.l.b16 %v8685
      %v8929 = vunpack.c.h.b16 %v8685
      %v8930 = vunpack.c.l.b16 %v8686
      %v8931 = vunpack.c.h.b16 %v8686
      %v8932 = vunpack.c.l.b16 %v8687
      %v8933 = vunpack.c.h.b16 %v8687
      %v8934 = vunpack.c.l.b16 %v8688
      %v8935 = vunpack.c.h.b16 %v8688
      %v8936 = vunpack.c.l.b16 %v8689
      %v8937 = vunpack.c.h.b16 %v8689
      %v8938 = vunpack.c.l.b16 %v8690
      %v8939 = vunpack.c.h.b16 %v8690
      %v8940 = vpack.c.b16 %v8802, %v8796
      %v8941 = vpack.c.b16 %v8803, %v8797
      %v8942 = vpack.c.b16 %v8804, %v8798
      %v8943 = vpack.c.b16 %v8805, %v8799
      %v8944 = vpack.c.b16 %v8806, %v8800
      %v8945 = vpack.c.b16 %v8807, %v8801
      %v8946 = vpack.c.b16 %v8814, %v8808
      %v8947 = vpack.c.b16 %v8815, %v8809
      %v8948 = vpack.c.b16 %v8816, %v8810
      %v8949 = vpack.c.b16 %v8817, %v8811
      %v8950 = vpack.c.b16 %v8818, %v8812
      %v8951 = vpack.c.b16 %v8819, %v8813
      %v8952 = vpack.c.b16 %v8826, %v8820
      %v8953 = vpack.c.b16 %v8827, %v8821
      %v8954 = vpack.c.b16 %v8828, %v8822
      %v8955 = vpack.c.b16 %v8829, %v8823
      %v8956 = vpack.c.b16 %v8830, %v8824
      %v8957 = vpack.c.b16 %v8831, %v8825
      %v8958 = vpack.c.b16 %v8838, %v8832
      %v8959 = vpack.c.b16 %v8839, %v8833
      %v8960 = vpack.c.b16 %v8840, %v8834
      %v8961 = vpack.c.b16 %v8841, %v8835
      %v8962 = vpack.c.b16 %v8842, %v8836
      %v8963 = vpack.c.b16 %v8843, %v8837
      %v8964 = vpack.c.b16 %v8850, %v8844
      %v8965 = vpack.c.b16 %v8851, %v8845
      %v8966 = vpack.c.b16 %v8852, %v8846
      %v8967 = vpack.c.b16 %v8853, %v8847
      %v8968 = vpack.c.b16 %v8854, %v8848
      %v8969 = vpack.c.b16 %v8855, %v8849
      %v8970 = vpack.c.b16 %v8862, %v8856
      %v8971 = vpack.c.b16 %v8863, %v8857
      %v8972 = vpack.c.b16 %v8864, %v8858
      %v8973 = vpack.c.b16 %v8865, %v8859
      %v8974 = vpack.c.b16 %v8866, %v8860
      %v8975 = vpack.c.b16 %v8867, %v8861
      %v8976 = vpack.c.b16 %v8874, %v8868
      %v8977 = vpack.c.b16 %v8875, %v8869
      %v8978 = vpack.c.b16 %v8876, %v8870
      %v8979 = vpack.c.b16 %v8877, %v8871
      %v8980 = vpack.c.b16 %v8878, %v8872
      %v8981 = vpack.c.b16 %v8879, %v8873
      %v8982 = vpack.c.b16 %v8886, %v8880
      %v8983 = vpack.c.b16 %v8887, %v8881
      %v8984 = vpack.c.b16 %v8888, %v8882
      %v8985 = vpack.c.b16 %v8889, %v8883
      %v8986 = vpack.c.b16 %v8890, %v8884
      %v8987 = vpack.c.b16 %v8891, %v8885
      %v8988 = vpack.c.b16 %v8898, %v8892
      %v8989 = vpack.c.b16 %v8899, %v8893
      %v8990 = vpack.c.b16 %v8900, %v8894
      %v8991 = vpack.c.b16 %v8901, %v8895
      %v8992 = vpack.c.b16 %v8902, %v8896
      %v8993 = vpack.c.b16 %v8903, %v8897
      %v8994 = vpack.c.b16 %v8910, %v8904
      %v8995 = vpack.c.b16 %v8911, %v8905
      %v8996 = vpack.c.b16 %v8912, %v8906
      %v8997 = vpack.c.b16 %v8913, %v8907
      %v8998 = vpack.c.b16 %v8914, %v8908
      %v8999 = vpack.c.b16 %v8915, %v8909
      %v9000 = vpack.c.b16 %v8922, %v8916
      %v9001 = vpack.c.b16 %v8923, %v8917
      %v9002 = vpack.c.b16 %v8924, %v8918
      %v9003 = vpack.c.b16 %v8925, %v8919
      %v9004 = vpack.c.b16 %v8926, %v8920
      %v9005 = vpack.c.b16 %v8927, %v8921
      %v9006 = vpack.c.b16 %v8934, %v8928
      %v9007 = vpack.c.b16 %v8935, %v8929
      %v9008 = vpack.c.b16 %v8936, %v8930
      %v9009 = vpack.c.b16 %v8937, %v8931
      %v9010 = vpack.c.b16 %v8938, %v8932
      %v9011 = vpack.c.b16 %v8939, %v8933
      %v9085 = vsel %vm1863, %v8617, 0
      %9087 = vmatprep.subr.bf16.mxu0 %v8941
      %9088 = vmatpush1.bf16.msra.mxu0 %v8940
      %9089 = vmatprep.subr.bf16.mxu0 %v8947
      %9090 = vmatpush1.bf16.msra.mxu0 %v8946
      %9091 = vmatprep.subr.bf16.mxu0 %v8953
      %9092 = vmatpush1.bf16.msra.mxu0 %v8952
      %9093 = vmatprep.subr.bf16.mxu0 %v8959
      %9094 = vmatpush1.bf16.msra.mxu0 %v8958
      %9095 = vmatprep.subr.bf16.mxu0 %v8965
      %9096 = vmatpush1.bf16.msra.mxu0 %v8964
      %9097 = vmatprep.subr.bf16.mxu0 %v8971
      %9098 = vmatpush1.bf16.msra.mxu0 %v8970
      %9099 = vmatprep.subr.bf16.mxu0 %v8977
      %9100 = vmatpush1.bf16.msra.mxu0 %v8976
      %9101 = vmatprep.subr.bf16.mxu0 %v8983
      %9102 = vmatpush1.bf16.msra.mxu0 %v8982
      %9103 = vmatprep.subr.bf16.mxu0 %v8989
      %9104 = vmatpush1.bf16.msra.mxu0 %v8988
      %9105 = vmatprep.subr.bf16.mxu0 %v8995
      %9106 = vmatpush1.bf16.msra.mxu0 %v8994
      %9107 = vmatprep.subr.bf16.mxu0 %v9001
      %9108 = vmatpush1.bf16.msra.mxu0 %v9000
      %9109 = vmatprep.subr.bf16.mxu0 %v9007
      %9110 = vmatpush1.bf16.msra.mxu0 %v9006
      %9111 = vmatprep.subr.bf16.mxu0 0
      %9112 = vmatpush1.bf16.msra.mxu0 0
      %9113 = vmatprep.subr.bf16.mxu0 0
      %9114 = vmatpush1.bf16.msra.mxu0 0
      %9115 = vmatprep.subr.bf16.mxu0 0
      %9116 = vmatpush1.bf16.msra.mxu0 0
      %9117 = vmatprep.subr.bf16.mxu0 0
      %9118 = vmatpush1.bf16.msra.mxu0 0
      %9119 = vmatprep.mubr.bf16.mxu0 %v9085
      %9120 = vmatmul.mubr.bf16.gmra.mrb[0].mxu0 %v8616
      %v9121 = vpop.f32.mrb[0].mxu0
      %v9122 = vadd.f32 %v8697, %v9121
      %v9123 = vpop.f32.mrb[0].mxu0
      %v9124 = vadd.f32 %v8701, %v9123
      %v9125 = vpop.f32.mrb[0].mxu0
      %v9126 = vpop.f32.mrb[0].mxu0
      %9127 = vdwg.mxu0
      %9128 = vmatprep.subr.bf16.mxu0 %v8943
      %9129 = vmatpush1.bf16.msra.mxu0 %v8942
      %9130 = vmatprep.subr.bf16.mxu0 %v8949
      %9131 = vmatpush1.bf16.msra.mxu0 %v8948
      %9132 = vmatprep.subr.bf16.mxu0 %v8955
      %9133 = vmatpush1.bf16.msra.mxu0 %v8954
      %9134 = vmatprep.subr.bf16.mxu0 %v8961
      %9135 = vmatpush1.bf16.msra.mxu0 %v8960
      %9136 = vmatprep.subr.bf16.mxu0 %v8967
      %9137 = vmatpush1.bf16.msra.mxu0 %v8966
      %9138 = vmatprep.subr.bf16.mxu0 %v8973
      %9139 = vmatpush1.bf16.msra.mxu0 %v8972
      %9140 = vmatprep.subr.bf16.mxu0 %v8979
      %9141 = vmatpush1.bf16.msra.mxu0 %v8978
      %9142 = vmatprep.subr.bf16.mxu0 %v8985
      %9143 = vmatpush1.bf16.msra.mxu0 %v8984
      %9144 = vmatprep.subr.bf16.mxu0 %v8991
      %9145 = vmatpush1.bf16.msra.mxu0 %v8990
      %9146 = vmatprep.subr.bf16.mxu0 %v8997
      %9147 = vmatpush1.bf16.msra.mxu0 %v8996
      %9148 = vmatprep.subr.bf16.mxu0 %v9003
      %9149 = vmatpush1.bf16.msra.mxu0 %v9002
      %9150 = vmatprep.subr.bf16.mxu0 %v9009
      %9151 = vmatpush1.bf16.msra.mxu0 %v9008
      %9152 = vmatprep.subr.bf16.mxu0 0
      %9153 = vmatpush1.bf16.msra.mxu0 0
      %9154 = vmatprep.subr.bf16.mxu0 0
      %9155 = vmatpush1.bf16.msra.mxu0 0
      %9156 = vmatprep.subr.bf16.mxu0 0
      %9157 = vmatpush1.bf16.msra.mxu0 0
      %9158 = vmatprep.subr.bf16.mxu0 0
      %9159 = vmatpush1.bf16.msra.mxu0 0
      %9160 = vmatprep.mubr.bf16.mxu0 %v9085
      %9161 = vmatmul.mubr.bf16.gmra.mrb[0].mxu0 %v8616
      %v9162 = vpop.f32.mrb[0].mxu0
      %v9163 = vadd.f32 %v8705, %v9162
      %v9164 = vpop.f32.mrb[0].mxu0
      %v9165 = vadd.f32 %v8709, %v9164
      %v9166 = vpop.f32.mrb[0].mxu0
      %v9167 = vpop.f32.mrb[0].mxu0
      %9168 = vdwg.mxu0
      %9169 = vmatprep.subr.bf16.mxu0 %v8945
      %9170 = vmatpush1.bf16.msra.mxu0 %v8944
      %9171 = vmatprep.subr.bf16.mxu0 %v8951
      %9172 = vmatpush1.bf16.msra.mxu0 %v8950
      %9173 = vmatprep.subr.bf16.mxu0 %v8957
      %9174 = vmatpush1.bf16.msra.mxu0 %v8956
      %9175 = vmatprep.subr.bf16.mxu0 %v8963
      %9176 = vmatpush1.bf16.msra.mxu0 %v8962
      %9177 = vmatprep.subr.bf16.mxu0 %v8969
      %9178 = vmatpush1.bf16.msra.mxu0 %v8968
      %9179 = vmatprep.subr.bf16.mxu0 %v8975
      %9180 = vmatpush1.bf16.msra.mxu0 %v8974
      %9181 = vmatprep.subr.bf16.mxu0 %v8981
      %9182 = vmatpush1.bf16.msra.mxu0 %v8980
      %9183 = vmatprep.subr.bf16.mxu0 %v8987
      %9184 = vmatpush1.bf16.msra.mxu0 %v8986
      %9185 = vmatprep.subr.bf16.mxu0 %v8993
      %9186 = vmatpush1.bf16.msra.mxu0 %v8992
      %9187 = vmatprep.subr.bf16.mxu0 %v8999
      %9188 = vmatpush1.bf16.msra.mxu0 %v8998
      %9189 = vmatprep.subr.bf16.mxu0 %v9005
      %9190 = vmatpush1.bf16.msra.mxu0 %v9004
      %9191 = vmatprep.subr.bf16.mxu0 %v9011
      %9192 = vmatpush1.bf16.msra.mxu0 %v9010
      %9193 = vmatprep.subr.bf16.mxu0 0
      %9194 = vmatpush1.bf16.msra.mxu0 0
      %9195 = vmatprep.subr.bf16.mxu0 0
      %9196 = vmatpush1.bf16.msra.mxu0 0
      %9197 = vmatprep.subr.bf16.mxu0 0
      %9198 = vmatpush1.bf16.msra.mxu0 0
      %9199 = vmatprep.subr.bf16.mxu0 0
      %9200 = vmatpush1.bf16.msra.mxu0 0
      %9201 = vmatprep.mubr.bf16.mxu0 %v9085
      %9202 = vmatmul.mubr.bf16.gmra.mrb[0].mxu0 %v8616
      %v9203 = vpop.f32.mrb[0].mxu0
      %v9204 = vadd.f32 %v8713, %v9203
      %v9205 = vpop.f32.mrb[0].mxu0
      %v9206 = vadd.f32 %v8717, %v9205
      %v9207 = vpop.f32.mrb[0].mxu0
      %v9208 = vpop.f32.mrb[0].mxu0
      %9209 = vdwg.mxu0
      %v9210 = vmul.f32 %v9122, 0.5
      %v9211 = vmul.f32 %v9124, 0.5
      %v9212 = vmul.f32 %v9163, 0.5
      %v9213 = vmul.f32 %v9165, 0.5
      %v9214 = vmul.f32 %v9204, 0.5
      %v9215 = vmul.f32 %v9206, 0.5
      %v9216 = vmul.f32 %v9122, 0.70710677
      %v9217 = vmul.f32 %v9124, 0.70710677
      %v9218 = vmul.f32 %v9163, 0.70710677
      %v9219 = vmul.f32 %v9165, 0.70710677
      %v9220 = vmul.f32 %v9204, 0.70710677
      %v9221 = vmul.f32 %v9206, 0.70710677
      %v9222 = verf.f32.pop %v9216
      %v9223 = verf.f32.pop %v9217
      %v9224 = verf.f32.pop %v9218
      %v9225 = verf.f32.pop %v9219
      %v9226 = verf.f32.pop %v9220
      %v9227 = verf.f32.pop %v9221
      %v9228 = vadd.f32 %v9222, 1.0
      %v9229 = vadd.f32 %v9223, 1.0
      %v9230 = vadd.f32 %v9224, 1.0
      %v9231 = vadd.f32 %v9225, 1.0
      %v9232 = vadd.f32 %v9226, 1.0
      %v9233 = vadd.f32 %v9227, 1.0
      %v9234 = vmul.f32 %v9210, %v9228
      %v9235 = vmul.f32 %v9211, %v9229
      %v9236 = vmul.f32 %v9212, %v9230
      %v9237 = vmul.f32 %v9213, %v9231
      %v9238 = vmul.f32 %v9214, %v9232
      %v9239 = vmul.f32 %v9215, %v9233
      %v9240 = vpack.c.bf16 %v9234, %v9234
      %v9241 = vpack.c.bf16 %v9235, %v9235
      %v9242 = vpack.c.bf16 %v9236, %v9236
      %v9243 = vpack.c.bf16 %v9237, %v9237
      %v9244 = vpack.c.bf16 %v9238, %v9238
      %v9245 = vpack.c.bf16 %v9239, %v9239
      %s9246 = scalar_lea.vmem %s55, 768
      %v9247 = vld [vmem:[%s9246] sm:$0xff]
      %v9248 = vld [vmem:[%s9246 + $0x8] sm:$0xff]
      %v9249 = vld [vmem:[%s9246 + $0x10] sm:$0xff]
      %v9250 = vld [vmem:[%s9246 + $0x18] sm:$0xff]
      %v9251 = vld [vmem:[%s9246 + $0x20] sm:$0xff]
      %v9252 = vld [vmem:[%s9246 + $0x28] sm:$0xff]
      %v9253 = vld [vmem:[%s9246 + $0x30] sm:$0xff]
      %v9254 = vld [vmem:[%s9246 + $0x38] sm:$0xff]
      %v9255 = vld [vmem:[%s9246 + $0x40] sm:$0xff]
      %v9256 = vld [vmem:[%s9246 + $0x48] sm:$0xff]
      %v9257 = vld [vmem:[%s9246 + $0x50] sm:$0xff]
      %v9258 = vld [vmem:[%s9246 + $0x58] sm:$0xff]
      %v9259 = vld [vmem:[%s9246 + $0x60] sm:$0xff]
      %v9260 = vld [vmem:[%s9246 + $0x68] sm:$0xff]
      %v9261 = vld [vmem:[%s9246 + $0x70] sm:$0xff]
      %v9262 = vld [vmem:[%s9246 + $0x78] sm:$0xff]
      %v9263 = vld [vmem:[%s9246 + $0x80] sm:$0xff]
      %v9264 = vld [vmem:[%s9246 + $0x88] sm:$0xff]
      %v9265 = vld [vmem:[%s9246 + $0x90] sm:$0xff]
      %v9266 = vld [vmem:[%s9246 + $0x98] sm:$0xff]
      %v9267 = vld [vmem:[%s9246 + $0xa0] sm:$0xff]
      %v9268 = vld [vmem:[%s9246 + $0xa8] sm:$0xff]
      %v9269 = vld [vmem:[%s9246 + $0xb0] sm:$0xff]
      %v9270 = vld [vmem:[%s9246 + $0xb8] sm:$0xff]
      %v9271 = vld [vmem:[%s9246 + $0xc0] sm:$0xff]
      %v9272 = vld [vmem:[%s9246 + $0xc8] sm:$0xff]
      %v9273 = vld [vmem:[%s9246 + $0xd0] sm:$0xff]
      %v9274 = vld [vmem:[%s9246 + $0xd8] sm:$0xff]
      %v9275 = vld [vmem:[%s9246 + $0xe0] sm:$0xff]
      %v9276 = vld [vmem:[%s9246 + $0xe8] sm:$0xff]
      %v9277 = vld [vmem:[%s9246 + $0xf0] sm:$0xff]
      %v9278 = vld [vmem:[%s9246 + $0xf8] sm:$0xff]
      %v9279 = vld [vmem:[%s9246 + $0x100] sm:$0xff]
      %v9280 = vld [vmem:[%s9246 + $0x108] sm:$0xff]
      %v9281 = vld [vmem:[%s9246 + $0x110] sm:$0xff]
      %v9282 = vld [vmem:[%s9246 + $0x118] sm:$0xff]
      %v9283 = vld [vmem:[%s9246 + $0x120] sm:$0xff]
      %v9284 = vld [vmem:[%s9246 + $0x128] sm:$0xff]
      %v9285 = vld [vmem:[%s9246 + $0x130] sm:$0xff]
      %v9286 = vld [vmem:[%s9246 + $0x138] sm:$0xff]
      %v9287 = vld [vmem:[%s9246 + $0x140] sm:$0xff]
      %v9288 = vld [vmem:[%s9246 + $0x148] sm:$0xff]
      %v9289 = vld [vmem:[%s9246 + $0x150] sm:$0xff]
      %v9290 = vld [vmem:[%s9246 + $0x158] sm:$0xff]
      %v9291 = vld [vmem:[%s9246 + $0x160] sm:$0xff]
      %v9292 = vld [vmem:[%s9246 + $0x168] sm:$0xff]
      %v9293 = vld [vmem:[%s9246 + $0x170] sm:$0xff]
      %v9294 = vld [vmem:[%s9246 + $0x178] sm:$0xff]
      %v9295 = vld [vmem:[%s9246 + $0x180] sm:$0xff]
      %v9296 = vld [vmem:[%s9246 + $0x188] sm:$0xff]
      %v9297 = vld [vmem:[%s9246 + $0x190] sm:$0xff]
      %v9298 = vld [vmem:[%s9246 + $0x198] sm:$0xff]
      %v9299 = vld [vmem:[%s9246 + $0x1a0] sm:$0xff]
      %v9300 = vld [vmem:[%s9246 + $0x1a8] sm:$0xff]
      %v9301 = vld [vmem:[%s9246 + $0x1b0] sm:$0xff]
      %v9302 = vld [vmem:[%s9246 + $0x1b8] sm:$0xff]
      %v9303 = vld [vmem:[%s9246 + $0x1c0] sm:$0xff]
      %v9304 = vld [vmem:[%s9246 + $0x1c8] sm:$0xff]
      %v9305 = vld [vmem:[%s9246 + $0x1d0] sm:$0xff]
      %v9306 = vld [vmem:[%s9246 + $0x1d8] sm:$0xff]
      %v9307 = vld [vmem:[%s9246 + $0x1e0] sm:$0xff]
      %v9308 = vld [vmem:[%s9246 + $0x1e8] sm:$0xff]
      %v9309 = vld [vmem:[%s9246 + $0x1f0] sm:$0xff]
      %v9310 = vld [vmem:[%s9246 + $0x1f8] sm:$0xff]
      %v9311 = vld [vmem:[%s9246 + $0x200] sm:$0xff]
      %v9312 = vld [vmem:[%s9246 + $0x208] sm:$0xff]
      %v9313 = vld [vmem:[%s9246 + $0x210] sm:$0xff]
      %v9314 = vld [vmem:[%s9246 + $0x218] sm:$0xff]
      %v9315 = vld [vmem:[%s9246 + $0x220] sm:$0xff]
      %v9316 = vld [vmem:[%s9246 + $0x228] sm:$0xff]
      %v9317 = vld [vmem:[%s9246 + $0x230] sm:$0xff]
      %v9318 = vld [vmem:[%s9246 + $0x238] sm:$0xff]
      %v9319 = vld [vmem:[%s9246 + $0x240] sm:$0xff]
      %v9320 = vld [vmem:[%s9246 + $0x248] sm:$0xff]
      %v9321 = vld [vmem:[%s9246 + $0x250] sm:$0xff]
      %v9322 = vld [vmem:[%s9246 + $0x258] sm:$0xff]
      %v9323 = vld [vmem:[%s9246 + $0x260] sm:$0xff]
      %v9324 = vld [vmem:[%s9246 + $0x268] sm:$0xff]
      %v9325 = vld [vmem:[%s9246 + $0x270] sm:$0xff]
      %v9326 = vld [vmem:[%s9246 + $0x278] sm:$0xff]
      %v9327 = vld [vmem:[%s9246 + $0x280] sm:$0xff]
      %v9328 = vld [vmem:[%s9246 + $0x288] sm:$0xff]
      %v9329 = vld [vmem:[%s9246 + $0x290] sm:$0xff]
      %v9330 = vld [vmem:[%s9246 + $0x298] sm:$0xff]
      %v9331 = vld [vmem:[%s9246 + $0x2a0] sm:$0xff]
      %v9332 = vld [vmem:[%s9246 + $0x2a8] sm:$0xff]
      %v9333 = vld [vmem:[%s9246 + $0x2b0] sm:$0xff]
      %v9334 = vld [vmem:[%s9246 + $0x2b8] sm:$0xff]
      %v9335 = vld [vmem:[%s9246 + $0x2c0] sm:$0xff]
      %v9336 = vld [vmem:[%s9246 + $0x2c8] sm:$0xff]
      %v9337 = vld [vmem:[%s9246 + $0x2d0] sm:$0xff]
      %v9338 = vld [vmem:[%s9246 + $0x2d8] sm:$0xff]
      %v9339 = vld [vmem:[%s9246 + $0x2e0] sm:$0xff]
      %v9340 = vld [vmem:[%s9246 + $0x2e8] sm:$0xff]
      %v9341 = vld [vmem:[%s9246 + $0x2f0] sm:$0xff]
      %v9342 = vld [vmem:[%s9246 + $0x2f8] sm:$0xff]
      %s9343 = scalar_lea.vmem %s57, 2
      %v9344 = vld [vmem:[%s9343] sm:$0x3]
      %v9346 = vlaneseq
      %v9347 = vshrl.u32 %v9346, 7
      %v9348 = vsub.s32 0, %v9347
      %v9349 = vrot.slane %v9344, %v9348
      %v9350 = vlaneseq
      %v9351 = vshrl.u32 %v9350, 7
      %v9352 = vsub.s32 1, %v9351
      %v9353 = vrot.slane %v9344, %v9352
      %v9452 = vunpack.c.l.b16 %v9247
      %v9453 = vunpack.c.h.b16 %v9247
      %v9454 = vunpack.c.l.b16 %v9248
      %v9455 = vunpack.c.h.b16 %v9248
      %v9456 = vunpack.c.l.b16 %v9249
      %v9457 = vunpack.c.h.b16 %v9249
      %v9458 = vunpack.c.l.b16 %v9250
      %v9459 = vunpack.c.h.b16 %v9250
      %v9460 = vunpack.c.l.b16 %v9251
      %v9461 = vunpack.c.h.b16 %v9251
      %v9462 = vunpack.c.l.b16 %v9252
      %v9463 = vunpack.c.h.b16 %v9252
      %v9464 = vunpack.c.l.b16 %v9253
      %v9465 = vunpack.c.h.b16 %v9253
      %v9466 = vunpack.c.l.b16 %v9254
      %v9467 = vunpack.c.h.b16 %v9254
      %v9468 = vunpack.c.l.b16 %v9255
      %v9469 = vunpack.c.h.b16 %v9255
      %v9470 = vunpack.c.l.b16 %v9256
      %v9471 = vunpack.c.h.b16 %v9256
      %v9472 = vunpack.c.l.b16 %v9257
      %v9473 = vunpack.c.h.b16 %v9257
      %v9474 = vunpack.c.l.b16 %v9258
      %v9475 = vunpack.c.h.b16 %v9258
      %v9476 = vunpack.c.l.b16 %v9259
      %v9477 = vunpack.c.h.b16 %v9259
      %v9478 = vunpack.c.l.b16 %v9260
      %v9479 = vunpack.c.h.b16 %v9260
      %v9480 = vunpack.c.l.b16 %v9261
      %v9481 = vunpack.c.h.b16 %v9261
      %v9482 = vunpack.c.l.b16 %v9262
      %v9483 = vunpack.c.h.b16 %v9262
      %v9484 = vunpack.c.l.b16 %v9263
      %v9485 = vunpack.c.h.b16 %v9263
      %v9486 = vunpack.c.l.b16 %v9264
      %v9487 = vunpack.c.h.b16 %v9264
      %v9488 = vunpack.c.l.b16 %v9265
      %v9489 = vunpack.c.h.b16 %v9265
      %v9490 = vunpack.c.l.b16 %v9266
      %v9491 = vunpack.c.h.b16 %v9266
      %v9492 = vunpack.c.l.b16 %v9267
      %v9493 = vunpack.c.h.b16 %v9267
      %v9494 = vunpack.c.l.b16 %v9268
      %v9495 = vunpack.c.h.b16 %v9268
      %v9496 = vunpack.c.l.b16 %v9269
      %v9497 = vunpack.c.h.b16 %v9269
      %v9498 = vunpack.c.l.b16 %v9270
      %v9499 = vunpack.c.h.b16 %v9270
      %v9500 = vunpack.c.l.b16 %v9271
      %v9501 = vunpack.c.h.b16 %v9271
      %v9502 = vunpack.c.l.b16 %v9272
      %v9503 = vunpack.c.h.b16 %v9272
      %v9504 = vunpack.c.l.b16 %v9273
      %v9505 = vunpack.c.h.b16 %v9273
      %v9506 = vunpack.c.l.b16 %v9274
      %v9507 = vunpack.c.h.b16 %v9274
      %v9508 = vunpack.c.l.b16 %v9275
      %v9509 = vunpack.c.h.b16 %v9275
      %v9510 = vunpack.c.l.b16 %v9276
      %v9511 = vunpack.c.h.b16 %v9276
      %v9512 = vunpack.c.l.b16 %v9277
      %v9513 = vunpack.c.h.b16 %v9277
      %v9514 = vunpack.c.l.b16 %v9278
      %v9515 = vunpack.c.h.b16 %v9278
      %v9516 = vunpack.c.l.b16 %v9279
      %v9517 = vunpack.c.h.b16 %v9279
      %v9518 = vunpack.c.l.b16 %v9280
      %v9519 = vunpack.c.h.b16 %v9280
      %v9520 = vunpack.c.l.b16 %v9281
      %v9521 = vunpack.c.h.b16 %v9281
      %v9522 = vunpack.c.l.b16 %v9282
      %v9523 = vunpack.c.h.b16 %v9282
      %v9524 = vunpack.c.l.b16 %v9283
      %v9525 = vunpack.c.h.b16 %v9283
      %v9526 = vunpack.c.l.b16 %v9284
      %v9527 = vunpack.c.h.b16 %v9284
      %v9528 = vunpack.c.l.b16 %v9285
      %v9529 = vunpack.c.h.b16 %v9285
      %v9530 = vunpack.c.l.b16 %v9286
      %v9531 = vunpack.c.h.b16 %v9286
      %v9532 = vunpack.c.l.b16 %v9287
      %v9533 = vunpack.c.h.b16 %v9287
      %v9534 = vunpack.c.l.b16 %v9288
      %v9535 = vunpack.c.h.b16 %v9288
      %v9536 = vunpack.c.l.b16 %v9289
      %v9537 = vunpack.c.h.b16 %v9289
      %v9538 = vunpack.c.l.b16 %v9290
      %v9539 = vunpack.c.h.b16 %v9290
      %v9540 = vunpack.c.l.b16 %v9291
      %v9541 = vunpack.c.h.b16 %v9291
      %v9542 = vunpack.c.l.b16 %v9292
      %v9543 = vunpack.c.h.b16 %v9292
      %v9544 = vunpack.c.l.b16 %v9293
      %v9545 = vunpack.c.h.b16 %v9293
      %v9546 = vunpack.c.l.b16 %v9294
      %v9547 = vunpack.c.h.b16 %v9294
      %v9548 = vunpack.c.l.b16 %v9295
      %v9549 = vunpack.c.h.b16 %v9295
      %v9550 = vunpack.c.l.b16 %v9296
      %v9551 = vunpack.c.h.b16 %v9296
      %v9552 = vunpack.c.l.b16 %v9297
      %v9553 = vunpack.c.h.b16 %v9297
      %v9554 = vunpack.c.l.b16 %v9298
      %v9555 = vunpack.c.h.b16 %v9298
      %v9556 = vunpack.c.l.b16 %v9299
      %v9557 = vunpack.c.h.b16 %v9299
      %v9558 = vunpack.c.l.b16 %v9300
      %v9559 = vunpack.c.h.b16 %v9300
      %v9560 = vunpack.c.l.b16 %v9301
      %v9561 = vunpack.c.h.b16 %v9301
      %v9562 = vunpack.c.l.b16 %v9302
      %v9563 = vunpack.c.h.b16 %v9302
      %v9564 = vunpack.c.l.b16 %v9303
      %v9565 = vunpack.c.h.b16 %v9303
      %v9566 = vunpack.c.l.b16 %v9304
      %v9567 = vunpack.c.h.b16 %v9304
      %v9568 = vunpack.c.l.b16 %v9305
      %v9569 = vunpack.c.h.b16 %v9305
      %v9570 = vunpack.c.l.b16 %v9306
      %v9571 = vunpack.c.h.b16 %v9306
      %v9572 = vunpack.c.l.b16 %v9307
      %v9573 = vunpack.c.h.b16 %v9307
      %v9574 = vunpack.c.l.b16 %v9308
      %v9575 = vunpack.c.h.b16 %v9308
      %v9576 = vunpack.c.l.b16 %v9309
      %v9577 = vunpack.c.h.b16 %v9309
      %v9578 = vunpack.c.l.b16 %v9310
      %v9579 = vunpack.c.h.b16 %v9310
      %v9580 = vunpack.c.l.b16 %v9311
      %v9581 = vunpack.c.h.b16 %v9311
      %v9582 = vunpack.c.l.b16 %v9312
      %v9583 = vunpack.c.h.b16 %v9312
      %v9584 = vunpack.c.l.b16 %v9313
      %v9585 = vunpack.c.h.b16 %v9313
      %v9586 = vunpack.c.l.b16 %v9314
      %v9587 = vunpack.c.h.b16 %v9314
      %v9588 = vunpack.c.l.b16 %v9315
      %v9589 = vunpack.c.h.b16 %v9315
      %v9590 = vunpack.c.l.b16 %v9316
      %v9591 = vunpack.c.h.b16 %v9316
      %v9592 = vunpack.c.l.b16 %v9317
      %v9593 = vunpack.c.h.b16 %v9317
      %v9594 = vunpack.c.l.b16 %v9318
      %v9595 = vunpack.c.h.b16 %v9318
      %v9596 = vunpack.c.l.b16 %v9319
      %v9597 = vunpack.c.h.b16 %v9319
      %v9598 = vunpack.c.l.b16 %v9320
      %v9599 = vunpack.c.h.b16 %v9320
      %v9600 = vunpack.c.l.b16 %v9321
      %v9601 = vunpack.c.h.b16 %v9321
      %v9602 = vunpack.c.l.b16 %v9322
      %v9603 = vunpack.c.h.b16 %v9322
      %v9604 = vunpack.c.l.b16 %v9323
      %v9605 = vunpack.c.h.b16 %v9323
      %v9606 = vunpack.c.l.b16 %v9324
      %v9607 = vunpack.c.h.b16 %v9324
      %v9608 = vunpack.c.l.b16 %v9325
      %v9609 = vunpack.c.h.b16 %v9325
      %v9610 = vunpack.c.l.b16 %v9326
      %v9611 = vunpack.c.h.b16 %v9326
      %v9612 = vunpack.c.l.b16 %v9327
      %v9613 = vunpack.c.h.b16 %v9327
      %v9614 = vunpack.c.l.b16 %v9328
      %v9615 = vunpack.c.h.b16 %v9328
      %v9616 = vunpack.c.l.b16 %v9329
      %v9617 = vunpack.c.h.b16 %v9329
      %v9618 = vunpack.c.l.b16 %v9330
      %v9619 = vunpack.c.h.b16 %v9330
      %v9620 = vunpack.c.l.b16 %v9331
      %v9621 = vunpack.c.h.b16 %v9331
      %v9622 = vunpack.c.l.b16 %v9332
      %v9623 = vunpack.c.h.b16 %v9332
      %v9624 = vunpack.c.l.b16 %v9333
      %v9625 = vunpack.c.h.b16 %v9333
      %v9626 = vunpack.c.l.b16 %v9334
      %v9627 = vunpack.c.h.b16 %v9334
      %v9628 = vunpack.c.l.b16 %v9335
      %v9629 = vunpack.c.h.b16 %v9335
      %v9630 = vunpack.c.l.b16 %v9336
      %v9631 = vunpack.c.h.b16 %v9336
      %v9632 = vunpack.c.l.b16 %v9337
      %v9633 = vunpack.c.h.b16 %v9337
      %v9634 = vunpack.c.l.b16 %v9338
      %v9635 = vunpack.c.h.b16 %v9338
      %v9636 = vunpack.c.l.b16 %v9339
      %v9637 = vunpack.c.h.b16 %v9339
      %v9638 = vunpack.c.l.b16 %v9340
      %v9639 = vunpack.c.h.b16 %v9340
      %v9640 = vunpack.c.l.b16 %v9341
      %v9641 = vunpack.c.h.b16 %v9341
      %v9642 = vunpack.c.l.b16 %v9342
      %v9643 = vunpack.c.h.b16 %v9342
      %v9644 = vpack.c.b16 %v9454, %v9452
      %v9645 = vpack.c.b16 %v9455, %v9453
      %v9646 = vpack.c.b16 %v9458, %v9456
      %v9647 = vpack.c.b16 %v9459, %v9457
      %v9648 = vpack.c.b16 %v9462, %v9460
      %v9649 = vpack.c.b16 %v9463, %v9461
      %v9650 = vpack.c.b16 %v9466, %v9464
      %v9651 = vpack.c.b16 %v9467, %v9465
      %v9652 = vpack.c.b16 %v9470, %v9468
      %v9653 = vpack.c.b16 %v9471, %v9469
      %v9654 = vpack.c.b16 %v9474, %v9472
      %v9655 = vpack.c.b16 %v9475, %v9473
      %v9656 = vpack.c.b16 %v9478, %v9476
      %v9657 = vpack.c.b16 %v9479, %v9477
      %v9658 = vpack.c.b16 %v9482, %v9480
      %v9659 = vpack.c.b16 %v9483, %v9481
      %v9660 = vpack.c.b16 %v9486, %v9484
      %v9661 = vpack.c.b16 %v9487, %v9485
      %v9662 = vpack.c.b16 %v9490, %v9488
      %v9663 = vpack.c.b16 %v9491, %v9489
      %v9664 = vpack.c.b16 %v9494, %v9492
      %v9665 = vpack.c.b16 %v9495, %v9493
      %v9666 = vpack.c.b16 %v9498, %v9496
      %v9667 = vpack.c.b16 %v9499, %v9497
      %v9668 = vpack.c.b16 %v9502, %v9500
      %v9669 = vpack.c.b16 %v9503, %v9501
      %v9670 = vpack.c.b16 %v9506, %v9504
      %v9671 = vpack.c.b16 %v9507, %v9505
      %v9672 = vpack.c.b16 %v9510, %v9508
      %v9673 = vpack.c.b16 %v9511, %v9509
      %v9674 = vpack.c.b16 %v9514, %v9512
      %v9675 = vpack.c.b16 %v9515, %v9513
      %v9676 = vpack.c.b16 %v9518, %v9516
      %v9677 = vpack.c.b16 %v9519, %v9517
      %v9678 = vpack.c.b16 %v9522, %v9520
      %v9679 = vpack.c.b16 %v9523, %v9521
      %v9680 = vpack.c.b16 %v9526, %v9524
      %v9681 = vpack.c.b16 %v9527, %v9525
      %v9682 = vpack.c.b16 %v9530, %v9528
      %v9683 = vpack.c.b16 %v9531, %v9529
      %v9684 = vpack.c.b16 %v9534, %v9532
      %v9685 = vpack.c.b16 %v9535, %v9533
      %v9686 = vpack.c.b16 %v9538, %v9536
      %v9687 = vpack.c.b16 %v9539, %v9537
      %v9688 = vpack.c.b16 %v9542, %v9540
      %v9689 = vpack.c.b16 %v9543, %v9541
      %v9690 = vpack.c.b16 %v9546, %v9544
      %v9691 = vpack.c.b16 %v9547, %v9545
      %v9692 = vpack.c.b16 %v9550, %v9548
      %v9693 = vpack.c.b16 %v9551, %v9549
      %v9694 = vpack.c.b16 %v9554, %v9552
      %v9695 = vpack.c.b16 %v9555, %v9553
      %v9696 = vpack.c.b16 %v9558, %v9556
      %v9697 = vpack.c.b16 %v9559, %v9557
      %v9698 = vpack.c.b16 %v9562, %v9560
      %v9699 = vpack.c.b16 %v9563, %v9561
      %v9700 = vpack.c.b16 %v9566, %v9564
      %v9701 = vpack.c.b16 %v9567, %v9565
      %v9702 = vpack.c.b16 %v9570, %v9568
      %v9703 = vpack.c.b16 %v9571, %v9569
      %v9704 = vpack.c.b16 %v9574, %v9572
      %v9705 = vpack.c.b16 %v9575, %v9573
      %v9706 = vpack.c.b16 %v9578, %v9576
      %v9707 = vpack.c.b16 %v9579, %v9577
      %v9708 = vpack.c.b16 %v9582, %v9580
      %v9709 = vpack.c.b16 %v9583, %v9581
      %v9710 = vpack.c.b16 %v9586, %v9584
      %v9711 = vpack.c.b16 %v9587, %v9585
      %v9712 = vpack.c.b16 %v9590, %v9588
      %v9713 = vpack.c.b16 %v9591, %v9589
      %v9714 = vpack.c.b16 %v9594, %v9592
      %v9715 = vpack.c.b16 %v9595, %v9593
      %v9716 = vpack.c.b16 %v9598, %v9596
      %v9717 = vpack.c.b16 %v9599, %v9597
      %v9718 = vpack.c.b16 %v9602, %v9600
      %v9719 = vpack.c.b16 %v9603, %v9601
      %v9720 = vpack.c.b16 %v9606, %v9604
      %v9721 = vpack.c.b16 %v9607, %v9605
      %v9722 = vpack.c.b16 %v9610, %v9608
      %v9723 = vpack.c.b16 %v9611, %v9609
      %v9724 = vpack.c.b16 %v9614, %v9612
      %v9725 = vpack.c.b16 %v9615, %v9613
      %v9726 = vpack.c.b16 %v9618, %v9616
      %v9727 = vpack.c.b16 %v9619, %v9617
      %v9728 = vpack.c.b16 %v9622, %v9620
      %v9729 = vpack.c.b16 %v9623, %v9621
      %v9730 = vpack.c.b16 %v9626, %v9624
      %v9731 = vpack.c.b16 %v9627, %v9625
      %v9732 = vpack.c.b16 %v9630, %v9628
      %v9733 = vpack.c.b16 %v9631, %v9629
      %v9734 = vpack.c.b16 %v9634, %v9632
      %v9735 = vpack.c.b16 %v9635, %v9633
      %v9736 = vpack.c.b16 %v9638, %v9636
      %v9737 = vpack.c.b16 %v9639, %v9637
      %v9738 = vpack.c.b16 %v9642, %v9640
      %v9739 = vpack.c.b16 %v9643, %v9641
      %9836 = vmatprep.subr.bf16.mxu0 %v9645
      %9837 = vmatpush1.bf16.msra.mxu0 %v9644
      %9838 = vmatprep.subr.bf16.mxu0 %v9647
      %9839 = vmatpush1.bf16.msra.mxu0 %v9646
      %9840 = vmatprep.subr.bf16.mxu0 %v9649
      %9841 = vmatpush1.bf16.msra.mxu0 %v9648
      %9842 = vmatprep.subr.bf16.mxu0 %v9651
      %9843 = vmatpush1.bf16.msra.mxu0 %v9650
      %9844 = vmatprep.subr.bf16.mxu0 %v9653
      %9845 = vmatpush1.bf16.msra.mxu0 %v9652
      %9846 = vmatprep.subr.bf16.mxu0 %v9655
      %9847 = vmatpush1.bf16.msra.mxu0 %v9654
      %9848 = vmatprep.subr.bf16.mxu0 %v9657
      %9849 = vmatpush1.bf16.msra.mxu0 %v9656
      %9850 = vmatprep.subr.bf16.mxu0 %v9659
      %9851 = vmatpush1.bf16.msra.mxu0 %v9658
      %9852 = vmatprep.subr.bf16.mxu0 %v9661
      %9853 = vmatpush1.bf16.msra.mxu0 %v9660
      %9854 = vmatprep.subr.bf16.mxu0 %v9663
      %9855 = vmatpush1.bf16.msra.mxu0 %v9662
      %9856 = vmatprep.subr.bf16.mxu0 %v9665
      %9857 = vmatpush1.bf16.msra.mxu0 %v9664
      %9858 = vmatprep.subr.bf16.mxu0 %v9667
      %9859 = vmatpush1.bf16.msra.mxu0 %v9666
      %9860 = vmatprep.subr.bf16.mxu0 %v9669
      %9861 = vmatpush1.bf16.msra.mxu0 %v9668
      %9862 = vmatprep.subr.bf16.mxu0 %v9671
      %9863 = vmatpush1.bf16.msra.mxu0 %v9670
      %9864 = vmatprep.subr.bf16.mxu0 %v9673
      %9865 = vmatpush1.bf16.msra.mxu0 %v9672
      %9866 = vmatprep.subr.bf16.mxu0 %v9675
      %9867 = vmatpush1.bf16.msra.mxu0 %v9674
      %9868 = vmatprep.mubr.bf16.mxu0 %v9241
      %9869 = vmatmul.mubr.bf16.gmra.mrb[0].mxu0 %v9240
      %v9870 = vpop.f32.mrb[0].mxu0
      %v9871 = vadd.f32 %v9349, %v9870
      %v9872 = vpop.f32.mrb[0].mxu0
      %v9873 = vadd.f32 %v9353, %v9872
      %v9874 = vpop.f32.mrb[0].mxu0
      %v9875 = vpop.f32.mrb[0].mxu0
      %9876 = vdwg.mxu0
      %9877 = vmatprep.subr.bf16.mxu0 %v9677
      %9878 = vmatpush1.bf16.msra.mxu0 %v9676
      %9879 = vmatprep.subr.bf16.mxu0 %v9679
      %9880 = vmatpush1.bf16.msra.mxu0 %v9678
      %9881 = vmatprep.subr.bf16.mxu0 %v9681
      %9882 = vmatpush1.bf16.msra.mxu0 %v9680
      %9883 = vmatprep.subr.bf16.mxu0 %v9683
      %9884 = vmatpush1.bf16.msra.mxu0 %v9682
      %9885 = vmatprep.subr.bf16.mxu0 %v9685
      %9886 = vmatpush1.bf16.msra.mxu0 %v9684
      %9887 = vmatprep.subr.bf16.mxu0 %v9687
      %9888 = vmatpush1.bf16.msra.mxu0 %v9686
      %9889 = vmatprep.subr.bf16.mxu0 %v9689
      %9890 = vmatpush1.bf16.msra.mxu0 %v9688
      %9891 = vmatprep.subr.bf16.mxu0 %v9691
      %9892 = vmatpush1.bf16.msra.mxu0 %v9690
      %9893 = vmatprep.subr.bf16.mxu0 %v9693
      %9894 = vmatpush1.bf16.msra.mxu0 %v9692
      %9895 = vmatprep.subr.bf16.mxu0 %v9695
      %9896 = vmatpush1.bf16.msra.mxu0 %v9694
      %9897 = vmatprep.subr.bf16.mxu0 %v9697
      %9898 = vmatpush1.bf16.msra.mxu0 %v9696
      %9899 = vmatprep.subr.bf16.mxu0 %v9699
      %9900 = vmatpush1.bf16.msra.mxu0 %v9698
      %9901 = vmatprep.subr.bf16.mxu0 %v9701
      %9902 = vmatpush1.bf16.msra.mxu0 %v9700
      %9903 = vmatprep.subr.bf16.mxu0 %v9703
      %9904 = vmatpush1.bf16.msra.mxu0 %v9702
      %9905 = vmatprep.subr.bf16.mxu0 %v9705
      %9906 = vmatpush1.bf16.msra.mxu0 %v9704
      %9907 = vmatprep.subr.bf16.mxu0 %v9707
      %9908 = vmatpush1.bf16.msra.mxu0 %v9706
      %9909 = vmatprep.mubr.bf16.mxu0 %v9243
      %9910 = vmatmul.mubr.bf16.gmra.mrb[0].mxu0 %v9242
      %v9911 = vpop.f32.mrb[0].mxu0
      %v9912 = vadd.f32 %v9871, %v9911
      %v9913 = vpop.f32.mrb[0].mxu0
      %v9914 = vadd.f32 %v9873, %v9913
      %v9915 = vpop.f32.mrb[0].mxu0
      %v9916 = vpop.f32.mrb[0].mxu0
      %9917 = vdwg.mxu0
      %9918 = vmatprep.subr.bf16.mxu0 %v9709
      %9919 = vmatpush1.bf16.msra.mxu0 %v9708
      %9920 = vmatprep.subr.bf16.mxu0 %v9711
      %9921 = vmatpush1.bf16.msra.mxu0 %v9710
      %9922 = vmatprep.subr.bf16.mxu0 %v9713
      %9923 = vmatpush1.bf16.msra.mxu0 %v9712
      %9924 = vmatprep.subr.bf16.mxu0 %v9715
      %9925 = vmatpush1.bf16.msra.mxu0 %v9714
      %9926 = vmatprep.subr.bf16.mxu0 %v9717
      %9927 = vmatpush1.bf16.msra.mxu0 %v9716
      %9928 = vmatprep.subr.bf16.mxu0 %v9719
      %9929 = vmatpush1.bf16.msra.mxu0 %v9718
      %9930 = vmatprep.subr.bf16.mxu0 %v9721
      %9931 = vmatpush1.bf16.msra.mxu0 %v9720
      %9932 = vmatprep.subr.bf16.mxu0 %v9723
      %9933 = vmatpush1.bf16.msra.mxu0 %v9722
      %9934 = vmatprep.subr.bf16.mxu0 %v9725
      %9935 = vmatpush1.bf16.msra.mxu0 %v9724
      %9936 = vmatprep.subr.bf16.mxu0 %v9727
      %9937 = vmatpush1.bf16.msra.mxu0 %v9726
      %9938 = vmatprep.subr.bf16.mxu0 %v9729
      %9939 = vmatpush1.bf16.msra.mxu0 %v9728
      %9940 = vmatprep.subr.bf16.mxu0 %v9731
      %9941 = vmatpush1.bf16.msra.mxu0 %v9730
      %9942 = vmatprep.subr.bf16.mxu0 %v9733
      %9943 = vmatpush1.bf16.msra.mxu0 %v9732
      %9944 = vmatprep.subr.bf16.mxu0 %v9735
      %9945 = vmatpush1.bf16.msra.mxu0 %v9734
      %9946 = vmatprep.subr.bf16.mxu0 %v9737
      %9947 = vmatpush1.bf16.msra.mxu0 %v9736
      %9948 = vmatprep.subr.bf16.mxu0 %v9739
      %9949 = vmatpush1.bf16.msra.mxu0 %v9738
      %9950 = vmatprep.mubr.bf16.mxu0 %v9245
      %9951 = vmatmul.mubr.bf16.gmra.mrb[0].mxu0 %v9244
      %v9952 = vpop.f32.mrb[0].mxu0
      %v9953 = vadd.f32 %v9912, %v9952
      %v9954 = vpop.f32.mrb[0].mxu0
      %v9955 = vadd.f32 %v9914, %v9954
      %v9956 = vpop.f32.mrb[0].mxu0
      %v9957 = vpop.f32.mrb[0].mxu0
      %9958 = vdwg.mxu0
      %v9959 = vadd.f32 %v8564, %v9953
      %v9960 = vadd.f32 %v8565, %v9955
      %v9961 = vld [vmem:[%s59] sm:$0x3]
      %v9962 = vld [vmem:[%s61] sm:$0x3]
      %v9963 = vsel %vm3779, %v9959, 0.0
      %v9964 = vsel %vm3781, %v9960, 0.0
      %v9965 = vadd.f32 %v9963, %v9964
      %9966 = vadd.xlane.f32.xlu0 %v9965
      %v9967 = vpop.xlane.xlu0 %9966
      %v9968 = vmul.f32 %v9967, %v3786
      %v9969 = vsub.f32 %v9959, %v9968
      %v9970 = vsub.f32 %v9960, %v9968
      %v9971 = vmul.f32 %v9969, %v9969
      %v9972 = vmul.f32 %v9970, %v9970
      %v9973 = vsel %vm3779, %v9971, 0.0
      %v9974 = vsel %vm3781, %v9972, 0.0
      %v9975 = vadd.f32 %v9973, %v9974
      %9976 = vadd.xlane.f32.xlu0 %v9975
      %v9977 = vpop.xlane.xlu0 %9976
      %v9978 = vmul.f32 %v9977, %v3786
      %v9979 = vadd.f32 %v9978, 1e-05
      %v9980 = vrsqrt.pop %v9979
      %v9981 = vmul.f32 %v9969, %v9980
      %v9982 = vmul.f32 %v9970, %v9980
      %v9984 = vlaneseq
      %v9985 = vshrl.u32 %v9984, 7
      %v9986 = vsub.s32 0, %v9985
      %v9987 = vrot.slane %v9961, %v9986
      %v9988 = vlaneseq
      %v9989 = vshrl.u32 %v9988, 7
      %v9990 = vsub.s32 1, %v9989
      %v9991 = vrot.slane %v9961, %v9990
      %v9994 = vmul.f32 %v9981, %v9987
      %v9995 = vmul.f32 %v9982, %v9991
      %v9997 = vlaneseq
      %v9998 = vshrl.u32 %v9997, 7
      %v9999 = vsub.s32 0, %v9998
      %v10000 = vrot.slane %v9962, %v9999
      %v10001 = vlaneseq
      %v10002 = vshrl.u32 %v10001, 7
      %v10003 = vsub.s32 1, %v10002
      %v10004 = vrot.slane %v9962, %v10003
      %v10007 = vadd.f32 %v9994, %v10000
      %v10008 = vadd.f32 %v9995, %v10004
      %v10011 = vcombine.low %v10007, %v10008
      %v10013 = vunpack.c.l.s4 1966171168
      %v10014 = vunpack.c.0.s8 %v10013
      %v10015 = vlaneseq
      %v10016 = vshrl.u32 %v10015, 7
      %v10017 = vsub.s32 %v10014, %v10016
      %v10018 = vrot.slane %v10011, %v10017
      %v10020 = vunpack.c.l.s4 1966171168
      %v10021 = vunpack.c.0.s8 %v10020
      %v10022 = vlaneseq
      %v10023 = vshrl.u32 %v10022, 7
      %v10024 = vsub.s32 %v10021, %v10023
      %v10025 = vrot.slane %v10018, %v10024
      %v10027 = vlaneseq
      %vm10028 = vcmp.ge.s32.totalorder %v10027, 0
      %vm10029 = vcmp.lt.s32.totalorder %v10027, 192
      %vm10030 = vmand %vm10028, %vm10029
      %10031 = vst.msk [vmem:[%s976] sm:$0x3] %vm10030, %v10025
      %p10032 = scmp.lt.s32.totalorder %s74, 1
      %s10033 = scalar_select %p10032, %s74, 1
      %s10034 = smul.addr %s10033, 2
      %s10035 = scalar_lea.vmem %s63, %s10034
      // Predicated region
      $region145: #{forward.1} parent=143 // pred_check
        %p10036 = pneg %p753
      $region146: #{forward.1} parent=143 // pred_check_branch
        %10038 = sbr.rel (%p10036) target = $region148
      $region147: #{forward.1} parent=143 // pred_region
        _
      $region148: #{forward.1} parent=143 // pred_fallthru
        _
    $region144: #{forward.1} parent=5 // pred_fallthru
      _
    %p10039 = scmp.le.s32.totalorder 2, %s69
    // Predicated region
    $region149: #{forward.1} parent=5 // pred_check
      %p10040 = pneg %p10039
    $region150: #{forward.1} parent=5 // pred_check_branch
      %10042 = sbr.rel (%p10040) target = $region152
    $region151: #{forward.1} parent=5 // pred_region
      %s10043 = ssub.s32 %s69, 2
      // Predicated region
      $region153: #{forward.1} parent=151 // pred_check
        %p10044 = pneg %p759
      $region154: #{forward.1} parent=151 // pred_check_branch
        %10046 = sbr.rel (%p10044) target = $region156
      $region155: #{forward.1} parent=151 // pred_region
        %p10047 = scmp.lt.s32.totalorder %s75, 1
        %s10048 = scalar_select %p10047, %s75, 1
        %s10049 = smul.addr %s10048, 2
        %s10050 = scalar_lea.vmem %s63, %s10049
      $region156: #{forward.1} parent=151 // pred_fallthru
        _
    $region152: #{forward.1} parent=5 // pred_fallthru
      _
  $region6: #{forward.1} parent=0 // loop_footer
    %s73 = sadd.s32 1, %s69
  $region7: #{forward.1} parent=0 // loop_footer_branch
    %68 = sbr.rel target = $region3
  $region8: #{forward.1} parent=0 // loop_exit
    _

</llo_original>
